<compile_context>
chip_gen: v7x
topology: tpu7x:2x2x1
jax: 0.10.0
libtpu: 0.0.40
codegen_flags: <defaults>
</compile_context>

<pallas_src>
import math

import jax
import jax.numpy as jnp
from jax.experimental import pallas as pl
from jax.experimental.pallas import tpu as pltpu


def _make_decoder_layer_kernel(n_heads: int, eps: float = 1e-5):

    def layer_norm(h, g, b):
        mu = jnp.mean(h, axis=-1, keepdims=True)
        xc = h - mu
        var = jnp.mean(xc * xc, axis=-1, keepdims=True)
        return xc * jax.lax.rsqrt(var + eps) * g + b

    def head_proj(src_bf, w_ref, b_ref):
        # src_bf: (S, D) bf16; w_ref: (N, D, hd) bf16; b_ref: (N, 1, hd) f32.
        # One batched MXU einsum produces all N in {H, 2H, 3H} head projections in
        # (N, S, hd) layout directly -- no lane slicing of activations.
        n = w_ref.shape[0]
        src_b = jnp.broadcast_to(src_bf[None], (n,) + src_bf.shape)
        p = jnp.einsum("nsD,nDd->nsd", src_b, w_ref[...],
                       preferred_element_type=jnp.float32)
        return p + b_ref[...]

    def attn_core(qh, kh, vh, masked, w_o_ref, b_o_ref, inv_scale):
        # qh: (H, Sq, hd) f32; kh/vh: (H, Sk, hd) f32; masked: (Sq, Sk) bool.
        s = jnp.einsum("hqd,hkd->hqk",
                       qh.astype(jnp.bfloat16), kh.astype(jnp.bfloat16),
                       preferred_element_type=jnp.float32) * inv_scale
        # `attention_score[mask] = -1e10` semantics from the PyTorch module.
        s = jnp.where(masked[None, :, :], jnp.float32(-1e10), s)
        m = jnp.max(s, axis=-1, keepdims=True)
        e = jnp.exp(s - m)
        l = jnp.sum(e, axis=-1, keepdims=True)
        ctx = jnp.einsum("hqk,hkd->hqd",
                         e.astype(jnp.bfloat16), vh.astype(jnp.bfloat16),
                         preferred_element_type=jnp.float32)
        # Normalization folded in after P@V; approx reciprocal runs on the EUP.
        # (Fine at single-layer tolerance; use exact reciprocal for deep stacks.)
        ctx = ctx * pl.reciprocal(l, approx=True)
        # Head merge folded into the output projection: batched per-head partial
        # outputs summed over the head axis == merged(Sq,D) @ Wo.
        out = jnp.einsum("hqd,hdD->hqD",
                         ctx.astype(jnp.bfloat16), w_o_ref[...],
                         preferred_element_type=jnp.float32)
        return jnp.sum(out, axis=0) + b_o_ref[...]

    def kernel(dec_len_ref, enc_len_ref,            # scalar prefetch (SMEM)
               x_ref, enc_ref,
               w_sqkv_ref, b_sqkv_ref, w_so_ref, b_so_ref,
               w_cq_ref, b_cq_ref, w_ckv_ref, b_ckv_ref, w_co_ref, b_co_ref,
               w_ff1_ref, b_ff1_ref, w_ff2_ref, b_ff2_ref,
               ln_g_ref, ln_b_ref, o_ref):
        H = n_heads
        b = pl.program_id(0)
        dec_len = dec_len_ref[b]
        enc_len = enc_len_ref[b]

        x = x_ref[0]                      # (Sq, D) f32
        enc = enc_ref[0]                  # (Sk, D) f32
        sq, d_model = x.shape
        sk = enc.shape[0]
        inv_scale = 1.0 / math.sqrt(d_model / H)

        # Masks built in-kernel (no (B,S,S) mask DMA): causal + decoder padding for
        # self-attention, encoder padding for cross-attention.
        q_pos = jax.lax.broadcasted_iota(jnp.int32, (sq, sq), 0)
        k_pos = jax.lax.broadcasted_iota(jnp.int32, (sq, sq), 1)
        self_masked = (k_pos > q_pos) | (k_pos >= dec_len)
        ek_pos = jax.lax.broadcasted_iota(jnp.int32, (sq, sk), 1)
        cross_masked = ek_pos >= enc_len

        # --- self attention + residual + LayerNorm (dropout = identity) -------
        qkv = head_proj(x.astype(jnp.bfloat16), w_sqkv_ref, b_sqkv_ref)  # (3H,Sq,hd)
        att = attn_core(qkv[:H], qkv[H:2 * H], qkv[2 * H:],
                        self_masked, w_so_ref, b_so_ref, inv_scale)
        x = layer_norm(x + att, ln_g_ref[0], ln_b_ref[0])

        # --- encoder-decoder attention + residual + LayerNorm -----------------
        qh = head_proj(x.astype(jnp.bfloat16), w_cq_ref, b_cq_ref)       # (H,Sq,hd)
        kv = head_proj(enc.astype(jnp.bfloat16), w_ckv_ref, b_ckv_ref)   # (2H,Sk,hd)
        att = attn_core(qh, kv[:H], kv[H:],
                        cross_masked, w_co_ref, b_co_ref, inv_scale)
        x = layer_norm(x + att, ln_g_ref[1], ln_b_ref[1])

        # --- feed forward (Linear -> ReLU -> Linear) + residual + LayerNorm ---
        h = jnp.dot(x.astype(jnp.bfloat16), w_ff1_ref[...],
                    preferred_element_type=jnp.float32) + b_ff1_ref[...]
        h = jnp.maximum(h, 0.0)
        ff = jnp.dot(h.astype(jnp.bfloat16), w_ff2_ref[...],
                     preferred_element_type=jnp.float32) + b_ff2_ref[...]
        x = layer_norm(x + ff, ln_g_ref[2], ln_b_ref[2])

        o_ref[0] = x.astype(o_ref.dtype)

    return kernel


def _split_heads_out(w, n_heads):
    # (D, D_out) -> (H, D, hd): output columns grouped per head (feature = h*hd+d).
    d_in, d_out = w.shape
    hd = d_out // n_heads
    return jnp.transpose(w.reshape(d_in, n_heads, hd), (1, 0, 2))


def _split_heads_bias(b, n_heads):
    # (1, D) -> (H, 1, hd)
    d = b.shape[-1]
    hd = d // n_heads
    return jnp.transpose(b.reshape(1, n_heads, hd), (1, 0, 2))


def decoder_layer_pallas(x, enc_out, dec_valid_len, enc_dec_valid_len, params,
                         n_heads, *, single_buffer_weights=True):
    """x: (B,Sq,D) f32; enc_out: (B,Sk,D) f32; *_valid_len: (B,) int32.

    Self-attention mask = causal OR k >= dec_valid_len[b];
    cross-attention mask = k >= enc_dec_valid_len[b]; both applied as
    `score := -1e10`, matching the PyTorch masked assignment.
    """
    B, Sq, D = x.shape
    _, Sk, _ = enc_out.shape
    d_ff = params["w_ff1"].shape[1]
    H = n_heads
    hd = D // H
    bf16 = jnp.bfloat16

    # ---- pack weights once in the wrapper (bf16 MXU operands, f32 biases) ----
    # (In a real model this packing happens once at init, not per call.)
    w_self, b_self = params["w_self"], params["b_self"]        # (4,D,D), (4,1,D)
    w_cross, b_cross = params["w_cross"], params["b_cross"]

    w_self_qkv = jnp.concatenate(
        [_split_heads_out(w_self[i], H) for i in range(3)], axis=0).astype(bf16)
    b_self_qkv = jnp.concatenate(
        [_split_heads_bias(b_self[i], H) for i in range(3)], axis=0)
    w_self_o = w_self[3].reshape(H, hd, D).astype(bf16)
    b_self_o = b_self[3]

    w_cross_q = _split_heads_out(w_cross[0], H).astype(bf16)
    b_cross_q = _split_heads_bias(b_cross[0], H)
    w_cross_kv = jnp.concatenate(
        [_split_heads_out(w_cross[i], H) for i in (1, 2)], axis=0).astype(bf16)
    b_cross_kv = jnp.concatenate(
        [_split_heads_bias(b_cross[i], H) for i in (1, 2)], axis=0)
    w_cross_o = w_cross[3].reshape(H, hd, D).astype(bf16)
    b_cross_o = b_cross[3]

    w_ff1 = params["w_ff1"].astype(bf16)
    w_ff2 = params["w_ff2"].astype(bf16)

    kernel = _make_decoder_layer_kernel(H)

    def batch_spec(s, d):
        return pl.BlockSpec((1, s, d), lambda b, dl, el: (b, 0, 0))

    def const_spec(shape):
        idx = {2: (lambda b, dl, el: (0, 0)),
               3: (lambda b, dl, el: (0, 0, 0))}[len(shape)]
        if single_buffer_weights:
            # Constant block index across the grid -> double-buffering is pure
            # VMEM waste; request a single buffer.
            return pl.BlockSpec(shape, idx, pipeline_mode=pl.Buffered(1))
        return pl.BlockSpec(shape, idx)

    in_specs = [
        batch_spec(Sq, D),             # x
        batch_spec(Sk, D),             # enc_out
        const_spec((3 * H, D, hd)),    # w_self_qkv  (bf16)
        const_spec((3 * H, 1, hd)),    # b_self_qkv
        const_spec((H, hd, D)),        # w_self_o    (bf16)
        const_spec((1, D)),            # b_self_o
        const_spec((H, D, hd)),        # w_cross_q   (bf16)
        const_spec((H, 1, hd)),        # b_cross_q
        const_spec((2 * H, D, hd)),    # w_cross_kv  (bf16)
        const_spec((2 * H, 1, hd)),    # b_cross_kv
        const_spec((H, hd, D)),        # w_cross_o   (bf16)
        const_spec((1, D)),            # b_cross_o
        const_spec((D, d_ff)),         # w_ff1 (bf16)
        const_spec((1, d_ff)),         # b_ff1
        const_spec((d_ff, D)),         # w_ff2 (bf16)
        const_spec((1, D)),            # b_ff2
        const_spec((3, 1, D)),         # ln_gamma [self, cross, ff]
        const_spec((3, 1, D)),         # ln_beta
    ]

    return pl.pallas_call(
        kernel,
        out_shape=jax.ShapeDtypeStruct((B, Sq, D), x.dtype),
        grid_spec=pltpu.PrefetchScalarGridSpec(
            num_scalar_prefetch=2,            # valid lengths -> SMEM
            grid=(B,),
            in_specs=in_specs,
            out_specs=batch_spec(Sq, D),
        ),
        compiler_params=pltpu.CompilerParams(
            dimension_semantics=("parallel",)),
    )(dec_valid_len, enc_dec_valid_len, x, enc_out,
      w_self_qkv, b_self_qkv, w_self_o, b_self_o,
      w_cross_q, b_cross_q, w_cross_kv, b_cross_kv, w_cross_o, b_cross_o,
      w_ff1, params["b_ff1"], w_ff2, params["b_ff2"],
      params["ln_gamma"], params["ln_beta"])


def decoder_layer_reference(x, enc_out, dec_mask, enc_dec_mask, params, n_heads):
    """Plain-JAX f32 reference mirroring the PyTorch DecoderLayer (eval mode)."""
    B, Sq, D = x.shape
    hd = D // n_heads
    scale = math.sqrt(D / n_heads)
    eps = 1e-5

    def layer_norm(h, g, b):
        mu = jnp.mean(h, axis=-1, keepdims=True)
        var = jnp.mean((h - mu) ** 2, axis=-1, keepdims=True)
        return (h - mu) / jnp.sqrt(var + eps) * g + b

    def mha(q, kv, w, b, mask):
        Q = q @ w[0] + b[0]
        K = kv @ w[1] + b[1]
        V = kv @ w[2] + b[2]

        def split(t):
            bb, s, _ = t.shape
            return t.reshape(bb, s, n_heads, hd).transpose(0, 2, 1, 3)

        Qh, Kh, Vh = split(Q), split(K), split(V)
        s = jnp.einsum("bhqd,bhkd->bhqk", Qh, Kh) / scale
        s = jnp.where(mask[:, None, :, :] != 0, -1e10, s)
        p = jax.nn.softmax(s, axis=-1)
        ctx = jnp.einsum("bhqk,bhkd->bhqd", p, Vh)
        bb, _, s_q, _ = ctx.shape
        ctx = ctx.transpose(0, 2, 1, 3).reshape(bb, s_q, D)
        return ctx @ w[3] + b[3]

    h = x
    att = mha(h, h, params["w_self"], params["b_self"], dec_mask)
    h = layer_norm(h + att, params["ln_gamma"][0], params["ln_beta"][0])
    att = mha(h, enc_out, params["w_cross"], params["b_cross"], enc_dec_mask)
    h = layer_norm(h + att, params["ln_gamma"][1], params["ln_beta"][1])
    ff = jnp.maximum(h @ params["w_ff1"] + params["b_ff1"], 0.0)
    ff = ff @ params["w_ff2"] + params["b_ff2"]
    h = layer_norm(h + ff, params["ln_gamma"][2], params["ln_beta"][2])
    return h


if __name__ == "__main__":
    # batch, dec seq, enc seq, d_model, n_heads, d_ff
    B, Sq, Sk, D, H, F = 2, 8, 8, 128, 4, 256

    key = jax.random.PRNGKey(0)
    ks = jax.random.split(key, 12)

    def uni(k, shape, bound):
        return jax.random.uniform(k, shape, jnp.float32, -bound, bound)

    bd = 1.0 / math.sqrt(D)
    bf = 1.0 / math.sqrt(F)
    # Weights stored as (in, out): forward computes x @ W + b (== nn.Linear with W^T).
    params = {
        "w_self":   uni(ks[0], (4, D, D), bd),
        "b_self":   uni(ks[1], (4, 1, D), bd),
        "w_cross":  uni(ks[2], (4, D, D), bd),
        "b_cross":  uni(ks[3], (4, 1, D), bd),
        "w_ff1":    uni(ks[4], (D, F), bd),
        "b_ff1":    uni(ks[5], (1, F), bd),
        "w_ff2":    uni(ks[6], (F, D), bf),
        "b_ff2":    uni(ks[7], (1, D), bf),
        "ln_gamma": jnp.ones((3, 1, D), jnp.float32),
        "ln_beta":  jnp.zeros((3, 1, D), jnp.float32),
    }

    x = jax.random.normal(ks[8], (B, Sq, D), jnp.float32)
    enc_out = jax.random.normal(ks[9], (B, Sk, D), jnp.float32)

    # Per-batch valid lengths (scalar-prefetch inputs for the kernel).
    dec_valid = jnp.array([Sq, Sq - 1], dtype=jnp.int32)
    enc_valid = jnp.array([Sk, Sk - 2], dtype=jnp.int32)

    # Equivalent boolean masks for the plain-JAX reference (nonzero = masked).
    pos_q = jnp.arange(Sq)
    pos_k_dec = jnp.arange(Sq)
    pos_k_enc = jnp.arange(Sk)
    dec_mask = ((pos_q[None, :, None] < pos_k_dec[None, None, :]) |
                (pos_k_dec[None, None, :] >= dec_valid[:, None, None])
                ).astype(jnp.int32)                                        # (B,Sq,Sq)
    enc_dec_mask = jnp.broadcast_to(
        pos_k_enc[None, None, :] >= enc_valid[:, None, None],
        (B, Sq, Sk)).astype(jnp.int32)                                     # (B,Sq,Sk)

    try:
        out = jax.block_until_ready(
            decoder_layer_pallas(x, enc_out, dec_valid, enc_valid, params, H,
                                 single_buffer_weights=True))
    except Exception:
        # pl.Buffered(1) (single-buffered constant blocks) unsupported by this
        # jax/libtpu build -> fall back to default double-buffering.
        out = jax.block_until_ready(
            decoder_layer_pallas(x, enc_out, dec_valid, enc_valid, params, H,
                                 single_buffer_weights=False))

    ref = decoder_layer_reference(x, enc_out, dec_mask, enc_dec_mask, params, H)
    err = jnp.max(jnp.abs(out - ref))
    assert out.shape == (B, Sq, D)
    # bf16 matmul operands vs f32 reference -> relaxed tolerance.
    assert jnp.allclose(out, ref, atol=5e-2, rtol=5e-2), f"max abs err = {err}"
    print("KERNEL_OK")
</pallas_src>

<mosaic_0001>
module attributes {stable_mosaic.version = 11 : i64} {
  func.func @kernel(%arg0: i32, %arg1: memref<2xi32, #tpu.memory_space<smem>>, %arg2: memref<2xi32, #tpu.memory_space<smem>>, %arg3: memref<1x8x128xf32, #tpu.memory_space<vmem>>, %arg4: memref<1x8x128xf32, #tpu.memory_space<vmem>>, %arg5: memref<12x128x32xbf16, #tpu.memory_space<vmem>>, %arg6: memref<12x1x32xf32, #tpu.memory_space<vmem>>, %arg7: memref<4x32x128xbf16, #tpu.memory_space<vmem>>, %arg8: memref<1x128xf32, #tpu.memory_space<vmem>>, %arg9: memref<4x128x32xbf16, #tpu.memory_space<vmem>>, %arg10: memref<4x1x32xf32, #tpu.memory_space<vmem>>, %arg11: memref<8x128x32xbf16, #tpu.memory_space<vmem>>, %arg12: memref<8x1x32xf32, #tpu.memory_space<vmem>>, %arg13: memref<4x32x128xbf16, #tpu.memory_space<vmem>>, %arg14: memref<1x128xf32, #tpu.memory_space<vmem>>, %arg15: memref<128x256xbf16, #tpu.memory_space<vmem>>, %arg16: memref<1x256xf32, #tpu.memory_space<vmem>>, %arg17: memref<256x128xbf16, #tpu.memory_space<vmem>>, %arg18: memref<1x128xf32, #tpu.memory_space<vmem>>, %arg19: memref<3x1x128xf32, #tpu.memory_space<vmem>>, %arg20: memref<3x1x128xf32, #tpu.memory_space<vmem>>, %arg21: memref<1x8x128xf32, #tpu.memory_space<vmem>>) attributes {dimension_semantics = [#tpu.dimension_semantics<parallel>], iteration_bounds = array<i64: 2>, scalar_prefetch = 2 : i64, scratch_operands = 0 : i64, tpu.core_type = #tpu.core_type<tc>, window_params = [{transform_indices = @transform_0, window_bounds = array<i64: 1, 8, 128>}, {transform_indices = @transform_1, window_bounds = array<i64: 1, 8, 128>}, {pipeline_mode = #tpu.pipeline_mode<synchronous>, transform_indices = @transform_2, window_bounds = array<i64: 12, 128, 32>}, {pipeline_mode = #tpu.pipeline_mode<synchronous>, transform_indices = @transform_3, window_bounds = array<i64: 12, 1, 32>}, {pipeline_mode = #tpu.pipeline_mode<synchronous>, transform_indices = @transform_4, window_bounds = array<i64: 4, 32, 128>}, {pipeline_mode = #tpu.pipeline_mode<synchronous>, transform_indices = @transform_5, window_bounds = array<i64: 1, 128>}, {pipeline_mode = #tpu.pipeline_mode<synchronous>, transform_indices = @transform_6, window_bounds = array<i64: 4, 128, 32>}, {pipeline_mode = #tpu.pipeline_mode<synchronous>, transform_indices = @transform_7, window_bounds = array<i64: 4, 1, 32>}, {pipeline_mode = #tpu.pipeline_mode<synchronous>, transform_indices = @transform_8, window_bounds = array<i64: 8, 128, 32>}, {pipeline_mode = #tpu.pipeline_mode<synchronous>, transform_indices = @transform_9, window_bounds = array<i64: 8, 1, 32>}, {pipeline_mode = #tpu.pipeline_mode<synchronous>, transform_indices = @transform_10, window_bounds = array<i64: 4, 32, 128>}, {pipeline_mode = #tpu.pipeline_mode<synchronous>, transform_indices = @transform_11, window_bounds = array<i64: 1, 128>}, {pipeline_mode = #tpu.pipeline_mode<synchronous>, transform_indices = @transform_12, window_bounds = array<i64: 128, 256>}, {pipeline_mode = #tpu.pipeline_mode<synchronous>, transform_indices = @transform_13, window_bounds = array<i64: 1, 256>}, {pipeline_mode = #tpu.pipeline_mode<synchronous>, transform_indices = @transform_14, window_bounds = array<i64: 256, 128>}, {pipeline_mode = #tpu.pipeline_mode<synchronous>, transform_indices = @transform_15, window_bounds = array<i64: 1, 128>}, {pipeline_mode = #tpu.pipeline_mode<synchronous>, transform_indices = @transform_16, window_bounds = array<i64: 3, 1, 128>}, {pipeline_mode = #tpu.pipeline_mode<synchronous>, transform_indices = @transform_17, window_bounds = array<i64: 3, 1, 128>}, {transform_indices = @transform_18, window_bounds = array<i64: 1, 8, 128>}]} {
    %0 = arith.index_cast %arg0 : i32 to index
    %1 = memref.load %arg1[%0] : memref<2xi32, #tpu.memory_space<smem>>
    %2 = arith.index_cast %arg0 : i32 to index
    %3 = memref.load %arg2[%2] : memref<2xi32, #tpu.memory_space<smem>>
    %c0 = arith.constant 0 : index
    %c0_0 = arith.constant 0 : index
    %c0_1 = arith.constant 0 : index
    %4 = vector.load %arg3[%c0, %c0_0, %c0_1] : memref<1x8x128xf32, #tpu.memory_space<vmem>>, vector<1x8x128xf32>
    %5 = vector.shape_cast %4 : vector<1x8x128xf32> to vector<8x128xf32>
    %c0_2 = arith.constant 0 : index
    %c0_3 = arith.constant 0 : index
    %c0_4 = arith.constant 0 : index
    %6 = vector.load %arg4[%c0_2, %c0_3, %c0_4] : memref<1x8x128xf32, #tpu.memory_space<vmem>>, vector<1x8x128xf32>
    %7 = vector.shape_cast %6 : vector<1x8x128xf32> to vector<8x128xf32>
    %8 = tpu.iota {dimensions = array<i32: 0>} : vector<8x8xi32>
    %9 = tpu.iota {dimensions = array<i32: 1>} : vector<8x8xi32>
    %10 = arith.cmpi sgt, %9, %8 : vector<8x8xi32>
    %11 = vector.broadcast %1 : i32 to vector<8x8xi32>
    %12 = arith.cmpi sge, %9, %11 : vector<8x8xi32>
    %13 = arith.ori %10, %12 : vector<8x8xi1>
    %14 = tpu.iota {dimensions = array<i32: 1>} : vector<8x8xi32>
    %15 = vector.broadcast %3 : i32 to vector<8x8xi32>
    %16 = arith.cmpi sge, %14, %15 : vector<8x8xi32>
    %17 = arith.truncf %5 : vector<8x128xf32> to vector<8x128xbf16>
    %18 = vector.shape_cast %17 : vector<8x128xbf16> to vector<1x8x128xbf16>
    %19 = vector.shape_cast %18 : vector<1x8x128xbf16> to vector<1x8x128xbf16>
    %20 = vector.broadcast %19 : vector<1x8x128xbf16> to vector<12x8x128xbf16>
    %c0_5 = arith.constant 0 : index
    %c0_6 = arith.constant 0 : index
    %c0_7 = arith.constant 0 : index
    %21 = vector.load %arg5[%c0_5, %c0_6, %c0_7] : memref<12x128x32xbf16, #tpu.memory_space<vmem>>, vector<12x128x32xbf16>
    "tpu.trace_start"() <{level = 10 : i32, message = "nsD,nDd->nsd"}> : () -> ()
    %cst = arith.constant dense<0.000000e+00> : vector<12x8x32xf32>
    %22 = tpu.matmul %20, %21, %cst {dimension_numbers = #tpu.dot_dimension_numbers<[2], [1], [1], [2], [0, 0, 0, 1, 1, 2], [0], [0]>} : vector<12x8x128xbf16>, vector<12x128x32xbf16>, vector<12x8x32xf32> -> vector<12x8x32xf32>
    "tpu.trace_stop"() : () -> ()
    %c0_8 = arith.constant 0 : index
    %c0_9 = arith.constant 0 : index
    %c0_10 = arith.constant 0 : index
    %23 = vector.load %arg6[%c0_8, %c0_9, %c0_10] : memref<12x1x32xf32, #tpu.memory_space<vmem>>, vector<12x1x32xf32>
    %24 = vector.broadcast %23 : vector<12x1x32xf32> to vector<12x8x32xf32>
    %25 = arith.addf %22, %24 : vector<12x8x32xf32>
    %26 = vector.extract_strided_slice %25 {offsets = [0, 0, 0], sizes = [4, 8, 32], strides = [1, 1, 1]} : vector<12x8x32xf32> to vector<4x8x32xf32>
    %27 = vector.extract_strided_slice %25 {offsets = [4, 0, 0], sizes = [4, 8, 32], strides = [1, 1, 1]} : vector<12x8x32xf32> to vector<4x8x32xf32>
    %28 = vector.extract_strided_slice %25 {offsets = [8, 0, 0], sizes = [4, 8, 32], strides = [1, 1, 1]} : vector<12x8x32xf32> to vector<4x8x32xf32>
    %29 = arith.truncf %26 : vector<4x8x32xf32> to vector<4x8x32xbf16>
    %30 = arith.truncf %27 : vector<4x8x32xf32> to vector<4x8x32xbf16>
    "tpu.trace_start"() <{level = 10 : i32, message = "hqd,hkd->hqk"}> : () -> ()
    %cst_11 = arith.constant dense<0.000000e+00> : vector<4x8x8xf32>
    %31 = tpu.matmul %29, %30, %cst_11 {dimension_numbers = #tpu.dot_dimension_numbers<[2], [2], [1], [1], [0, 0, 0, 1, 1, 1], [0], [0]>} : vector<4x8x32xbf16>, vector<4x8x32xbf16>, vector<4x8x8xf32> -> vector<4x8x8xf32>
    "tpu.trace_stop"() : () -> ()
    %cst_12 = arith.constant 0.176776692 : f32
    %32 = vector.broadcast %cst_12 : f32 to vector<4x8x8xf32>
    %33 = arith.mulf %31, %32 : vector<4x8x8xf32>
    %34 = vector.shape_cast %13 : vector<8x8xi1> to vector<1x8x8xi1>
    %cst_13 = arith.constant -1.000000e+10 : f32
    %35 = vector.shape_cast %34 : vector<1x8x8xi1> to vector<1x8x8xi1>
    %36 = vector.broadcast %35 : vector<1x8x8xi1> to vector<4x8x8xi1>
    %37 = vector.broadcast %cst_13 : f32 to vector<4x8x8xf32>
    %38 = arith.select %36, %37, %33 : vector<4x8x8xi1>, vector<4x8x8xf32>
    %cst_14 = arith.constant dense<0xFF800000> : vector<4x8xf32>
    %39 = vector.multi_reduction <maximumf>, %38, %cst_14 [2] : vector<4x8x8xf32> to vector<4x8xf32>
    %40 = vector.shape_cast %39 : vector<4x8xf32> to vector<4x8x1xf32>
    %41 = vector.broadcast %40 : vector<4x8x1xf32> to vector<4x8x8xf32>
    %42 = arith.subf %38, %41 : vector<4x8x8xf32>
    %43 = math.exp %42 : vector<4x8x8xf32>
    %cst_15 = arith.constant dense<0.000000e+00> : vector<4x8xf32>
    %44 = vector.multi_reduction <add>, %43, %cst_15 [2] : vector<4x8x8xf32> to vector<4x8xf32>
    %45 = vector.shape_cast %44 : vector<4x8xf32> to vector<4x8x1xf32>
    %46 = arith.truncf %43 : vector<4x8x8xf32> to vector<4x8x8xbf16>
    %47 = arith.truncf %28 : vector<4x8x32xf32> to vector<4x8x32xbf16>
    "tpu.trace_start"() <{level = 10 : i32, message = "hqk,hkd->hqd"}> : () -> ()
    %cst_16 = arith.constant dense<0.000000e+00> : vector<4x8x32xf32>
    %48 = tpu.matmul %46, %47, %cst_16 {dimension_numbers = #tpu.dot_dimension_numbers<[2], [1], [1], [2], [0, 0, 0, 1, 1, 2], [0], [0]>} : vector<4x8x8xbf16>, vector<4x8x32xbf16>, vector<4x8x32xf32> -> vector<4x8x32xf32>
    "tpu.trace_stop"() : () -> ()
    %49 = tpu.reciprocal %45 {approx = true} : vector<4x8x1xf32> -> vector<4x8x1xf32>
    %50 = vector.broadcast %49 : vector<4x8x1xf32> to vector<4x8x32xf32>
    %51 = arith.mulf %48, %50 : vector<4x8x32xf32>
    %52 = arith.truncf %51 : vector<4x8x32xf32> to vector<4x8x32xbf16>
    %c0_17 = arith.constant 0 : index
    %c0_18 = arith.constant 0 : index
    %c0_19 = arith.constant 0 : index
    %53 = vector.load %arg7[%c0_17, %c0_18, %c0_19] : memref<4x32x128xbf16, #tpu.memory_space<vmem>>, vector<4x32x128xbf16>
    "tpu.trace_start"() <{level = 10 : i32, message = "hqd,hdD->hqD"}> : () -> ()
    %cst_20 = arith.constant dense<0.000000e+00> : vector<4x8x128xf32>
    %54 = tpu.matmul %52, %53, %cst_20 {dimension_numbers = #tpu.dot_dimension_numbers<[2], [1], [1], [2], [0, 0, 0, 1, 1, 2], [0], [0]>} : vector<4x8x32xbf16>, vector<4x32x128xbf16>, vector<4x8x128xf32> -> vector<4x8x128xf32>
    "tpu.trace_stop"() : () -> ()
    %cst_21 = arith.constant dense<0.000000e+00> : vector<8x128xf32>
    %55 = vector.multi_reduction <add>, %54, %cst_21 [0] : vector<4x8x128xf32> to vector<8x128xf32>
    %c0_22 = arith.constant 0 : index
    %c0_23 = arith.constant 0 : index
    %56 = vector.load %arg8[%c0_22, %c0_23] : memref<1x128xf32, #tpu.memory_space<vmem>>, vector<1x128xf32>
    %57 = vector.broadcast %56 : vector<1x128xf32> to vector<8x128xf32>
    %58 = arith.addf %55, %57 : vector<8x128xf32>
    %59 = arith.addf %5, %58 : vector<8x128xf32>
    %c0_24 = arith.constant 0 : index
    %c0_25 = arith.constant 0 : index
    %c0_26 = arith.constant 0 : index
    %60 = vector.load %arg19[%c0_24, %c0_25, %c0_26] : memref<3x1x128xf32, #tpu.memory_space<vmem>>, vector<1x1x128xf32>
    %61 = vector.shape_cast %60 : vector<1x1x128xf32> to vector<1x128xf32>
    %c0_27 = arith.constant 0 : index
    %c0_28 = arith.constant 0 : index
    %c0_29 = arith.constant 0 : index
    %62 = vector.load %arg20[%c0_27, %c0_28, %c0_29] : memref<3x1x128xf32, #tpu.memory_space<vmem>>, vector<1x1x128xf32>
    %63 = vector.shape_cast %62 : vector<1x1x128xf32> to vector<1x128xf32>
    %cst_30 = arith.constant dense<0.000000e+00> : vector<8xf32>
    %64 = vector.multi_reduction <add>, %59, %cst_30 [1] : vector<8x128xf32> to vector<8xf32>
    %65 = vector.shape_cast %64 : vector<8xf32> to vector<8x1xf32>
    %cst_31 = arith.constant 1.280000e+02 : f32
    %66 = vector.broadcast %cst_31 : f32 to vector<8x1xf32>
    %67 = arith.divf %65, %66 : vector<8x1xf32>
    %68 = vector.broadcast %67 : vector<8x1xf32> to vector<8x128xf32>
    %69 = arith.subf %59, %68 : vector<8x128xf32>
    %70 = arith.mulf %69, %69 : vector<8x128xf32>
    %cst_32 = arith.constant dense<0.000000e+00> : vector<8xf32>
    %71 = vector.multi_reduction <add>, %70, %cst_32 [1] : vector<8x128xf32> to vector<8xf32>
    %72 = vector.shape_cast %71 : vector<8xf32> to vector<8x1xf32>
    %cst_33 = arith.constant 1.280000e+02 : f32
    %73 = vector.broadcast %cst_33 : f32 to vector<8x1xf32>
    %74 = arith.divf %72, %73 : vector<8x1xf32>
    %cst_34 = arith.constant 9.99999974E-6 : f32
    %75 = vector.broadcast %cst_34 : f32 to vector<8x1xf32>
    %76 = arith.addf %74, %75 : vector<8x1xf32>
    %77 = math.rsqrt %76 : vector<8x1xf32>
    %78 = vector.broadcast %77 : vector<8x1xf32> to vector<8x128xf32>
    %79 = arith.mulf %69, %78 : vector<8x128xf32>
    %80 = vector.broadcast %61 : vector<1x128xf32> to vector<8x128xf32>
    %81 = arith.mulf %79, %80 : vector<8x128xf32>
    %82 = vector.broadcast %63 : vector<1x128xf32> to vector<8x128xf32>
    %83 = arith.addf %81, %82 : vector<8x128xf32>
    %84 = arith.truncf %83 : vector<8x128xf32> to vector<8x128xbf16>
    %85 = vector.shape_cast %84 : vector<8x128xbf16> to vector<1x8x128xbf16>
    %86 = vector.shape_cast %85 : vector<1x8x128xbf16> to vector<1x8x128xbf16>
    %87 = vector.broadcast %86 : vector<1x8x128xbf16> to vector<4x8x128xbf16>
    %c0_35 = arith.constant 0 : index
    %c0_36 = arith.constant 0 : index
    %c0_37 = arith.constant 0 : index
    %88 = vector.load %arg9[%c0_35, %c0_36, %c0_37] : memref<4x128x32xbf16, #tpu.memory_space<vmem>>, vector<4x128x32xbf16>
    "tpu.trace_start"() <{level = 10 : i32, message = "nsD,nDd->nsd"}> : () -> ()
    %cst_38 = arith.constant dense<0.000000e+00> : vector<4x8x32xf32>
    %89 = tpu.matmul %87, %88, %cst_38 {dimension_numbers = #tpu.dot_dimension_numbers<[2], [1], [1], [2], [0, 0, 0, 1, 1, 2], [0], [0]>} : vector<4x8x128xbf16>, vector<4x128x32xbf16>, vector<4x8x32xf32> -> vector<4x8x32xf32>
    "tpu.trace_stop"() : () -> ()
    %c0_39 = arith.constant 0 : index
    %c0_40 = arith.constant 0 : index
    %c0_41 = arith.constant 0 : index
    %90 = vector.load %arg10[%c0_39, %c0_40, %c0_41] : memref<4x1x32xf32, #tpu.memory_space<vmem>>, vector<4x1x32xf32>
    %91 = vector.broadcast %90 : vector<4x1x32xf32> to vector<4x8x32xf32>
    %92 = arith.addf %89, %91 : vector<4x8x32xf32>
    %93 = arith.truncf %7 : vector<8x128xf32> to vector<8x128xbf16>
    %94 = vector.shape_cast %93 : vector<8x128xbf16> to vector<1x8x128xbf16>
    %95 = vector.shape_cast %94 : vector<1x8x128xbf16> to vector<1x8x128xbf16>
    %96 = vector.broadcast %95 : vector<1x8x128xbf16> to vector<8x8x128xbf16>
    %c0_42 = arith.constant 0 : index
    %c0_43 = arith.constant 0 : index
    %c0_44 = arith.constant 0 : index
    %97 = vector.load %arg11[%c0_42, %c0_43, %c0_44] : memref<8x128x32xbf16, #tpu.memory_space<vmem>>, vector<8x128x32xbf16>
    "tpu.trace_start"() <{level = 10 : i32, message = "nsD,nDd->nsd"}> : () -> ()
    %cst_45 = arith.constant dense<0.000000e+00> : vector<8x8x32xf32>
    %98 = tpu.matmul %96, %97, %cst_45 {dimension_numbers = #tpu.dot_dimension_numbers<[2], [1], [1], [2], [0, 0, 0, 1, 1, 2], [0], [0]>} : vector<8x8x128xbf16>, vector<8x128x32xbf16>, vector<8x8x32xf32> -> vector<8x8x32xf32>
    "tpu.trace_stop"() : () -> ()
    %c0_46 = arith.constant 0 : index
    %c0_47 = arith.constant 0 : index
    %c0_48 = arith.constant 0 : index
    %99 = vector.load %arg12[%c0_46, %c0_47, %c0_48] : memref<8x1x32xf32, #tpu.memory_space<vmem>>, vector<8x1x32xf32>
    %100 = vector.broadcast %99 : vector<8x1x32xf32> to vector<8x8x32xf32>
    %101 = arith.addf %98, %100 : vector<8x8x32xf32>
    %102 = vector.extract_strided_slice %101 {offsets = [0, 0, 0], sizes = [4, 8, 32], strides = [1, 1, 1]} : vector<8x8x32xf32> to vector<4x8x32xf32>
    %103 = vector.extract_strided_slice %101 {offsets = [4, 0, 0], sizes = [4, 8, 32], strides = [1, 1, 1]} : vector<8x8x32xf32> to vector<4x8x32xf32>
    %104 = arith.truncf %92 : vector<4x8x32xf32> to vector<4x8x32xbf16>
    %105 = arith.truncf %102 : vector<4x8x32xf32> to vector<4x8x32xbf16>
    "tpu.trace_start"() <{level = 10 : i32, message = "hqd,hkd->hqk"}> : () -> ()
    %cst_49 = arith.constant dense<0.000000e+00> : vector<4x8x8xf32>
    %106 = tpu.matmul %104, %105, %cst_49 {dimension_numbers = #tpu.dot_dimension_numbers<[2], [2], [1], [1], [0, 0, 0, 1, 1, 1], [0], [0]>} : vector<4x8x32xbf16>, vector<4x8x32xbf16>, vector<4x8x8xf32> -> vector<4x8x8xf32>
    "tpu.trace_stop"() : () -> ()
    %cst_50 = arith.constant 0.176776692 : f32
    %107 = vector.broadcast %cst_50 : f32 to vector<4x8x8xf32>
    %108 = arith.mulf %106, %107 : vector<4x8x8xf32>
    %109 = vector.shape_cast %16 : vector<8x8xi1> to vector<1x8x8xi1>
    %cst_51 = arith.constant -1.000000e+10 : f32
    %110 = vector.shape_cast %109 : vector<1x8x8xi1> to vector<1x8x8xi1>
    %111 = vector.broadcast %110 : vector<1x8x8xi1> to vector<4x8x8xi1>
    %112 = vector.broadcast %cst_51 : f32 to vector<4x8x8xf32>
    %113 = arith.select %111, %112, %108 : vector<4x8x8xi1>, vector<4x8x8xf32>
    %cst_52 = arith.constant dense<0xFF800000> : vector<4x8xf32>
    %114 = vector.multi_reduction <maximumf>, %113, %cst_52 [2] : vector<4x8x8xf32> to vector<4x8xf32>
    %115 = vector.shape_cast %114 : vector<4x8xf32> to vector<4x8x1xf32>
    %116 = vector.broadcast %115 : vector<4x8x1xf32> to vector<4x8x8xf32>
    %117 = arith.subf %113, %116 : vector<4x8x8xf32>
    %118 = math.exp %117 : vector<4x8x8xf32>
    %cst_53 = arith.constant dense<0.000000e+00> : vector<4x8xf32>
    %119 = vector.multi_reduction <add>, %118, %cst_53 [2] : vector<4x8x8xf32> to vector<4x8xf32>
    %120 = vector.shape_cast %119 : vector<4x8xf32> to vector<4x8x1xf32>
    %121 = arith.truncf %118 : vector<4x8x8xf32> to vector<4x8x8xbf16>
    %122 = arith.truncf %103 : vector<4x8x32xf32> to vector<4x8x32xbf16>
    "tpu.trace_start"() <{level = 10 : i32, message = "hqk,hkd->hqd"}> : () -> ()
    %cst_54 = arith.constant dense<0.000000e+00> : vector<4x8x32xf32>
    %123 = tpu.matmul %121, %122, %cst_54 {dimension_numbers = #tpu.dot_dimension_numbers<[2], [1], [1], [2], [0, 0, 0, 1, 1, 2], [0], [0]>} : vector<4x8x8xbf16>, vector<4x8x32xbf16>, vector<4x8x32xf32> -> vector<4x8x32xf32>
    "tpu.trace_stop"() : () -> ()
    %124 = tpu.reciprocal %120 {approx = true} : vector<4x8x1xf32> -> vector<4x8x1xf32>
    %125 = vector.broadcast %124 : vector<4x8x1xf32> to vector<4x8x32xf32>
    %126 = arith.mulf %123, %125 : vector<4x8x32xf32>
    %127 = arith.truncf %126 : vector<4x8x32xf32> to vector<4x8x32xbf16>
    %c0_55 = arith.constant 0 : index
    %c0_56 = arith.constant 0 : index
    %c0_57 = arith.constant 0 : index
    %128 = vector.load %arg13[%c0_55, %c0_56, %c0_57] : memref<4x32x128xbf16, #tpu.memory_space<vmem>>, vector<4x32x128xbf16>
    "tpu.trace_start"() <{level = 10 : i32, message = "hqd,hdD->hqD"}> : () -> ()
    %cst_58 = arith.constant dense<0.000000e+00> : vector<4x8x128xf32>
    %129 = tpu.matmul %127, %128, %cst_58 {dimension_numbers = #tpu.dot_dimension_numbers<[2], [1], [1], [2], [0, 0, 0, 1, 1, 2], [0], [0]>} : vector<4x8x32xbf16>, vector<4x32x128xbf16>, vector<4x8x128xf32> -> vector<4x8x128xf32>
    "tpu.trace_stop"() : () -> ()
    %cst_59 = arith.constant dense<0.000000e+00> : vector<8x128xf32>
    %130 = vector.multi_reduction <add>, %129, %cst_59 [0] : vector<4x8x128xf32> to vector<8x128xf32>
    %c0_60 = arith.constant 0 : index
    %c0_61 = arith.constant 0 : index
    %131 = vector.load %arg14[%c0_60, %c0_61] : memref<1x128xf32, #tpu.memory_space<vmem>>, vector<1x128xf32>
    %132 = vector.broadcast %131 : vector<1x128xf32> to vector<8x128xf32>
    %133 = arith.addf %130, %132 : vector<8x128xf32>
    %134 = arith.addf %83, %133 : vector<8x128xf32>
    %c1 = arith.constant 1 : index
    %c0_62 = arith.constant 0 : index
    %c0_63 = arith.constant 0 : index
    %135 = vector.load %arg19[%c1, %c0_62, %c0_63] : memref<3x1x128xf32, #tpu.memory_space<vmem>>, vector<1x1x128xf32>
    %136 = vector.shape_cast %135 : vector<1x1x128xf32> to vector<1x128xf32>
    %c1_64 = arith.constant 1 : index
    %c0_65 = arith.constant 0 : index
    %c0_66 = arith.constant 0 : index
    %137 = vector.load %arg20[%c1_64, %c0_65, %c0_66] : memref<3x1x128xf32, #tpu.memory_space<vmem>>, vector<1x1x128xf32>
    %138 = vector.shape_cast %137 : vector<1x1x128xf32> to vector<1x128xf32>
    %cst_67 = arith.constant dense<0.000000e+00> : vector<8xf32>
    %139 = vector.multi_reduction <add>, %134, %cst_67 [1] : vector<8x128xf32> to vector<8xf32>
    %140 = vector.shape_cast %139 : vector<8xf32> to vector<8x1xf32>
    %cst_68 = arith.constant 1.280000e+02 : f32
    %141 = vector.broadcast %cst_68 : f32 to vector<8x1xf32>
    %142 = arith.divf %140, %141 : vector<8x1xf32>
    %143 = vector.broadcast %142 : vector<8x1xf32> to vector<8x128xf32>
    %144 = arith.subf %134, %143 : vector<8x128xf32>
    %145 = arith.mulf %144, %144 : vector<8x128xf32>
    %cst_69 = arith.constant dense<0.000000e+00> : vector<8xf32>
    %146 = vector.multi_reduction <add>, %145, %cst_69 [1] : vector<8x128xf32> to vector<8xf32>
    %147 = vector.shape_cast %146 : vector<8xf32> to vector<8x1xf32>
    %cst_70 = arith.constant 1.280000e+02 : f32
    %148 = vector.broadcast %cst_70 : f32 to vector<8x1xf32>
    %149 = arith.divf %147, %148 : vector<8x1xf32>
    %cst_71 = arith.constant 9.99999974E-6 : f32
    %150 = vector.broadcast %cst_71 : f32 to vector<8x1xf32>
    %151 = arith.addf %149, %150 : vector<8x1xf32>
    %152 = math.rsqrt %151 : vector<8x1xf32>
    %153 = vector.broadcast %152 : vector<8x1xf32> to vector<8x128xf32>
    %154 = arith.mulf %144, %153 : vector<8x128xf32>
    %155 = vector.broadcast %136 : vector<1x128xf32> to vector<8x128xf32>
    %156 = arith.mulf %154, %155 : vector<8x128xf32>
    %157 = vector.broadcast %138 : vector<1x128xf32> to vector<8x128xf32>
    %158 = arith.addf %156, %157 : vector<8x128xf32>
    %159 = arith.truncf %158 : vector<8x128xf32> to vector<8x128xbf16>
    %c0_72 = arith.constant 0 : index
    %c0_73 = arith.constant 0 : index
    %160 = vector.load %arg15[%c0_72, %c0_73] : memref<128x256xbf16, #tpu.memory_space<vmem>>, vector<128x256xbf16>
    %cst_74 = arith.constant dense<0.000000e+00> : vector<8x256xf32>
    %161 = tpu.matmul %159, %160, %cst_74 {dimension_numbers = #tpu.dot_dimension_numbers<[1], [0], [0], [1], [0, 0, 1, 1], [], []>} : vector<8x128xbf16>, vector<128x256xbf16>, vector<8x256xf32> -> vector<8x256xf32>
    %c0_75 = arith.constant 0 : index
    %c0_76 = arith.constant 0 : index
    %162 = vector.load %arg16[%c0_75, %c0_76] : memref<1x256xf32, #tpu.memory_space<vmem>>, vector<1x256xf32>
    %163 = vector.broadcast %162 : vector<1x256xf32> to vector<8x256xf32>
    %164 = arith.addf %161, %163 : vector<8x256xf32>
    %cst_77 = arith.constant 0.000000e+00 : f32
    %165 = vector.broadcast %cst_77 : f32 to vector<8x256xf32>
    %166 = arith.maximumf %164, %165 : vector<8x256xf32>
    %167 = arith.truncf %166 : vector<8x256xf32> to vector<8x256xbf16>
    %c0_78 = arith.constant 0 : index
    %c0_79 = arith.constant 0 : index
    %168 = vector.load %arg17[%c0_78, %c0_79] : memref<256x128xbf16, #tpu.memory_space<vmem>>, vector<256x128xbf16>
    %cst_80 = arith.constant dense<0.000000e+00> : vector<8x128xf32>
    %169 = tpu.matmul %167, %168, %cst_80 {dimension_numbers = #tpu.dot_dimension_numbers<[1], [0], [0], [1], [0, 0, 1, 1], [], []>} : vector<8x256xbf16>, vector<256x128xbf16>, vector<8x128xf32> -> vector<8x128xf32>
    %c0_81 = arith.constant 0 : index
    %c0_82 = arith.constant 0 : index
    %170 = vector.load %arg18[%c0_81, %c0_82] : memref<1x128xf32, #tpu.memory_space<vmem>>, vector<1x128xf32>
    %171 = vector.broadcast %170 : vector<1x128xf32> to vector<8x128xf32>
    %172 = arith.addf %169, %171 : vector<8x128xf32>
    %173 = arith.addf %158, %172 : vector<8x128xf32>
    %c2 = arith.constant 2 : index
    %c0_83 = arith.constant 0 : index
    %c0_84 = arith.constant 0 : index
    %174 = vector.load %arg19[%c2, %c0_83, %c0_84] : memref<3x1x128xf32, #tpu.memory_space<vmem>>, vector<1x1x128xf32>
    %175 = vector.shape_cast %174 : vector<1x1x128xf32> to vector<1x128xf32>
    %c2_85 = arith.constant 2 : index
    %c0_86 = arith.constant 0 : index
    %c0_87 = arith.constant 0 : index
    %176 = vector.load %arg20[%c2_85, %c0_86, %c0_87] : memref<3x1x128xf32, #tpu.memory_space<vmem>>, vector<1x1x128xf32>
    %177 = vector.shape_cast %176 : vector<1x1x128xf32> to vector<1x128xf32>
    %cst_88 = arith.constant dense<0.000000e+00> : vector<8xf32>
    %178 = vector.multi_reduction <add>, %173, %cst_88 [1] : vector<8x128xf32> to vector<8xf32>
    %179 = vector.shape_cast %178 : vector<8xf32> to vector<8x1xf32>
    %cst_89 = arith.constant 1.280000e+02 : f32
    %180 = vector.broadcast %cst_89 : f32 to vector<8x1xf32>
    %181 = arith.divf %179, %180 : vector<8x1xf32>
    %182 = vector.broadcast %181 : vector<8x1xf32> to vector<8x128xf32>
    %183 = arith.subf %173, %182 : vector<8x128xf32>
    %184 = arith.mulf %183, %183 : vector<8x128xf32>
    %cst_90 = arith.constant dense<0.000000e+00> : vector<8xf32>
    %185 = vector.multi_reduction <add>, %184, %cst_90 [1] : vector<8x128xf32> to vector<8xf32>
    %186 = vector.shape_cast %185 : vector<8xf32> to vector<8x1xf32>
    %cst_91 = arith.constant 1.280000e+02 : f32
    %187 = vector.broadcast %cst_91 : f32 to vector<8x1xf32>
    %188 = arith.divf %186, %187 : vector<8x1xf32>
    %cst_92 = arith.constant 9.99999974E-6 : f32
    %189 = vector.broadcast %cst_92 : f32 to vector<8x1xf32>
    %190 = arith.addf %188, %189 : vector<8x1xf32>
    %191 = math.rsqrt %190 : vector<8x1xf32>
    %192 = vector.broadcast %191 : vector<8x1xf32> to vector<8x128xf32>
    %193 = arith.mulf %183, %192 : vector<8x128xf32>
    %194 = vector.broadcast %175 : vector<1x128xf32> to vector<8x128xf32>
    %195 = arith.mulf %193, %194 : vector<8x128xf32>
    %196 = vector.broadcast %177 : vector<1x128xf32> to vector<8x128xf32>
    %197 = arith.addf %195, %196 : vector<8x128xf32>
    %c0_93 = arith.constant 0 : index
    %c0_94 = arith.constant 0 : index
    %c0_95 = arith.constant 0 : index
    %198 = vector.load %arg21[%c0_93, %c0_94, %c0_95] : memref<1x8x128xf32, #tpu.memory_space<vmem>>, vector<1x8x128xf32>
    %199 = vector.shape_cast %198 : vector<1x8x128xf32> to vector<8x128xf32>
    %200 = vector.shape_cast %197 : vector<8x128xf32> to vector<1x8x128xf32>
    tpu.vector_store %arg21[%c0_93, %c0_94, %c0_95], %200 {strides = array<i32>} : memref<1x8x128xf32, #tpu.memory_space<vmem>>, vector<1x8x128xf32>,
    return
  }
  func.func @transform_0(%arg0: i32, %arg1: memref<2xi32, #tpu.memory_space<smem>>, %arg2: memref<2xi32, #tpu.memory_space<smem>>) -> (i32, i32, i32) {
    %c0_i32 = arith.constant 0 : i32
    %c0_i32_0 = arith.constant 0 : i32
    %c0_i32_1 = arith.constant 0 : i32
    return %arg0, %c0_i32, %c0_i32_0 : i32, i32, i32
  }
  func.func @transform_1(%arg0: i32, %arg1: memref<2xi32, #tpu.memory_space<smem>>, %arg2: memref<2xi32, #tpu.memory_space<smem>>) -> (i32, i32, i32) {
    %c0_i32 = arith.constant 0 : i32
    %c0_i32_0 = arith.constant 0 : i32
    %c0_i32_1 = arith.constant 0 : i32
    return %arg0, %c0_i32, %c0_i32_0 : i32, i32, i32
  }
  func.func @transform_2(%arg0: i32, %arg1: memref<2xi32, #tpu.memory_space<smem>>, %arg2: memref<2xi32, #tpu.memory_space<smem>>) -> (i32, i32, i32) {
    %c0_i32 = arith.constant 0 : i32
    %c0_i32_0 = arith.constant 0 : i32
    %c0_i32_1 = arith.constant 0 : i32
    %c0_i32_2 = arith.constant 0 : i32
    return %c0_i32, %c0_i32_0, %c0_i32_1 : i32, i32, i32
  }
  func.func @transform_3(%arg0: i32, %arg1: memref<2xi32, #tpu.memory_space<smem>>, %arg2: memref<2xi32, #tpu.memory_space<smem>>) -> (i32, i32, i32) {
    %c0_i32 = arith.constant 0 : i32
    %c0_i32_0 = arith.constant 0 : i32
    %c0_i32_1 = arith.constant 0 : i32
    %c0_i32_2 = arith.constant 0 : i32
    return %c0_i32, %c0_i32_0, %c0_i32_1 : i32, i32, i32
  }
  func.func @transform_4(%arg0: i32, %arg1: memref<2xi32, #tpu.memory_space<smem>>, %arg2: memref<2xi32, #tpu.memory_space<smem>>) -> (i32, i32, i32) {
    %c0_i32 = arith.constant 0 : i32
    %c0_i32_0 = arith.constant 0 : i32
    %c0_i32_1 = arith.constant 0 : i32
    %c0_i32_2 = arith.constant 0 : i32
    return %c0_i32, %c0_i32_0, %c0_i32_1 : i32, i32, i32
  }
  func.func @transform_5(%arg0: i32, %arg1: memref<2xi32, #tpu.memory_space<smem>>, %arg2: memref<2xi32, #tpu.memory_space<smem>>) -> (i32, i32) {
    %c0_i32 = arith.constant 0 : i32
    %c0_i32_0 = arith.constant 0 : i32
    %c0_i32_1 = arith.constant 0 : i32
    return %c0_i32, %c0_i32_0 : i32, i32
  }
  func.func @transform_6(%arg0: i32, %arg1: memref<2xi32, #tpu.memory_space<smem>>, %arg2: memref<2xi32, #tpu.memory_space<smem>>) -> (i32, i32, i32) {
    %c0_i32 = arith.constant 0 : i32
    %c0_i32_0 = arith.constant 0 : i32
    %c0_i32_1 = arith.constant 0 : i32
    %c0_i32_2 = arith.constant 0 : i32
    return %c0_i32, %c0_i32_0, %c0_i32_1 : i32, i32, i32
  }
  func.func @transform_7(%arg0: i32, %arg1: memref<2xi32, #tpu.memory_space<smem>>, %arg2: memref<2xi32, #tpu.memory_space<smem>>) -> (i32, i32, i32) {
    %c0_i32 = arith.constant 0 : i32
    %c0_i32_0 = arith.constant 0 : i32
    %c0_i32_1 = arith.constant 0 : i32
    %c0_i32_2 = arith.constant 0 : i32
    return %c0_i32, %c0_i32_0, %c0_i32_1 : i32, i32, i32
  }
  func.func @transform_8(%arg0: i32, %arg1: memref<2xi32, #tpu.memory_space<smem>>, %arg2: memref<2xi32, #tpu.memory_space<smem>>) -> (i32, i32, i32) {
    %c0_i32 = arith.constant 0 : i32
    %c0_i32_0 = arith.constant 0 : i32
    %c0_i32_1 = arith.constant 0 : i32
    %c0_i32_2 = arith.constant 0 : i32
    return %c0_i32, %c0_i32_0, %c0_i32_1 : i32, i32, i32
  }
  func.func @transform_9(%arg0: i32, %arg1: memref<2xi32, #tpu.memory_space<smem>>, %arg2: memref<2xi32, #tpu.memory_space<smem>>) -> (i32, i32, i32) {
    %c0_i32 = arith.constant 0 : i32
    %c0_i32_0 = arith.constant 0 : i32
    %c0_i32_1 = arith.constant 0 : i32
    %c0_i32_2 = arith.constant 0 : i32
    return %c0_i32, %c0_i32_0, %c0_i32_1 : i32, i32, i32
  }
  func.func @transform_10(%arg0: i32, %arg1: memref<2xi32, #tpu.memory_space<smem>>, %arg2: memref<2xi32, #tpu.memory_space<smem>>) -> (i32, i32, i32) {
    %c0_i32 = arith.constant 0 : i32
    %c0_i32_0 = arith.constant 0 : i32
    %c0_i32_1 = arith.constant 0 : i32
    %c0_i32_2 = arith.constant 0 : i32
    return %c0_i32, %c0_i32_0, %c0_i32_1 : i32, i32, i32
  }
  func.func @transform_11(%arg0: i32, %arg1: memref<2xi32, #tpu.memory_space<smem>>, %arg2: memref<2xi32, #tpu.memory_space<smem>>) -> (i32, i32) {
    %c0_i32 = arith.constant 0 : i32
    %c0_i32_0 = arith.constant 0 : i32
    %c0_i32_1 = arith.constant 0 : i32
    return %c0_i32, %c0_i32_0 : i32, i32
  }
  func.func @transform_12(%arg0: i32, %arg1: memref<2xi32, #tpu.memory_space<smem>>, %arg2: memref<2xi32, #tpu.memory_space<smem>>) -> (i32, i32) {
    %c0_i32 = arith.constant 0 : i32
    %c0_i32_0 = arith.constant 0 : i32
    %c0_i32_1 = arith.constant 0 : i32
    return %c0_i32, %c0_i32_0 : i32, i32
  }
  func.func @transform_13(%arg0: i32, %arg1: memref<2xi32, #tpu.memory_space<smem>>, %arg2: memref<2xi32, #tpu.memory_space<smem>>) -> (i32, i32) {
    %c0_i32 = arith.constant 0 : i32
    %c0_i32_0 = arith.constant 0 : i32
    %c0_i32_1 = arith.constant 0 : i32
    return %c0_i32, %c0_i32_0 : i32, i32
  }
  func.func @transform_14(%arg0: i32, %arg1: memref<2xi32, #tpu.memory_space<smem>>, %arg2: memref<2xi32, #tpu.memory_space<smem>>) -> (i32, i32) {
    %c0_i32 = arith.constant 0 : i32
    %c0_i32_0 = arith.constant 0 : i32
    %c0_i32_1 = arith.constant 0 : i32
    return %c0_i32, %c0_i32_0 : i32, i32
  }
  func.func @transform_15(%arg0: i32, %arg1: memref<2xi32, #tpu.memory_space<smem>>, %arg2: memref<2xi32, #tpu.memory_space<smem>>) -> (i32, i32) {
    %c0_i32 = arith.constant 0 : i32
    %c0_i32_0 = arith.constant 0 : i32
    %c0_i32_1 = arith.constant 0 : i32
    return %c0_i32, %c0_i32_0 : i32, i32
  }
  func.func @transform_16(%arg0: i32, %arg1: memref<2xi32, #tpu.memory_space<smem>>, %arg2: memref<2xi32, #tpu.memory_space<smem>>) -> (i32, i32, i32) {
    %c0_i32 = arith.constant 0 : i32
    %c0_i32_0 = arith.constant 0 : i32
    %c0_i32_1 = arith.constant 0 : i32
    %c0_i32_2 = arith.constant 0 : i32
    return %c0_i32, %c0_i32_0, %c0_i32_1 : i32, i32, i32
  }
  func.func @transform_17(%arg0: i32, %arg1: memref<2xi32, #tpu.memory_space<smem>>, %arg2: memref<2xi32, #tpu.memory_space<smem>>) -> (i32, i32, i32) {
    %c0_i32 = arith.constant 0 : i32
    %c0_i32_0 = arith.constant 0 : i32
    %c0_i32_1 = arith.constant 0 : i32
    %c0_i32_2 = arith.constant 0 : i32
    return %c0_i32, %c0_i32_0, %c0_i32_1 : i32, i32, i32
  }
  func.func @transform_18(%arg0: i32, %arg1: memref<2xi32, #tpu.memory_space<smem>>, %arg2: memref<2xi32, #tpu.memory_space<smem>>) -> (i32, i32, i32) {
    %c0_i32 = arith.constant 0 : i32
    %c0_i32_0 = arith.constant 0 : i32
    %c0_i32_1 = arith.constant 0 : i32
    return %arg0, %c0_i32, %c0_i32_0 : i32, i32, i32
  }
}

module attributes {stable_mosaic.version = 11 : i64} {
  func.func @kernel(%arg0: i32, %arg1: memref<2xi32, #tpu.memory_space<smem>>, %arg2: memref<2xi32, #tpu.memory_space<smem>>, %arg3: memref<1x8x128xf32, #tpu.memory_space<vmem>>, %arg4: memref<1x8x128xf32, #tpu.memory_space<vmem>>, %arg5: memref<12x128x32xbf16, #tpu.memory_space<vmem>>, %arg6: memref<12x1x32xf32, #tpu.memory_space<vmem>>, %arg7: memref<4x32x128xbf16, #tpu.memory_space<vmem>>, %arg8: memref<1x128xf32, #tpu.memory_space<vmem>>, %arg9: memref<4x128x32xbf16, #tpu.memory_space<vmem>>, %arg10: memref<4x1x32xf32, #tpu.memory_space<vmem>>, %arg11: memref<8x128x32xbf16, #tpu.memory_space<vmem>>, %arg12: memref<8x1x32xf32, #tpu.memory_space<vmem>>, %arg13: memref<4x32x128xbf16, #tpu.memory_space<vmem>>, %arg14: memref<1x128xf32, #tpu.memory_space<vmem>>, %arg15: memref<128x256xbf16, #tpu.memory_space<vmem>>, %arg16: memref<1x256xf32, #tpu.memory_space<vmem>>, %arg17: memref<256x128xbf16, #tpu.memory_space<vmem>>, %arg18: memref<1x128xf32, #tpu.memory_space<vmem>>, %arg19: memref<3x1x128xf32, #tpu.memory_space<vmem>>, %arg20: memref<3x1x128xf32, #tpu.memory_space<vmem>>, %arg21: memref<1x8x128xf32, #tpu.memory_space<vmem>>) attributes {dimension_semantics = [#tpu.dimension_semantics<parallel>], iteration_bounds = array<i64: 2>, scalar_prefetch = 2 : i64, scratch_operands = 0 : i64, tpu.core_type = #tpu.core_type<tc>, window_params = [{transform_indices = @transform_0, window_bounds = array<i64: 1, 8, 128>}, {transform_indices = @transform_1, window_bounds = array<i64: 1, 8, 128>}, {pipeline_mode = #tpu.pipeline_mode<synchronous>, transform_indices = @transform_2, window_bounds = array<i64: 12, 128, 32>}, {pipeline_mode = #tpu.pipeline_mode<synchronous>, transform_indices = @transform_3, window_bounds = array<i64: 12, 1, 32>}, {pipeline_mode = #tpu.pipeline_mode<synchronous>, transform_indices = @transform_4, window_bounds = array<i64: 4, 32, 128>}, {pipeline_mode = #tpu.pipeline_mode<synchronous>, transform_indices = @transform_5, window_bounds = array<i64: 1, 128>}, {pipeline_mode = #tpu.pipeline_mode<synchronous>, transform_indices = @transform_6, window_bounds = array<i64: 4, 128, 32>}, {pipeline_mode = #tpu.pipeline_mode<synchronous>, transform_indices = @transform_7, window_bounds = array<i64: 4, 1, 32>}, {pipeline_mode = #tpu.pipeline_mode<synchronous>, transform_indices = @transform_8, window_bounds = array<i64: 8, 128, 32>}, {pipeline_mode = #tpu.pipeline_mode<synchronous>, transform_indices = @transform_9, window_bounds = array<i64: 8, 1, 32>}, {pipeline_mode = #tpu.pipeline_mode<synchronous>, transform_indices = @transform_10, window_bounds = array<i64: 4, 32, 128>}, {pipeline_mode = #tpu.pipeline_mode<synchronous>, transform_indices = @transform_11, window_bounds = array<i64: 1, 128>}, {pipeline_mode = #tpu.pipeline_mode<synchronous>, transform_indices = @transform_12, window_bounds = array<i64: 128, 256>}, {pipeline_mode = #tpu.pipeline_mode<synchronous>, transform_indices = @transform_13, window_bounds = array<i64: 1, 256>}, {pipeline_mode = #tpu.pipeline_mode<synchronous>, transform_indices = @transform_14, window_bounds = array<i64: 256, 128>}, {pipeline_mode = #tpu.pipeline_mode<synchronous>, transform_indices = @transform_15, window_bounds = array<i64: 1, 128>}, {pipeline_mode = #tpu.pipeline_mode<synchronous>, transform_indices = @transform_16, window_bounds = array<i64: 3, 1, 128>}, {pipeline_mode = #tpu.pipeline_mode<synchronous>, transform_indices = @transform_17, window_bounds = array<i64: 3, 1, 128>}, {transform_indices = @transform_18, window_bounds = array<i64: 1, 8, 128>}]} {
    %0 = arith.index_cast %arg0 : i32 to index
    %1 = memref.load %arg1[%0] : memref<2xi32, #tpu.memory_space<smem>>
    %2 = arith.index_cast %arg0 : i32 to index
    %3 = memref.load %arg2[%2] : memref<2xi32, #tpu.memory_space<smem>>
    %c0 = arith.constant 0 : index
    %c0_0 = arith.constant 0 : index
    %c0_1 = arith.constant 0 : index
    %4 = vector.load %arg3[%c0, %c0_0, %c0_1] : memref<1x8x128xf32, #tpu.memory_space<vmem>>, vector<1x8x128xf32>
    %5 = vector.shape_cast %4 : vector<1x8x128xf32> to vector<8x128xf32>
    %c0_2 = arith.constant 0 : index
    %c0_3 = arith.constant 0 : index
    %c0_4 = arith.constant 0 : index
    %6 = vector.load %arg4[%c0_2, %c0_3, %c0_4] : memref<1x8x128xf32, #tpu.memory_space<vmem>>, vector<1x8x128xf32>
    %7 = vector.shape_cast %6 : vector<1x8x128xf32> to vector<8x128xf32>
    %8 = tpu.iota {dimensions = array<i32: 0>} : vector<8x8xi32>
    %9 = tpu.iota {dimensions = array<i32: 1>} : vector<8x8xi32>
    %10 = arith.cmpi sgt, %9, %8 : vector<8x8xi32>
    %11 = vector.broadcast %1 : i32 to vector<8x8xi32>
    %12 = arith.cmpi sge, %9, %11 : vector<8x8xi32>
    %13 = arith.ori %10, %12 : vector<8x8xi1>
    %14 = tpu.iota {dimensions = array<i32: 1>} : vector<8x8xi32>
    %15 = vector.broadcast %3 : i32 to vector<8x8xi32>
    %16 = arith.cmpi sge, %14, %15 : vector<8x8xi32>
    %17 = arith.truncf %5 : vector<8x128xf32> to vector<8x128xbf16>
    %18 = vector.shape_cast %17 : vector<8x128xbf16> to vector<1x8x128xbf16>
    %19 = vector.shape_cast %18 : vector<1x8x128xbf16> to vector<1x8x128xbf16>
    %20 = vector.broadcast %19 : vector<1x8x128xbf16> to vector<12x8x128xbf16>
    %c0_5 = arith.constant 0 : index
    %c0_6 = arith.constant 0 : index
    %c0_7 = arith.constant 0 : index
    %21 = vector.load %arg5[%c0_5, %c0_6, %c0_7] : memref<12x128x32xbf16, #tpu.memory_space<vmem>>, vector<12x128x32xbf16>
    "tpu.trace_start"() <{level = 10 : i32, message = "nsD,nDd->nsd"}> : () -> ()
    %cst = arith.constant dense<0.000000e+00> : vector<12x8x32xf32>
    %22 = tpu.matmul %20, %21, %cst {dimension_numbers = #tpu.dot_dimension_numbers<[2], [1], [1], [2], [0, 0, 0, 1, 1, 2], [0], [0]>} : vector<12x8x128xbf16>, vector<12x128x32xbf16>, vector<12x8x32xf32> -> vector<12x8x32xf32>
    "tpu.trace_stop"() : () -> ()
    %c0_8 = arith.constant 0 : index
    %c0_9 = arith.constant 0 : index
    %c0_10 = arith.constant 0 : index
    %23 = vector.load %arg6[%c0_8, %c0_9, %c0_10] : memref<12x1x32xf32, #tpu.memory_space<vmem>>, vector<12x1x32xf32>
    %24 = vector.broadcast %23 : vector<12x1x32xf32> to vector<12x8x32xf32>
    %25 = arith.addf %22, %24 : vector<12x8x32xf32>
    %26 = vector.extract_strided_slice %25 {offsets = [0, 0, 0], sizes = [4, 8, 32], strides = [1, 1, 1]} : vector<12x8x32xf32> to vector<4x8x32xf32>
    %27 = vector.extract_strided_slice %25 {offsets = [4, 0, 0], sizes = [4, 8, 32], strides = [1, 1, 1]} : vector<12x8x32xf32> to vector<4x8x32xf32>
    %28 = vector.extract_strided_slice %25 {offsets = [8, 0, 0], sizes = [4, 8, 32], strides = [1, 1, 1]} : vector<12x8x32xf32> to vector<4x8x32xf32>
    %29 = arith.truncf %26 : vector<4x8x32xf32> to vector<4x8x32xbf16>
    %30 = arith.truncf %27 : vector<4x8x32xf32> to vector<4x8x32xbf16>
    "tpu.trace_start"() <{level = 10 : i32, message = "hqd,hkd->hqk"}> : () -> ()
    %cst_11 = arith.constant dense<0.000000e+00> : vector<4x8x8xf32>
    %31 = tpu.matmul %29, %30, %cst_11 {dimension_numbers = #tpu.dot_dimension_numbers<[2], [2], [1], [1], [0, 0, 0, 1, 1, 1], [0], [0]>} : vector<4x8x32xbf16>, vector<4x8x32xbf16>, vector<4x8x8xf32> -> vector<4x8x8xf32>
    "tpu.trace_stop"() : () -> ()
    %cst_12 = arith.constant 0.176776692 : f32
    %32 = vector.broadcast %cst_12 : f32 to vector<4x8x8xf32>
    %33 = arith.mulf %31, %32 : vector<4x8x8xf32>
    %34 = vector.shape_cast %13 : vector<8x8xi1> to vector<1x8x8xi1>
    %cst_13 = arith.constant -1.000000e+10 : f32
    %35 = vector.shape_cast %34 : vector<1x8x8xi1> to vector<1x8x8xi1>
    %36 = vector.broadcast %35 : vector<1x8x8xi1> to vector<4x8x8xi1>
    %37 = vector.broadcast %cst_13 : f32 to vector<4x8x8xf32>
    %38 = arith.select %36, %37, %33 : vector<4x8x8xi1>, vector<4x8x8xf32>
    %cst_14 = arith.constant dense<0xFF800000> : vector<4x8xf32>
    %39 = vector.multi_reduction <maximumf>, %38, %cst_14 [2] : vector<4x8x8xf32> to vector<4x8xf32>
    %40 = vector.shape_cast %39 : vector<4x8xf32> to vector<4x8x1xf32>
    %41 = vector.broadcast %40 : vector<4x8x1xf32> to vector<4x8x8xf32>
    %42 = arith.subf %38, %41 : vector<4x8x8xf32>
    %43 = math.exp %42 : vector<4x8x8xf32>
    %cst_15 = arith.constant dense<0.000000e+00> : vector<4x8xf32>
    %44 = vector.multi_reduction <add>, %43, %cst_15 [2] : vector<4x8x8xf32> to vector<4x8xf32>
    %45 = vector.shape_cast %44 : vector<4x8xf32> to vector<4x8x1xf32>
    %46 = arith.truncf %43 : vector<4x8x8xf32> to vector<4x8x8xbf16>
    %47 = arith.truncf %28 : vector<4x8x32xf32> to vector<4x8x32xbf16>
    "tpu.trace_start"() <{level = 10 : i32, message = "hqk,hkd->hqd"}> : () -> ()
    %cst_16 = arith.constant dense<0.000000e+00> : vector<4x8x32xf32>
    %48 = tpu.matmul %46, %47, %cst_16 {dimension_numbers = #tpu.dot_dimension_numbers<[2], [1], [1], [2], [0, 0, 0, 1, 1, 2], [0], [0]>} : vector<4x8x8xbf16>, vector<4x8x32xbf16>, vector<4x8x32xf32> -> vector<4x8x32xf32>
    "tpu.trace_stop"() : () -> ()
    %49 = tpu.reciprocal %45 {approx = true} : vector<4x8x1xf32> -> vector<4x8x1xf32>
    %50 = vector.broadcast %49 : vector<4x8x1xf32> to vector<4x8x32xf32>
    %51 = arith.mulf %48, %50 : vector<4x8x32xf32>
    %52 = arith.truncf %51 : vector<4x8x32xf32> to vector<4x8x32xbf16>
    %c0_17 = arith.constant 0 : index
    %c0_18 = arith.constant 0 : index
    %c0_19 = arith.constant 0 : index
    %53 = vector.load %arg7[%c0_17, %c0_18, %c0_19] : memref<4x32x128xbf16, #tpu.memory_space<vmem>>, vector<4x32x128xbf16>
    "tpu.trace_start"() <{level = 10 : i32, message = "hqd,hdD->hqD"}> : () -> ()
    %cst_20 = arith.constant dense<0.000000e+00> : vector<4x8x128xf32>
    %54 = tpu.matmul %52, %53, %cst_20 {dimension_numbers = #tpu.dot_dimension_numbers<[2], [1], [1], [2], [0, 0, 0, 1, 1, 2], [0], [0]>} : vector<4x8x32xbf16>, vector<4x32x128xbf16>, vector<4x8x128xf32> -> vector<4x8x128xf32>
    "tpu.trace_stop"() : () -> ()
    %cst_21 = arith.constant dense<0.000000e+00> : vector<8x128xf32>
    %55 = vector.multi_reduction <add>, %54, %cst_21 [0] : vector<4x8x128xf32> to vector<8x128xf32>
    %c0_22 = arith.constant 0 : index
    %c0_23 = arith.constant 0 : index
    %56 = vector.load %arg8[%c0_22, %c0_23] : memref<1x128xf32, #tpu.memory_space<vmem>>, vector<1x128xf32>
    %57 = vector.broadcast %56 : vector<1x128xf32> to vector<8x128xf32>
    %58 = arith.addf %55, %57 : vector<8x128xf32>
    %59 = arith.addf %5, %58 : vector<8x128xf32>
    %c0_24 = arith.constant 0 : index
    %c0_25 = arith.constant 0 : index
    %c0_26 = arith.constant 0 : index
    %60 = vector.load %arg19[%c0_24, %c0_25, %c0_26] : memref<3x1x128xf32, #tpu.memory_space<vmem>>, vector<1x1x128xf32>
    %61 = vector.shape_cast %60 : vector<1x1x128xf32> to vector<1x128xf32>
    %c0_27 = arith.constant 0 : index
    %c0_28 = arith.constant 0 : index
    %c0_29 = arith.constant 0 : index
    %62 = vector.load %arg20[%c0_27, %c0_28, %c0_29] : memref<3x1x128xf32, #tpu.memory_space<vmem>>, vector<1x1x128xf32>
    %63 = vector.shape_cast %62 : vector<1x1x128xf32> to vector<1x128xf32>
    %cst_30 = arith.constant dense<0.000000e+00> : vector<8xf32>
    %64 = vector.multi_reduction <add>, %59, %cst_30 [1] : vector<8x128xf32> to vector<8xf32>
    %65 = vector.shape_cast %64 : vector<8xf32> to vector<8x1xf32>
    %cst_31 = arith.constant 1.280000e+02 : f32
    %66 = vector.broadcast %cst_31 : f32 to vector<8x1xf32>
    %67 = arith.divf %65, %66 : vector<8x1xf32>
    %68 = vector.broadcast %67 : vector<8x1xf32> to vector<8x128xf32>
    %69 = arith.subf %59, %68 : vector<8x128xf32>
    %70 = arith.mulf %69, %69 : vector<8x128xf32>
    %cst_32 = arith.constant dense<0.000000e+00> : vector<8xf32>
    %71 = vector.multi_reduction <add>, %70, %cst_32 [1] : vector<8x128xf32> to vector<8xf32>
    %72 = vector.shape_cast %71 : vector<8xf32> to vector<8x1xf32>
    %cst_33 = arith.constant 1.280000e+02 : f32
    %73 = vector.broadcast %cst_33 : f32 to vector<8x1xf32>
    %74 = arith.divf %72, %73 : vector<8x1xf32>
    %cst_34 = arith.constant 9.99999974E-6 : f32
    %75 = vector.broadcast %cst_34 : f32 to vector<8x1xf32>
    %76 = arith.addf %74, %75 : vector<8x1xf32>
    %77 = math.rsqrt %76 : vector<8x1xf32>
    %78 = vector.broadcast %77 : vector<8x1xf32> to vector<8x128xf32>
    %79 = arith.mulf %69, %78 : vector<8x128xf32>
    %80 = vector.broadcast %61 : vector<1x128xf32> to vector<8x128xf32>
    %81 = arith.mulf %79, %80 : vector<8x128xf32>
    %82 = vector.broadcast %63 : vector<1x128xf32> to vector<8x128xf32>
    %83 = arith.addf %81, %82 : vector<8x128xf32>
    %84 = arith.truncf %83 : vector<8x128xf32> to vector<8x128xbf16>
    %85 = vector.shape_cast %84 : vector<8x128xbf16> to vector<1x8x128xbf16>
    %86 = vector.shape_cast %85 : vector<1x8x128xbf16> to vector<1x8x128xbf16>
    %87 = vector.broadcast %86 : vector<1x8x128xbf16> to vector<4x8x128xbf16>
    %c0_35 = arith.constant 0 : index
    %c0_36 = arith.constant 0 : index
    %c0_37 = arith.constant 0 : index
    %88 = vector.load %arg9[%c0_35, %c0_36, %c0_37] : memref<4x128x32xbf16, #tpu.memory_space<vmem>>, vector<4x128x32xbf16>
    "tpu.trace_start"() <{level = 10 : i32, message = "nsD,nDd->nsd"}> : () -> ()
    %cst_38 = arith.constant dense<0.000000e+00> : vector<4x8x32xf32>
    %89 = tpu.matmul %87, %88, %cst_38 {dimension_numbers = #tpu.dot_dimension_numbers<[2], [1], [1], [2], [0, 0, 0, 1, 1, 2], [0], [0]>} : vector<4x8x128xbf16>, vector<4x128x32xbf16>, vector<4x8x32xf32> -> vector<4x8x32xf32>
    "tpu.trace_stop"() : () -> ()
    %c0_39 = arith.constant 0 : index
    %c0_40 = arith.constant 0 : index
    %c0_41 = arith.constant 0 : index
    %90 = vector.load %arg10[%c0_39, %c0_40, %c0_41] : memref<4x1x32xf32, #tpu.memory_space<vmem>>, vector<4x1x32xf32>
    %91 = vector.broadcast %90 : vector<4x1x32xf32> to vector<4x8x32xf32>
    %92 = arith.addf %89, %91 : vector<4x8x32xf32>
    %93 = arith.truncf %7 : vector<8x128xf32> to vector<8x128xbf16>
    %94 = vector.shape_cast %93 : vector<8x128xbf16> to vector<1x8x128xbf16>
    %95 = vector.shape_cast %94 : vector<1x8x128xbf16> to vector<1x8x128xbf16>
    %96 = vector.broadcast %95 : vector<1x8x128xbf16> to vector<8x8x128xbf16>
    %c0_42 = arith.constant 0 : index
    %c0_43 = arith.constant 0 : index
    %c0_44 = arith.constant 0 : index
    %97 = vector.load %arg11[%c0_42, %c0_43, %c0_44] : memref<8x128x32xbf16, #tpu.memory_space<vmem>>, vector<8x128x32xbf16>
    "tpu.trace_start"() <{level = 10 : i32, message = "nsD,nDd->nsd"}> : () -> ()
    %cst_45 = arith.constant dense<0.000000e+00> : vector<8x8x32xf32>
    %98 = tpu.matmul %96, %97, %cst_45 {dimension_numbers = #tpu.dot_dimension_numbers<[2], [1], [1], [2], [0, 0, 0, 1, 1, 2], [0], [0]>} : vector<8x8x128xbf16>, vector<8x128x32xbf16>, vector<8x8x32xf32> -> vector<8x8x32xf32>
    "tpu.trace_stop"() : () -> ()
    %c0_46 = arith.constant 0 : index
    %c0_47 = arith.constant 0 : index
    %c0_48 = arith.constant 0 : index
    %99 = vector.load %arg12[%c0_46, %c0_47, %c0_48] : memref<8x1x32xf32, #tpu.memory_space<vmem>>, vector<8x1x32xf32>
    %100 = vector.broadcast %99 : vector<8x1x32xf32> to vector<8x8x32xf32>
    %101 = arith.addf %98, %100 : vector<8x8x32xf32>
    %102 = vector.extract_strided_slice %101 {offsets = [0, 0, 0], sizes = [4, 8, 32], strides = [1, 1, 1]} : vector<8x8x32xf32> to vector<4x8x32xf32>
    %103 = vector.extract_strided_slice %101 {offsets = [4, 0, 0], sizes = [4, 8, 32], strides = [1, 1, 1]} : vector<8x8x32xf32> to vector<4x8x32xf32>
    %104 = arith.truncf %92 : vector<4x8x32xf32> to vector<4x8x32xbf16>
    %105 = arith.truncf %102 : vector<4x8x32xf32> to vector<4x8x32xbf16>
    "tpu.trace_start"() <{level = 10 : i32, message = "hqd,hkd->hqk"}> : () -> ()
    %cst_49 = arith.constant dense<0.000000e+00> : vector<4x8x8xf32>
    %106 = tpu.matmul %104, %105, %cst_49 {dimension_numbers = #tpu.dot_dimension_numbers<[2], [2], [1], [1], [0, 0, 0, 1, 1, 1], [0], [0]>} : vector<4x8x32xbf16>, vector<4x8x32xbf16>, vector<4x8x8xf32> -> vector<4x8x8xf32>
    "tpu.trace_stop"() : () -> ()
    %cst_50 = arith.constant 0.176776692 : f32
    %107 = vector.broadcast %cst_50 : f32 to vector<4x8x8xf32>
    %108 = arith.mulf %106, %107 : vector<4x8x8xf32>
    %109 = vector.shape_cast %16 : vector<8x8xi1> to vector<1x8x8xi1>
    %cst_51 = arith.constant -1.000000e+10 : f32
    %110 = vector.shape_cast %109 : vector<1x8x8xi1> to vector<1x8x8xi1>
    %111 = vector.broadcast %110 : vector<1x8x8xi1> to vector<4x8x8xi1>
    %112 = vector.broadcast %cst_51 : f32 to vector<4x8x8xf32>
    %113 = arith.select %111, %112, %108 : vector<4x8x8xi1>, vector<4x8x8xf32>
    %cst_52 = arith.constant dense<0xFF800000> : vector<4x8xf32>
    %114 = vector.multi_reduction <maximumf>, %113, %cst_52 [2] : vector<4x8x8xf32> to vector<4x8xf32>
    %115 = vector.shape_cast %114 : vector<4x8xf32> to vector<4x8x1xf32>
    %116 = vector.broadcast %115 : vector<4x8x1xf32> to vector<4x8x8xf32>
    %117 = arith.subf %113, %116 : vector<4x8x8xf32>
    %118 = math.exp %117 : vector<4x8x8xf32>
    %cst_53 = arith.constant dense<0.000000e+00> : vector<4x8xf32>
    %119 = vector.multi_reduction <add>, %118, %cst_53 [2] : vector<4x8x8xf32> to vector<4x8xf32>
    %120 = vector.shape_cast %119 : vector<4x8xf32> to vector<4x8x1xf32>
    %121 = arith.truncf %118 : vector<4x8x8xf32> to vector<4x8x8xbf16>
    %122 = arith.truncf %103 : vector<4x8x32xf32> to vector<4x8x32xbf16>
    "tpu.trace_start"() <{level = 10 : i32, message = "hqk,hkd->hqd"}> : () -> ()
    %cst_54 = arith.constant dense<0.000000e+00> : vector<4x8x32xf32>
    %123 = tpu.matmul %121, %122, %cst_54 {dimension_numbers = #tpu.dot_dimension_numbers<[2], [1], [1], [2], [0, 0, 0, 1, 1, 2], [0], [0]>} : vector<4x8x8xbf16>, vector<4x8x32xbf16>, vector<4x8x32xf32> -> vector<4x8x32xf32>
    "tpu.trace_stop"() : () -> ()
    %124 = tpu.reciprocal %120 {approx = true} : vector<4x8x1xf32> -> vector<4x8x1xf32>
    %125 = vector.broadcast %124 : vector<4x8x1xf32> to vector<4x8x32xf32>
    %126 = arith.mulf %123, %125 : vector<4x8x32xf32>
    %127 = arith.truncf %126 : vector<4x8x32xf32> to vector<4x8x32xbf16>
    %c0_55 = arith.constant 0 : index
    %c0_56 = arith.constant 0 : index
    %c0_57 = arith.constant 0 : index
    %128 = vector.load %arg13[%c0_55, %c0_56, %c0_57] : memref<4x32x128xbf16, #tpu.memory_space<vmem>>, vector<4x32x128xbf16>
    "tpu.trace_start"() <{level = 10 : i32, message = "hqd,hdD->hqD"}> : () -> ()
    %cst_58 = arith.constant dense<0.000000e+00> : vector<4x8x128xf32>
    %129 = tpu.matmul %127, %128, %cst_58 {dimension_numbers = #tpu.dot_dimension_numbers<[2], [1], [1], [2], [0, 0, 0, 1, 1, 2], [0], [0]>} : vector<4x8x32xbf16>, vector<4x32x128xbf16>, vector<4x8x128xf32> -> vector<4x8x128xf32>
    "tpu.trace_stop"() : () -> ()
    %cst_59 = arith.constant dense<0.000000e+00> : vector<8x128xf32>
    %130 = vector.multi_reduction <add>, %129, %cst_59 [0] : vector<4x8x128xf32> to vector<8x128xf32>
    %c0_60 = arith.constant 0 : index
    %c0_61 = arith.constant 0 : index
    %131 = vector.load %arg14[%c0_60, %c0_61] : memref<1x128xf32, #tpu.memory_space<vmem>>, vector<1x128xf32>
    %132 = vector.broadcast %131 : vector<1x128xf32> to vector<8x128xf32>
    %133 = arith.addf %130, %132 : vector<8x128xf32>
    %134 = arith.addf %83, %133 : vector<8x128xf32>
    %c1 = arith.constant 1 : index
    %c0_62 = arith.constant 0 : index
    %c0_63 = arith.constant 0 : index
    %135 = vector.load %arg19[%c1, %c0_62, %c0_63] : memref<3x1x128xf32, #tpu.memory_space<vmem>>, vector<1x1x128xf32>
    %136 = vector.shape_cast %135 : vector<1x1x128xf32> to vector<1x128xf32>
    %c1_64 = arith.constant 1 : index
    %c0_65 = arith.constant 0 : index
    %c0_66 = arith.constant 0 : index
    %137 = vector.load %arg20[%c1_64, %c0_65, %c0_66] : memref<3x1x128xf32, #tpu.memory_space<vmem>>, vector<1x1x128xf32>
    %138 = vector.shape_cast %137 : vector<1x1x128xf32> to vector<1x128xf32>
    %cst_67 = arith.constant dense<0.000000e+00> : vector<8xf32>
    %139 = vector.multi_reduction <add>, %134, %cst_67 [1] : vector<8x128xf32> to vector<8xf32>
    %140 = vector.shape_cast %139 : vector<8xf32> to vector<8x1xf32>
    %cst_68 = arith.constant 1.280000e+02 : f32
    %141 = vector.broadcast %cst_68 : f32 to vector<8x1xf32>
    %142 = arith.divf %140, %141 : vector<8x1xf32>
    %143 = vector.broadcast %142 : vector<8x1xf32> to vector<8x128xf32>
    %144 = arith.subf %134, %143 : vector<8x128xf32>
    %145 = arith.mulf %144, %144 : vector<8x128xf32>
    %cst_69 = arith.constant dense<0.000000e+00> : vector<8xf32>
    %146 = vector.multi_reduction <add>, %145, %cst_69 [1] : vector<8x128xf32> to vector<8xf32>
    %147 = vector.shape_cast %146 : vector<8xf32> to vector<8x1xf32>
    %cst_70 = arith.constant 1.280000e+02 : f32
    %148 = vector.broadcast %cst_70 : f32 to vector<8x1xf32>
    %149 = arith.divf %147, %148 : vector<8x1xf32>
    %cst_71 = arith.constant 9.99999974E-6 : f32
    %150 = vector.broadcast %cst_71 : f32 to vector<8x1xf32>
    %151 = arith.addf %149, %150 : vector<8x1xf32>
    %152 = math.rsqrt %151 : vector<8x1xf32>
    %153 = vector.broadcast %152 : vector<8x1xf32> to vector<8x128xf32>
    %154 = arith.mulf %144, %153 : vector<8x128xf32>
    %155 = vector.broadcast %136 : vector<1x128xf32> to vector<8x128xf32>
    %156 = arith.mulf %154, %155 : vector<8x128xf32>
    %157 = vector.broadcast %138 : vector<1x128xf32> to vector<8x128xf32>
    %158 = arith.addf %156, %157 : vector<8x128xf32>
    %159 = arith.truncf %158 : vector<8x128xf32> to vector<8x128xbf16>
    %c0_72 = arith.constant 0 : index
    %c0_73 = arith.constant 0 : index
    %160 = vector.load %arg15[%c0_72, %c0_73] : memref<128x256xbf16, #tpu.memory_space<vmem>>, vector<128x256xbf16>
    %cst_74 = arith.constant dense<0.000000e+00> : vector<8x256xf32>
    %161 = tpu.matmul %159, %160, %cst_74 {dimension_numbers = #tpu.dot_dimension_numbers<[1], [0], [0], [1], [0, 0, 1, 1], [], []>} : vector<8x128xbf16>, vector<128x256xbf16>, vector<8x256xf32> -> vector<8x256xf32>
    %c0_75 = arith.constant 0 : index
    %c0_76 = arith.constant 0 : index
    %162 = vector.load %arg16[%c0_75, %c0_76] : memref<1x256xf32, #tpu.memory_space<vmem>>, vector<1x256xf32>
    %163 = vector.broadcast %162 : vector<1x256xf32> to vector<8x256xf32>
    %164 = arith.addf %161, %163 : vector<8x256xf32>
    %cst_77 = arith.constant 0.000000e+00 : f32
    %165 = vector.broadcast %cst_77 : f32 to vector<8x256xf32>
    %166 = arith.maximumf %164, %165 : vector<8x256xf32>
    %167 = arith.truncf %166 : vector<8x256xf32> to vector<8x256xbf16>
    %c0_78 = arith.constant 0 : index
    %c0_79 = arith.constant 0 : index
    %168 = vector.load %arg17[%c0_78, %c0_79] : memref<256x128xbf16, #tpu.memory_space<vmem>>, vector<256x128xbf16>
    %cst_80 = arith.constant dense<0.000000e+00> : vector<8x128xf32>
    %169 = tpu.matmul %167, %168, %cst_80 {dimension_numbers = #tpu.dot_dimension_numbers<[1], [0], [0], [1], [0, 0, 1, 1], [], []>} : vector<8x256xbf16>, vector<256x128xbf16>, vector<8x128xf32> -> vector<8x128xf32>
    %c0_81 = arith.constant 0 : index
    %c0_82 = arith.constant 0 : index
    %170 = vector.load %arg18[%c0_81, %c0_82] : memref<1x128xf32, #tpu.memory_space<vmem>>, vector<1x128xf32>
    %171 = vector.broadcast %170 : vector<1x128xf32> to vector<8x128xf32>
    %172 = arith.addf %169, %171 : vector<8x128xf32>
    %173 = arith.addf %158, %172 : vector<8x128xf32>
    %c2 = arith.constant 2 : index
    %c0_83 = arith.constant 0 : index
    %c0_84 = arith.constant 0 : index
    %174 = vector.load %arg19[%c2, %c0_83, %c0_84] : memref<3x1x128xf32, #tpu.memory_space<vmem>>, vector<1x1x128xf32>
    %175 = vector.shape_cast %174 : vector<1x1x128xf32> to vector<1x128xf32>
    %c2_85 = arith.constant 2 : index
    %c0_86 = arith.constant 0 : index
    %c0_87 = arith.constant 0 : index
    %176 = vector.load %arg20[%c2_85, %c0_86, %c0_87] : memref<3x1x128xf32, #tpu.memory_space<vmem>>, vector<1x1x128xf32>
    %177 = vector.shape_cast %176 : vector<1x1x128xf32> to vector<1x128xf32>
    %cst_88 = arith.constant dense<0.000000e+00> : vector<8xf32>
    %178 = vector.multi_reduction <add>, %173, %cst_88 [1] : vector<8x128xf32> to vector<8xf32>
    %179 = vector.shape_cast %178 : vector<8xf32> to vector<8x1xf32>
    %cst_89 = arith.constant 1.280000e+02 : f32
    %180 = vector.broadcast %cst_89 : f32 to vector<8x1xf32>
    %181 = arith.divf %179, %180 : vector<8x1xf32>
    %182 = vector.broadcast %181 : vector<8x1xf32> to vector<8x128xf32>
    %183 = arith.subf %173, %182 : vector<8x128xf32>
    %184 = arith.mulf %183, %183 : vector<8x128xf32>
    %cst_90 = arith.constant dense<0.000000e+00> : vector<8xf32>
    %185 = vector.multi_reduction <add>, %184, %cst_90 [1] : vector<8x128xf32> to vector<8xf32>
    %186 = vector.shape_cast %185 : vector<8xf32> to vector<8x1xf32>
    %cst_91 = arith.constant 1.280000e+02 : f32
    %187 = vector.broadcast %cst_91 : f32 to vector<8x1xf32>
    %188 = arith.divf %186, %187 : vector<8x1xf32>
    %cst_92 = arith.constant 9.99999974E-6 : f32
    %189 = vector.broadcast %cst_92 : f32 to vector<8x1xf32>
    %190 = arith.addf %188, %189 : vector<8x1xf32>
    %191 = math.rsqrt %190 : vector<8x1xf32>
    %192 = vector.broadcast %191 : vector<8x1xf32> to vector<8x128xf32>
    %193 = arith.mulf %183, %192 : vector<8x128xf32>
    %194 = vector.broadcast %175 : vector<1x128xf32> to vector<8x128xf32>
    %195 = arith.mulf %193, %194 : vector<8x128xf32>
    %196 = vector.broadcast %177 : vector<1x128xf32> to vector<8x128xf32>
    %197 = arith.addf %195, %196 : vector<8x128xf32>
    %c0_93 = arith.constant 0 : index
    %c0_94 = arith.constant 0 : index
    %c0_95 = arith.constant 0 : index
    %198 = vector.load %arg21[%c0_93, %c0_94, %c0_95] : memref<1x8x128xf32, #tpu.memory_space<vmem>>, vector<1x8x128xf32>
    %199 = vector.shape_cast %198 : vector<1x8x128xf32> to vector<8x128xf32>
    %200 = vector.shape_cast %197 : vector<8x128xf32> to vector<1x8x128xf32>
    tpu.vector_store %arg21[%c0_93, %c0_94, %c0_95], %200 {strides = array<i32>} : memref<1x8x128xf32, #tpu.memory_space<vmem>>, vector<1x8x128xf32>,
    return
  }
  func.func @transform_0(%arg0: i32, %arg1: memref<2xi32, #tpu.memory_space<smem>>, %arg2: memref<2xi32, #tpu.memory_space<smem>>) -> (i32, i32, i32) {
    %c0_i32 = arith.constant 0 : i32
    %c0_i32_0 = arith.constant 0 : i32
    %c0_i32_1 = arith.constant 0 : i32
    return %arg0, %c0_i32, %c0_i32_0 : i32, i32, i32
  }
  func.func @transform_1(%arg0: i32, %arg1: memref<2xi32, #tpu.memory_space<smem>>, %arg2: memref<2xi32, #tpu.memory_space<smem>>) -> (i32, i32, i32) {
    %c0_i32 = arith.constant 0 : i32
    %c0_i32_0 = arith.constant 0 : i32
    %c0_i32_1 = arith.constant 0 : i32
    return %arg0, %c0_i32, %c0_i32_0 : i32, i32, i32
  }
  func.func @transform_2(%arg0: i32, %arg1: memref<2xi32, #tpu.memory_space<smem>>, %arg2: memref<2xi32, #tpu.memory_space<smem>>) -> (i32, i32, i32) {
    %c0_i32 = arith.constant 0 : i32
    %c0_i32_0 = arith.constant 0 : i32
    %c0_i32_1 = arith.constant 0 : i32
    %c0_i32_2 = arith.constant 0 : i32
    return %c0_i32, %c0_i32_0, %c0_i32_1 : i32, i32, i32
  }
  func.func @transform_3(%arg0: i32, %arg1: memref<2xi32, #tpu.memory_space<smem>>, %arg2: memref<2xi32, #tpu.memory_space<smem>>) -> (i32, i32, i32) {
    %c0_i32 = arith.constant 0 : i32
    %c0_i32_0 = arith.constant 0 : i32
    %c0_i32_1 = arith.constant 0 : i32
    %c0_i32_2 = arith.constant 0 : i32
    return %c0_i32, %c0_i32_0, %c0_i32_1 : i32, i32, i32
  }
  func.func @transform_4(%arg0: i32, %arg1: memref<2xi32, #tpu.memory_space<smem>>, %arg2: memref<2xi32, #tpu.memory_space<smem>>) -> (i32, i32, i32) {
    %c0_i32 = arith.constant 0 : i32
    %c0_i32_0 = arith.constant 0 : i32
    %c0_i32_1 = arith.constant 0 : i32
    %c0_i32_2 = arith.constant 0 : i32
    return %c0_i32, %c0_i32_0, %c0_i32_1 : i32, i32, i32
  }
  func.func @transform_5(%arg0: i32, %arg1: memref<2xi32, #tpu.memory_space<smem>>, %arg2: memref<2xi32, #tpu.memory_space<smem>>) -> (i32, i32) {
    %c0_i32 = arith.constant 0 : i32
    %c0_i32_0 = arith.constant 0 : i32
    %c0_i32_1 = arith.constant 0 : i32
    return %c0_i32, %c0_i32_0 : i32, i32
  }
  func.func @transform_6(%arg0: i32, %arg1: memref<2xi32, #tpu.memory_space<smem>>, %arg2: memref<2xi32, #tpu.memory_space<smem>>) -> (i32, i32, i32) {
    %c0_i32 = arith.constant 0 : i32
    %c0_i32_0 = arith.constant 0 : i32
    %c0_i32_1 = arith.constant 0 : i32
    %c0_i32_2 = arith.constant 0 : i32
    return %c0_i32, %c0_i32_0, %c0_i32_1 : i32, i32, i32
  }
  func.func @transform_7(%arg0: i32, %arg1: memref<2xi32, #tpu.memory_space<smem>>, %arg2: memref<2xi32, #tpu.memory_space<smem>>) -> (i32, i32, i32) {
    %c0_i32 = arith.constant 0 : i32
    %c0_i32_0 = arith.constant 0 : i32
    %c0_i32_1 = arith.constant 0 : i32
    %c0_i32_2 = arith.constant 0 : i32
    return %c0_i32, %c0_i32_0, %c0_i32_1 : i32, i32, i32
  }
  func.func @transform_8(%arg0: i32, %arg1: memref<2xi32, #tpu.memory_space<smem>>, %arg2: memref<2xi32, #tpu.memory_space<smem>>) -> (i32, i32, i32) {
    %c0_i32 = arith.constant 0 : i32
    %c0_i32_0 = arith.constant 0 : i32
    %c0_i32_1 = arith.constant 0 : i32
    %c0_i32_2 = arith.constant 0 : i32
    return %c0_i32, %c0_i32_0, %c0_i32_1 : i32, i32, i32
  }
  func.func @transform_9(%arg0: i32, %arg1: memref<2xi32, #tpu.memory_space<smem>>, %arg2: memref<2xi32, #tpu.memory_space<smem>>) -> (i32, i32, i32) {
    %c0_i32 = arith.constant 0 : i32
    %c0_i32_0 = arith.constant 0 : i32
    %c0_i32_1 = arith.constant 0 : i32
    %c0_i32_2 = arith.constant 0 : i32
    return %c0_i32, %c0_i32_0, %c0_i32_1 : i32, i32, i32
  }
  func.func @transform_10(%arg0: i32, %arg1: memref<2xi32, #tpu.memory_space<smem>>, %arg2: memref<2xi32, #tpu.memory_space<smem>>) -> (i32, i32, i32) {
    %c0_i32 = arith.constant 0 : i32
    %c0_i32_0 = arith.constant 0 : i32
    %c0_i32_1 = arith.constant 0 : i32
    %c0_i32_2 = arith.constant 0 : i32
    return %c0_i32, %c0_i32_0, %c0_i32_1 : i32, i32, i32
  }
  func.func @transform_11(%arg0: i32, %arg1: memref<2xi32, #tpu.memory_space<smem>>, %arg2: memref<2xi32, #tpu.memory_space<smem>>) -> (i32, i32) {
    %c0_i32 = arith.constant 0 : i32
    %c0_i32_0 = arith.constant 0 : i32
    %c0_i32_1 = arith.constant 0 : i32
    return %c0_i32, %c0_i32_0 : i32, i32
  }
  func.func @transform_12(%arg0: i32, %arg1: memref<2xi32, #tpu.memory_space<smem>>, %arg2: memref<2xi32, #tpu.memory_space<smem>>) -> (i32, i32) {
    %c0_i32 = arith.constant 0 : i32
    %c0_i32_0 = arith.constant 0 : i32
    %c0_i32_1 = arith.constant 0 : i32
    return %c0_i32, %c0_i32_0 : i32, i32
  }
  func.func @transform_13(%arg0: i32, %arg1: memref<2xi32, #tpu.memory_space<smem>>, %arg2: memref<2xi32, #tpu.memory_space<smem>>) -> (i32, i32) {
    %c0_i32 = arith.constant 0 : i32
    %c0_i32_0 = arith.constant 0 : i32
    %c0_i32_1 = arith.constant 0 : i32
    return %c0_i32, %c0_i32_0 : i32, i32
  }
  func.func @transform_14(%arg0: i32, %arg1: memref<2xi32, #tpu.memory_space<smem>>, %arg2: memref<2xi32, #tpu.memory_space<smem>>) -> (i32, i32) {
    %c0_i32 = arith.constant 0 : i32
    %c0_i32_0 = arith.constant 0 : i32
    %c0_i32_1 = arith.constant 0 : i32
    return %c0_i32, %c0_i32_0 : i32, i32
  }
  func.func @transform_15(%arg0: i32, %arg1: memref<2xi32, #tpu.memory_space<smem>>, %arg2: memref<2xi32, #tpu.memory_space<smem>>) -> (i32, i32) {
    %c0_i32 = arith.constant 0 : i32
    %c0_i32_0 = arith.constant 0 : i32
    %c0_i32_1 = arith.constant 0 : i32
    return %c0_i32, %c0_i32_0 : i32, i32
  }
  func.func @transform_16(%arg0: i32, %arg1: memref<2xi32, #tpu.memory_space<smem>>, %arg2: memref<2xi32, #tpu.memory_space<smem>>) -> (i32, i32, i32) {
    %c0_i32 = arith.constant 0 : i32
    %c0_i32_0 = arith.constant 0 : i32
    %c0_i32_1 = arith.constant 0 : i32
    %c0_i32_2 = arith.constant 0 : i32
    return %c0_i32, %c0_i32_0, %c0_i32_1 : i32, i32, i32
  }
  func.func @transform_17(%arg0: i32, %arg1: memref<2xi32, #tpu.memory_space<smem>>, %arg2: memref<2xi32, #tpu.memory_space<smem>>) -> (i32, i32, i32) {
    %c0_i32 = arith.constant 0 : i32
    %c0_i32_0 = arith.constant 0 : i32
    %c0_i32_1 = arith.constant 0 : i32
    %c0_i32_2 = arith.constant 0 : i32
    return %c0_i32, %c0_i32_0, %c0_i32_1 : i32, i32, i32
  }
  func.func @transform_18(%arg0: i32, %arg1: memref<2xi32, #tpu.memory_space<smem>>, %arg2: memref<2xi32, #tpu.memory_space<smem>>) -> (i32, i32, i32) {
    %c0_i32 = arith.constant 0 : i32
    %c0_i32_0 = arith.constant 0 : i32
    %c0_i32_1 = arith.constant 0 : i32
    return %arg0, %c0_i32, %c0_i32_0 : i32, i32, i32
  }
}

</mosaic_0001>

<llo_original>
// kernel: tpu_custom_call.1
$region0: #{tpu_custom_call.1}
  #allocation0 [shape = 'u32[]', space=smem, size = 0x4, offset = 0x4, fixed_abs, tag = 'smem constant byte address 0x4 - core index']
  #allocation1 [shape = 'u32[144,128]{1,0:T(1,128)}', space=vmem, size = 0x12000, scoped, tag = 'internal scratch']
  #allocation2 [shape = 's32[1]{0}', space=sflag, size = 0x4, scoped, tag = 'scoped memory for tpu_custom_call.1']
  #allocation3 [shape = 'u8[512]{0}', space=smem, size = 0x200, scoped, tag = 'prefetched SMEM operand 0']
  #allocation4 [shape = 'u8[512]{0}', space=smem, size = 0x200, scoped, tag = 'prefetched SMEM operand 1']
  %s0 = inlined_call_operand.vmem [shape: s32[2], index: 0, kind: input, shape index: {}]
  %s1 = inlined_call_operand.vmem [shape: s32[2], index: 1, kind: input, shape index: {}]
  %s2 = inlined_call_operand.vmem [shape: f32[2,8,128], index: 2, kind: input, shape index: {}]
  %s3 = inlined_call_operand.vmem [shape: f32[2,8,128], index: 3, kind: input, shape index: {}]
  %s4 = inlined_call_operand.vmem [shape: bf16[12,128,32], index: 4, kind: input, shape index: {}]
  %s5 = inlined_call_operand.vmem [shape: f32[12,1,32], index: 5, kind: input, shape index: {}]
  %s6 = inlined_call_operand.vmem [shape: bf16[4,32,128], index: 6, kind: input, shape index: {}]
  %s7 = inlined_call_operand.vmem [shape: f32[1,128], index: 7, kind: input, shape index: {}]
  %s8 = inlined_call_operand.vmem [shape: bf16[4,128,32], index: 8, kind: input, shape index: {}]
  %s9 = inlined_call_operand.vmem [shape: f32[4,1,32], index: 9, kind: input, shape index: {}]
  %s10 = inlined_call_operand.vmem [shape: bf16[8,128,32], index: 10, kind: input, shape index: {}]
  %s11 = inlined_call_operand.vmem [shape: f32[8,1,32], index: 11, kind: input, shape index: {}]
  %s12 = inlined_call_operand.vmem [shape: bf16[4,32,128], index: 12, kind: input, shape index: {}]
  %s13 = inlined_call_operand.vmem [shape: f32[1,128], index: 13, kind: input, shape index: {}]
  %s14 = inlined_call_operand.vmem [shape: bf16[128,256], index: 14, kind: input, shape index: {}]
  %s15 = inlined_call_operand.vmem [shape: f32[1,256], index: 15, kind: input, shape index: {}]
  %s16 = inlined_call_operand.vmem [shape: bf16[256,128], index: 16, kind: input, shape index: {}]
  %s17 = inlined_call_operand.vmem [shape: f32[1,128], index: 17, kind: input, shape index: {}]
  %s18 = inlined_call_operand.vmem [shape: f32[3,1,128], index: 18, kind: input, shape index: {}]
  %s19 = inlined_call_operand.vmem [shape: f32[3,1,128], index: 19, kind: input, shape index: {}]
  %s20 = inlined_call_operand.hbm [shape: f32[2,8,128], index: 20, kind: output, shape index: {}]
  %s21 = sld [smem:[#allocation0]]
  $region105: #{tpu_custom_call.1} parent=0
    _
  %s23 = ssub.s32 1, %s21
  %s24 = scalar_select 0, %s23, %s21
  %s25 = sshll.u32 %s0, 4
  %s26 = int_to_ptr.vmem [resolvable:$true] %s25
  %28 = dma.vmem_to_smem %s26, 16, [#allocation3], [#allocation2]
  %s29 = sshll.u32 %s1, 4
  %s30 = int_to_ptr.vmem [resolvable:$true] %s29
  %32 = dma.vmem_to_smem %s30, 16, [#allocation4], [#allocation2]
  %33 = dma.done [#allocation2], 32
  %34 = sfence
  $region1: #{tpu_custom_call.1} parent=0
    #allocation5 [shape = 'u8[8192]{0}', space=vmem, size = 0x2000, scoped, tag = 'output window, operand 0']
    #allocation6 [shape = 's32[2]{0}', space=sflag, size = 0x8, scoped, tag = 'scoped memory for tpu_custom_call.1']
    %35 = vsyncpa [#allocation6], 0
    %s36 = scalar_lea.sflag [#allocation6], 1
    %37 = vsyncpa %s36, 0
    loop: start=0, step=1, limit=4
    $region2: #{tpu_custom_call.1} parent=1 // loop_pre_header
      _
    $region3: #{tpu_custom_call.1} parent=1 // loop_header
      %s39 = sphi 0, %s43
      %p40 = scmp.ge.s32.totalorder %s39, 4
      %s49 = sphi 0, %s51
      %s52 = sphi 0, %s49
      %s53 = sphi 0, %s52
      %s69 = sphi 0, %s53
      %s75 = sphi 0, %s77
      %s78 = sphi 0, %s75
      %s79 = sphi 0, %s78
      %s95 = sphi 0, %s79
      %s99 = sphi 0, %s99
      %s101 = sphi 0, %s99
      %s102 = sphi 0, %s101
      %s116 = sphi 0, %s102
      %s120 = sphi 0, %s120
      %s122 = sphi 0, %s120
      %s123 = sphi 0, %s122
      %s137 = sphi 0, %s123
      %s141 = sphi 0, %s141
      %s143 = sphi 0, %s141
      %s144 = sphi 0, %s143
      %s158 = sphi 0, %s144
      %s162 = sphi 0, %s162
      %s164 = sphi 0, %s162
      %s165 = sphi 0, %s164
      %s179 = sphi 0, %s165
      %s183 = sphi 0, %s183
      %s185 = sphi 0, %s183
      %s186 = sphi 0, %s185
      %s200 = sphi 0, %s186
      %s204 = sphi 0, %s204
      %s206 = sphi 0, %s204
      %s207 = sphi 0, %s206
      %s221 = sphi 0, %s207
      %s225 = sphi 0, %s225
      %s227 = sphi 0, %s225
      %s228 = sphi 0, %s227
      %s242 = sphi 0, %s228
      %s246 = sphi 0, %s246
      %s248 = sphi 0, %s246
      %s249 = sphi 0, %s248
      %s263 = sphi 0, %s249
      %s267 = sphi 0, %s267
      %s269 = sphi 0, %s267
      %s270 = sphi 0, %s269
      %s284 = sphi 0, %s270
      %s288 = sphi 0, %s288
      %s290 = sphi 0, %s288
      %s291 = sphi 0, %s290
      %s305 = sphi 0, %s291
      %s309 = sphi 0, %s309
      %s311 = sphi 0, %s309
      %s312 = sphi 0, %s311
      %s326 = sphi 0, %s312
      %s330 = sphi 0, %s330
      %s332 = sphi 0, %s330
      %s333 = sphi 0, %s332
      %s347 = sphi 0, %s333
      %s351 = sphi 0, %s351
      %s353 = sphi 0, %s351
      %s354 = sphi 0, %s353
      %s368 = sphi 0, %s354
      %s372 = sphi 0, %s372
      %s374 = sphi 0, %s372
      %s375 = sphi 0, %s374
      %s389 = sphi 0, %s375
      %s393 = sphi 0, %s393
      %s395 = sphi 0, %s393
      %s396 = sphi 0, %s395
      %s410 = sphi 0, %s396
      %s414 = sphi 0, %s414
      %s416 = sphi 0, %s414
      %s417 = sphi 0, %s416
      %s431 = sphi 0, %s417
      %s437 = sphi 0, %s439
      %s440 = sphi 0, %s437
      %s441 = sphi 0, %s440
      %s457 = sphi 0, %s441
    $region4: #{tpu_custom_call.1} parent=1 // loop_header_branch
      %42 = sbr.rel (%p40) target = $region8
    $region5: #{tpu_custom_call.1} parent=1 // loop_body
      %s44 = ssub.s32 %s39, 1
      %s45 = ssub.s32 %s39, 2
      %s46 = sadd.s32 %s39, 1
      %s47 = ssub.s32 %s39, %s46
      %p48 = scmp.eq.s32.totalorder %s47, 0
      %s50 = sadd.s32 %s49, 1
      %s51 = scalar_select %p48, %s49, %s50
      %p54 = pneg %p48
      %p55 = scmp.eq.s32.totalorder %s39, 1
      %p56 = por %p54, %p55
      %p57 = scmp.ne.s32.totalorder %s49, %s52
      %p58 = scmp.eq.s32.totalorder %s39, 0
      %p59 = por %p57, %p58
      %p60 = scmp.ne.s32.totalorder %s49, %s52
      %p61 = scmp.eq.s32.totalorder %s44, 1
      %p62 = por %p60, %p61
      %p63 = scmp.ne.s32.totalorder %s52, %s53
      %p64 = scmp.eq.s32.totalorder %s44, 0
      %p65 = por %p63, %p64
      %p66 = scmp.ne.s32.totalorder %s52, %s53
      %p67 = scmp.eq.s32.totalorder %s45, 1
      %p68 = por %p66, %p67
      %p70 = scmp.ne.s32.totalorder %s53, %s69
      %p71 = scmp.eq.s32.totalorder %s45, 0
      %p72 = por %p70, %p71
      %s73 = ssub.s32 %s39, %s46
      %p74 = scmp.eq.s32.totalorder %s73, 0
      %s76 = sadd.s32 %s75, 1
      %s77 = scalar_select %p74, %s75, %s76
      %p80 = pneg %p74
      %p81 = scmp.eq.s32.totalorder %s39, 1
      %p82 = por %p80, %p81
      %p83 = scmp.ne.s32.totalorder %s75, %s78
      %p84 = scmp.eq.s32.totalorder %s39, 0
      %p85 = por %p83, %p84
      %p86 = scmp.ne.s32.totalorder %s75, %s78
      %p87 = scmp.eq.s32.totalorder %s44, 1
      %p88 = por %p86, %p87
      %p89 = scmp.ne.s32.totalorder %s78, %s79
      %p90 = scmp.eq.s32.totalorder %s44, 0
      %p91 = por %p89, %p90
      %p92 = scmp.ne.s32.totalorder %s78, %s79
      %p93 = scmp.eq.s32.totalorder %s45, 1
      %p94 = por %p92, %p93
      %p96 = scmp.ne.s32.totalorder %s79, %s95
      %p97 = scmp.eq.s32.totalorder %s45, 0
      %p98 = por %p96, %p97
      %s100 = sadd.s32 %s99, 1
      %p103 = scmp.eq.s32.totalorder %s39, 1
      %p104 = scmp.ne.s32.totalorder %s99, %s101
      %p105 = scmp.eq.s32.totalorder %s39, 0
      %p106 = por %p104, %p105
      %p107 = scmp.ne.s32.totalorder %s99, %s101
      %p108 = scmp.eq.s32.totalorder %s44, 1
      %p109 = por %p107, %p108
      %p110 = scmp.ne.s32.totalorder %s101, %s102
      %p111 = scmp.eq.s32.totalorder %s44, 0
      %p112 = por %p110, %p111
      %p113 = scmp.ne.s32.totalorder %s101, %s102
      %p114 = scmp.eq.s32.totalorder %s45, 1
      %p115 = por %p113, %p114
      %p117 = scmp.ne.s32.totalorder %s102, %s116
      %p118 = scmp.eq.s32.totalorder %s45, 0
      %p119 = por %p117, %p118
      %s121 = sadd.s32 %s120, 1
      %p124 = scmp.eq.s32.totalorder %s39, 1
      %p125 = scmp.ne.s32.totalorder %s120, %s122
      %p126 = scmp.eq.s32.totalorder %s39, 0
      %p127 = por %p125, %p126
      %p128 = scmp.ne.s32.totalorder %s120, %s122
      %p129 = scmp.eq.s32.totalorder %s44, 1
      %p130 = por %p128, %p129
      %p131 = scmp.ne.s32.totalorder %s122, %s123
      %p132 = scmp.eq.s32.totalorder %s44, 0
      %p133 = por %p131, %p132
      %p134 = scmp.ne.s32.totalorder %s122, %s123
      %p135 = scmp.eq.s32.totalorder %s45, 1
      %p136 = por %p134, %p135
      %p138 = scmp.ne.s32.totalorder %s123, %s137
      %p139 = scmp.eq.s32.totalorder %s45, 0
      %p140 = por %p138, %p139
      %s142 = sadd.s32 %s141, 1
      %p145 = scmp.eq.s32.totalorder %s39, 1
      %p146 = scmp.ne.s32.totalorder %s141, %s143
      %p147 = scmp.eq.s32.totalorder %s39, 0
      %p148 = por %p146, %p147
      %p149 = scmp.ne.s32.totalorder %s141, %s143
      %p150 = scmp.eq.s32.totalorder %s44, 1
      %p151 = por %p149, %p150
      %p152 = scmp.ne.s32.totalorder %s143, %s144
      %p153 = scmp.eq.s32.totalorder %s44, 0
      %p154 = por %p152, %p153
      %p155 = scmp.ne.s32.totalorder %s143, %s144
      %p156 = scmp.eq.s32.totalorder %s45, 1
      %p157 = por %p155, %p156
      %p159 = scmp.ne.s32.totalorder %s144, %s158
      %p160 = scmp.eq.s32.totalorder %s45, 0
      %p161 = por %p159, %p160
      %s163 = sadd.s32 %s162, 1
      %p166 = scmp.eq.s32.totalorder %s39, 1
      %p167 = scmp.ne.s32.totalorder %s162, %s164
      %p168 = scmp.eq.s32.totalorder %s39, 0
      %p169 = por %p167, %p168
      %p170 = scmp.ne.s32.totalorder %s162, %s164
      %p171 = scmp.eq.s32.totalorder %s44, 1
      %p172 = por %p170, %p171
      %p173 = scmp.ne.s32.totalorder %s164, %s165
      %p174 = scmp.eq.s32.totalorder %s44, 0
      %p175 = por %p173, %p174
      %p176 = scmp.ne.s32.totalorder %s164, %s165
      %p177 = scmp.eq.s32.totalorder %s45, 1
      %p178 = por %p176, %p177
      %p180 = scmp.ne.s32.totalorder %s165, %s179
      %p181 = scmp.eq.s32.totalorder %s45, 0
      %p182 = por %p180, %p181
      %s184 = sadd.s32 %s183, 1
      %p187 = scmp.eq.s32.totalorder %s39, 1
      %p188 = scmp.ne.s32.totalorder %s183, %s185
      %p189 = scmp.eq.s32.totalorder %s39, 0
      %p190 = por %p188, %p189
      %p191 = scmp.ne.s32.totalorder %s183, %s185
      %p192 = scmp.eq.s32.totalorder %s44, 1
      %p193 = por %p191, %p192
      %p194 = scmp.ne.s32.totalorder %s185, %s186
      %p195 = scmp.eq.s32.totalorder %s44, 0
      %p196 = por %p194, %p195
      %p197 = scmp.ne.s32.totalorder %s185, %s186
      %p198 = scmp.eq.s32.totalorder %s45, 1
      %p199 = por %p197, %p198
      %p201 = scmp.ne.s32.totalorder %s186, %s200
      %p202 = scmp.eq.s32.totalorder %s45, 0
      %p203 = por %p201, %p202
      %s205 = sadd.s32 %s204, 1
      %p208 = scmp.eq.s32.totalorder %s39, 1
      %p209 = scmp.ne.s32.totalorder %s204, %s206
      %p210 = scmp.eq.s32.totalorder %s39, 0
      %p211 = por %p209, %p210
      %p212 = scmp.ne.s32.totalorder %s204, %s206
      %p213 = scmp.eq.s32.totalorder %s44, 1
      %p214 = por %p212, %p213
      %p215 = scmp.ne.s32.totalorder %s206, %s207
      %p216 = scmp.eq.s32.totalorder %s44, 0
      %p217 = por %p215, %p216
      %p218 = scmp.ne.s32.totalorder %s206, %s207
      %p219 = scmp.eq.s32.totalorder %s45, 1
      %p220 = por %p218, %p219
      %p222 = scmp.ne.s32.totalorder %s207, %s221
      %p223 = scmp.eq.s32.totalorder %s45, 0
      %p224 = por %p222, %p223
      %s226 = sadd.s32 %s225, 1
      %p229 = scmp.eq.s32.totalorder %s39, 1
      %p230 = scmp.ne.s32.totalorder %s225, %s227
      %p231 = scmp.eq.s32.totalorder %s39, 0
      %p232 = por %p230, %p231
      %p233 = scmp.ne.s32.totalorder %s225, %s227
      %p234 = scmp.eq.s32.totalorder %s44, 1
      %p235 = por %p233, %p234
      %p236 = scmp.ne.s32.totalorder %s227, %s228
      %p237 = scmp.eq.s32.totalorder %s44, 0
      %p238 = por %p236, %p237
      %p239 = scmp.ne.s32.totalorder %s227, %s228
      %p240 = scmp.eq.s32.totalorder %s45, 1
      %p241 = por %p239, %p240
      %p243 = scmp.ne.s32.totalorder %s228, %s242
      %p244 = scmp.eq.s32.totalorder %s45, 0
      %p245 = por %p243, %p244
      %s247 = sadd.s32 %s246, 1
      %p250 = scmp.eq.s32.totalorder %s39, 1
      %p251 = scmp.ne.s32.totalorder %s246, %s248
      %p252 = scmp.eq.s32.totalorder %s39, 0
      %p253 = por %p251, %p252
      %p254 = scmp.ne.s32.totalorder %s246, %s248
      %p255 = scmp.eq.s32.totalorder %s44, 1
      %p256 = por %p254, %p255
      %p257 = scmp.ne.s32.totalorder %s248, %s249
      %p258 = scmp.eq.s32.totalorder %s44, 0
      %p259 = por %p257, %p258
      %p260 = scmp.ne.s32.totalorder %s248, %s249
      %p261 = scmp.eq.s32.totalorder %s45, 1
      %p262 = por %p260, %p261
      %p264 = scmp.ne.s32.totalorder %s249, %s263
      %p265 = scmp.eq.s32.totalorder %s45, 0
      %p266 = por %p264, %p265
      %s268 = sadd.s32 %s267, 1
      %p271 = scmp.eq.s32.totalorder %s39, 1
      %p272 = scmp.ne.s32.totalorder %s267, %s269
      %p273 = scmp.eq.s32.totalorder %s39, 0
      %p274 = por %p272, %p273
      %p275 = scmp.ne.s32.totalorder %s267, %s269
      %p276 = scmp.eq.s32.totalorder %s44, 1
      %p277 = por %p275, %p276
      %p278 = scmp.ne.s32.totalorder %s269, %s270
      %p279 = scmp.eq.s32.totalorder %s44, 0
      %p280 = por %p278, %p279
      %p281 = scmp.ne.s32.totalorder %s269, %s270
      %p282 = scmp.eq.s32.totalorder %s45, 1
      %p283 = por %p281, %p282
      %p285 = scmp.ne.s32.totalorder %s270, %s284
      %p286 = scmp.eq.s32.totalorder %s45, 0
      %p287 = por %p285, %p286
      %s289 = sadd.s32 %s288, 1
      %p292 = scmp.eq.s32.totalorder %s39, 1
      %p293 = scmp.ne.s32.totalorder %s288, %s290
      %p294 = scmp.eq.s32.totalorder %s39, 0
      %p295 = por %p293, %p294
      %p296 = scmp.ne.s32.totalorder %s288, %s290
      %p297 = scmp.eq.s32.totalorder %s44, 1
      %p298 = por %p296, %p297
      %p299 = scmp.ne.s32.totalorder %s290, %s291
      %p300 = scmp.eq.s32.totalorder %s44, 0
      %p301 = por %p299, %p300
      %p302 = scmp.ne.s32.totalorder %s290, %s291
      %p303 = scmp.eq.s32.totalorder %s45, 1
      %p304 = por %p302, %p303
      %p306 = scmp.ne.s32.totalorder %s291, %s305
      %p307 = scmp.eq.s32.totalorder %s45, 0
      %p308 = por %p306, %p307
      %s310 = sadd.s32 %s309, 1
      %p313 = scmp.eq.s32.totalorder %s39, 1
      %p314 = scmp.ne.s32.totalorder %s309, %s311
      %p315 = scmp.eq.s32.totalorder %s39, 0
      %p316 = por %p314, %p315
      %p317 = scmp.ne.s32.totalorder %s309, %s311
      %p318 = scmp.eq.s32.totalorder %s44, 1
      %p319 = por %p317, %p318
      %p320 = scmp.ne.s32.totalorder %s311, %s312
      %p321 = scmp.eq.s32.totalorder %s44, 0
      %p322 = por %p320, %p321
      %p323 = scmp.ne.s32.totalorder %s311, %s312
      %p324 = scmp.eq.s32.totalorder %s45, 1
      %p325 = por %p323, %p324
      %p327 = scmp.ne.s32.totalorder %s312, %s326
      %p328 = scmp.eq.s32.totalorder %s45, 0
      %p329 = por %p327, %p328
      %s331 = sadd.s32 %s330, 1
      %p334 = scmp.eq.s32.totalorder %s39, 1
      %p335 = scmp.ne.s32.totalorder %s330, %s332
      %p336 = scmp.eq.s32.totalorder %s39, 0
      %p337 = por %p335, %p336
      %p338 = scmp.ne.s32.totalorder %s330, %s332
      %p339 = scmp.eq.s32.totalorder %s44, 1
      %p340 = por %p338, %p339
      %p341 = scmp.ne.s32.totalorder %s332, %s333
      %p342 = scmp.eq.s32.totalorder %s44, 0
      %p343 = por %p341, %p342
      %p344 = scmp.ne.s32.totalorder %s332, %s333
      %p345 = scmp.eq.s32.totalorder %s45, 1
      %p346 = por %p344, %p345
      %p348 = scmp.ne.s32.totalorder %s333, %s347
      %p349 = scmp.eq.s32.totalorder %s45, 0
      %p350 = por %p348, %p349
      %s352 = sadd.s32 %s351, 1
      %p355 = scmp.eq.s32.totalorder %s39, 1
      %p356 = scmp.ne.s32.totalorder %s351, %s353
      %p357 = scmp.eq.s32.totalorder %s39, 0
      %p358 = por %p356, %p357
      %p359 = scmp.ne.s32.totalorder %s351, %s353
      %p360 = scmp.eq.s32.totalorder %s44, 1
      %p361 = por %p359, %p360
      %p362 = scmp.ne.s32.totalorder %s353, %s354
      %p363 = scmp.eq.s32.totalorder %s44, 0
      %p364 = por %p362, %p363
      %p365 = scmp.ne.s32.totalorder %s353, %s354
      %p366 = scmp.eq.s32.totalorder %s45, 1
      %p367 = por %p365, %p366
      %p369 = scmp.ne.s32.totalorder %s354, %s368
      %p370 = scmp.eq.s32.totalorder %s45, 0
      %p371 = por %p369, %p370
      %s373 = sadd.s32 %s372, 1
      %p376 = scmp.eq.s32.totalorder %s39, 1
      %p377 = scmp.ne.s32.totalorder %s372, %s374
      %p378 = scmp.eq.s32.totalorder %s39, 0
      %p379 = por %p377, %p378
      %p380 = scmp.ne.s32.totalorder %s372, %s374
      %p381 = scmp.eq.s32.totalorder %s44, 1
      %p382 = por %p380, %p381
      %p383 = scmp.ne.s32.totalorder %s374, %s375
      %p384 = scmp.eq.s32.totalorder %s44, 0
      %p385 = por %p383, %p384
      %p386 = scmp.ne.s32.totalorder %s374, %s375
      %p387 = scmp.eq.s32.totalorder %s45, 1
      %p388 = por %p386, %p387
      %p390 = scmp.ne.s32.totalorder %s375, %s389
      %p391 = scmp.eq.s32.totalorder %s45, 0
      %p392 = por %p390, %p391
      %s394 = sadd.s32 %s393, 1
      %p397 = scmp.eq.s32.totalorder %s39, 1
      %p398 = scmp.ne.s32.totalorder %s393, %s395
      %p399 = scmp.eq.s32.totalorder %s39, 0
      %p400 = por %p398, %p399
      %p401 = scmp.ne.s32.totalorder %s393, %s395
      %p402 = scmp.eq.s32.totalorder %s44, 1
      %p403 = por %p401, %p402
      %p404 = scmp.ne.s32.totalorder %s395, %s396
      %p405 = scmp.eq.s32.totalorder %s44, 0
      %p406 = por %p404, %p405
      %p407 = scmp.ne.s32.totalorder %s395, %s396
      %p408 = scmp.eq.s32.totalorder %s45, 1
      %p409 = por %p407, %p408
      %p411 = scmp.ne.s32.totalorder %s396, %s410
      %p412 = scmp.eq.s32.totalorder %s45, 0
      %p413 = por %p411, %p412
      %s415 = sadd.s32 %s414, 1
      %p418 = scmp.eq.s32.totalorder %s39, 1
      %p419 = scmp.ne.s32.totalorder %s414, %s416
      %p420 = scmp.eq.s32.totalorder %s39, 0
      %p421 = por %p419, %p420
      %p422 = scmp.ne.s32.totalorder %s414, %s416
      %p423 = scmp.eq.s32.totalorder %s44, 1
      %p424 = por %p422, %p423
      %p425 = scmp.ne.s32.totalorder %s416, %s417
      %p426 = scmp.eq.s32.totalorder %s44, 0
      %p427 = por %p425, %p426
      %p428 = scmp.ne.s32.totalorder %s416, %s417
      %p429 = scmp.eq.s32.totalorder %s45, 1
      %p430 = por %p428, %p429
      %p432 = scmp.ne.s32.totalorder %s417, %s431
      %p433 = scmp.eq.s32.totalorder %s45, 0
      %p434 = por %p432, %p433
      %s435 = ssub.s32 %s39, %s46
      %p436 = scmp.eq.s32.totalorder %s435, 0
      %s438 = sadd.s32 %s437, 1
      %s439 = scalar_select %p436, %s437, %s438
      %p442 = pneg %p436
      %p443 = scmp.eq.s32.totalorder %s39, 1
      %p444 = por %p442, %p443
      %p445 = scmp.ne.s32.totalorder %s437, %s440
      %p446 = scmp.eq.s32.totalorder %s39, 0
      %p447 = por %p445, %p446
      %p448 = scmp.ne.s32.totalorder %s437, %s440
      %p449 = scmp.eq.s32.totalorder %s44, 1
      %p450 = por %p448, %p449
      %p451 = scmp.ne.s32.totalorder %s440, %s441
      %p452 = scmp.eq.s32.totalorder %s44, 0
      %p453 = por %p451, %p452
      %p454 = scmp.ne.s32.totalorder %s440, %s441
      %p455 = scmp.eq.s32.totalorder %s45, 1
      %p456 = por %p454, %p455
      %p458 = scmp.ne.s32.totalorder %s441, %s457
      %p459 = scmp.eq.s32.totalorder %s45, 0
      %p460 = por %p458, %p459
      %p461 = scmp.le.s32.totalorder 1, %s39
      %p462 = scmp.lt.s32.totalorder %s39, 3
      %p463 = pnand %p461, %p462
      %p464 = pneg %p463
      // Predicated region
      $region9: #{tpu_custom_call.1} parent=5 // pred_check
        _
      $region10: #{tpu_custom_call.1} parent=5 // pred_check_branch
        %466 = sbr.rel (%p463) target = $region12
      $region11: #{tpu_custom_call.1} parent=5 // pred_region
        %s467 = ssub.s32 %s39, 1
        // Predicated region
        $region13: #{tpu_custom_call.1} parent=11 // pred_check
          %p468 = pneg %p112
        $region14: #{tpu_custom_call.1} parent=11 // pred_check_branch
          %470 = sbr.rel (%p468) target = $region16
        $region15: #{tpu_custom_call.1} parent=11 // pred_region
          _
        $region16: #{tpu_custom_call.1} parent=11 // pred_fallthru
          _
        // Predicated region
        $region17: #{tpu_custom_call.1} parent=11 // pred_check
          %p471 = pneg %p133
        $region18: #{tpu_custom_call.1} parent=11 // pred_check_branch
          %473 = sbr.rel (%p471) target = $region20
        $region19: #{tpu_custom_call.1} parent=11 // pred_region
          _
        $region20: #{tpu_custom_call.1} parent=11 // pred_fallthru
          _
        // Predicated region
        $region21: #{tpu_custom_call.1} parent=11 // pred_check
          %p474 = pneg %p154
        $region22: #{tpu_custom_call.1} parent=11 // pred_check_branch
          %476 = sbr.rel (%p474) target = $region24
        $region23: #{tpu_custom_call.1} parent=11 // pred_region
          _
        $region24: #{tpu_custom_call.1} parent=11 // pred_fallthru
          _
        // Predicated region
        $region25: #{tpu_custom_call.1} parent=11 // pred_check
          %p477 = pneg %p175
        $region26: #{tpu_custom_call.1} parent=11 // pred_check_branch
          %479 = sbr.rel (%p477) target = $region28
        $region27: #{tpu_custom_call.1} parent=11 // pred_region
          _
        $region28: #{tpu_custom_call.1} parent=11 // pred_fallthru
          _
        // Predicated region
        $region29: #{tpu_custom_call.1} parent=11 // pred_check
          %p480 = pneg %p196
        $region30: #{tpu_custom_call.1} parent=11 // pred_check_branch
          %482 = sbr.rel (%p480) target = $region32
        $region31: #{tpu_custom_call.1} parent=11 // pred_region
          _
        $region32: #{tpu_custom_call.1} parent=11 // pred_fallthru
          _
        // Predicated region
        $region33: #{tpu_custom_call.1} parent=11 // pred_check
          %p483 = pneg %p217
        $region34: #{tpu_custom_call.1} parent=11 // pred_check_branch
          %485 = sbr.rel (%p483) target = $region36
        $region35: #{tpu_custom_call.1} parent=11 // pred_region
          _
        $region36: #{tpu_custom_call.1} parent=11 // pred_fallthru
          _
        // Predicated region
        $region37: #{tpu_custom_call.1} parent=11 // pred_check
          %p486 = pneg %p238
        $region38: #{tpu_custom_call.1} parent=11 // pred_check_branch
          %488 = sbr.rel (%p486) target = $region40
        $region39: #{tpu_custom_call.1} parent=11 // pred_region
          _
        $region40: #{tpu_custom_call.1} parent=11 // pred_fallthru
          _
        // Predicated region
        $region41: #{tpu_custom_call.1} parent=11 // pred_check
          %p489 = pneg %p259
        $region42: #{tpu_custom_call.1} parent=11 // pred_check_branch
          %491 = sbr.rel (%p489) target = $region44
        $region43: #{tpu_custom_call.1} parent=11 // pred_region
          _
        $region44: #{tpu_custom_call.1} parent=11 // pred_fallthru
          _
        // Predicated region
        $region45: #{tpu_custom_call.1} parent=11 // pred_check
          %p492 = pneg %p280
        $region46: #{tpu_custom_call.1} parent=11 // pred_check_branch
          %494 = sbr.rel (%p492) target = $region48
        $region47: #{tpu_custom_call.1} parent=11 // pred_region
          _
        $region48: #{tpu_custom_call.1} parent=11 // pred_fallthru
          _
        // Predicated region
        $region49: #{tpu_custom_call.1} parent=11 // pred_check
          %p495 = pneg %p301
        $region50: #{tpu_custom_call.1} parent=11 // pred_check_branch
          %497 = sbr.rel (%p495) target = $region52
        $region51: #{tpu_custom_call.1} parent=11 // pred_region
          _
        $region52: #{tpu_custom_call.1} parent=11 // pred_fallthru
          _
        // Predicated region
        $region53: #{tpu_custom_call.1} parent=11 // pred_check
          %p498 = pneg %p322
        $region54: #{tpu_custom_call.1} parent=11 // pred_check_branch
          %500 = sbr.rel (%p498) target = $region56
        $region55: #{tpu_custom_call.1} parent=11 // pred_region
          _
        $region56: #{tpu_custom_call.1} parent=11 // pred_fallthru
          _
        // Predicated region
        $region57: #{tpu_custom_call.1} parent=11 // pred_check
          %p501 = pneg %p343
        $region58: #{tpu_custom_call.1} parent=11 // pred_check_branch
          %503 = sbr.rel (%p501) target = $region60
        $region59: #{tpu_custom_call.1} parent=11 // pred_region
          _
        $region60: #{tpu_custom_call.1} parent=11 // pred_fallthru
          _
        // Predicated region
        $region61: #{tpu_custom_call.1} parent=11 // pred_check
          %p504 = pneg %p364
        $region62: #{tpu_custom_call.1} parent=11 // pred_check_branch
          %506 = sbr.rel (%p504) target = $region64
        $region63: #{tpu_custom_call.1} parent=11 // pred_region
          _
        $region64: #{tpu_custom_call.1} parent=11 // pred_fallthru
          _
        // Predicated region
        $region65: #{tpu_custom_call.1} parent=11 // pred_check
          %p507 = pneg %p385
        $region66: #{tpu_custom_call.1} parent=11 // pred_check_branch
          %509 = sbr.rel (%p507) target = $region68
        $region67: #{tpu_custom_call.1} parent=11 // pred_region
          _
        $region68: #{tpu_custom_call.1} parent=11 // pred_fallthru
          _
        // Predicated region
        $region69: #{tpu_custom_call.1} parent=11 // pred_check
          %p510 = pneg %p406
        $region70: #{tpu_custom_call.1} parent=11 // pred_check_branch
          %512 = sbr.rel (%p510) target = $region72
        $region71: #{tpu_custom_call.1} parent=11 // pred_region
          _
        $region72: #{tpu_custom_call.1} parent=11 // pred_fallthru
          _
        // Predicated region
        $region73: #{tpu_custom_call.1} parent=11 // pred_check
          %p513 = pneg %p427
        $region74: #{tpu_custom_call.1} parent=11 // pred_check_branch
          %515 = sbr.rel (%p513) target = $region76
        $region75: #{tpu_custom_call.1} parent=11 // pred_region
          _
        $region76: #{tpu_custom_call.1} parent=11 // pred_fallthru
          _
      $region12: #{tpu_custom_call.1} parent=5 // pred_fallthru
        _
      %p516 = scmp.lt.s32.totalorder %s39, 2
      // Predicated region
      $region77: #{tpu_custom_call.1} parent=5 // pred_check
        %p517 = pneg %p516
      $region78: #{tpu_custom_call.1} parent=5 // pred_check_branch
        %519 = sbr.rel (%p517) target = $region80
      $region79: #{tpu_custom_call.1} parent=5 // pred_region
        // Predicated region
        $region81: #{tpu_custom_call.1} parent=79 // pred_check
          %p520 = pneg %p59
        $region82: #{tpu_custom_call.1} parent=79 // pred_check_branch
          %522 = sbr.rel (%p520) target = $region84
        $region83: #{tpu_custom_call.1} parent=79 // pred_region
          %p523 = scmp.lt.s32.totalorder %s39, 1
          %s524 = scalar_select %p523, %s39, 1
          %s525 = smul.addr %s524, 8
          %s526 = scalar_lea.vmem %s2, %s525
        $region84: #{tpu_custom_call.1} parent=79 // pred_fallthru
          _
        // Predicated region
        $region85: #{tpu_custom_call.1} parent=79 // pred_check
          %p527 = pneg %p85
        $region86: #{tpu_custom_call.1} parent=79 // pred_check_branch
          %529 = sbr.rel (%p527) target = $region88
        $region87: #{tpu_custom_call.1} parent=79 // pred_region
          %p530 = scmp.lt.s32.totalorder %s39, 1
          %s531 = scalar_select %p530, %s39, 1
          %s532 = smul.addr %s531, 8
          %s533 = scalar_lea.vmem %s3, %s532
        $region88: #{tpu_custom_call.1} parent=79 // pred_fallthru
          _
      $region80: #{tpu_custom_call.1} parent=5 // pred_fallthru
        _
      %p534 = scmp.le.s32.totalorder 1, %s39
      %p535 = scmp.lt.s32.totalorder %s39, 3
      %p536 = pnand %p534, %p535
      %p537 = pneg %p536
      // Predicated region
      $region89: #{tpu_custom_call.1} parent=5 // pred_check
        _
      $region90: #{tpu_custom_call.1} parent=5 // pred_check_branch
        %539 = sbr.rel (%p536) target = $region92
      $region91: #{tpu_custom_call.1} parent=5 // pred_region
        %s540 = ssub.s32 %s39, 1
        %p541 = scmp.lt.s32.totalorder %s44, 1
        %s542 = scalar_select %p541, %s44, 1
        %s543 = smul.addr %s542, 8
        %s544 = scalar_lea.vmem %s2, %s543
        %p545 = pneg %p65
        %p546 = pneg %p62
        %p547 = scmp.lt.s32.totalorder %s44, 1
        %s548 = scalar_select %p547, %s44, 1
        %s549 = smul.addr %s548, 8
        %s550 = scalar_lea.vmem %s3, %s549
        %p551 = pneg %p91
        %p552 = pneg %p88
        %p553 = pneg %p112
        %p554 = pneg %p109
        %p555 = pneg %p133
        %p556 = pneg %p130
        %p557 = pneg %p154
        %p558 = pneg %p151
        %p559 = pneg %p175
        %p560 = pneg %p172
        %p561 = pneg %p196
        %p562 = pneg %p193
        %p563 = pneg %p217
        %p564 = pneg %p214
        %p565 = pneg %p238
        %p566 = pneg %p235
        %p567 = pneg %p259
        %p568 = pneg %p256
        %p569 = pneg %p280
        %p570 = pneg %p277
        %p571 = pneg %p301
        %p572 = pneg %p298
        %p573 = pneg %p322
        %p574 = pneg %p319
        %p575 = pneg %p343
        %p576 = pneg %p340
        %p577 = pneg %p364
        %p578 = pneg %p361
        %p579 = pneg %p385
        %p580 = pneg %p382
        %p581 = pneg %p406
        %p582 = pneg %p403
        %p583 = pneg %p427
        %p584 = pneg %p424
        %p585 = pneg %p453
        %p586 = pneg %p450
        %s587 = sand.u32 %s440, 1
        %s588 = scalar_lea.sflag [#allocation6], %s587
        %s589 = sand.u32 %s440, 1
        %s590 = smul.addr %s589, 8
        %s591 = scalar_lea.vmem [#allocation5], %s590
        %p592 = scmp.lt.s32.totalorder %s44, 1
        %s593 = scalar_select %p592, %s44, 1
        %s594 = smul.addr %s593, 8
        %s595 = scalar_lea.vmem %s2, %s594
        %p596 = scmp.lt.s32.totalorder %s44, 1
        %s597 = scalar_select %p596, %s44, 1
        %s598 = smul.addr %s597, 8
        %s599 = scalar_lea.vmem %s3, %s598
        %s601 = sld [smem:[#allocation3 + %s44]]
        %s602 = sld [smem:[#allocation4 + %s44]]
        %v603 = vld [vmem:[%s595] sm:$0xff]
        %v604 = vld [vmem:[%s599] sm:$0xff]
        %v605 = vlaneseq
        %v606 = vshrl.u32 %v605, 7
        %v607 = vlaneseq
        %v608 = vand.u32 %v607, 127
        %vm609 = vcmp.gt.s32.totalorder %v608, %v606
        %v610 = vstv %s601
        %vm611 = vcmp.ge.s32.totalorder %v608, %v610
        %vm612 = vmor %vm609, %vm611
        %v613 = vstv %s602
        %vm614 = vcmp.ge.s32.totalorder %v608, %v613
        %v615 = vpack.c.bf16 %v603, %v603
        %v616 = vld [vmem:[%s4] sm:$0xf]
        %v617 = vld [vmem:[%s4 + $0x4] sm:$0xf]
        %v618 = vld [vmem:[%s4 + $0x8] sm:$0xf]
        %v619 = vld [vmem:[%s4 + $0xc] sm:$0xf]
        %v620 = vld [vmem:[%s4 + $0x10] sm:$0xf]
        %v621 = vld [vmem:[%s4 + $0x14] sm:$0xf]
        %v622 = vld [vmem:[%s4 + $0x18] sm:$0xf]
        %v623 = vld [vmem:[%s4 + $0x1c] sm:$0xf]
        %v624 = vld [vmem:[%s4 + $0x20] sm:$0xf]
        %v625 = vld [vmem:[%s4 + $0x24] sm:$0xf]
        %v626 = vld [vmem:[%s4 + $0x28] sm:$0xf]
        %v627 = vld [vmem:[%s4 + $0x2c] sm:$0xf]
        %v628 = vld [vmem:[%s4 + $0x30] sm:$0xf]
        %v629 = vld [vmem:[%s4 + $0x34] sm:$0xf]
        %v630 = vld [vmem:[%s4 + $0x38] sm:$0xf]
        %v631 = vld [vmem:[%s4 + $0x3c] sm:$0xf]
        %v632 = vld [vmem:[%s4 + $0x40] sm:$0xf]
        %v633 = vld [vmem:[%s4 + $0x44] sm:$0xf]
        %v634 = vld [vmem:[%s4 + $0x48] sm:$0xf]
        %v635 = vld [vmem:[%s4 + $0x4c] sm:$0xf]
        %v636 = vld [vmem:[%s4 + $0x50] sm:$0xf]
        %v637 = vld [vmem:[%s4 + $0x54] sm:$0xf]
        %v638 = vld [vmem:[%s4 + $0x58] sm:$0xf]
        %v639 = vld [vmem:[%s4 + $0x5c] sm:$0xf]
        %v640 = vld [vmem:[%s4 + $0x60] sm:$0xf]
        %v641 = vld [vmem:[%s4 + $0x64] sm:$0xf]
        %v642 = vld [vmem:[%s4 + $0x68] sm:$0xf]
        %v643 = vld [vmem:[%s4 + $0x6c] sm:$0xf]
        %v644 = vld [vmem:[%s4 + $0x70] sm:$0xf]
        %v645 = vld [vmem:[%s4 + $0x74] sm:$0xf]
        %v646 = vld [vmem:[%s4 + $0x78] sm:$0xf]
        %v647 = vld [vmem:[%s4 + $0x7c] sm:$0xf]
        %v648 = vld [vmem:[%s4 + $0x80] sm:$0xf]
        %v649 = vld [vmem:[%s4 + $0x84] sm:$0xf]
        %v650 = vld [vmem:[%s4 + $0x88] sm:$0xf]
        %v651 = vld [vmem:[%s4 + $0x8c] sm:$0xf]
        %v652 = vld [vmem:[%s4 + $0x90] sm:$0xf]
        %v653 = vld [vmem:[%s4 + $0x94] sm:$0xf]
        %v654 = vld [vmem:[%s4 + $0x98] sm:$0xf]
        %v655 = vld [vmem:[%s4 + $0x9c] sm:$0xf]
        %v656 = vld [vmem:[%s4 + $0xa0] sm:$0xf]
        %v657 = vld [vmem:[%s4 + $0xa4] sm:$0xf]
        %v658 = vld [vmem:[%s4 + $0xa8] sm:$0xf]
        %v659 = vld [vmem:[%s4 + $0xac] sm:$0xf]
        %v660 = vld [vmem:[%s4 + $0xb0] sm:$0xf]
        %v661 = vld [vmem:[%s4 + $0xb4] sm:$0xf]
        %v662 = vld [vmem:[%s4 + $0xb8] sm:$0xf]
        %v663 = vld [vmem:[%s4 + $0xbc] sm:$0xf]
        %v664 = vld [vmem:[%s4 + $0xc0] sm:$0xf]
        %v665 = vld [vmem:[%s4 + $0xc4] sm:$0xf]
        %v666 = vld [vmem:[%s4 + $0xc8] sm:$0xf]
        %v667 = vld [vmem:[%s4 + $0xcc] sm:$0xf]
        %v668 = vld [vmem:[%s4 + $0xd0] sm:$0xf]
        %v669 = vld [vmem:[%s4 + $0xd4] sm:$0xf]
        %v670 = vld [vmem:[%s4 + $0xd8] sm:$0xf]
        %v671 = vld [vmem:[%s4 + $0xdc] sm:$0xf]
        %v672 = vld [vmem:[%s4 + $0xe0] sm:$0xf]
        %v673 = vld [vmem:[%s4 + $0xe4] sm:$0xf]
        %v674 = vld [vmem:[%s4 + $0xe8] sm:$0xf]
        %v675 = vld [vmem:[%s4 + $0xec] sm:$0xf]
        %v676 = vld [vmem:[%s4 + $0xf0] sm:$0xf]
        %v677 = vld [vmem:[%s4 + $0xf4] sm:$0xf]
        %v678 = vld [vmem:[%s4 + $0xf8] sm:$0xf]
        %v679 = vld [vmem:[%s4 + $0xfc] sm:$0xf]
        %v680 = vld [vmem:[%s4 + $0x100] sm:$0xf]
        %v681 = vld [vmem:[%s4 + $0x104] sm:$0xf]
        %v682 = vld [vmem:[%s4 + $0x108] sm:$0xf]
        %v683 = vld [vmem:[%s4 + $0x10c] sm:$0xf]
        %v684 = vld [vmem:[%s4 + $0x110] sm:$0xf]
        %v685 = vld [vmem:[%s4 + $0x114] sm:$0xf]
        %v686 = vld [vmem:[%s4 + $0x118] sm:$0xf]
        %v687 = vld [vmem:[%s4 + $0x11c] sm:$0xf]
        %v688 = vld [vmem:[%s4 + $0x120] sm:$0xf]
        %v689 = vld [vmem:[%s4 + $0x124] sm:$0xf]
        %v690 = vld [vmem:[%s4 + $0x128] sm:$0xf]
        %v691 = vld [vmem:[%s4 + $0x12c] sm:$0xf]
        %v692 = vld [vmem:[%s4 + $0x130] sm:$0xf]
        %v693 = vld [vmem:[%s4 + $0x134] sm:$0xf]
        %v694 = vld [vmem:[%s4 + $0x138] sm:$0xf]
        %v695 = vld [vmem:[%s4 + $0x13c] sm:$0xf]
        %v696 = vld [vmem:[%s4 + $0x140] sm:$0xf]
        %v697 = vld [vmem:[%s4 + $0x144] sm:$0xf]
        %v698 = vld [vmem:[%s4 + $0x148] sm:$0xf]
        %v699 = vld [vmem:[%s4 + $0x14c] sm:$0xf]
        %v700 = vld [vmem:[%s4 + $0x150] sm:$0xf]
        %v701 = vld [vmem:[%s4 + $0x154] sm:$0xf]
        %v702 = vld [vmem:[%s4 + $0x158] sm:$0xf]
        %v703 = vld [vmem:[%s4 + $0x15c] sm:$0xf]
        %v704 = vld [vmem:[%s4 + $0x160] sm:$0xf]
        %v705 = vld [vmem:[%s4 + $0x164] sm:$0xf]
        %v706 = vld [vmem:[%s4 + $0x168] sm:$0xf]
        %v707 = vld [vmem:[%s4 + $0x16c] sm:$0xf]
        %v708 = vld [vmem:[%s4 + $0x170] sm:$0xf]
        %v709 = vld [vmem:[%s4 + $0x174] sm:$0xf]
        %v710 = vld [vmem:[%s4 + $0x178] sm:$0xf]
        %v711 = vld [vmem:[%s4 + $0x17c] sm:$0xf]
        %v712 = vld [vmem:[%s4 + $0x180] sm:$0xf]
        %v713 = vld [vmem:[%s4 + $0x184] sm:$0xf]
        %v714 = vld [vmem:[%s4 + $0x188] sm:$0xf]
        %v715 = vld [vmem:[%s4 + $0x18c] sm:$0xf]
        %v716 = vld [vmem:[%s4 + $0x190] sm:$0xf]
        %v717 = vld [vmem:[%s4 + $0x194] sm:$0xf]
        %v718 = vld [vmem:[%s4 + $0x198] sm:$0xf]
        %v719 = vld [vmem:[%s4 + $0x19c] sm:$0xf]
        %v720 = vld [vmem:[%s4 + $0x1a0] sm:$0xf]
        %v721 = vld [vmem:[%s4 + $0x1a4] sm:$0xf]
        %v722 = vld [vmem:[%s4 + $0x1a8] sm:$0xf]
        %v723 = vld [vmem:[%s4 + $0x1ac] sm:$0xf]
        %v724 = vld [vmem:[%s4 + $0x1b0] sm:$0xf]
        %v725 = vld [vmem:[%s4 + $0x1b4] sm:$0xf]
        %v726 = vld [vmem:[%s4 + $0x1b8] sm:$0xf]
        %v727 = vld [vmem:[%s4 + $0x1bc] sm:$0xf]
        %v728 = vld [vmem:[%s4 + $0x1c0] sm:$0xf]
        %v729 = vld [vmem:[%s4 + $0x1c4] sm:$0xf]
        %v730 = vld [vmem:[%s4 + $0x1c8] sm:$0xf]
        %v731 = vld [vmem:[%s4 + $0x1cc] sm:$0xf]
        %v732 = vld [vmem:[%s4 + $0x1d0] sm:$0xf]
        %v733 = vld [vmem:[%s4 + $0x1d4] sm:$0xf]
        %v734 = vld [vmem:[%s4 + $0x1d8] sm:$0xf]
        %v735 = vld [vmem:[%s4 + $0x1dc] sm:$0xf]
        %v736 = vld [vmem:[%s4 + $0x1e0] sm:$0xf]
        %v737 = vld [vmem:[%s4 + $0x1e4] sm:$0xf]
        %v738 = vld [vmem:[%s4 + $0x1e8] sm:$0xf]
        %v739 = vld [vmem:[%s4 + $0x1ec] sm:$0xf]
        %v740 = vld [vmem:[%s4 + $0x1f0] sm:$0xf]
        %v741 = vld [vmem:[%s4 + $0x1f4] sm:$0xf]
        %v742 = vld [vmem:[%s4 + $0x1f8] sm:$0xf]
        %v743 = vld [vmem:[%s4 + $0x1fc] sm:$0xf]
        %v744 = vld [vmem:[%s4 + $0x200] sm:$0xf]
        %v745 = vld [vmem:[%s4 + $0x204] sm:$0xf]
        %v746 = vld [vmem:[%s4 + $0x208] sm:$0xf]
        %v747 = vld [vmem:[%s4 + $0x20c] sm:$0xf]
        %v748 = vld [vmem:[%s4 + $0x210] sm:$0xf]
        %v749 = vld [vmem:[%s4 + $0x214] sm:$0xf]
        %v750 = vld [vmem:[%s4 + $0x218] sm:$0xf]
        %v751 = vld [vmem:[%s4 + $0x21c] sm:$0xf]
        %v752 = vld [vmem:[%s4 + $0x220] sm:$0xf]
        %v753 = vld [vmem:[%s4 + $0x224] sm:$0xf]
        %v754 = vld [vmem:[%s4 + $0x228] sm:$0xf]
        %v755 = vld [vmem:[%s4 + $0x22c] sm:$0xf]
        %v756 = vld [vmem:[%s4 + $0x230] sm:$0xf]
        %v757 = vld [vmem:[%s4 + $0x234] sm:$0xf]
        %v758 = vld [vmem:[%s4 + $0x238] sm:$0xf]
        %v759 = vld [vmem:[%s4 + $0x23c] sm:$0xf]
        %v760 = vld [vmem:[%s4 + $0x240] sm:$0xf]
        %v761 = vld [vmem:[%s4 + $0x244] sm:$0xf]
        %v762 = vld [vmem:[%s4 + $0x248] sm:$0xf]
        %v763 = vld [vmem:[%s4 + $0x24c] sm:$0xf]
        %v764 = vld [vmem:[%s4 + $0x250] sm:$0xf]
        %v765 = vld [vmem:[%s4 + $0x254] sm:$0xf]
        %v766 = vld [vmem:[%s4 + $0x258] sm:$0xf]
        %v767 = vld [vmem:[%s4 + $0x25c] sm:$0xf]
        %v768 = vld [vmem:[%s4 + $0x260] sm:$0xf]
        %v769 = vld [vmem:[%s4 + $0x264] sm:$0xf]
        %v770 = vld [vmem:[%s4 + $0x268] sm:$0xf]
        %v771 = vld [vmem:[%s4 + $0x26c] sm:$0xf]
        %v772 = vld [vmem:[%s4 + $0x270] sm:$0xf]
        %v773 = vld [vmem:[%s4 + $0x274] sm:$0xf]
        %v774 = vld [vmem:[%s4 + $0x278] sm:$0xf]
        %v775 = vld [vmem:[%s4 + $0x27c] sm:$0xf]
        %v776 = vld [vmem:[%s4 + $0x280] sm:$0xf]
        %v777 = vld [vmem:[%s4 + $0x284] sm:$0xf]
        %v778 = vld [vmem:[%s4 + $0x288] sm:$0xf]
        %v779 = vld [vmem:[%s4 + $0x28c] sm:$0xf]
        %v780 = vld [vmem:[%s4 + $0x290] sm:$0xf]
        %v781 = vld [vmem:[%s4 + $0x294] sm:$0xf]
        %v782 = vld [vmem:[%s4 + $0x298] sm:$0xf]
        %v783 = vld [vmem:[%s4 + $0x29c] sm:$0xf]
        %v784 = vld [vmem:[%s4 + $0x2a0] sm:$0xf]
        %v785 = vld [vmem:[%s4 + $0x2a4] sm:$0xf]
        %v786 = vld [vmem:[%s4 + $0x2a8] sm:$0xf]
        %v787 = vld [vmem:[%s4 + $0x2ac] sm:$0xf]
        %v788 = vld [vmem:[%s4 + $0x2b0] sm:$0xf]
        %v789 = vld [vmem:[%s4 + $0x2b4] sm:$0xf]
        %v790 = vld [vmem:[%s4 + $0x2b8] sm:$0xf]
        %v791 = vld [vmem:[%s4 + $0x2bc] sm:$0xf]
        %v792 = vld [vmem:[%s4 + $0x2c0] sm:$0xf]
        %v793 = vld [vmem:[%s4 + $0x2c4] sm:$0xf]
        %v794 = vld [vmem:[%s4 + $0x2c8] sm:$0xf]
        %v795 = vld [vmem:[%s4 + $0x2cc] sm:$0xf]
        %v796 = vld [vmem:[%s4 + $0x2d0] sm:$0xf]
        %v797 = vld [vmem:[%s4 + $0x2d4] sm:$0xf]
        %v798 = vld [vmem:[%s4 + $0x2d8] sm:$0xf]
        %v799 = vld [vmem:[%s4 + $0x2dc] sm:$0xf]
        %v800 = vld [vmem:[%s4 + $0x2e0] sm:$0xf]
        %v801 = vld [vmem:[%s4 + $0x2e4] sm:$0xf]
        %v802 = vld [vmem:[%s4 + $0x2e8] sm:$0xf]
        %v803 = vld [vmem:[%s4 + $0x2ec] sm:$0xf]
        %v804 = vld [vmem:[%s4 + $0x2f0] sm:$0xf]
        %v805 = vld [vmem:[%s4 + $0x2f4] sm:$0xf]
        %v806 = vld [vmem:[%s4 + $0x2f8] sm:$0xf]
        %v807 = vld [vmem:[%s4 + $0x2fc] sm:$0xf]
        %v808 = vld [vmem:[%s5] sm:$0x1]
        %v809 = vld [vmem:[%s5 + $0x1] sm:$0x1]
        %v810 = vld [vmem:[%s5 + $0x2] sm:$0x1]
        %v811 = vld [vmem:[%s5 + $0x3] sm:$0x1]
        %v812 = vld [vmem:[%s5 + $0x4] sm:$0x1]
        %v813 = vld [vmem:[%s5 + $0x5] sm:$0x1]
        %v814 = vld [vmem:[%s5 + $0x6] sm:$0x1]
        %v815 = vld [vmem:[%s5 + $0x7] sm:$0x1]
        %v816 = vld [vmem:[%s5 + $0x8] sm:$0x1]
        %v817 = vld [vmem:[%s5 + $0x9] sm:$0x1]
        %v818 = vld [vmem:[%s5 + $0xa] sm:$0x1]
        %v819 = vld [vmem:[%s5 + $0xb] sm:$0x1]
        %v832 = vlaneseq
        %v833 = vshrl.u32 %v832, 7
        %v834 = vsub.s32 0, %v833
        %v835 = vrot.slane %v808, %v834
        %v836 = vlaneseq
        %v837 = vshrl.u32 %v836, 7
        %v838 = vsub.s32 0, %v837
        %v839 = vrot.slane %v809, %v838
        %v840 = vlaneseq
        %v841 = vshrl.u32 %v840, 7
        %v842 = vsub.s32 0, %v841
        %v843 = vrot.slane %v810, %v842
        %v844 = vlaneseq
        %v845 = vshrl.u32 %v844, 7
        %v846 = vsub.s32 0, %v845
        %v847 = vrot.slane %v811, %v846
        %v848 = vlaneseq
        %v849 = vshrl.u32 %v848, 7
        %v850 = vsub.s32 0, %v849
        %v851 = vrot.slane %v812, %v850
        %v852 = vlaneseq
        %v853 = vshrl.u32 %v852, 7
        %v854 = vsub.s32 0, %v853
        %v855 = vrot.slane %v813, %v854
        %v856 = vlaneseq
        %v857 = vshrl.u32 %v856, 7
        %v858 = vsub.s32 0, %v857
        %v859 = vrot.slane %v814, %v858
        %v860 = vlaneseq
        %v861 = vshrl.u32 %v860, 7
        %v862 = vsub.s32 0, %v861
        %v863 = vrot.slane %v815, %v862
        %v864 = vlaneseq
        %v865 = vshrl.u32 %v864, 7
        %v866 = vsub.s32 0, %v865
        %v867 = vrot.slane %v816, %v866
        %v868 = vlaneseq
        %v869 = vshrl.u32 %v868, 7
        %v870 = vsub.s32 0, %v869
        %v871 = vrot.slane %v817, %v870
        %v872 = vlaneseq
        %v873 = vshrl.u32 %v872, 7
        %v874 = vsub.s32 0, %v873
        %v875 = vrot.slane %v818, %v874
        %v876 = vlaneseq
        %v877 = vshrl.u32 %v876, 7
        %v878 = vsub.s32 0, %v877
        %v879 = vrot.slane %v819, %v878
        %v908 = vunpack.c.l.b16 %v616
        %v909 = vunpack.c.l.b16 %v617
        %v910 = vunpack.c.l.b16 %v618
        %v911 = vunpack.c.l.b16 %v619
        %v912 = vunpack.c.l.b16 %v620
        %v913 = vunpack.c.l.b16 %v621
        %v914 = vunpack.c.l.b16 %v622
        %v915 = vunpack.c.l.b16 %v623
        %v916 = vunpack.c.l.b16 %v624
        %v917 = vunpack.c.l.b16 %v625
        %v918 = vunpack.c.l.b16 %v626
        %v919 = vunpack.c.l.b16 %v627
        %v920 = vunpack.c.l.b16 %v628
        %v921 = vunpack.c.l.b16 %v629
        %v922 = vunpack.c.l.b16 %v630
        %v923 = vunpack.c.l.b16 %v631
        %v924 = vpack.c.b16 %v909, %v908
        %v925 = vpack.c.b16 %v911, %v910
        %v926 = vpack.c.b16 %v913, %v912
        %v927 = vpack.c.b16 %v915, %v914
        %v928 = vpack.c.b16 %v917, %v916
        %v929 = vpack.c.b16 %v919, %v918
        %v930 = vpack.c.b16 %v921, %v920
        %v931 = vpack.c.b16 %v923, %v922
        %940 = vmatprep.subr.bf16.mxu0 0
        %941 = vmatpush1.bf16.msra.mxu0 %v924
        %942 = vmatprep.subr.bf16.mxu0 0
        %943 = vmatpush1.bf16.msra.mxu0 %v925
        %944 = vmatprep.subr.bf16.mxu0 0
        %945 = vmatpush1.bf16.msra.mxu0 %v926
        %946 = vmatprep.subr.bf16.mxu0 0
        %947 = vmatpush1.bf16.msra.mxu0 %v927
        %948 = vmatprep.subr.bf16.mxu0 0
        %949 = vmatpush1.bf16.msra.mxu0 %v928
        %950 = vmatprep.subr.bf16.mxu0 0
        %951 = vmatpush1.bf16.msra.mxu0 %v929
        %952 = vmatprep.subr.bf16.mxu0 0
        %953 = vmatpush1.bf16.msra.mxu0 %v930
        %954 = vmatprep.subr.bf16.mxu0 0
        %955 = vmatpush1.bf16.msra.mxu0 %v931
        %956 = vmatprep.subr.bf16.mxu0 0
        %957 = vmatpush1.bf16.msra.mxu0 0
        %958 = vmatprep.subr.bf16.mxu0 0
        %959 = vmatpush1.bf16.msra.mxu0 0
        %960 = vmatprep.subr.bf16.mxu0 0
        %961 = vmatpush1.bf16.msra.mxu0 0
        %962 = vmatprep.subr.bf16.mxu0 0
        %963 = vmatpush1.bf16.msra.mxu0 0
        %964 = vmatprep.subr.bf16.mxu0 0
        %965 = vmatpush1.bf16.msra.mxu0 0
        %966 = vmatprep.subr.bf16.mxu0 0
        %967 = vmatpush1.bf16.msra.mxu0 0
        %968 = vmatprep.subr.bf16.mxu0 0
        %969 = vmatpush1.bf16.msra.mxu0 0
        %970 = vmatprep.subr.bf16.mxu0 0
        %971 = vmatpush1.bf16.msra.mxu0 0
        %972 = vmatprep.mubr.bf16.mxu0 0
        %973 = vmatmul.mubr.bf16.gmra.mrb[0].mxu0 %v615
        %v974 = vpop.f32.mrb[0].mxu0
        %v975 = vadd.f32 %v835, %v974
        %v976 = vpop.f32.mrb[0].mxu0
        %v977 = vpop.f32.mrb[0].mxu0
        %v978 = vpop.f32.mrb[0].mxu0
        %979 = vdwg.mxu0
        %v996 = vunpack.c.l.b16 %v632
        %v997 = vunpack.c.l.b16 %v633
        %v998 = vunpack.c.l.b16 %v634
        %v999 = vunpack.c.l.b16 %v635
        %v1000 = vunpack.c.l.b16 %v636
        %v1001 = vunpack.c.l.b16 %v637
        %v1002 = vunpack.c.l.b16 %v638
        %v1003 = vunpack.c.l.b16 %v639
        %v1004 = vunpack.c.l.b16 %v640
        %v1005 = vunpack.c.l.b16 %v641
        %v1006 = vunpack.c.l.b16 %v642
        %v1007 = vunpack.c.l.b16 %v643
        %v1008 = vunpack.c.l.b16 %v644
        %v1009 = vunpack.c.l.b16 %v645
        %v1010 = vunpack.c.l.b16 %v646
        %v1011 = vunpack.c.l.b16 %v647
        %v1012 = vpack.c.b16 %v997, %v996
        %v1013 = vpack.c.b16 %v999, %v998
        %v1014 = vpack.c.b16 %v1001, %v1000
        %v1015 = vpack.c.b16 %v1003, %v1002
        %v1016 = vpack.c.b16 %v1005, %v1004
        %v1017 = vpack.c.b16 %v1007, %v1006
        %v1018 = vpack.c.b16 %v1009, %v1008
        %v1019 = vpack.c.b16 %v1011, %v1010
        %1028 = vmatprep.subr.bf16.mxu0 0
        %1029 = vmatpush1.bf16.msra.mxu0 %v1012
        %1030 = vmatprep.subr.bf16.mxu0 0
        %1031 = vmatpush1.bf16.msra.mxu0 %v1013
        %1032 = vmatprep.subr.bf16.mxu0 0
        %1033 = vmatpush1.bf16.msra.mxu0 %v1014
        %1034 = vmatprep.subr.bf16.mxu0 0
        %1035 = vmatpush1.bf16.msra.mxu0 %v1015
        %1036 = vmatprep.subr.bf16.mxu0 0
        %1037 = vmatpush1.bf16.msra.mxu0 %v1016
        %1038 = vmatprep.subr.bf16.mxu0 0
        %1039 = vmatpush1.bf16.msra.mxu0 %v1017
        %1040 = vmatprep.subr.bf16.mxu0 0
        %1041 = vmatpush1.bf16.msra.mxu0 %v1018
        %1042 = vmatprep.subr.bf16.mxu0 0
        %1043 = vmatpush1.bf16.msra.mxu0 %v1019
        %1044 = vmatprep.subr.bf16.mxu0 0
        %1045 = vmatpush1.bf16.msra.mxu0 0
        %1046 = vmatprep.subr.bf16.mxu0 0
        %1047 = vmatpush1.bf16.msra.mxu0 0
        %1048 = vmatprep.subr.bf16.mxu0 0
        %1049 = vmatpush1.bf16.msra.mxu0 0
        %1050 = vmatprep.subr.bf16.mxu0 0
        %1051 = vmatpush1.bf16.msra.mxu0 0
        %1052 = vmatprep.subr.bf16.mxu0 0
        %1053 = vmatpush1.bf16.msra.mxu0 0
        %1054 = vmatprep.subr.bf16.mxu0 0
        %1055 = vmatpush1.bf16.msra.mxu0 0
        %1056 = vmatprep.subr.bf16.mxu0 0
        %1057 = vmatpush1.bf16.msra.mxu0 0
        %1058 = vmatprep.subr.bf16.mxu0 0
        %1059 = vmatpush1.bf16.msra.mxu0 0
        %1060 = vmatprep.mubr.bf16.mxu0 0
        %1061 = vmatmul.mubr.bf16.gmra.mrb[0].mxu0 %v615
        %v1062 = vpop.f32.mrb[0].mxu0
        %v1063 = vadd.f32 %v839, %v1062
        %v1064 = vpop.f32.mrb[0].mxu0
        %v1065 = vpop.f32.mrb[0].mxu0
        %v1066 = vpop.f32.mrb[0].mxu0
        %1067 = vdwg.mxu0
        %v1084 = vunpack.c.l.b16 %v648
        %v1085 = vunpack.c.l.b16 %v649
        %v1086 = vunpack.c.l.b16 %v650
        %v1087 = vunpack.c.l.b16 %v651
        %v1088 = vunpack.c.l.b16 %v652
        %v1089 = vunpack.c.l.b16 %v653
        %v1090 = vunpack.c.l.b16 %v654
        %v1091 = vunpack.c.l.b16 %v655
        %v1092 = vunpack.c.l.b16 %v656
        %v1093 = vunpack.c.l.b16 %v657
        %v1094 = vunpack.c.l.b16 %v658
        %v1095 = vunpack.c.l.b16 %v659
        %v1096 = vunpack.c.l.b16 %v660
        %v1097 = vunpack.c.l.b16 %v661
        %v1098 = vunpack.c.l.b16 %v662
        %v1099 = vunpack.c.l.b16 %v663
        %v1100 = vpack.c.b16 %v1085, %v1084
        %v1101 = vpack.c.b16 %v1087, %v1086
        %v1102 = vpack.c.b16 %v1089, %v1088
        %v1103 = vpack.c.b16 %v1091, %v1090
        %v1104 = vpack.c.b16 %v1093, %v1092
        %v1105 = vpack.c.b16 %v1095, %v1094
        %v1106 = vpack.c.b16 %v1097, %v1096
        %v1107 = vpack.c.b16 %v1099, %v1098
        %1116 = vmatprep.subr.bf16.mxu0 0
        %1117 = vmatpush1.bf16.msra.mxu0 %v1100
        %1118 = vmatprep.subr.bf16.mxu0 0
        %1119 = vmatpush1.bf16.msra.mxu0 %v1101
        %1120 = vmatprep.subr.bf16.mxu0 0
        %1121 = vmatpush1.bf16.msra.mxu0 %v1102
        %1122 = vmatprep.subr.bf16.mxu0 0
        %1123 = vmatpush1.bf16.msra.mxu0 %v1103
        %1124 = vmatprep.subr.bf16.mxu0 0
        %1125 = vmatpush1.bf16.msra.mxu0 %v1104
        %1126 = vmatprep.subr.bf16.mxu0 0
        %1127 = vmatpush1.bf16.msra.mxu0 %v1105
        %1128 = vmatprep.subr.bf16.mxu0 0
        %1129 = vmatpush1.bf16.msra.mxu0 %v1106
        %1130 = vmatprep.subr.bf16.mxu0 0
        %1131 = vmatpush1.bf16.msra.mxu0 %v1107
        %1132 = vmatprep.subr.bf16.mxu0 0
        %1133 = vmatpush1.bf16.msra.mxu0 0
        %1134 = vmatprep.subr.bf16.mxu0 0
        %1135 = vmatpush1.bf16.msra.mxu0 0
        %1136 = vmatprep.subr.bf16.mxu0 0
        %1137 = vmatpush1.bf16.msra.mxu0 0
        %1138 = vmatprep.subr.bf16.mxu0 0
        %1139 = vmatpush1.bf16.msra.mxu0 0
        %1140 = vmatprep.subr.bf16.mxu0 0
        %1141 = vmatpush1.bf16.msra.mxu0 0
        %1142 = vmatprep.subr.bf16.mxu0 0
        %1143 = vmatpush1.bf16.msra.mxu0 0
        %1144 = vmatprep.subr.bf16.mxu0 0
        %1145 = vmatpush1.bf16.msra.mxu0 0
        %1146 = vmatprep.subr.bf16.mxu0 0
        %1147 = vmatpush1.bf16.msra.mxu0 0
        %1148 = vmatprep.mubr.bf16.mxu0 0
        %1149 = vmatmul.mubr.bf16.gmra.mrb[0].mxu0 %v615
        %v1150 = vpop.f32.mrb[0].mxu0
        %v1151 = vadd.f32 %v843, %v1150
        %v1152 = vpop.f32.mrb[0].mxu0
        %v1153 = vpop.f32.mrb[0].mxu0
        %v1154 = vpop.f32.mrb[0].mxu0
        %1155 = vdwg.mxu0
        %v1172 = vunpack.c.l.b16 %v664
        %v1173 = vunpack.c.l.b16 %v665
        %v1174 = vunpack.c.l.b16 %v666
        %v1175 = vunpack.c.l.b16 %v667
        %v1176 = vunpack.c.l.b16 %v668
        %v1177 = vunpack.c.l.b16 %v669
        %v1178 = vunpack.c.l.b16 %v670
        %v1179 = vunpack.c.l.b16 %v671
        %v1180 = vunpack.c.l.b16 %v672
        %v1181 = vunpack.c.l.b16 %v673
        %v1182 = vunpack.c.l.b16 %v674
        %v1183 = vunpack.c.l.b16 %v675
        %v1184 = vunpack.c.l.b16 %v676
        %v1185 = vunpack.c.l.b16 %v677
        %v1186 = vunpack.c.l.b16 %v678
        %v1187 = vunpack.c.l.b16 %v679
        %v1188 = vpack.c.b16 %v1173, %v1172
        %v1189 = vpack.c.b16 %v1175, %v1174
        %v1190 = vpack.c.b16 %v1177, %v1176
        %v1191 = vpack.c.b16 %v1179, %v1178
        %v1192 = vpack.c.b16 %v1181, %v1180
        %v1193 = vpack.c.b16 %v1183, %v1182
        %v1194 = vpack.c.b16 %v1185, %v1184
        %v1195 = vpack.c.b16 %v1187, %v1186
        %1204 = vmatprep.subr.bf16.mxu0 0
        %1205 = vmatpush1.bf16.msra.mxu0 %v1188
        %1206 = vmatprep.subr.bf16.mxu0 0
        %1207 = vmatpush1.bf16.msra.mxu0 %v1189
        %1208 = vmatprep.subr.bf16.mxu0 0
        %1209 = vmatpush1.bf16.msra.mxu0 %v1190
        %1210 = vmatprep.subr.bf16.mxu0 0
        %1211 = vmatpush1.bf16.msra.mxu0 %v1191
        %1212 = vmatprep.subr.bf16.mxu0 0
        %1213 = vmatpush1.bf16.msra.mxu0 %v1192
        %1214 = vmatprep.subr.bf16.mxu0 0
        %1215 = vmatpush1.bf16.msra.mxu0 %v1193
        %1216 = vmatprep.subr.bf16.mxu0 0
        %1217 = vmatpush1.bf16.msra.mxu0 %v1194
        %1218 = vmatprep.subr.bf16.mxu0 0
        %1219 = vmatpush1.bf16.msra.mxu0 %v1195
        %1220 = vmatprep.subr.bf16.mxu0 0
        %1221 = vmatpush1.bf16.msra.mxu0 0
        %1222 = vmatprep.subr.bf16.mxu0 0
        %1223 = vmatpush1.bf16.msra.mxu0 0
        %1224 = vmatprep.subr.bf16.mxu0 0
        %1225 = vmatpush1.bf16.msra.mxu0 0
        %1226 = vmatprep.subr.bf16.mxu0 0
        %1227 = vmatpush1.bf16.msra.mxu0 0
        %1228 = vmatprep.subr.bf16.mxu0 0
        %1229 = vmatpush1.bf16.msra.mxu0 0
        %1230 = vmatprep.subr.bf16.mxu0 0
        %1231 = vmatpush1.bf16.msra.mxu0 0
        %1232 = vmatprep.subr.bf16.mxu0 0
        %1233 = vmatpush1.bf16.msra.mxu0 0
        %1234 = vmatprep.subr.bf16.mxu0 0
        %1235 = vmatpush1.bf16.msra.mxu0 0
        %1236 = vmatprep.mubr.bf16.mxu0 0
        %1237 = vmatmul.mubr.bf16.gmra.mrb[0].mxu0 %v615
        %v1238 = vpop.f32.mrb[0].mxu0
        %v1239 = vadd.f32 %v847, %v1238
        %v1240 = vpop.f32.mrb[0].mxu0
        %v1241 = vpop.f32.mrb[0].mxu0
        %v1242 = vpop.f32.mrb[0].mxu0
        %1243 = vdwg.mxu0
        %v1260 = vunpack.c.l.b16 %v680
        %v1261 = vunpack.c.l.b16 %v681
        %v1262 = vunpack.c.l.b16 %v682
        %v1263 = vunpack.c.l.b16 %v683
        %v1264 = vunpack.c.l.b16 %v684
        %v1265 = vunpack.c.l.b16 %v685
        %v1266 = vunpack.c.l.b16 %v686
        %v1267 = vunpack.c.l.b16 %v687
        %v1268 = vunpack.c.l.b16 %v688
        %v1269 = vunpack.c.l.b16 %v689
        %v1270 = vunpack.c.l.b16 %v690
        %v1271 = vunpack.c.l.b16 %v691
        %v1272 = vunpack.c.l.b16 %v692
        %v1273 = vunpack.c.l.b16 %v693
        %v1274 = vunpack.c.l.b16 %v694
        %v1275 = vunpack.c.l.b16 %v695
        %v1276 = vpack.c.b16 %v1261, %v1260
        %v1277 = vpack.c.b16 %v1263, %v1262
        %v1278 = vpack.c.b16 %v1265, %v1264
        %v1279 = vpack.c.b16 %v1267, %v1266
        %v1280 = vpack.c.b16 %v1269, %v1268
        %v1281 = vpack.c.b16 %v1271, %v1270
        %v1282 = vpack.c.b16 %v1273, %v1272
        %v1283 = vpack.c.b16 %v1275, %v1274
        %1292 = vmatprep.subr.bf16.mxu0 0
        %1293 = vmatpush1.bf16.msra.mxu0 %v1276
        %1294 = vmatprep.subr.bf16.mxu0 0
        %1295 = vmatpush1.bf16.msra.mxu0 %v1277
        %1296 = vmatprep.subr.bf16.mxu0 0
        %1297 = vmatpush1.bf16.msra.mxu0 %v1278
        %1298 = vmatprep.subr.bf16.mxu0 0
        %1299 = vmatpush1.bf16.msra.mxu0 %v1279
        %1300 = vmatprep.subr.bf16.mxu0 0
        %1301 = vmatpush1.bf16.msra.mxu0 %v1280
        %1302 = vmatprep.subr.bf16.mxu0 0
        %1303 = vmatpush1.bf16.msra.mxu0 %v1281
        %1304 = vmatprep.subr.bf16.mxu0 0
        %1305 = vmatpush1.bf16.msra.mxu0 %v1282
        %1306 = vmatprep.subr.bf16.mxu0 0
        %1307 = vmatpush1.bf16.msra.mxu0 %v1283
        %1308 = vmatprep.subr.bf16.mxu0 0
        %1309 = vmatpush1.bf16.msra.mxu0 0
        %1310 = vmatprep.subr.bf16.mxu0 0
        %1311 = vmatpush1.bf16.msra.mxu0 0
        %1312 = vmatprep.subr.bf16.mxu0 0
        %1313 = vmatpush1.bf16.msra.mxu0 0
        %1314 = vmatprep.subr.bf16.mxu0 0
        %1315 = vmatpush1.bf16.msra.mxu0 0
        %1316 = vmatprep.subr.bf16.mxu0 0
        %1317 = vmatpush1.bf16.msra.mxu0 0
        %1318 = vmatprep.subr.bf16.mxu0 0
        %1319 = vmatpush1.bf16.msra.mxu0 0
        %1320 = vmatprep.subr.bf16.mxu0 0
        %1321 = vmatpush1.bf16.msra.mxu0 0
        %1322 = vmatprep.subr.bf16.mxu0 0
        %1323 = vmatpush1.bf16.msra.mxu0 0
        %1324 = vmatprep.mubr.bf16.mxu0 0
        %1325 = vmatmul.mubr.bf16.gmra.mrb[0].mxu0 %v615
        %v1326 = vpop.f32.mrb[0].mxu0
        %v1327 = vadd.f32 %v851, %v1326
        %v1328 = vpop.f32.mrb[0].mxu0
        %v1329 = vpop.f32.mrb[0].mxu0
        %v1330 = vpop.f32.mrb[0].mxu0
        %1331 = vdwg.mxu0
        %v1348 = vunpack.c.l.b16 %v696
        %v1349 = vunpack.c.l.b16 %v697
        %v1350 = vunpack.c.l.b16 %v698
        %v1351 = vunpack.c.l.b16 %v699
        %v1352 = vunpack.c.l.b16 %v700
        %v1353 = vunpack.c.l.b16 %v701
        %v1354 = vunpack.c.l.b16 %v702
        %v1355 = vunpack.c.l.b16 %v703
        %v1356 = vunpack.c.l.b16 %v704
        %v1357 = vunpack.c.l.b16 %v705
        %v1358 = vunpack.c.l.b16 %v706
        %v1359 = vunpack.c.l.b16 %v707
        %v1360 = vunpack.c.l.b16 %v708
        %v1361 = vunpack.c.l.b16 %v709
        %v1362 = vunpack.c.l.b16 %v710
        %v1363 = vunpack.c.l.b16 %v711
        %v1364 = vpack.c.b16 %v1349, %v1348
        %v1365 = vpack.c.b16 %v1351, %v1350
        %v1366 = vpack.c.b16 %v1353, %v1352
        %v1367 = vpack.c.b16 %v1355, %v1354
        %v1368 = vpack.c.b16 %v1357, %v1356
        %v1369 = vpack.c.b16 %v1359, %v1358
        %v1370 = vpack.c.b16 %v1361, %v1360
        %v1371 = vpack.c.b16 %v1363, %v1362
        %1380 = vmatprep.subr.bf16.mxu0 0
        %1381 = vmatpush1.bf16.msra.mxu0 %v1364
        %1382 = vmatprep.subr.bf16.mxu0 0
        %1383 = vmatpush1.bf16.msra.mxu0 %v1365
        %1384 = vmatprep.subr.bf16.mxu0 0
        %1385 = vmatpush1.bf16.msra.mxu0 %v1366
        %1386 = vmatprep.subr.bf16.mxu0 0
        %1387 = vmatpush1.bf16.msra.mxu0 %v1367
        %1388 = vmatprep.subr.bf16.mxu0 0
        %1389 = vmatpush1.bf16.msra.mxu0 %v1368
        %1390 = vmatprep.subr.bf16.mxu0 0
        %1391 = vmatpush1.bf16.msra.mxu0 %v1369
        %1392 = vmatprep.subr.bf16.mxu0 0
        %1393 = vmatpush1.bf16.msra.mxu0 %v1370
        %1394 = vmatprep.subr.bf16.mxu0 0
        %1395 = vmatpush1.bf16.msra.mxu0 %v1371
        %1396 = vmatprep.subr.bf16.mxu0 0
        %1397 = vmatpush1.bf16.msra.mxu0 0
        %1398 = vmatprep.subr.bf16.mxu0 0
        %1399 = vmatpush1.bf16.msra.mxu0 0
        %1400 = vmatprep.subr.bf16.mxu0 0
        %1401 = vmatpush1.bf16.msra.mxu0 0
        %1402 = vmatprep.subr.bf16.mxu0 0
        %1403 = vmatpush1.bf16.msra.mxu0 0
        %1404 = vmatprep.subr.bf16.mxu0 0
        %1405 = vmatpush1.bf16.msra.mxu0 0
        %1406 = vmatprep.subr.bf16.mxu0 0
        %1407 = vmatpush1.bf16.msra.mxu0 0
        %1408 = vmatprep.subr.bf16.mxu0 0
        %1409 = vmatpush1.bf16.msra.mxu0 0
        %1410 = vmatprep.subr.bf16.mxu0 0
        %1411 = vmatpush1.bf16.msra.mxu0 0
        %1412 = vmatprep.mubr.bf16.mxu0 0
        %1413 = vmatmul.mubr.bf16.gmra.mrb[0].mxu0 %v615
        %v1414 = vpop.f32.mrb[0].mxu0
        %v1415 = vadd.f32 %v855, %v1414
        %v1416 = vpop.f32.mrb[0].mxu0
        %v1417 = vpop.f32.mrb[0].mxu0
        %v1418 = vpop.f32.mrb[0].mxu0
        %1419 = vdwg.mxu0
        %v1436 = vunpack.c.l.b16 %v712
        %v1437 = vunpack.c.l.b16 %v713
        %v1438 = vunpack.c.l.b16 %v714
        %v1439 = vunpack.c.l.b16 %v715
        %v1440 = vunpack.c.l.b16 %v716
        %v1441 = vunpack.c.l.b16 %v717
        %v1442 = vunpack.c.l.b16 %v718
        %v1443 = vunpack.c.l.b16 %v719
        %v1444 = vunpack.c.l.b16 %v720
        %v1445 = vunpack.c.l.b16 %v721
        %v1446 = vunpack.c.l.b16 %v722
        %v1447 = vunpack.c.l.b16 %v723
        %v1448 = vunpack.c.l.b16 %v724
        %v1449 = vunpack.c.l.b16 %v725
        %v1450 = vunpack.c.l.b16 %v726
        %v1451 = vunpack.c.l.b16 %v727
        %v1452 = vpack.c.b16 %v1437, %v1436
        %v1453 = vpack.c.b16 %v1439, %v1438
        %v1454 = vpack.c.b16 %v1441, %v1440
        %v1455 = vpack.c.b16 %v1443, %v1442
        %v1456 = vpack.c.b16 %v1445, %v1444
        %v1457 = vpack.c.b16 %v1447, %v1446
        %v1458 = vpack.c.b16 %v1449, %v1448
        %v1459 = vpack.c.b16 %v1451, %v1450
        %1468 = vmatprep.subr.bf16.mxu0 0
        %1469 = vmatpush1.bf16.msra.mxu0 %v1452
        %1470 = vmatprep.subr.bf16.mxu0 0
        %1471 = vmatpush1.bf16.msra.mxu0 %v1453
        %1472 = vmatprep.subr.bf16.mxu0 0
        %1473 = vmatpush1.bf16.msra.mxu0 %v1454
        %1474 = vmatprep.subr.bf16.mxu0 0
        %1475 = vmatpush1.bf16.msra.mxu0 %v1455
        %1476 = vmatprep.subr.bf16.mxu0 0
        %1477 = vmatpush1.bf16.msra.mxu0 %v1456
        %1478 = vmatprep.subr.bf16.mxu0 0
        %1479 = vmatpush1.bf16.msra.mxu0 %v1457
        %1480 = vmatprep.subr.bf16.mxu0 0
        %1481 = vmatpush1.bf16.msra.mxu0 %v1458
        %1482 = vmatprep.subr.bf16.mxu0 0
        %1483 = vmatpush1.bf16.msra.mxu0 %v1459
        %1484 = vmatprep.subr.bf16.mxu0 0
        %1485 = vmatpush1.bf16.msra.mxu0 0
        %1486 = vmatprep.subr.bf16.mxu0 0
        %1487 = vmatpush1.bf16.msra.mxu0 0
        %1488 = vmatprep.subr.bf16.mxu0 0
        %1489 = vmatpush1.bf16.msra.mxu0 0
        %1490 = vmatprep.subr.bf16.mxu0 0
        %1491 = vmatpush1.bf16.msra.mxu0 0
        %1492 = vmatprep.subr.bf16.mxu0 0
        %1493 = vmatpush1.bf16.msra.mxu0 0
        %1494 = vmatprep.subr.bf16.mxu0 0
        %1495 = vmatpush1.bf16.msra.mxu0 0
        %1496 = vmatprep.subr.bf16.mxu0 0
        %1497 = vmatpush1.bf16.msra.mxu0 0
        %1498 = vmatprep.subr.bf16.mxu0 0
        %1499 = vmatpush1.bf16.msra.mxu0 0
        %1500 = vmatprep.mubr.bf16.mxu0 0
        %1501 = vmatmul.mubr.bf16.gmra.mrb[0].mxu0 %v615
        %v1502 = vpop.f32.mrb[0].mxu0
        %v1503 = vadd.f32 %v859, %v1502
        %v1504 = vpop.f32.mrb[0].mxu0
        %v1505 = vpop.f32.mrb[0].mxu0
        %v1506 = vpop.f32.mrb[0].mxu0
        %1507 = vdwg.mxu0
        %v1524 = vunpack.c.l.b16 %v728
        %v1525 = vunpack.c.l.b16 %v729
        %v1526 = vunpack.c.l.b16 %v730
        %v1527 = vunpack.c.l.b16 %v731
        %v1528 = vunpack.c.l.b16 %v732
        %v1529 = vunpack.c.l.b16 %v733
        %v1530 = vunpack.c.l.b16 %v734
        %v1531 = vunpack.c.l.b16 %v735
        %v1532 = vunpack.c.l.b16 %v736
        %v1533 = vunpack.c.l.b16 %v737
        %v1534 = vunpack.c.l.b16 %v738
        %v1535 = vunpack.c.l.b16 %v739
        %v1536 = vunpack.c.l.b16 %v740
        %v1537 = vunpack.c.l.b16 %v741
        %v1538 = vunpack.c.l.b16 %v742
        %v1539 = vunpack.c.l.b16 %v743
        %v1540 = vpack.c.b16 %v1525, %v1524
        %v1541 = vpack.c.b16 %v1527, %v1526
        %v1542 = vpack.c.b16 %v1529, %v1528
        %v1543 = vpack.c.b16 %v1531, %v1530
        %v1544 = vpack.c.b16 %v1533, %v1532
        %v1545 = vpack.c.b16 %v1535, %v1534
        %v1546 = vpack.c.b16 %v1537, %v1536
        %v1547 = vpack.c.b16 %v1539, %v1538
        %1556 = vmatprep.subr.bf16.mxu0 0
        %1557 = vmatpush1.bf16.msra.mxu0 %v1540
        %1558 = vmatprep.subr.bf16.mxu0 0
        %1559 = vmatpush1.bf16.msra.mxu0 %v1541
        %1560 = vmatprep.subr.bf16.mxu0 0
        %1561 = vmatpush1.bf16.msra.mxu0 %v1542
        %1562 = vmatprep.subr.bf16.mxu0 0
        %1563 = vmatpush1.bf16.msra.mxu0 %v1543
        %1564 = vmatprep.subr.bf16.mxu0 0
        %1565 = vmatpush1.bf16.msra.mxu0 %v1544
        %1566 = vmatprep.subr.bf16.mxu0 0
        %1567 = vmatpush1.bf16.msra.mxu0 %v1545
        %1568 = vmatprep.subr.bf16.mxu0 0
        %1569 = vmatpush1.bf16.msra.mxu0 %v1546
        %1570 = vmatprep.subr.bf16.mxu0 0
        %1571 = vmatpush1.bf16.msra.mxu0 %v1547
        %1572 = vmatprep.subr.bf16.mxu0 0
        %1573 = vmatpush1.bf16.msra.mxu0 0
        %1574 = vmatprep.subr.bf16.mxu0 0
        %1575 = vmatpush1.bf16.msra.mxu0 0
        %1576 = vmatprep.subr.bf16.mxu0 0
        %1577 = vmatpush1.bf16.msra.mxu0 0
        %1578 = vmatprep.subr.bf16.mxu0 0
        %1579 = vmatpush1.bf16.msra.mxu0 0
        %1580 = vmatprep.subr.bf16.mxu0 0
        %1581 = vmatpush1.bf16.msra.mxu0 0
        %1582 = vmatprep.subr.bf16.mxu0 0
        %1583 = vmatpush1.bf16.msra.mxu0 0
        %1584 = vmatprep.subr.bf16.mxu0 0
        %1585 = vmatpush1.bf16.msra.mxu0 0
        %1586 = vmatprep.subr.bf16.mxu0 0
        %1587 = vmatpush1.bf16.msra.mxu0 0
        %1588 = vmatprep.mubr.bf16.mxu0 0
        %1589 = vmatmul.mubr.bf16.gmra.mrb[0].mxu0 %v615
        %v1590 = vpop.f32.mrb[0].mxu0
        %v1591 = vadd.f32 %v863, %v1590
        %v1592 = vpop.f32.mrb[0].mxu0
        %v1593 = vpop.f32.mrb[0].mxu0
        %v1594 = vpop.f32.mrb[0].mxu0
        %1595 = vdwg.mxu0
        %v1612 = vunpack.c.l.b16 %v744
        %v1613 = vunpack.c.l.b16 %v745
        %v1614 = vunpack.c.l.b16 %v746
        %v1615 = vunpack.c.l.b16 %v747
        %v1616 = vunpack.c.l.b16 %v748
        %v1617 = vunpack.c.l.b16 %v749
        %v1618 = vunpack.c.l.b16 %v750
        %v1619 = vunpack.c.l.b16 %v751
        %v1620 = vunpack.c.l.b16 %v752
        %v1621 = vunpack.c.l.b16 %v753
        %v1622 = vunpack.c.l.b16 %v754
        %v1623 = vunpack.c.l.b16 %v755
        %v1624 = vunpack.c.l.b16 %v756
        %v1625 = vunpack.c.l.b16 %v757
        %v1626 = vunpack.c.l.b16 %v758
        %v1627 = vunpack.c.l.b16 %v759
        %v1628 = vpack.c.b16 %v1613, %v1612
        %v1629 = vpack.c.b16 %v1615, %v1614
        %v1630 = vpack.c.b16 %v1617, %v1616
        %v1631 = vpack.c.b16 %v1619, %v1618
        %v1632 = vpack.c.b16 %v1621, %v1620
        %v1633 = vpack.c.b16 %v1623, %v1622
        %v1634 = vpack.c.b16 %v1625, %v1624
        %v1635 = vpack.c.b16 %v1627, %v1626
        %1644 = vmatprep.subr.bf16.mxu0 0
        %1645 = vmatpush1.bf16.msra.mxu0 %v1628
        %1646 = vmatprep.subr.bf16.mxu0 0
        %1647 = vmatpush1.bf16.msra.mxu0 %v1629
        %1648 = vmatprep.subr.bf16.mxu0 0
        %1649 = vmatpush1.bf16.msra.mxu0 %v1630
        %1650 = vmatprep.subr.bf16.mxu0 0
        %1651 = vmatpush1.bf16.msra.mxu0 %v1631
        %1652 = vmatprep.subr.bf16.mxu0 0
        %1653 = vmatpush1.bf16.msra.mxu0 %v1632
        %1654 = vmatprep.subr.bf16.mxu0 0
        %1655 = vmatpush1.bf16.msra.mxu0 %v1633
        %1656 = vmatprep.subr.bf16.mxu0 0
        %1657 = vmatpush1.bf16.msra.mxu0 %v1634
        %1658 = vmatprep.subr.bf16.mxu0 0
        %1659 = vmatpush1.bf16.msra.mxu0 %v1635
        %1660 = vmatprep.subr.bf16.mxu0 0
        %1661 = vmatpush1.bf16.msra.mxu0 0
        %1662 = vmatprep.subr.bf16.mxu0 0
        %1663 = vmatpush1.bf16.msra.mxu0 0
        %1664 = vmatprep.subr.bf16.mxu0 0
        %1665 = vmatpush1.bf16.msra.mxu0 0
        %1666 = vmatprep.subr.bf16.mxu0 0
        %1667 = vmatpush1.bf16.msra.mxu0 0
        %1668 = vmatprep.subr.bf16.mxu0 0
        %1669 = vmatpush1.bf16.msra.mxu0 0
        %1670 = vmatprep.subr.bf16.mxu0 0
        %1671 = vmatpush1.bf16.msra.mxu0 0
        %1672 = vmatprep.subr.bf16.mxu0 0
        %1673 = vmatpush1.bf16.msra.mxu0 0
        %1674 = vmatprep.subr.bf16.mxu0 0
        %1675 = vmatpush1.bf16.msra.mxu0 0
        %1676 = vmatprep.mubr.bf16.mxu0 0
        %1677 = vmatmul.mubr.bf16.gmra.mrb[0].mxu0 %v615
        %v1678 = vpop.f32.mrb[0].mxu0
        %v1679 = vadd.f32 %v867, %v1678
        %v1680 = vpop.f32.mrb[0].mxu0
        %v1681 = vpop.f32.mrb[0].mxu0
        %v1682 = vpop.f32.mrb[0].mxu0
        %1683 = vdwg.mxu0
        %v1700 = vunpack.c.l.b16 %v760
        %v1701 = vunpack.c.l.b16 %v761
        %v1702 = vunpack.c.l.b16 %v762
        %v1703 = vunpack.c.l.b16 %v763
        %v1704 = vunpack.c.l.b16 %v764
        %v1705 = vunpack.c.l.b16 %v765
        %v1706 = vunpack.c.l.b16 %v766
        %v1707 = vunpack.c.l.b16 %v767
        %v1708 = vunpack.c.l.b16 %v768
        %v1709 = vunpack.c.l.b16 %v769
        %v1710 = vunpack.c.l.b16 %v770
        %v1711 = vunpack.c.l.b16 %v771
        %v1712 = vunpack.c.l.b16 %v772
        %v1713 = vunpack.c.l.b16 %v773
        %v1714 = vunpack.c.l.b16 %v774
        %v1715 = vunpack.c.l.b16 %v775
        %v1716 = vpack.c.b16 %v1701, %v1700
        %v1717 = vpack.c.b16 %v1703, %v1702
        %v1718 = vpack.c.b16 %v1705, %v1704
        %v1719 = vpack.c.b16 %v1707, %v1706
        %v1720 = vpack.c.b16 %v1709, %v1708
        %v1721 = vpack.c.b16 %v1711, %v1710
        %v1722 = vpack.c.b16 %v1713, %v1712
        %v1723 = vpack.c.b16 %v1715, %v1714
        %1732 = vmatprep.subr.bf16.mxu0 0
        %1733 = vmatpush1.bf16.msra.mxu0 %v1716
        %1734 = vmatprep.subr.bf16.mxu0 0
        %1735 = vmatpush1.bf16.msra.mxu0 %v1717
        %1736 = vmatprep.subr.bf16.mxu0 0
        %1737 = vmatpush1.bf16.msra.mxu0 %v1718
        %1738 = vmatprep.subr.bf16.mxu0 0
        %1739 = vmatpush1.bf16.msra.mxu0 %v1719
        %1740 = vmatprep.subr.bf16.mxu0 0
        %1741 = vmatpush1.bf16.msra.mxu0 %v1720
        %1742 = vmatprep.subr.bf16.mxu0 0
        %1743 = vmatpush1.bf16.msra.mxu0 %v1721
        %1744 = vmatprep.subr.bf16.mxu0 0
        %1745 = vmatpush1.bf16.msra.mxu0 %v1722
        %1746 = vmatprep.subr.bf16.mxu0 0
        %1747 = vmatpush1.bf16.msra.mxu0 %v1723
        %1748 = vmatprep.subr.bf16.mxu0 0
        %1749 = vmatpush1.bf16.msra.mxu0 0
        %1750 = vmatprep.subr.bf16.mxu0 0
        %1751 = vmatpush1.bf16.msra.mxu0 0
        %1752 = vmatprep.subr.bf16.mxu0 0
        %1753 = vmatpush1.bf16.msra.mxu0 0
        %1754 = vmatprep.subr.bf16.mxu0 0
        %1755 = vmatpush1.bf16.msra.mxu0 0
        %1756 = vmatprep.subr.bf16.mxu0 0
        %1757 = vmatpush1.bf16.msra.mxu0 0
        %1758 = vmatprep.subr.bf16.mxu0 0
        %1759 = vmatpush1.bf16.msra.mxu0 0
        %1760 = vmatprep.subr.bf16.mxu0 0
        %1761 = vmatpush1.bf16.msra.mxu0 0
        %1762 = vmatprep.subr.bf16.mxu0 0
        %1763 = vmatpush1.bf16.msra.mxu0 0
        %1764 = vmatprep.mubr.bf16.mxu0 0
        %1765 = vmatmul.mubr.bf16.gmra.mrb[0].mxu0 %v615
        %v1766 = vpop.f32.mrb[0].mxu0
        %v1767 = vadd.f32 %v871, %v1766
        %v1768 = vpop.f32.mrb[0].mxu0
        %v1769 = vpop.f32.mrb[0].mxu0
        %v1770 = vpop.f32.mrb[0].mxu0
        %1771 = vdwg.mxu0
        %v1788 = vunpack.c.l.b16 %v776
        %v1789 = vunpack.c.l.b16 %v777
        %v1790 = vunpack.c.l.b16 %v778
        %v1791 = vunpack.c.l.b16 %v779
        %v1792 = vunpack.c.l.b16 %v780
        %v1793 = vunpack.c.l.b16 %v781
        %v1794 = vunpack.c.l.b16 %v782
        %v1795 = vunpack.c.l.b16 %v783
        %v1796 = vunpack.c.l.b16 %v784
        %v1797 = vunpack.c.l.b16 %v785
        %v1798 = vunpack.c.l.b16 %v786
        %v1799 = vunpack.c.l.b16 %v787
        %v1800 = vunpack.c.l.b16 %v788
        %v1801 = vunpack.c.l.b16 %v789
        %v1802 = vunpack.c.l.b16 %v790
        %v1803 = vunpack.c.l.b16 %v791
        %v1804 = vpack.c.b16 %v1789, %v1788
        %v1805 = vpack.c.b16 %v1791, %v1790
        %v1806 = vpack.c.b16 %v1793, %v1792
        %v1807 = vpack.c.b16 %v1795, %v1794
        %v1808 = vpack.c.b16 %v1797, %v1796
        %v1809 = vpack.c.b16 %v1799, %v1798
        %v1810 = vpack.c.b16 %v1801, %v1800
        %v1811 = vpack.c.b16 %v1803, %v1802
        %1820 = vmatprep.subr.bf16.mxu0 0
        %1821 = vmatpush1.bf16.msra.mxu0 %v1804
        %1822 = vmatprep.subr.bf16.mxu0 0
        %1823 = vmatpush1.bf16.msra.mxu0 %v1805
        %1824 = vmatprep.subr.bf16.mxu0 0
        %1825 = vmatpush1.bf16.msra.mxu0 %v1806
        %1826 = vmatprep.subr.bf16.mxu0 0
        %1827 = vmatpush1.bf16.msra.mxu0 %v1807
        %1828 = vmatprep.subr.bf16.mxu0 0
        %1829 = vmatpush1.bf16.msra.mxu0 %v1808
        %1830 = vmatprep.subr.bf16.mxu0 0
        %1831 = vmatpush1.bf16.msra.mxu0 %v1809
        %1832 = vmatprep.subr.bf16.mxu0 0
        %1833 = vmatpush1.bf16.msra.mxu0 %v1810
        %1834 = vmatprep.subr.bf16.mxu0 0
        %1835 = vmatpush1.bf16.msra.mxu0 %v1811
        %1836 = vmatprep.subr.bf16.mxu0 0
        %1837 = vmatpush1.bf16.msra.mxu0 0
        %1838 = vmatprep.subr.bf16.mxu0 0
        %1839 = vmatpush1.bf16.msra.mxu0 0
        %1840 = vmatprep.subr.bf16.mxu0 0
        %1841 = vmatpush1.bf16.msra.mxu0 0
        %1842 = vmatprep.subr.bf16.mxu0 0
        %1843 = vmatpush1.bf16.msra.mxu0 0
        %1844 = vmatprep.subr.bf16.mxu0 0
        %1845 = vmatpush1.bf16.msra.mxu0 0
        %1846 = vmatprep.subr.bf16.mxu0 0
        %1847 = vmatpush1.bf16.msra.mxu0 0
        %1848 = vmatprep.subr.bf16.mxu0 0
        %1849 = vmatpush1.bf16.msra.mxu0 0
        %1850 = vmatprep.subr.bf16.mxu0 0
        %1851 = vmatpush1.bf16.msra.mxu0 0
        %1852 = vmatprep.mubr.bf16.mxu0 0
        %1853 = vmatmul.mubr.bf16.gmra.mrb[0].mxu0 %v615
        %v1854 = vpop.f32.mrb[0].mxu0
        %v1855 = vadd.f32 %v875, %v1854
        %v1856 = vpop.f32.mrb[0].mxu0
        %v1857 = vpop.f32.mrb[0].mxu0
        %v1858 = vpop.f32.mrb[0].mxu0
        %1859 = vdwg.mxu0
        %v1876 = vunpack.c.l.b16 %v792
        %v1877 = vunpack.c.l.b16 %v793
        %v1878 = vunpack.c.l.b16 %v794
        %v1879 = vunpack.c.l.b16 %v795
        %v1880 = vunpack.c.l.b16 %v796
        %v1881 = vunpack.c.l.b16 %v797
        %v1882 = vunpack.c.l.b16 %v798
        %v1883 = vunpack.c.l.b16 %v799
        %v1884 = vunpack.c.l.b16 %v800
        %v1885 = vunpack.c.l.b16 %v801
        %v1886 = vunpack.c.l.b16 %v802
        %v1887 = vunpack.c.l.b16 %v803
        %v1888 = vunpack.c.l.b16 %v804
        %v1889 = vunpack.c.l.b16 %v805
        %v1890 = vunpack.c.l.b16 %v806
        %v1891 = vunpack.c.l.b16 %v807
        %v1892 = vpack.c.b16 %v1877, %v1876
        %v1893 = vpack.c.b16 %v1879, %v1878
        %v1894 = vpack.c.b16 %v1881, %v1880
        %v1895 = vpack.c.b16 %v1883, %v1882
        %v1896 = vpack.c.b16 %v1885, %v1884
        %v1897 = vpack.c.b16 %v1887, %v1886
        %v1898 = vpack.c.b16 %v1889, %v1888
        %v1899 = vpack.c.b16 %v1891, %v1890
        %1908 = vmatprep.subr.bf16.mxu0 0
        %1909 = vmatpush1.bf16.msra.mxu0 %v1892
        %1910 = vmatprep.subr.bf16.mxu0 0
        %1911 = vmatpush1.bf16.msra.mxu0 %v1893
        %1912 = vmatprep.subr.bf16.mxu0 0
        %1913 = vmatpush1.bf16.msra.mxu0 %v1894
        %1914 = vmatprep.subr.bf16.mxu0 0
        %1915 = vmatpush1.bf16.msra.mxu0 %v1895
        %1916 = vmatprep.subr.bf16.mxu0 0
        %1917 = vmatpush1.bf16.msra.mxu0 %v1896
        %1918 = vmatprep.subr.bf16.mxu0 0
        %1919 = vmatpush1.bf16.msra.mxu0 %v1897
        %1920 = vmatprep.subr.bf16.mxu0 0
        %1921 = vmatpush1.bf16.msra.mxu0 %v1898
        %1922 = vmatprep.subr.bf16.mxu0 0
        %1923 = vmatpush1.bf16.msra.mxu0 %v1899
        %1924 = vmatprep.subr.bf16.mxu0 0
        %1925 = vmatpush1.bf16.msra.mxu0 0
        %1926 = vmatprep.subr.bf16.mxu0 0
        %1927 = vmatpush1.bf16.msra.mxu0 0
        %1928 = vmatprep.subr.bf16.mxu0 0
        %1929 = vmatpush1.bf16.msra.mxu0 0
        %1930 = vmatprep.subr.bf16.mxu0 0
        %1931 = vmatpush1.bf16.msra.mxu0 0
        %1932 = vmatprep.subr.bf16.mxu0 0
        %1933 = vmatpush1.bf16.msra.mxu0 0
        %1934 = vmatprep.subr.bf16.mxu0 0
        %1935 = vmatpush1.bf16.msra.mxu0 0
        %1936 = vmatprep.subr.bf16.mxu0 0
        %1937 = vmatpush1.bf16.msra.mxu0 0
        %1938 = vmatprep.subr.bf16.mxu0 0
        %1939 = vmatpush1.bf16.msra.mxu0 0
        %1940 = vmatprep.mubr.bf16.mxu0 0
        %1941 = vmatmul.mubr.bf16.gmra.mrb[0].mxu0 %v615
        %v1942 = vpop.f32.mrb[0].mxu0
        %v1943 = vadd.f32 %v879, %v1942
        %v1944 = vpop.f32.mrb[0].mxu0
        %v1945 = vpop.f32.mrb[0].mxu0
        %v1946 = vpop.f32.mrb[0].mxu0
        %1947 = vdwg.mxu0
        %v1948 = vpack.c.bf16 %v975, %v975
        %v1949 = vpack.c.bf16 %v1063, %v1063
        %v1950 = vpack.c.bf16 %v1151, %v1151
        %v1951 = vpack.c.bf16 %v1239, %v1239
        %v1952 = vpack.c.bf16 %v1327, %v1327
        %v1953 = vpack.c.bf16 %v1415, %v1415
        %v1954 = vpack.c.bf16 %v1503, %v1503
        %v1955 = vpack.c.bf16 %v1591, %v1591
        %vm1956 = vcmask 261120
        %v1958 = vsel %vm1956, %v1948, 0
        %v1961 = vsel %vm1956, %v1952, 0
        %1963 = vmatprep.subr.bf16.mxu0 0
        %1964 = vmatpush1.bf16.xpose.msra.mxu0 %v1961
        %1965 = vmatprep.subr.bf16.mxu0 0
        %1966 = vmatpush1.bf16.xpose.msra.mxu0 0
        %1967 = vmatprep.subr.bf16.mxu0 0
        %1968 = vmatpush1.bf16.xpose.msra.mxu0 0
        %1969 = vmatprep.subr.bf16.mxu0 0
        %1970 = vmatpush1.bf16.xpose.msra.mxu0 0
        %1971 = vmatprep.subr.bf16.mxu0 0
        %1972 = vmatpush1.bf16.xpose.msra.mxu0 0
        %1973 = vmatprep.subr.bf16.mxu0 0
        %1974 = vmatpush1.bf16.xpose.msra.mxu0 0
        %1975 = vmatprep.subr.bf16.mxu0 0
        %1976 = vmatpush1.bf16.xpose.msra.mxu0 0
        %1977 = vmatprep.subr.bf16.mxu0 0
        %1978 = vmatpush1.bf16.xpose.msra.mxu0 0
        %1979 = vmatprep.subr.bf16.mxu0 0
        %1980 = vmatpush1.bf16.xpose.msra.mxu0 0
        %1981 = vmatprep.subr.bf16.mxu0 0
        %1982 = vmatpush1.bf16.xpose.msra.mxu0 0
        %1983 = vmatprep.subr.bf16.mxu0 0
        %1984 = vmatpush1.bf16.xpose.msra.mxu0 0
        %1985 = vmatprep.subr.bf16.mxu0 0
        %1986 = vmatpush1.bf16.xpose.msra.mxu0 0
        %1987 = vmatprep.subr.bf16.mxu0 0
        %1988 = vmatpush1.bf16.xpose.msra.mxu0 0
        %1989 = vmatprep.subr.bf16.mxu0 0
        %1990 = vmatpush1.bf16.xpose.msra.mxu0 0
        %1991 = vmatprep.subr.bf16.mxu0 0
        %1992 = vmatpush1.bf16.xpose.msra.mxu0 0
        %1993 = vmatprep.subr.bf16.mxu0 0
        %1994 = vmatpush1.bf16.xpose.msra.mxu0 0
        %1995 = vmatprep.mubr.bf16.mxu0 0
        %1996 = vmatmul.mubr.bf16.gmra.mrb[0].mxu0 %v1958
        %v1997 = vpop.f32.mrb[0].mxu0
        %v1998 = vadd.f32 0.0, %v1997
        %v1999 = vpop.f32.mrb[0].mxu0
        %v2000 = vpop.f32.mrb[0].mxu0
        %v2001 = vpop.f32.mrb[0].mxu0
        %2002 = vdwg.mxu0
        %v2004 = vsel %vm1956, %v1949, 0
        %v2007 = vsel %vm1956, %v1953, 0
        %2009 = vmatprep.subr.bf16.mxu0 0
        %2010 = vmatpush1.bf16.xpose.msra.mxu0 %v2007
        %2011 = vmatprep.subr.bf16.mxu0 0
        %2012 = vmatpush1.bf16.xpose.msra.mxu0 0
        %2013 = vmatprep.subr.bf16.mxu0 0
        %2014 = vmatpush1.bf16.xpose.msra.mxu0 0
        %2015 = vmatprep.subr.bf16.mxu0 0
        %2016 = vmatpush1.bf16.xpose.msra.mxu0 0
        %2017 = vmatprep.subr.bf16.mxu0 0
        %2018 = vmatpush1.bf16.xpose.msra.mxu0 0
        %2019 = vmatprep.subr.bf16.mxu0 0
        %2020 = vmatpush1.bf16.xpose.msra.mxu0 0
        %2021 = vmatprep.subr.bf16.mxu0 0
        %2022 = vmatpush1.bf16.xpose.msra.mxu0 0
        %2023 = vmatprep.subr.bf16.mxu0 0
        %2024 = vmatpush1.bf16.xpose.msra.mxu0 0
        %2025 = vmatprep.subr.bf16.mxu0 0
        %2026 = vmatpush1.bf16.xpose.msra.mxu0 0
        %2027 = vmatprep.subr.bf16.mxu0 0
        %2028 = vmatpush1.bf16.xpose.msra.mxu0 0
        %2029 = vmatprep.subr.bf16.mxu0 0
        %2030 = vmatpush1.bf16.xpose.msra.mxu0 0
        %2031 = vmatprep.subr.bf16.mxu0 0
        %2032 = vmatpush1.bf16.xpose.msra.mxu0 0
        %2033 = vmatprep.subr.bf16.mxu0 0
        %2034 = vmatpush1.bf16.xpose.msra.mxu0 0
        %2035 = vmatprep.subr.bf16.mxu0 0
        %2036 = vmatpush1.bf16.xpose.msra.mxu0 0
        %2037 = vmatprep.subr.bf16.mxu0 0
        %2038 = vmatpush1.bf16.xpose.msra.mxu0 0
        %2039 = vmatprep.subr.bf16.mxu0 0
        %2040 = vmatpush1.bf16.xpose.msra.mxu0 0
        %2041 = vmatprep.mubr.bf16.mxu0 0
        %2042 = vmatmul.mubr.bf16.gmra.mrb[0].mxu0 %v2004
        %v2043 = vpop.f32.mrb[0].mxu0
        %v2044 = vadd.f32 0.0, %v2043
        %v2045 = vpop.f32.mrb[0].mxu0
        %v2046 = vpop.f32.mrb[0].mxu0
        %v2047 = vpop.f32.mrb[0].mxu0
        %2048 = vdwg.mxu0
        %v2050 = vsel %vm1956, %v1950, 0
        %v2053 = vsel %vm1956, %v1954, 0
        %2055 = vmatprep.subr.bf16.mxu0 0
        %2056 = vmatpush1.bf16.xpose.msra.mxu0 %v2053
        %2057 = vmatprep.subr.bf16.mxu0 0
        %2058 = vmatpush1.bf16.xpose.msra.mxu0 0
        %2059 = vmatprep.subr.bf16.mxu0 0
        %2060 = vmatpush1.bf16.xpose.msra.mxu0 0
        %2061 = vmatprep.subr.bf16.mxu0 0
        %2062 = vmatpush1.bf16.xpose.msra.mxu0 0
        %2063 = vmatprep.subr.bf16.mxu0 0
        %2064 = vmatpush1.bf16.xpose.msra.mxu0 0
        %2065 = vmatprep.subr.bf16.mxu0 0
        %2066 = vmatpush1.bf16.xpose.msra.mxu0 0
        %2067 = vmatprep.subr.bf16.mxu0 0
        %2068 = vmatpush1.bf16.xpose.msra.mxu0 0
        %2069 = vmatprep.subr.bf16.mxu0 0
        %2070 = vmatpush1.bf16.xpose.msra.mxu0 0
        %2071 = vmatprep.subr.bf16.mxu0 0
        %2072 = vmatpush1.bf16.xpose.msra.mxu0 0
        %2073 = vmatprep.subr.bf16.mxu0 0
        %2074 = vmatpush1.bf16.xpose.msra.mxu0 0
        %2075 = vmatprep.subr.bf16.mxu0 0
        %2076 = vmatpush1.bf16.xpose.msra.mxu0 0
        %2077 = vmatprep.subr.bf16.mxu0 0
        %2078 = vmatpush1.bf16.xpose.msra.mxu0 0
        %2079 = vmatprep.subr.bf16.mxu0 0
        %2080 = vmatpush1.bf16.xpose.msra.mxu0 0
        %2081 = vmatprep.subr.bf16.mxu0 0
        %2082 = vmatpush1.bf16.xpose.msra.mxu0 0
        %2083 = vmatprep.subr.bf16.mxu0 0
        %2084 = vmatpush1.bf16.xpose.msra.mxu0 0
        %2085 = vmatprep.subr.bf16.mxu0 0
        %2086 = vmatpush1.bf16.xpose.msra.mxu0 0
        %2087 = vmatprep.mubr.bf16.mxu0 0
        %2088 = vmatmul.mubr.bf16.gmra.mrb[0].mxu0 %v2050
        %v2089 = vpop.f32.mrb[0].mxu0
        %v2090 = vadd.f32 0.0, %v2089
        %v2091 = vpop.f32.mrb[0].mxu0
        %v2092 = vpop.f32.mrb[0].mxu0
        %v2093 = vpop.f32.mrb[0].mxu0
        %2094 = vdwg.mxu0
        %v2096 = vsel %vm1956, %v1951, 0
        %v2099 = vsel %vm1956, %v1955, 0
        %2101 = vmatprep.subr.bf16.mxu0 0
        %2102 = vmatpush1.bf16.xpose.msra.mxu0 %v2099
        %2103 = vmatprep.subr.bf16.mxu0 0
        %2104 = vmatpush1.bf16.xpose.msra.mxu0 0
        %2105 = vmatprep.subr.bf16.mxu0 0
        %2106 = vmatpush1.bf16.xpose.msra.mxu0 0
        %2107 = vmatprep.subr.bf16.mxu0 0
        %2108 = vmatpush1.bf16.xpose.msra.mxu0 0
        %2109 = vmatprep.subr.bf16.mxu0 0
        %2110 = vmatpush1.bf16.xpose.msra.mxu0 0
        %2111 = vmatprep.subr.bf16.mxu0 0
        %2112 = vmatpush1.bf16.xpose.msra.mxu0 0
        %2113 = vmatprep.subr.bf16.mxu0 0
        %2114 = vmatpush1.bf16.xpose.msra.mxu0 0
        %2115 = vmatprep.subr.bf16.mxu0 0
        %2116 = vmatpush1.bf16.xpose.msra.mxu0 0
        %2117 = vmatprep.subr.bf16.mxu0 0
        %2118 = vmatpush1.bf16.xpose.msra.mxu0 0
        %2119 = vmatprep.subr.bf16.mxu0 0
        %2120 = vmatpush1.bf16.xpose.msra.mxu0 0
        %2121 = vmatprep.subr.bf16.mxu0 0
        %2122 = vmatpush1.bf16.xpose.msra.mxu0 0
        %2123 = vmatprep.subr.bf16.mxu0 0
        %2124 = vmatpush1.bf16.xpose.msra.mxu0 0
        %2125 = vmatprep.subr.bf16.mxu0 0
        %2126 = vmatpush1.bf16.xpose.msra.mxu0 0
        %2127 = vmatprep.subr.bf16.mxu0 0
        %2128 = vmatpush1.bf16.xpose.msra.mxu0 0
        %2129 = vmatprep.subr.bf16.mxu0 0
        %2130 = vmatpush1.bf16.xpose.msra.mxu0 0
        %2131 = vmatprep.subr.bf16.mxu0 0
        %2132 = vmatpush1.bf16.xpose.msra.mxu0 0
        %2133 = vmatprep.mubr.bf16.mxu0 0
        %2134 = vmatmul.mubr.bf16.gmra.mrb[0].mxu0 %v2096
        %v2135 = vpop.f32.mrb[0].mxu0
        %v2136 = vadd.f32 0.0, %v2135
        %v2137 = vpop.f32.mrb[0].mxu0
        %v2138 = vpop.f32.mrb[0].mxu0
        %v2139 = vpop.f32.mrb[0].mxu0
        %2140 = vdwg.mxu0
        %v2141 = vmul.f32 %v1998, 0.17677669
        %v2142 = vmul.f32 %v2044, 0.17677669
        %v2143 = vmul.f32 %v2090, 0.17677669
        %v2144 = vmul.f32 %v2136, 0.17677669
        %v2145 = vsel %vm612, 1, 0
        %vm2146 = vcmp.eq.s32.totalorder %v2145, 1
        %v2147 = vsel %vm2146, -1e+10, %v2141
        %v2148 = vsel %vm2146, -1e+10, %v2142
        %v2149 = vsel %vm2146, -1e+10, %v2143
        %v2150 = vsel %vm2146, -1e+10, %v2144
        %vm2151 = vcmask 64512
        %v2152 = vsel %vm2151, %v2147, -inf
        %2153 = vmax.xlane.f32.xlu0 %v2152
        %v2154 = vpop.xlane.xlu0 %2153
        %v2155 = vsel %vm2151, %v2148, -inf
        %2156 = vmax.xlane.f32.xlu0 %v2155
        %v2157 = vpop.xlane.xlu0 %2156
        %v2158 = vsel %vm2151, %v2149, -inf
        %2159 = vmax.xlane.f32.xlu0 %v2158
        %v2160 = vpop.xlane.xlu0 %2159
        %v2161 = vsel %vm2151, %v2150, -inf
        %2162 = vmax.xlane.f32.xlu0 %v2161
        %v2163 = vpop.xlane.xlu0 %2162
        %v2164 = vsub.f32 %v2147, %v2154
        %v2165 = vsub.f32 %v2148, %v2157
        %v2166 = vsub.f32 %v2149, %v2160
        %v2167 = vsub.f32 %v2150, %v2163
        %v2168 = vmul.f32 %v2164, 1.442695
        %v2169 = vpow.pop %v2168
        %v2170 = vmul.f32 %v2165, 1.442695
        %v2171 = vpow.pop %v2170
        %v2172 = vmul.f32 %v2166, 1.442695
        %v2173 = vpow.pop %v2172
        %v2174 = vmul.f32 %v2167, 1.442695
        %v2175 = vpow.pop %v2174
        %v2176 = vsel %vm2151, %v2169, 0.0
        %2177 = vadd.xlane.f32.xlu0 %v2176
        %v2178 = vpop.xlane.xlu0 %2177
        %v2179 = vsel %vm2151, %v2171, 0.0
        %2180 = vadd.xlane.f32.xlu0 %v2179
        %v2181 = vpop.xlane.xlu0 %2180
        %v2182 = vsel %vm2151, %v2173, 0.0
        %2183 = vadd.xlane.f32.xlu0 %v2182
        %v2184 = vpop.xlane.xlu0 %2183
        %v2185 = vsel %vm2151, %v2175, 0.0
        %2186 = vadd.xlane.f32.xlu0 %v2185
        %v2187 = vpop.xlane.xlu0 %2186
        %v2188 = vpack.c.bf16 %v2169, %v2169
        %v2189 = vpack.c.bf16 %v2171, %v2171
        %v2190 = vpack.c.bf16 %v2173, %v2173
        %v2191 = vpack.c.bf16 %v2175, %v2175
        %v2192 = vpack.c.bf16 %v1679, %v1679
        %v2193 = vpack.c.bf16 %v1767, %v1767
        %v2194 = vpack.c.bf16 %v1855, %v1855
        %v2195 = vpack.c.bf16 %v1943, %v1943
        %v2197 = vsel %vm2151, %v2188, 0
        %vm2199 = vcmask 1043456
        %v2201 = vsel %vm2199, %v2192, 0
        %2203 = vmatprep.subr.bf16.mxu0 0
        %2204 = vmatpush1.bf16.msra.mxu0 %v2201
        %2205 = vmatprep.subr.bf16.mxu0 0
        %2206 = vmatpush1.bf16.msra.mxu0 0
        %2207 = vmatprep.subr.bf16.mxu0 0
        %2208 = vmatpush1.bf16.msra.mxu0 0
        %2209 = vmatprep.subr.bf16.mxu0 0
        %2210 = vmatpush1.bf16.msra.mxu0 0
        %2211 = vmatprep.subr.bf16.mxu0 0
        %2212 = vmatpush1.bf16.msra.mxu0 0
        %2213 = vmatprep.subr.bf16.mxu0 0
        %2214 = vmatpush1.bf16.msra.mxu0 0
        %2215 = vmatprep.subr.bf16.mxu0 0
        %2216 = vmatpush1.bf16.msra.mxu0 0
        %2217 = vmatprep.subr.bf16.mxu0 0
        %2218 = vmatpush1.bf16.msra.mxu0 0
        %2219 = vmatprep.subr.bf16.mxu0 0
        %2220 = vmatpush1.bf16.msra.mxu0 0
        %2221 = vmatprep.subr.bf16.mxu0 0
        %2222 = vmatpush1.bf16.msra.mxu0 0
        %2223 = vmatprep.subr.bf16.mxu0 0
        %2224 = vmatpush1.bf16.msra.mxu0 0
        %2225 = vmatprep.subr.bf16.mxu0 0
        %2226 = vmatpush1.bf16.msra.mxu0 0
        %2227 = vmatprep.subr.bf16.mxu0 0
        %2228 = vmatpush1.bf16.msra.mxu0 0
        %2229 = vmatprep.subr.bf16.mxu0 0
        %2230 = vmatpush1.bf16.msra.mxu0 0
        %2231 = vmatprep.subr.bf16.mxu0 0
        %2232 = vmatpush1.bf16.msra.mxu0 0
        %2233 = vmatprep.subr.bf16.mxu0 0
        %2234 = vmatpush1.bf16.msra.mxu0 0
        %2235 = vmatprep.mubr.bf16.mxu0 0
        %2236 = vmatmul.mubr.bf16.gmra.mrb[0].mxu0 %v2197
        %v2237 = vpop.f32.mrb[0].mxu0
        %v2238 = vadd.f32 0.0, %v2237
        %v2239 = vpop.f32.mrb[0].mxu0
        %v2240 = vpop.f32.mrb[0].mxu0
        %v2241 = vpop.f32.mrb[0].mxu0
        %2242 = vdwg.mxu0
        %v2244 = vsel %vm2151, %v2189, 0
        %v2247 = vsel %vm2199, %v2193, 0
        %2249 = vmatprep.subr.bf16.mxu0 0
        %2250 = vmatpush1.bf16.msra.mxu0 %v2247
        %2251 = vmatprep.subr.bf16.mxu0 0
        %2252 = vmatpush1.bf16.msra.mxu0 0
        %2253 = vmatprep.subr.bf16.mxu0 0
        %2254 = vmatpush1.bf16.msra.mxu0 0
        %2255 = vmatprep.subr.bf16.mxu0 0
        %2256 = vmatpush1.bf16.msra.mxu0 0
        %2257 = vmatprep.subr.bf16.mxu0 0
        %2258 = vmatpush1.bf16.msra.mxu0 0
        %2259 = vmatprep.subr.bf16.mxu0 0
        %2260 = vmatpush1.bf16.msra.mxu0 0
        %2261 = vmatprep.subr.bf16.mxu0 0
        %2262 = vmatpush1.bf16.msra.mxu0 0
        %2263 = vmatprep.subr.bf16.mxu0 0
        %2264 = vmatpush1.bf16.msra.mxu0 0
        %2265 = vmatprep.subr.bf16.mxu0 0
        %2266 = vmatpush1.bf16.msra.mxu0 0
        %2267 = vmatprep.subr.bf16.mxu0 0
        %2268 = vmatpush1.bf16.msra.mxu0 0
        %2269 = vmatprep.subr.bf16.mxu0 0
        %2270 = vmatpush1.bf16.msra.mxu0 0
        %2271 = vmatprep.subr.bf16.mxu0 0
        %2272 = vmatpush1.bf16.msra.mxu0 0
        %2273 = vmatprep.subr.bf16.mxu0 0
        %2274 = vmatpush1.bf16.msra.mxu0 0
        %2275 = vmatprep.subr.bf16.mxu0 0
        %2276 = vmatpush1.bf16.msra.mxu0 0
        %2277 = vmatprep.subr.bf16.mxu0 0
        %2278 = vmatpush1.bf16.msra.mxu0 0
        %2279 = vmatprep.subr.bf16.mxu0 0
        %2280 = vmatpush1.bf16.msra.mxu0 0
        %2281 = vmatprep.mubr.bf16.mxu0 0
        %2282 = vmatmul.mubr.bf16.gmra.mrb[0].mxu0 %v2244
        %v2283 = vpop.f32.mrb[0].mxu0
        %v2284 = vadd.f32 0.0, %v2283
        %v2285 = vpop.f32.mrb[0].mxu0
        %v2286 = vpop.f32.mrb[0].mxu0
        %v2287 = vpop.f32.mrb[0].mxu0
        %2288 = vdwg.mxu0
        %v2290 = vsel %vm2151, %v2190, 0
        %v2293 = vsel %vm2199, %v2194, 0
        %2295 = vmatprep.subr.bf16.mxu0 0
        %2296 = vmatpush1.bf16.msra.mxu0 %v2293
        %2297 = vmatprep.subr.bf16.mxu0 0
        %2298 = vmatpush1.bf16.msra.mxu0 0
        %2299 = vmatprep.subr.bf16.mxu0 0
        %2300 = vmatpush1.bf16.msra.mxu0 0
        %2301 = vmatprep.subr.bf16.mxu0 0
        %2302 = vmatpush1.bf16.msra.mxu0 0
        %2303 = vmatprep.subr.bf16.mxu0 0
        %2304 = vmatpush1.bf16.msra.mxu0 0
        %2305 = vmatprep.subr.bf16.mxu0 0
        %2306 = vmatpush1.bf16.msra.mxu0 0
        %2307 = vmatprep.subr.bf16.mxu0 0
        %2308 = vmatpush1.bf16.msra.mxu0 0
        %2309 = vmatprep.subr.bf16.mxu0 0
        %2310 = vmatpush1.bf16.msra.mxu0 0
        %2311 = vmatprep.subr.bf16.mxu0 0
        %2312 = vmatpush1.bf16.msra.mxu0 0
        %2313 = vmatprep.subr.bf16.mxu0 0
        %2314 = vmatpush1.bf16.msra.mxu0 0
        %2315 = vmatprep.subr.bf16.mxu0 0
        %2316 = vmatpush1.bf16.msra.mxu0 0
        %2317 = vmatprep.subr.bf16.mxu0 0
        %2318 = vmatpush1.bf16.msra.mxu0 0
        %2319 = vmatprep.subr.bf16.mxu0 0
        %2320 = vmatpush1.bf16.msra.mxu0 0
        %2321 = vmatprep.subr.bf16.mxu0 0
        %2322 = vmatpush1.bf16.msra.mxu0 0
        %2323 = vmatprep.subr.bf16.mxu0 0
        %2324 = vmatpush1.bf16.msra.mxu0 0
        %2325 = vmatprep.subr.bf16.mxu0 0
        %2326 = vmatpush1.bf16.msra.mxu0 0
        %2327 = vmatprep.mubr.bf16.mxu0 0
        %2328 = vmatmul.mubr.bf16.gmra.mrb[0].mxu0 %v2290
        %v2329 = vpop.f32.mrb[0].mxu0
        %v2330 = vadd.f32 0.0, %v2329
        %v2331 = vpop.f32.mrb[0].mxu0
        %v2332 = vpop.f32.mrb[0].mxu0
        %v2333 = vpop.f32.mrb[0].mxu0
        %2334 = vdwg.mxu0
        %v2336 = vsel %vm2151, %v2191, 0
        %v2339 = vsel %vm2199, %v2195, 0
        %2341 = vmatprep.subr.bf16.mxu0 0
        %2342 = vmatpush1.bf16.msra.mxu0 %v2339
        %2343 = vmatprep.subr.bf16.mxu0 0
        %2344 = vmatpush1.bf16.msra.mxu0 0
        %2345 = vmatprep.subr.bf16.mxu0 0
        %2346 = vmatpush1.bf16.msra.mxu0 0
        %2347 = vmatprep.subr.bf16.mxu0 0
        %2348 = vmatpush1.bf16.msra.mxu0 0
        %2349 = vmatprep.subr.bf16.mxu0 0
        %2350 = vmatpush1.bf16.msra.mxu0 0
        %2351 = vmatprep.subr.bf16.mxu0 0
        %2352 = vmatpush1.bf16.msra.mxu0 0
        %2353 = vmatprep.subr.bf16.mxu0 0
        %2354 = vmatpush1.bf16.msra.mxu0 0
        %2355 = vmatprep.subr.bf16.mxu0 0
        %2356 = vmatpush1.bf16.msra.mxu0 0
        %2357 = vmatprep.subr.bf16.mxu0 0
        %2358 = vmatpush1.bf16.msra.mxu0 0
        %2359 = vmatprep.subr.bf16.mxu0 0
        %2360 = vmatpush1.bf16.msra.mxu0 0
        %2361 = vmatprep.subr.bf16.mxu0 0
        %2362 = vmatpush1.bf16.msra.mxu0 0
        %2363 = vmatprep.subr.bf16.mxu0 0
        %2364 = vmatpush1.bf16.msra.mxu0 0
        %2365 = vmatprep.subr.bf16.mxu0 0
        %2366 = vmatpush1.bf16.msra.mxu0 0
        %2367 = vmatprep.subr.bf16.mxu0 0
        %2368 = vmatpush1.bf16.msra.mxu0 0
        %2369 = vmatprep.subr.bf16.mxu0 0
        %2370 = vmatpush1.bf16.msra.mxu0 0
        %2371 = vmatprep.subr.bf16.mxu0 0
        %2372 = vmatpush1.bf16.msra.mxu0 0
        %2373 = vmatprep.mubr.bf16.mxu0 0
        %2374 = vmatmul.mubr.bf16.gmra.mrb[0].mxu0 %v2336
        %v2375 = vpop.f32.mrb[0].mxu0
        %v2376 = vadd.f32 0.0, %v2375
        %v2377 = vpop.f32.mrb[0].mxu0
        %v2378 = vpop.f32.mrb[0].mxu0
        %v2379 = vpop.f32.mrb[0].mxu0
        %2380 = vdwg.mxu0
        %v2381 = vrcp.pop %v2178
        %v2382 = vrcp.pop %v2181
        %v2383 = vrcp.pop %v2184
        %v2384 = vrcp.pop %v2187
        %v2385 = vmul.f32 %v2238, %v2381
        %v2386 = vmul.f32 %v2284, %v2382
        %v2387 = vmul.f32 %v2330, %v2383
        %v2388 = vmul.f32 %v2376, %v2384
        %v2389 = vpack.c.bf16 %v2385, %v2385
        %v2390 = vpack.c.bf16 %v2386, %v2386
        %v2391 = vpack.c.bf16 %v2387, %v2387
        %v2392 = vpack.c.bf16 %v2388, %v2388
        %v2393 = vld [vmem:[%s6] sm:$0xf]
        %v2394 = vld [vmem:[%s6 + $0x4] sm:$0xf]
        %v2395 = vld [vmem:[%s6 + $0x8] sm:$0xf]
        %v2396 = vld [vmem:[%s6 + $0xc] sm:$0xf]
        %v2397 = vld [vmem:[%s6 + $0x10] sm:$0xf]
        %v2398 = vld [vmem:[%s6 + $0x14] sm:$0xf]
        %v2399 = vld [vmem:[%s6 + $0x18] sm:$0xf]
        %v2400 = vld [vmem:[%s6 + $0x1c] sm:$0xf]
        %v2401 = vld [vmem:[%s6 + $0x20] sm:$0xf]
        %v2402 = vld [vmem:[%s6 + $0x24] sm:$0xf]
        %v2403 = vld [vmem:[%s6 + $0x28] sm:$0xf]
        %v2404 = vld [vmem:[%s6 + $0x2c] sm:$0xf]
        %v2405 = vld [vmem:[%s6 + $0x30] sm:$0xf]
        %v2406 = vld [vmem:[%s6 + $0x34] sm:$0xf]
        %v2407 = vld [vmem:[%s6 + $0x38] sm:$0xf]
        %v2408 = vld [vmem:[%s6 + $0x3c] sm:$0xf]
        %v2413 = vunpack.c.l.b16 %v2393
        %v2414 = vunpack.c.l.b16 %v2394
        %v2415 = vunpack.c.l.b16 %v2395
        %v2416 = vunpack.c.l.b16 %v2396
        %v2417 = vpack.c.b16 %v2414, %v2413
        %v2418 = vpack.c.b16 %v2416, %v2415
        %v2422 = vsel %vm1956, %v2389, 0
        %2424 = vmatprep.subr.bf16.mxu0 0
        %2425 = vmatpush1.bf16.msra.mxu0 %v2417
        %2426 = vmatprep.subr.bf16.mxu0 0
        %2427 = vmatpush1.bf16.msra.mxu0 %v2418
        %2428 = vmatprep.subr.bf16.mxu0 0
        %2429 = vmatpush1.bf16.msra.mxu0 0
        %2430 = vmatprep.subr.bf16.mxu0 0
        %2431 = vmatpush1.bf16.msra.mxu0 0
        %2432 = vmatprep.subr.bf16.mxu0 0
        %2433 = vmatpush1.bf16.msra.mxu0 0
        %2434 = vmatprep.subr.bf16.mxu0 0
        %2435 = vmatpush1.bf16.msra.mxu0 0
        %2436 = vmatprep.subr.bf16.mxu0 0
        %2437 = vmatpush1.bf16.msra.mxu0 0
        %2438 = vmatprep.subr.bf16.mxu0 0
        %2439 = vmatpush1.bf16.msra.mxu0 0
        %2440 = vmatprep.subr.bf16.mxu0 0
        %2441 = vmatpush1.bf16.msra.mxu0 0
        %2442 = vmatprep.subr.bf16.mxu0 0
        %2443 = vmatpush1.bf16.msra.mxu0 0
        %2444 = vmatprep.subr.bf16.mxu0 0
        %2445 = vmatpush1.bf16.msra.mxu0 0
        %2446 = vmatprep.subr.bf16.mxu0 0
        %2447 = vmatpush1.bf16.msra.mxu0 0
        %2448 = vmatprep.subr.bf16.mxu0 0
        %2449 = vmatpush1.bf16.msra.mxu0 0
        %2450 = vmatprep.subr.bf16.mxu0 0
        %2451 = vmatpush1.bf16.msra.mxu0 0
        %2452 = vmatprep.subr.bf16.mxu0 0
        %2453 = vmatpush1.bf16.msra.mxu0 0
        %2454 = vmatprep.subr.bf16.mxu0 0
        %2455 = vmatpush1.bf16.msra.mxu0 0
        %2456 = vmatprep.mubr.bf16.mxu0 0
        %2457 = vmatmul.mubr.bf16.gmra.mrb[0].mxu0 %v2422
        %v2458 = vpop.f32.mrb[0].mxu0
        %v2459 = vadd.f32 0.0, %v2458
        %v2460 = vpop.f32.mrb[0].mxu0
        %v2461 = vpop.f32.mrb[0].mxu0
        %v2462 = vpop.f32.mrb[0].mxu0
        %2463 = vdwg.mxu0
        %v2468 = vunpack.c.l.b16 %v2397
        %v2469 = vunpack.c.l.b16 %v2398
        %v2470 = vunpack.c.l.b16 %v2399
        %v2471 = vunpack.c.l.b16 %v2400
        %v2472 = vpack.c.b16 %v2469, %v2468
        %v2473 = vpack.c.b16 %v2471, %v2470
        %v2477 = vsel %vm1956, %v2390, 0
        %2479 = vmatprep.subr.bf16.mxu0 0
        %2480 = vmatpush1.bf16.msra.mxu0 %v2472
        %2481 = vmatprep.subr.bf16.mxu0 0
        %2482 = vmatpush1.bf16.msra.mxu0 %v2473
        %2483 = vmatprep.subr.bf16.mxu0 0
        %2484 = vmatpush1.bf16.msra.mxu0 0
        %2485 = vmatprep.subr.bf16.mxu0 0
        %2486 = vmatpush1.bf16.msra.mxu0 0
        %2487 = vmatprep.subr.bf16.mxu0 0
        %2488 = vmatpush1.bf16.msra.mxu0 0
        %2489 = vmatprep.subr.bf16.mxu0 0
        %2490 = vmatpush1.bf16.msra.mxu0 0
        %2491 = vmatprep.subr.bf16.mxu0 0
        %2492 = vmatpush1.bf16.msra.mxu0 0
        %2493 = vmatprep.subr.bf16.mxu0 0
        %2494 = vmatpush1.bf16.msra.mxu0 0
        %2495 = vmatprep.subr.bf16.mxu0 0
        %2496 = vmatpush1.bf16.msra.mxu0 0
        %2497 = vmatprep.subr.bf16.mxu0 0
        %2498 = vmatpush1.bf16.msra.mxu0 0
        %2499 = vmatprep.subr.bf16.mxu0 0
        %2500 = vmatpush1.bf16.msra.mxu0 0
        %2501 = vmatprep.subr.bf16.mxu0 0
        %2502 = vmatpush1.bf16.msra.mxu0 0
        %2503 = vmatprep.subr.bf16.mxu0 0
        %2504 = vmatpush1.bf16.msra.mxu0 0
        %2505 = vmatprep.subr.bf16.mxu0 0
        %2506 = vmatpush1.bf16.msra.mxu0 0
        %2507 = vmatprep.subr.bf16.mxu0 0
        %2508 = vmatpush1.bf16.msra.mxu0 0
        %2509 = vmatprep.subr.bf16.mxu0 0
        %2510 = vmatpush1.bf16.msra.mxu0 0
        %2511 = vmatprep.mubr.bf16.mxu0 0
        %2512 = vmatmul.mubr.bf16.gmra.mrb[0].mxu0 %v2477
        %v2513 = vpop.f32.mrb[0].mxu0
        %v2514 = vadd.f32 0.0, %v2513
        %v2515 = vpop.f32.mrb[0].mxu0
        %v2516 = vpop.f32.mrb[0].mxu0
        %v2517 = vpop.f32.mrb[0].mxu0
        %2518 = vdwg.mxu0
        %v2523 = vunpack.c.l.b16 %v2401
        %v2524 = vunpack.c.l.b16 %v2402
        %v2525 = vunpack.c.l.b16 %v2403
        %v2526 = vunpack.c.l.b16 %v2404
        %v2527 = vpack.c.b16 %v2524, %v2523
        %v2528 = vpack.c.b16 %v2526, %v2525
        %v2532 = vsel %vm1956, %v2391, 0
        %2534 = vmatprep.subr.bf16.mxu0 0
        %2535 = vmatpush1.bf16.msra.mxu0 %v2527
        %2536 = vmatprep.subr.bf16.mxu0 0
        %2537 = vmatpush1.bf16.msra.mxu0 %v2528
        %2538 = vmatprep.subr.bf16.mxu0 0
        %2539 = vmatpush1.bf16.msra.mxu0 0
        %2540 = vmatprep.subr.bf16.mxu0 0
        %2541 = vmatpush1.bf16.msra.mxu0 0
        %2542 = vmatprep.subr.bf16.mxu0 0
        %2543 = vmatpush1.bf16.msra.mxu0 0
        %2544 = vmatprep.subr.bf16.mxu0 0
        %2545 = vmatpush1.bf16.msra.mxu0 0
        %2546 = vmatprep.subr.bf16.mxu0 0
        %2547 = vmatpush1.bf16.msra.mxu0 0
        %2548 = vmatprep.subr.bf16.mxu0 0
        %2549 = vmatpush1.bf16.msra.mxu0 0
        %2550 = vmatprep.subr.bf16.mxu0 0
        %2551 = vmatpush1.bf16.msra.mxu0 0
        %2552 = vmatprep.subr.bf16.mxu0 0
        %2553 = vmatpush1.bf16.msra.mxu0 0
        %2554 = vmatprep.subr.bf16.mxu0 0
        %2555 = vmatpush1.bf16.msra.mxu0 0
        %2556 = vmatprep.subr.bf16.mxu0 0
        %2557 = vmatpush1.bf16.msra.mxu0 0
        %2558 = vmatprep.subr.bf16.mxu0 0
        %2559 = vmatpush1.bf16.msra.mxu0 0
        %2560 = vmatprep.subr.bf16.mxu0 0
        %2561 = vmatpush1.bf16.msra.mxu0 0
        %2562 = vmatprep.subr.bf16.mxu0 0
        %2563 = vmatpush1.bf16.msra.mxu0 0
        %2564 = vmatprep.subr.bf16.mxu0 0
        %2565 = vmatpush1.bf16.msra.mxu0 0
        %2566 = vmatprep.mubr.bf16.mxu0 0
        %2567 = vmatmul.mubr.bf16.gmra.mrb[0].mxu0 %v2532
        %v2568 = vpop.f32.mrb[0].mxu0
        %v2569 = vadd.f32 0.0, %v2568
        %v2570 = vpop.f32.mrb[0].mxu0
        %v2571 = vpop.f32.mrb[0].mxu0
        %v2572 = vpop.f32.mrb[0].mxu0
        %2573 = vdwg.mxu0
        %v2578 = vunpack.c.l.b16 %v2405
        %v2579 = vunpack.c.l.b16 %v2406
        %v2580 = vunpack.c.l.b16 %v2407
        %v2581 = vunpack.c.l.b16 %v2408
        %v2582 = vpack.c.b16 %v2579, %v2578
        %v2583 = vpack.c.b16 %v2581, %v2580
        %v2587 = vsel %vm1956, %v2392, 0
        %2589 = vmatprep.subr.bf16.mxu0 0
        %2590 = vmatpush1.bf16.msra.mxu0 %v2582
        %2591 = vmatprep.subr.bf16.mxu0 0
        %2592 = vmatpush1.bf16.msra.mxu0 %v2583
        %2593 = vmatprep.subr.bf16.mxu0 0
        %2594 = vmatpush1.bf16.msra.mxu0 0
        %2595 = vmatprep.subr.bf16.mxu0 0
        %2596 = vmatpush1.bf16.msra.mxu0 0
        %2597 = vmatprep.subr.bf16.mxu0 0
        %2598 = vmatpush1.bf16.msra.mxu0 0
        %2599 = vmatprep.subr.bf16.mxu0 0
        %2600 = vmatpush1.bf16.msra.mxu0 0
        %2601 = vmatprep.subr.bf16.mxu0 0
        %2602 = vmatpush1.bf16.msra.mxu0 0
        %2603 = vmatprep.subr.bf16.mxu0 0
        %2604 = vmatpush1.bf16.msra.mxu0 0
        %2605 = vmatprep.subr.bf16.mxu0 0
        %2606 = vmatpush1.bf16.msra.mxu0 0
        %2607 = vmatprep.subr.bf16.mxu0 0
        %2608 = vmatpush1.bf16.msra.mxu0 0
        %2609 = vmatprep.subr.bf16.mxu0 0
        %2610 = vmatpush1.bf16.msra.mxu0 0
        %2611 = vmatprep.subr.bf16.mxu0 0
        %2612 = vmatpush1.bf16.msra.mxu0 0
        %2613 = vmatprep.subr.bf16.mxu0 0
        %2614 = vmatpush1.bf16.msra.mxu0 0
        %2615 = vmatprep.subr.bf16.mxu0 0
        %2616 = vmatpush1.bf16.msra.mxu0 0
        %2617 = vmatprep.subr.bf16.mxu0 0
        %2618 = vmatpush1.bf16.msra.mxu0 0
        %2619 = vmatprep.subr.bf16.mxu0 0
        %2620 = vmatpush1.bf16.msra.mxu0 0
        %2621 = vmatprep.mubr.bf16.mxu0 0
        %2622 = vmatmul.mubr.bf16.gmra.mrb[0].mxu0 %v2587
        %v2623 = vpop.f32.mrb[0].mxu0
        %v2624 = vadd.f32 0.0, %v2623
        %v2625 = vpop.f32.mrb[0].mxu0
        %v2626 = vpop.f32.mrb[0].mxu0
        %v2627 = vpop.f32.mrb[0].mxu0
        %2628 = vdwg.mxu0
        %v2629 = vadd.f32 %v2459, %v2514
        %v2630 = vadd.f32 %v2629, %v2569
        %v2631 = vadd.f32 %v2630, %v2624
        %v2632 = vld [vmem:[%s7] sm:$0x1]
        %v2634 = vlaneseq
        %v2635 = vshrl.u32 %v2634, 7
        %v2636 = vsub.s32 0, %v2635
        %v2637 = vrot.slane %v2632, %v2636
        %v2639 = vadd.f32 %v2631, %v2637
        %v2640 = vadd.f32 %v603, %v2639
        %v2641 = vld [vmem:[%s18] sm:$0x1]
        %v2642 = vld [vmem:[%s19] sm:$0x1]
        %2643 = vadd.xlane.f32.xlu0 %v2640
        %v2644 = vpop.xlane.xlu0 %2643
        %v2645 = vrcp.pop 128.0
        %v2646 = vmul.f32 %v2644, %v2645
        %v2647 = vsub.f32 %v2640, %v2646
        %v2648 = vmul.f32 %v2647, %v2647
        %2649 = vadd.xlane.f32.xlu0 %v2648
        %v2650 = vpop.xlane.xlu0 %2649
        %v2651 = vmul.f32 %v2650, %v2645
        %v2652 = vadd.f32 %v2651, 1e-05
        %v2653 = vrsqrt.pop %v2652
        %v2654 = vmul.f32 %v2647, %v2653
        %v2656 = vlaneseq
        %v2657 = vshrl.u32 %v2656, 7
        %v2658 = vsub.s32 0, %v2657
        %v2659 = vrot.slane %v2641, %v2658
        %v2661 = vmul.f32 %v2654, %v2659
        %v2663 = vlaneseq
        %v2664 = vshrl.u32 %v2663, 7
        %v2665 = vsub.s32 0, %v2664
        %v2666 = vrot.slane %v2642, %v2665
        %v2668 = vadd.f32 %v2661, %v2666
        %v2669 = vpack.c.bf16 %v2668, %v2668
        %v2670 = vld [vmem:[%s8] sm:$0xf]
        %v2671 = vld [vmem:[%s8 + $0x4] sm:$0xf]
        %v2672 = vld [vmem:[%s8 + $0x8] sm:$0xf]
        %v2673 = vld [vmem:[%s8 + $0xc] sm:$0xf]
        %v2674 = vld [vmem:[%s8 + $0x10] sm:$0xf]
        %v2675 = vld [vmem:[%s8 + $0x14] sm:$0xf]
        %v2676 = vld [vmem:[%s8 + $0x18] sm:$0xf]
        %v2677 = vld [vmem:[%s8 + $0x1c] sm:$0xf]
        %v2678 = vld [vmem:[%s8 + $0x20] sm:$0xf]
        %v2679 = vld [vmem:[%s8 + $0x24] sm:$0xf]
        %v2680 = vld [vmem:[%s8 + $0x28] sm:$0xf]
        %v2681 = vld [vmem:[%s8 + $0x2c] sm:$0xf]
        %v2682 = vld [vmem:[%s8 + $0x30] sm:$0xf]
        %v2683 = vld [vmem:[%s8 + $0x34] sm:$0xf]
        %v2684 = vld [vmem:[%s8 + $0x38] sm:$0xf]
        %v2685 = vld [vmem:[%s8 + $0x3c] sm:$0xf]
        %v2686 = vld [vmem:[%s8 + $0x40] sm:$0xf]
        %v2687 = vld [vmem:[%s8 + $0x44] sm:$0xf]
        %v2688 = vld [vmem:[%s8 + $0x48] sm:$0xf]
        %v2689 = vld [vmem:[%s8 + $0x4c] sm:$0xf]
        %v2690 = vld [vmem:[%s8 + $0x50] sm:$0xf]
        %v2691 = vld [vmem:[%s8 + $0x54] sm:$0xf]
        %v2692 = vld [vmem:[%s8 + $0x58] sm:$0xf]
        %v2693 = vld [vmem:[%s8 + $0x5c] sm:$0xf]
        %v2694 = vld [vmem:[%s8 + $0x60] sm:$0xf]
        %v2695 = vld [vmem:[%s8 + $0x64] sm:$0xf]
        %v2696 = vld [vmem:[%s8 + $0x68] sm:$0xf]
        %v2697 = vld [vmem:[%s8 + $0x6c] sm:$0xf]
        %v2698 = vld [vmem:[%s8 + $0x70] sm:$0xf]
        %v2699 = vld [vmem:[%s8 + $0x74] sm:$0xf]
        %v2700 = vld [vmem:[%s8 + $0x78] sm:$0xf]
        %v2701 = vld [vmem:[%s8 + $0x7c] sm:$0xf]
        %v2702 = vld [vmem:[%s8 + $0x80] sm:$0xf]
        %v2703 = vld [vmem:[%s8 + $0x84] sm:$0xf]
        %v2704 = vld [vmem:[%s8 + $0x88] sm:$0xf]
        %v2705 = vld [vmem:[%s8 + $0x8c] sm:$0xf]
        %v2706 = vld [vmem:[%s8 + $0x90] sm:$0xf]
        %v2707 = vld [vmem:[%s8 + $0x94] sm:$0xf]
        %v2708 = vld [vmem:[%s8 + $0x98] sm:$0xf]
        %v2709 = vld [vmem:[%s8 + $0x9c] sm:$0xf]
        %v2710 = vld [vmem:[%s8 + $0xa0] sm:$0xf]
        %v2711 = vld [vmem:[%s8 + $0xa4] sm:$0xf]
        %v2712 = vld [vmem:[%s8 + $0xa8] sm:$0xf]
        %v2713 = vld [vmem:[%s8 + $0xac] sm:$0xf]
        %v2714 = vld [vmem:[%s8 + $0xb0] sm:$0xf]
        %v2715 = vld [vmem:[%s8 + $0xb4] sm:$0xf]
        %v2716 = vld [vmem:[%s8 + $0xb8] sm:$0xf]
        %v2717 = vld [vmem:[%s8 + $0xbc] sm:$0xf]
        %v2718 = vld [vmem:[%s8 + $0xc0] sm:$0xf]
        %v2719 = vld [vmem:[%s8 + $0xc4] sm:$0xf]
        %v2720 = vld [vmem:[%s8 + $0xc8] sm:$0xf]
        %v2721 = vld [vmem:[%s8 + $0xcc] sm:$0xf]
        %v2722 = vld [vmem:[%s8 + $0xd0] sm:$0xf]
        %v2723 = vld [vmem:[%s8 + $0xd4] sm:$0xf]
        %v2724 = vld [vmem:[%s8 + $0xd8] sm:$0xf]
        %v2725 = vld [vmem:[%s8 + $0xdc] sm:$0xf]
        %v2726 = vld [vmem:[%s8 + $0xe0] sm:$0xf]
        %v2727 = vld [vmem:[%s8 + $0xe4] sm:$0xf]
        %v2728 = vld [vmem:[%s8 + $0xe8] sm:$0xf]
        %v2729 = vld [vmem:[%s8 + $0xec] sm:$0xf]
        %v2730 = vld [vmem:[%s8 + $0xf0] sm:$0xf]
        %v2731 = vld [vmem:[%s8 + $0xf4] sm:$0xf]
        %v2732 = vld [vmem:[%s8 + $0xf8] sm:$0xf]
        %v2733 = vld [vmem:[%s8 + $0xfc] sm:$0xf]
        %v2734 = vld [vmem:[%s9] sm:$0x1]
        %v2735 = vld [vmem:[%s9 + $0x1] sm:$0x1]
        %v2736 = vld [vmem:[%s9 + $0x2] sm:$0x1]
        %v2737 = vld [vmem:[%s9 + $0x3] sm:$0x1]
        %v2742 = vlaneseq
        %v2743 = vshrl.u32 %v2742, 7
        %v2744 = vsub.s32 0, %v2743
        %v2745 = vrot.slane %v2734, %v2744
        %v2746 = vlaneseq
        %v2747 = vshrl.u32 %v2746, 7
        %v2748 = vsub.s32 0, %v2747
        %v2749 = vrot.slane %v2735, %v2748
        %v2750 = vlaneseq
        %v2751 = vshrl.u32 %v2750, 7
        %v2752 = vsub.s32 0, %v2751
        %v2753 = vrot.slane %v2736, %v2752
        %v2754 = vlaneseq
        %v2755 = vshrl.u32 %v2754, 7
        %v2756 = vsub.s32 0, %v2755
        %v2757 = vrot.slane %v2737, %v2756
        %v2778 = vunpack.c.l.b16 %v2670
        %v2779 = vunpack.c.l.b16 %v2671
        %v2780 = vunpack.c.l.b16 %v2672
        %v2781 = vunpack.c.l.b16 %v2673
        %v2782 = vunpack.c.l.b16 %v2674
        %v2783 = vunpack.c.l.b16 %v2675
        %v2784 = vunpack.c.l.b16 %v2676
        %v2785 = vunpack.c.l.b16 %v2677
        %v2786 = vunpack.c.l.b16 %v2678
        %v2787 = vunpack.c.l.b16 %v2679
        %v2788 = vunpack.c.l.b16 %v2680
        %v2789 = vunpack.c.l.b16 %v2681
        %v2790 = vunpack.c.l.b16 %v2682
        %v2791 = vunpack.c.l.b16 %v2683
        %v2792 = vunpack.c.l.b16 %v2684
        %v2793 = vunpack.c.l.b16 %v2685
        %v2794 = vpack.c.b16 %v2779, %v2778
        %v2795 = vpack.c.b16 %v2781, %v2780
        %v2796 = vpack.c.b16 %v2783, %v2782
        %v2797 = vpack.c.b16 %v2785, %v2784
        %v2798 = vpack.c.b16 %v2787, %v2786
        %v2799 = vpack.c.b16 %v2789, %v2788
        %v2800 = vpack.c.b16 %v2791, %v2790
        %v2801 = vpack.c.b16 %v2793, %v2792
        %2810 = vmatprep.subr.bf16.mxu0 0
        %2811 = vmatpush1.bf16.msra.mxu0 %v2794
        %2812 = vmatprep.subr.bf16.mxu0 0
        %2813 = vmatpush1.bf16.msra.mxu0 %v2795
        %2814 = vmatprep.subr.bf16.mxu0 0
        %2815 = vmatpush1.bf16.msra.mxu0 %v2796
        %2816 = vmatprep.subr.bf16.mxu0 0
        %2817 = vmatpush1.bf16.msra.mxu0 %v2797
        %2818 = vmatprep.subr.bf16.mxu0 0
        %2819 = vmatpush1.bf16.msra.mxu0 %v2798
        %2820 = vmatprep.subr.bf16.mxu0 0
        %2821 = vmatpush1.bf16.msra.mxu0 %v2799
        %2822 = vmatprep.subr.bf16.mxu0 0
        %2823 = vmatpush1.bf16.msra.mxu0 %v2800
        %2824 = vmatprep.subr.bf16.mxu0 0
        %2825 = vmatpush1.bf16.msra.mxu0 %v2801
        %2826 = vmatprep.subr.bf16.mxu0 0
        %2827 = vmatpush1.bf16.msra.mxu0 0
        %2828 = vmatprep.subr.bf16.mxu0 0
        %2829 = vmatpush1.bf16.msra.mxu0 0
        %2830 = vmatprep.subr.bf16.mxu0 0
        %2831 = vmatpush1.bf16.msra.mxu0 0
        %2832 = vmatprep.subr.bf16.mxu0 0
        %2833 = vmatpush1.bf16.msra.mxu0 0
        %2834 = vmatprep.subr.bf16.mxu0 0
        %2835 = vmatpush1.bf16.msra.mxu0 0
        %2836 = vmatprep.subr.bf16.mxu0 0
        %2837 = vmatpush1.bf16.msra.mxu0 0
        %2838 = vmatprep.subr.bf16.mxu0 0
        %2839 = vmatpush1.bf16.msra.mxu0 0
        %2840 = vmatprep.subr.bf16.mxu0 0
        %2841 = vmatpush1.bf16.msra.mxu0 0
        %2842 = vmatprep.mubr.bf16.mxu0 0
        %2843 = vmatmul.mubr.bf16.gmra.mrb[0].mxu0 %v2669
        %v2844 = vpop.f32.mrb[0].mxu0
        %v2845 = vadd.f32 %v2745, %v2844
        %v2846 = vpop.f32.mrb[0].mxu0
        %v2847 = vpop.f32.mrb[0].mxu0
        %v2848 = vpop.f32.mrb[0].mxu0
        %2849 = vdwg.mxu0
        %v2866 = vunpack.c.l.b16 %v2686
        %v2867 = vunpack.c.l.b16 %v2687
        %v2868 = vunpack.c.l.b16 %v2688
        %v2869 = vunpack.c.l.b16 %v2689
        %v2870 = vunpack.c.l.b16 %v2690
        %v2871 = vunpack.c.l.b16 %v2691
        %v2872 = vunpack.c.l.b16 %v2692
        %v2873 = vunpack.c.l.b16 %v2693
        %v2874 = vunpack.c.l.b16 %v2694
        %v2875 = vunpack.c.l.b16 %v2695
        %v2876 = vunpack.c.l.b16 %v2696
        %v2877 = vunpack.c.l.b16 %v2697
        %v2878 = vunpack.c.l.b16 %v2698
        %v2879 = vunpack.c.l.b16 %v2699
        %v2880 = vunpack.c.l.b16 %v2700
        %v2881 = vunpack.c.l.b16 %v2701
        %v2882 = vpack.c.b16 %v2867, %v2866
        %v2883 = vpack.c.b16 %v2869, %v2868
        %v2884 = vpack.c.b16 %v2871, %v2870
        %v2885 = vpack.c.b16 %v2873, %v2872
        %v2886 = vpack.c.b16 %v2875, %v2874
        %v2887 = vpack.c.b16 %v2877, %v2876
        %v2888 = vpack.c.b16 %v2879, %v2878
        %v2889 = vpack.c.b16 %v2881, %v2880
        %2898 = vmatprep.subr.bf16.mxu0 0
        %2899 = vmatpush1.bf16.msra.mxu0 %v2882
        %2900 = vmatprep.subr.bf16.mxu0 0
        %2901 = vmatpush1.bf16.msra.mxu0 %v2883
        %2902 = vmatprep.subr.bf16.mxu0 0
        %2903 = vmatpush1.bf16.msra.mxu0 %v2884
        %2904 = vmatprep.subr.bf16.mxu0 0
        %2905 = vmatpush1.bf16.msra.mxu0 %v2885
        %2906 = vmatprep.subr.bf16.mxu0 0
        %2907 = vmatpush1.bf16.msra.mxu0 %v2886
        %2908 = vmatprep.subr.bf16.mxu0 0
        %2909 = vmatpush1.bf16.msra.mxu0 %v2887
        %2910 = vmatprep.subr.bf16.mxu0 0
        %2911 = vmatpush1.bf16.msra.mxu0 %v2888
        %2912 = vmatprep.subr.bf16.mxu0 0
        %2913 = vmatpush1.bf16.msra.mxu0 %v2889
        %2914 = vmatprep.subr.bf16.mxu0 0
        %2915 = vmatpush1.bf16.msra.mxu0 0
        %2916 = vmatprep.subr.bf16.mxu0 0
        %2917 = vmatpush1.bf16.msra.mxu0 0
        %2918 = vmatprep.subr.bf16.mxu0 0
        %2919 = vmatpush1.bf16.msra.mxu0 0
        %2920 = vmatprep.subr.bf16.mxu0 0
        %2921 = vmatpush1.bf16.msra.mxu0 0
        %2922 = vmatprep.subr.bf16.mxu0 0
        %2923 = vmatpush1.bf16.msra.mxu0 0
        %2924 = vmatprep.subr.bf16.mxu0 0
        %2925 = vmatpush1.bf16.msra.mxu0 0
        %2926 = vmatprep.subr.bf16.mxu0 0
        %2927 = vmatpush1.bf16.msra.mxu0 0
        %2928 = vmatprep.subr.bf16.mxu0 0
        %2929 = vmatpush1.bf16.msra.mxu0 0
        %2930 = vmatprep.mubr.bf16.mxu0 0
        %2931 = vmatmul.mubr.bf16.gmra.mrb[0].mxu0 %v2669
        %v2932 = vpop.f32.mrb[0].mxu0
        %v2933 = vadd.f32 %v2749, %v2932
        %v2934 = vpop.f32.mrb[0].mxu0
        %v2935 = vpop.f32.mrb[0].mxu0
        %v2936 = vpop.f32.mrb[0].mxu0
        %2937 = vdwg.mxu0
        %v2954 = vunpack.c.l.b16 %v2702
        %v2955 = vunpack.c.l.b16 %v2703
        %v2956 = vunpack.c.l.b16 %v2704
        %v2957 = vunpack.c.l.b16 %v2705
        %v2958 = vunpack.c.l.b16 %v2706
        %v2959 = vunpack.c.l.b16 %v2707
        %v2960 = vunpack.c.l.b16 %v2708
        %v2961 = vunpack.c.l.b16 %v2709
        %v2962 = vunpack.c.l.b16 %v2710
        %v2963 = vunpack.c.l.b16 %v2711
        %v2964 = vunpack.c.l.b16 %v2712
        %v2965 = vunpack.c.l.b16 %v2713
        %v2966 = vunpack.c.l.b16 %v2714
        %v2967 = vunpack.c.l.b16 %v2715
        %v2968 = vunpack.c.l.b16 %v2716
        %v2969 = vunpack.c.l.b16 %v2717
        %v2970 = vpack.c.b16 %v2955, %v2954
        %v2971 = vpack.c.b16 %v2957, %v2956
        %v2972 = vpack.c.b16 %v2959, %v2958
        %v2973 = vpack.c.b16 %v2961, %v2960
        %v2974 = vpack.c.b16 %v2963, %v2962
        %v2975 = vpack.c.b16 %v2965, %v2964
        %v2976 = vpack.c.b16 %v2967, %v2966
        %v2977 = vpack.c.b16 %v2969, %v2968
        %2986 = vmatprep.subr.bf16.mxu0 0
        %2987 = vmatpush1.bf16.msra.mxu0 %v2970
        %2988 = vmatprep.subr.bf16.mxu0 0
        %2989 = vmatpush1.bf16.msra.mxu0 %v2971
        %2990 = vmatprep.subr.bf16.mxu0 0
        %2991 = vmatpush1.bf16.msra.mxu0 %v2972
        %2992 = vmatprep.subr.bf16.mxu0 0
        %2993 = vmatpush1.bf16.msra.mxu0 %v2973
        %2994 = vmatprep.subr.bf16.mxu0 0
        %2995 = vmatpush1.bf16.msra.mxu0 %v2974
        %2996 = vmatprep.subr.bf16.mxu0 0
        %2997 = vmatpush1.bf16.msra.mxu0 %v2975
        %2998 = vmatprep.subr.bf16.mxu0 0
        %2999 = vmatpush1.bf16.msra.mxu0 %v2976
        %3000 = vmatprep.subr.bf16.mxu0 0
        %3001 = vmatpush1.bf16.msra.mxu0 %v2977
        %3002 = vmatprep.subr.bf16.mxu0 0
        %3003 = vmatpush1.bf16.msra.mxu0 0
        %3004 = vmatprep.subr.bf16.mxu0 0
        %3005 = vmatpush1.bf16.msra.mxu0 0
        %3006 = vmatprep.subr.bf16.mxu0 0
        %3007 = vmatpush1.bf16.msra.mxu0 0
        %3008 = vmatprep.subr.bf16.mxu0 0
        %3009 = vmatpush1.bf16.msra.mxu0 0
        %3010 = vmatprep.subr.bf16.mxu0 0
        %3011 = vmatpush1.bf16.msra.mxu0 0
        %3012 = vmatprep.subr.bf16.mxu0 0
        %3013 = vmatpush1.bf16.msra.mxu0 0
        %3014 = vmatprep.subr.bf16.mxu0 0
        %3015 = vmatpush1.bf16.msra.mxu0 0
        %3016 = vmatprep.subr.bf16.mxu0 0
        %3017 = vmatpush1.bf16.msra.mxu0 0
        %3018 = vmatprep.mubr.bf16.mxu0 0
        %3019 = vmatmul.mubr.bf16.gmra.mrb[0].mxu0 %v2669
        %v3020 = vpop.f32.mrb[0].mxu0
        %v3021 = vadd.f32 %v2753, %v3020
        %v3022 = vpop.f32.mrb[0].mxu0
        %v3023 = vpop.f32.mrb[0].mxu0
        %v3024 = vpop.f32.mrb[0].mxu0
        %3025 = vdwg.mxu0
        %v3042 = vunpack.c.l.b16 %v2718
        %v3043 = vunpack.c.l.b16 %v2719
        %v3044 = vunpack.c.l.b16 %v2720
        %v3045 = vunpack.c.l.b16 %v2721
        %v3046 = vunpack.c.l.b16 %v2722
        %v3047 = vunpack.c.l.b16 %v2723
        %v3048 = vunpack.c.l.b16 %v2724
        %v3049 = vunpack.c.l.b16 %v2725
        %v3050 = vunpack.c.l.b16 %v2726
        %v3051 = vunpack.c.l.b16 %v2727
        %v3052 = vunpack.c.l.b16 %v2728
        %v3053 = vunpack.c.l.b16 %v2729
        %v3054 = vunpack.c.l.b16 %v2730
        %v3055 = vunpack.c.l.b16 %v2731
        %v3056 = vunpack.c.l.b16 %v2732
        %v3057 = vunpack.c.l.b16 %v2733
        %v3058 = vpack.c.b16 %v3043, %v3042
        %v3059 = vpack.c.b16 %v3045, %v3044
        %v3060 = vpack.c.b16 %v3047, %v3046
        %v3061 = vpack.c.b16 %v3049, %v3048
        %v3062 = vpack.c.b16 %v3051, %v3050
        %v3063 = vpack.c.b16 %v3053, %v3052
        %v3064 = vpack.c.b16 %v3055, %v3054
        %v3065 = vpack.c.b16 %v3057, %v3056
        %3074 = vmatprep.subr.bf16.mxu0 0
        %3075 = vmatpush1.bf16.msra.mxu0 %v3058
        %3076 = vmatprep.subr.bf16.mxu0 0
        %3077 = vmatpush1.bf16.msra.mxu0 %v3059
        %3078 = vmatprep.subr.bf16.mxu0 0
        %3079 = vmatpush1.bf16.msra.mxu0 %v3060
        %3080 = vmatprep.subr.bf16.mxu0 0
        %3081 = vmatpush1.bf16.msra.mxu0 %v3061
        %3082 = vmatprep.subr.bf16.mxu0 0
        %3083 = vmatpush1.bf16.msra.mxu0 %v3062
        %3084 = vmatprep.subr.bf16.mxu0 0
        %3085 = vmatpush1.bf16.msra.mxu0 %v3063
        %3086 = vmatprep.subr.bf16.mxu0 0
        %3087 = vmatpush1.bf16.msra.mxu0 %v3064
        %3088 = vmatprep.subr.bf16.mxu0 0
        %3089 = vmatpush1.bf16.msra.mxu0 %v3065
        %3090 = vmatprep.subr.bf16.mxu0 0
        %3091 = vmatpush1.bf16.msra.mxu0 0
        %3092 = vmatprep.subr.bf16.mxu0 0
        %3093 = vmatpush1.bf16.msra.mxu0 0
        %3094 = vmatprep.subr.bf16.mxu0 0
        %3095 = vmatpush1.bf16.msra.mxu0 0
        %3096 = vmatprep.subr.bf16.mxu0 0
        %3097 = vmatpush1.bf16.msra.mxu0 0
        %3098 = vmatprep.subr.bf16.mxu0 0
        %3099 = vmatpush1.bf16.msra.mxu0 0
        %3100 = vmatprep.subr.bf16.mxu0 0
        %3101 = vmatpush1.bf16.msra.mxu0 0
        %3102 = vmatprep.subr.bf16.mxu0 0
        %3103 = vmatpush1.bf16.msra.mxu0 0
        %3104 = vmatprep.subr.bf16.mxu0 0
        %3105 = vmatpush1.bf16.msra.mxu0 0
        %3106 = vmatprep.mubr.bf16.mxu0 0
        %3107 = vmatmul.mubr.bf16.gmra.mrb[0].mxu0 %v2669
        %v3108 = vpop.f32.mrb[0].mxu0
        %v3109 = vadd.f32 %v2757, %v3108
        %v3110 = vpop.f32.mrb[0].mxu0
        %v3111 = vpop.f32.mrb[0].mxu0
        %v3112 = vpop.f32.mrb[0].mxu0
        %3113 = vdwg.mxu0
        %v3114 = vpack.c.bf16 %v604, %v604
        %v3115 = vld [vmem:[%s10] sm:$0xf]
        %v3116 = vld [vmem:[%s10 + $0x4] sm:$0xf]
        %v3117 = vld [vmem:[%s10 + $0x8] sm:$0xf]
        %v3118 = vld [vmem:[%s10 + $0xc] sm:$0xf]
        %v3119 = vld [vmem:[%s10 + $0x10] sm:$0xf]
        %v3120 = vld [vmem:[%s10 + $0x14] sm:$0xf]
        %v3121 = vld [vmem:[%s10 + $0x18] sm:$0xf]
        %v3122 = vld [vmem:[%s10 + $0x1c] sm:$0xf]
        %v3123 = vld [vmem:[%s10 + $0x20] sm:$0xf]
        %v3124 = vld [vmem:[%s10 + $0x24] sm:$0xf]
        %v3125 = vld [vmem:[%s10 + $0x28] sm:$0xf]
        %v3126 = vld [vmem:[%s10 + $0x2c] sm:$0xf]
        %v3127 = vld [vmem:[%s10 + $0x30] sm:$0xf]
        %v3128 = vld [vmem:[%s10 + $0x34] sm:$0xf]
        %v3129 = vld [vmem:[%s10 + $0x38] sm:$0xf]
        %v3130 = vld [vmem:[%s10 + $0x3c] sm:$0xf]
        %v3131 = vld [vmem:[%s10 + $0x40] sm:$0xf]
        %v3132 = vld [vmem:[%s10 + $0x44] sm:$0xf]
        %v3133 = vld [vmem:[%s10 + $0x48] sm:$0xf]
        %v3134 = vld [vmem:[%s10 + $0x4c] sm:$0xf]
        %v3135 = vld [vmem:[%s10 + $0x50] sm:$0xf]
        %v3136 = vld [vmem:[%s10 + $0x54] sm:$0xf]
        %v3137 = vld [vmem:[%s10 + $0x58] sm:$0xf]
        %v3138 = vld [vmem:[%s10 + $0x5c] sm:$0xf]
        %v3139 = vld [vmem:[%s10 + $0x60] sm:$0xf]
        %v3140 = vld [vmem:[%s10 + $0x64] sm:$0xf]
        %v3141 = vld [vmem:[%s10 + $0x68] sm:$0xf]
        %v3142 = vld [vmem:[%s10 + $0x6c] sm:$0xf]
        %v3143 = vld [vmem:[%s10 + $0x70] sm:$0xf]
        %v3144 = vld [vmem:[%s10 + $0x74] sm:$0xf]
        %v3145 = vld [vmem:[%s10 + $0x78] sm:$0xf]
        %v3146 = vld [vmem:[%s10 + $0x7c] sm:$0xf]
        %v3147 = vld [vmem:[%s10 + $0x80] sm:$0xf]
        %v3148 = vld [vmem:[%s10 + $0x84] sm:$0xf]
        %v3149 = vld [vmem:[%s10 + $0x88] sm:$0xf]
        %v3150 = vld [vmem:[%s10 + $0x8c] sm:$0xf]
        %v3151 = vld [vmem:[%s10 + $0x90] sm:$0xf]
        %v3152 = vld [vmem:[%s10 + $0x94] sm:$0xf]
        %v3153 = vld [vmem:[%s10 + $0x98] sm:$0xf]
        %v3154 = vld [vmem:[%s10 + $0x9c] sm:$0xf]
        %v3155 = vld [vmem:[%s10 + $0xa0] sm:$0xf]
        %v3156 = vld [vmem:[%s10 + $0xa4] sm:$0xf]
        %v3157 = vld [vmem:[%s10 + $0xa8] sm:$0xf]
        %v3158 = vld [vmem:[%s10 + $0xac] sm:$0xf]
        %v3159 = vld [vmem:[%s10 + $0xb0] sm:$0xf]
        %v3160 = vld [vmem:[%s10 + $0xb4] sm:$0xf]
        %v3161 = vld [vmem:[%s10 + $0xb8] sm:$0xf]
        %v3162 = vld [vmem:[%s10 + $0xbc] sm:$0xf]
        %v3163 = vld [vmem:[%s10 + $0xc0] sm:$0xf]
        %v3164 = vld [vmem:[%s10 + $0xc4] sm:$0xf]
        %v3165 = vld [vmem:[%s10 + $0xc8] sm:$0xf]
        %v3166 = vld [vmem:[%s10 + $0xcc] sm:$0xf]
        %v3167 = vld [vmem:[%s10 + $0xd0] sm:$0xf]
        %v3168 = vld [vmem:[%s10 + $0xd4] sm:$0xf]
        %v3169 = vld [vmem:[%s10 + $0xd8] sm:$0xf]
        %v3170 = vld [vmem:[%s10 + $0xdc] sm:$0xf]
        %v3171 = vld [vmem:[%s10 + $0xe0] sm:$0xf]
        %v3172 = vld [vmem:[%s10 + $0xe4] sm:$0xf]
        %v3173 = vld [vmem:[%s10 + $0xe8] sm:$0xf]
        %v3174 = vld [vmem:[%s10 + $0xec] sm:$0xf]
        %v3175 = vld [vmem:[%s10 + $0xf0] sm:$0xf]
        %v3176 = vld [vmem:[%s10 + $0xf4] sm:$0xf]
        %v3177 = vld [vmem:[%s10 + $0xf8] sm:$0xf]
        %v3178 = vld [vmem:[%s10 + $0xfc] sm:$0xf]
        %v3179 = vld [vmem:[%s10 + $0x100] sm:$0xf]
        %v3180 = vld [vmem:[%s10 + $0x104] sm:$0xf]
        %v3181 = vld [vmem:[%s10 + $0x108] sm:$0xf]
        %v3182 = vld [vmem:[%s10 + $0x10c] sm:$0xf]
        %v3183 = vld [vmem:[%s10 + $0x110] sm:$0xf]
        %v3184 = vld [vmem:[%s10 + $0x114] sm:$0xf]
        %v3185 = vld [vmem:[%s10 + $0x118] sm:$0xf]
        %v3186 = vld [vmem:[%s10 + $0x11c] sm:$0xf]
        %v3187 = vld [vmem:[%s10 + $0x120] sm:$0xf]
        %v3188 = vld [vmem:[%s10 + $0x124] sm:$0xf]
        %v3189 = vld [vmem:[%s10 + $0x128] sm:$0xf]
        %v3190 = vld [vmem:[%s10 + $0x12c] sm:$0xf]
        %v3191 = vld [vmem:[%s10 + $0x130] sm:$0xf]
        %v3192 = vld [vmem:[%s10 + $0x134] sm:$0xf]
        %v3193 = vld [vmem:[%s10 + $0x138] sm:$0xf]
        %v3194 = vld [vmem:[%s10 + $0x13c] sm:$0xf]
        %v3195 = vld [vmem:[%s10 + $0x140] sm:$0xf]
        %v3196 = vld [vmem:[%s10 + $0x144] sm:$0xf]
        %v3197 = vld [vmem:[%s10 + $0x148] sm:$0xf]
        %v3198 = vld [vmem:[%s10 + $0x14c] sm:$0xf]
        %v3199 = vld [vmem:[%s10 + $0x150] sm:$0xf]
        %v3200 = vld [vmem:[%s10 + $0x154] sm:$0xf]
        %v3201 = vld [vmem:[%s10 + $0x158] sm:$0xf]
        %v3202 = vld [vmem:[%s10 + $0x15c] sm:$0xf]
        %v3203 = vld [vmem:[%s10 + $0x160] sm:$0xf]
        %v3204 = vld [vmem:[%s10 + $0x164] sm:$0xf]
        %v3205 = vld [vmem:[%s10 + $0x168] sm:$0xf]
        %v3206 = vld [vmem:[%s10 + $0x16c] sm:$0xf]
        %v3207 = vld [vmem:[%s10 + $0x170] sm:$0xf]
        %v3208 = vld [vmem:[%s10 + $0x174] sm:$0xf]
        %v3209 = vld [vmem:[%s10 + $0x178] sm:$0xf]
        %v3210 = vld [vmem:[%s10 + $0x17c] sm:$0xf]
        %v3211 = vld [vmem:[%s10 + $0x180] sm:$0xf]
        %v3212 = vld [vmem:[%s10 + $0x184] sm:$0xf]
        %v3213 = vld [vmem:[%s10 + $0x188] sm:$0xf]
        %v3214 = vld [vmem:[%s10 + $0x18c] sm:$0xf]
        %v3215 = vld [vmem:[%s10 + $0x190] sm:$0xf]
        %v3216 = vld [vmem:[%s10 + $0x194] sm:$0xf]
        %v3217 = vld [vmem:[%s10 + $0x198] sm:$0xf]
        %v3218 = vld [vmem:[%s10 + $0x19c] sm:$0xf]
        %v3219 = vld [vmem:[%s10 + $0x1a0] sm:$0xf]
        %v3220 = vld [vmem:[%s10 + $0x1a4] sm:$0xf]
        %v3221 = vld [vmem:[%s10 + $0x1a8] sm:$0xf]
        %v3222 = vld [vmem:[%s10 + $0x1ac] sm:$0xf]
        %v3223 = vld [vmem:[%s10 + $0x1b0] sm:$0xf]
        %v3224 = vld [vmem:[%s10 + $0x1b4] sm:$0xf]
        %v3225 = vld [vmem:[%s10 + $0x1b8] sm:$0xf]
        %v3226 = vld [vmem:[%s10 + $0x1bc] sm:$0xf]
        %v3227 = vld [vmem:[%s10 + $0x1c0] sm:$0xf]
        %v3228 = vld [vmem:[%s10 + $0x1c4] sm:$0xf]
        %v3229 = vld [vmem:[%s10 + $0x1c8] sm:$0xf]
        %v3230 = vld [vmem:[%s10 + $0x1cc] sm:$0xf]
        %v3231 = vld [vmem:[%s10 + $0x1d0] sm:$0xf]
        %v3232 = vld [vmem:[%s10 + $0x1d4] sm:$0xf]
        %v3233 = vld [vmem:[%s10 + $0x1d8] sm:$0xf]
        %v3234 = vld [vmem:[%s10 + $0x1dc] sm:$0xf]
        %v3235 = vld [vmem:[%s10 + $0x1e0] sm:$0xf]
        %v3236 = vld [vmem:[%s10 + $0x1e4] sm:$0xf]
        %v3237 = vld [vmem:[%s10 + $0x1e8] sm:$0xf]
        %v3238 = vld [vmem:[%s10 + $0x1ec] sm:$0xf]
        %v3239 = vld [vmem:[%s10 + $0x1f0] sm:$0xf]
        %v3240 = vld [vmem:[%s10 + $0x1f4] sm:$0xf]
        %v3241 = vld [vmem:[%s10 + $0x1f8] sm:$0xf]
        %v3242 = vld [vmem:[%s10 + $0x1fc] sm:$0xf]
        %v3243 = vld [vmem:[%s11] sm:$0x1]
        %v3244 = vld [vmem:[%s11 + $0x1] sm:$0x1]
        %v3245 = vld [vmem:[%s11 + $0x2] sm:$0x1]
        %v3246 = vld [vmem:[%s11 + $0x3] sm:$0x1]
        %v3247 = vld [vmem:[%s11 + $0x4] sm:$0x1]
        %v3248 = vld [vmem:[%s11 + $0x5] sm:$0x1]
        %v3249 = vld [vmem:[%s11 + $0x6] sm:$0x1]
        %v3250 = vld [vmem:[%s11 + $0x7] sm:$0x1]
        %v3259 = vlaneseq
        %v3260 = vshrl.u32 %v3259, 7
        %v3261 = vsub.s32 0, %v3260
        %v3262 = vrot.slane %v3243, %v3261
        %v3263 = vlaneseq
        %v3264 = vshrl.u32 %v3263, 7
        %v3265 = vsub.s32 0, %v3264
        %v3266 = vrot.slane %v3244, %v3265
        %v3267 = vlaneseq
        %v3268 = vshrl.u32 %v3267, 7
        %v3269 = vsub.s32 0, %v3268
        %v3270 = vrot.slane %v3245, %v3269
        %v3271 = vlaneseq
        %v3272 = vshrl.u32 %v3271, 7
        %v3273 = vsub.s32 0, %v3272
        %v3274 = vrot.slane %v3246, %v3273
        %v3275 = vlaneseq
        %v3276 = vshrl.u32 %v3275, 7
        %v3277 = vsub.s32 0, %v3276
        %v3278 = vrot.slane %v3247, %v3277
        %v3279 = vlaneseq
        %v3280 = vshrl.u32 %v3279, 7
        %v3281 = vsub.s32 0, %v3280
        %v3282 = vrot.slane %v3248, %v3281
        %v3283 = vlaneseq
        %v3284 = vshrl.u32 %v3283, 7
        %v3285 = vsub.s32 0, %v3284
        %v3286 = vrot.slane %v3249, %v3285
        %v3287 = vlaneseq
        %v3288 = vshrl.u32 %v3287, 7
        %v3289 = vsub.s32 0, %v3288
        %v3290 = vrot.slane %v3250, %v3289
        %v3315 = vunpack.c.l.b16 %v3115
        %v3316 = vunpack.c.l.b16 %v3116
        %v3317 = vunpack.c.l.b16 %v3117
        %v3318 = vunpack.c.l.b16 %v3118
        %v3319 = vunpack.c.l.b16 %v3119
        %v3320 = vunpack.c.l.b16 %v3120
        %v3321 = vunpack.c.l.b16 %v3121
        %v3322 = vunpack.c.l.b16 %v3122
        %v3323 = vunpack.c.l.b16 %v3123
        %v3324 = vunpack.c.l.b16 %v3124
        %v3325 = vunpack.c.l.b16 %v3125
        %v3326 = vunpack.c.l.b16 %v3126
        %v3327 = vunpack.c.l.b16 %v3127
        %v3328 = vunpack.c.l.b16 %v3128
        %v3329 = vunpack.c.l.b16 %v3129
        %v3330 = vunpack.c.l.b16 %v3130
        %v3331 = vpack.c.b16 %v3316, %v3315
        %v3332 = vpack.c.b16 %v3318, %v3317
        %v3333 = vpack.c.b16 %v3320, %v3319
        %v3334 = vpack.c.b16 %v3322, %v3321
        %v3335 = vpack.c.b16 %v3324, %v3323
        %v3336 = vpack.c.b16 %v3326, %v3325
        %v3337 = vpack.c.b16 %v3328, %v3327
        %v3338 = vpack.c.b16 %v3330, %v3329
        %3347 = vmatprep.subr.bf16.mxu0 0
        %3348 = vmatpush1.bf16.msra.mxu0 %v3331
        %3349 = vmatprep.subr.bf16.mxu0 0
        %3350 = vmatpush1.bf16.msra.mxu0 %v3332
        %3351 = vmatprep.subr.bf16.mxu0 0
        %3352 = vmatpush1.bf16.msra.mxu0 %v3333
        %3353 = vmatprep.subr.bf16.mxu0 0
        %3354 = vmatpush1.bf16.msra.mxu0 %v3334
        %3355 = vmatprep.subr.bf16.mxu0 0
        %3356 = vmatpush1.bf16.msra.mxu0 %v3335
        %3357 = vmatprep.subr.bf16.mxu0 0
        %3358 = vmatpush1.bf16.msra.mxu0 %v3336
        %3359 = vmatprep.subr.bf16.mxu0 0
        %3360 = vmatpush1.bf16.msra.mxu0 %v3337
        %3361 = vmatprep.subr.bf16.mxu0 0
        %3362 = vmatpush1.bf16.msra.mxu0 %v3338
        %3363 = vmatprep.subr.bf16.mxu0 0
        %3364 = vmatpush1.bf16.msra.mxu0 0
        %3365 = vmatprep.subr.bf16.mxu0 0
        %3366 = vmatpush1.bf16.msra.mxu0 0
        %3367 = vmatprep.subr.bf16.mxu0 0
        %3368 = vmatpush1.bf16.msra.mxu0 0
        %3369 = vmatprep.subr.bf16.mxu0 0
        %3370 = vmatpush1.bf16.msra.mxu0 0
        %3371 = vmatprep.subr.bf16.mxu0 0
        %3372 = vmatpush1.bf16.msra.mxu0 0
        %3373 = vmatprep.subr.bf16.mxu0 0
        %3374 = vmatpush1.bf16.msra.mxu0 0
        %3375 = vmatprep.subr.bf16.mxu0 0
        %3376 = vmatpush1.bf16.msra.mxu0 0
        %3377 = vmatprep.subr.bf16.mxu0 0
        %3378 = vmatpush1.bf16.msra.mxu0 0
        %3379 = vmatprep.mubr.bf16.mxu0 0
        %3380 = vmatmul.mubr.bf16.gmra.mrb[0].mxu0 %v3114
        %v3381 = vpop.f32.mrb[0].mxu0
        %v3382 = vadd.f32 %v3262, %v3381
        %v3383 = vpop.f32.mrb[0].mxu0
        %v3384 = vpop.f32.mrb[0].mxu0
        %v3385 = vpop.f32.mrb[0].mxu0
        %3386 = vdwg.mxu0
        %v3403 = vunpack.c.l.b16 %v3131
        %v3404 = vunpack.c.l.b16 %v3132
        %v3405 = vunpack.c.l.b16 %v3133
        %v3406 = vunpack.c.l.b16 %v3134
        %v3407 = vunpack.c.l.b16 %v3135
        %v3408 = vunpack.c.l.b16 %v3136
        %v3409 = vunpack.c.l.b16 %v3137
        %v3410 = vunpack.c.l.b16 %v3138
        %v3411 = vunpack.c.l.b16 %v3139
        %v3412 = vunpack.c.l.b16 %v3140
        %v3413 = vunpack.c.l.b16 %v3141
        %v3414 = vunpack.c.l.b16 %v3142
        %v3415 = vunpack.c.l.b16 %v3143
        %v3416 = vunpack.c.l.b16 %v3144
        %v3417 = vunpack.c.l.b16 %v3145
        %v3418 = vunpack.c.l.b16 %v3146
        %v3419 = vpack.c.b16 %v3404, %v3403
        %v3420 = vpack.c.b16 %v3406, %v3405
        %v3421 = vpack.c.b16 %v3408, %v3407
        %v3422 = vpack.c.b16 %v3410, %v3409
        %v3423 = vpack.c.b16 %v3412, %v3411
        %v3424 = vpack.c.b16 %v3414, %v3413
        %v3425 = vpack.c.b16 %v3416, %v3415
        %v3426 = vpack.c.b16 %v3418, %v3417
        %3435 = vmatprep.subr.bf16.mxu0 0
        %3436 = vmatpush1.bf16.msra.mxu0 %v3419
        %3437 = vmatprep.subr.bf16.mxu0 0
        %3438 = vmatpush1.bf16.msra.mxu0 %v3420
        %3439 = vmatprep.subr.bf16.mxu0 0
        %3440 = vmatpush1.bf16.msra.mxu0 %v3421
        %3441 = vmatprep.subr.bf16.mxu0 0
        %3442 = vmatpush1.bf16.msra.mxu0 %v3422
        %3443 = vmatprep.subr.bf16.mxu0 0
        %3444 = vmatpush1.bf16.msra.mxu0 %v3423
        %3445 = vmatprep.subr.bf16.mxu0 0
        %3446 = vmatpush1.bf16.msra.mxu0 %v3424
        %3447 = vmatprep.subr.bf16.mxu0 0
        %3448 = vmatpush1.bf16.msra.mxu0 %v3425
        %3449 = vmatprep.subr.bf16.mxu0 0
        %3450 = vmatpush1.bf16.msra.mxu0 %v3426
        %3451 = vmatprep.subr.bf16.mxu0 0
        %3452 = vmatpush1.bf16.msra.mxu0 0
        %3453 = vmatprep.subr.bf16.mxu0 0
        %3454 = vmatpush1.bf16.msra.mxu0 0
        %3455 = vmatprep.subr.bf16.mxu0 0
        %3456 = vmatpush1.bf16.msra.mxu0 0
        %3457 = vmatprep.subr.bf16.mxu0 0
        %3458 = vmatpush1.bf16.msra.mxu0 0
        %3459 = vmatprep.subr.bf16.mxu0 0
        %3460 = vmatpush1.bf16.msra.mxu0 0
        %3461 = vmatprep.subr.bf16.mxu0 0
        %3462 = vmatpush1.bf16.msra.mxu0 0
        %3463 = vmatprep.subr.bf16.mxu0 0
        %3464 = vmatpush1.bf16.msra.mxu0 0
        %3465 = vmatprep.subr.bf16.mxu0 0
        %3466 = vmatpush1.bf16.msra.mxu0 0
        %3467 = vmatprep.mubr.bf16.mxu0 0
        %3468 = vmatmul.mubr.bf16.gmra.mrb[0].mxu0 %v3114
        %v3469 = vpop.f32.mrb[0].mxu0
        %v3470 = vadd.f32 %v3266, %v3469
        %v3471 = vpop.f32.mrb[0].mxu0
        %v3472 = vpop.f32.mrb[0].mxu0
        %v3473 = vpop.f32.mrb[0].mxu0
        %3474 = vdwg.mxu0
        %v3491 = vunpack.c.l.b16 %v3147
        %v3492 = vunpack.c.l.b16 %v3148
        %v3493 = vunpack.c.l.b16 %v3149
        %v3494 = vunpack.c.l.b16 %v3150
        %v3495 = vunpack.c.l.b16 %v3151
        %v3496 = vunpack.c.l.b16 %v3152
        %v3497 = vunpack.c.l.b16 %v3153
        %v3498 = vunpack.c.l.b16 %v3154
        %v3499 = vunpack.c.l.b16 %v3155
        %v3500 = vunpack.c.l.b16 %v3156
        %v3501 = vunpack.c.l.b16 %v3157
        %v3502 = vunpack.c.l.b16 %v3158
        %v3503 = vunpack.c.l.b16 %v3159
        %v3504 = vunpack.c.l.b16 %v3160
        %v3505 = vunpack.c.l.b16 %v3161
        %v3506 = vunpack.c.l.b16 %v3162
        %v3507 = vpack.c.b16 %v3492, %v3491
        %v3508 = vpack.c.b16 %v3494, %v3493
        %v3509 = vpack.c.b16 %v3496, %v3495
        %v3510 = vpack.c.b16 %v3498, %v3497
        %v3511 = vpack.c.b16 %v3500, %v3499
        %v3512 = vpack.c.b16 %v3502, %v3501
        %v3513 = vpack.c.b16 %v3504, %v3503
        %v3514 = vpack.c.b16 %v3506, %v3505
        %3523 = vmatprep.subr.bf16.mxu0 0
        %3524 = vmatpush1.bf16.msra.mxu0 %v3507
        %3525 = vmatprep.subr.bf16.mxu0 0
        %3526 = vmatpush1.bf16.msra.mxu0 %v3508
        %3527 = vmatprep.subr.bf16.mxu0 0
        %3528 = vmatpush1.bf16.msra.mxu0 %v3509
        %3529 = vmatprep.subr.bf16.mxu0 0
        %3530 = vmatpush1.bf16.msra.mxu0 %v3510
        %3531 = vmatprep.subr.bf16.mxu0 0
        %3532 = vmatpush1.bf16.msra.mxu0 %v3511
        %3533 = vmatprep.subr.bf16.mxu0 0
        %3534 = vmatpush1.bf16.msra.mxu0 %v3512
        %3535 = vmatprep.subr.bf16.mxu0 0
        %3536 = vmatpush1.bf16.msra.mxu0 %v3513
        %3537 = vmatprep.subr.bf16.mxu0 0
        %3538 = vmatpush1.bf16.msra.mxu0 %v3514
        %3539 = vmatprep.subr.bf16.mxu0 0
        %3540 = vmatpush1.bf16.msra.mxu0 0
        %3541 = vmatprep.subr.bf16.mxu0 0
        %3542 = vmatpush1.bf16.msra.mxu0 0
        %3543 = vmatprep.subr.bf16.mxu0 0
        %3544 = vmatpush1.bf16.msra.mxu0 0
        %3545 = vmatprep.subr.bf16.mxu0 0
        %3546 = vmatpush1.bf16.msra.mxu0 0
        %3547 = vmatprep.subr.bf16.mxu0 0
        %3548 = vmatpush1.bf16.msra.mxu0 0
        %3549 = vmatprep.subr.bf16.mxu0 0
        %3550 = vmatpush1.bf16.msra.mxu0 0
        %3551 = vmatprep.subr.bf16.mxu0 0
        %3552 = vmatpush1.bf16.msra.mxu0 0
        %3553 = vmatprep.subr.bf16.mxu0 0
        %3554 = vmatpush1.bf16.msra.mxu0 0
        %3555 = vmatprep.mubr.bf16.mxu0 0
        %3556 = vmatmul.mubr.bf16.gmra.mrb[0].mxu0 %v3114
        %v3557 = vpop.f32.mrb[0].mxu0
        %v3558 = vadd.f32 %v3270, %v3557
        %v3559 = vpop.f32.mrb[0].mxu0
        %v3560 = vpop.f32.mrb[0].mxu0
        %v3561 = vpop.f32.mrb[0].mxu0
        %3562 = vdwg.mxu0
        %v3579 = vunpack.c.l.b16 %v3163
        %v3580 = vunpack.c.l.b16 %v3164
        %v3581 = vunpack.c.l.b16 %v3165
        %v3582 = vunpack.c.l.b16 %v3166
        %v3583 = vunpack.c.l.b16 %v3167
        %v3584 = vunpack.c.l.b16 %v3168
        %v3585 = vunpack.c.l.b16 %v3169
        %v3586 = vunpack.c.l.b16 %v3170
        %v3587 = vunpack.c.l.b16 %v3171
        %v3588 = vunpack.c.l.b16 %v3172
        %v3589 = vunpack.c.l.b16 %v3173
        %v3590 = vunpack.c.l.b16 %v3174
        %v3591 = vunpack.c.l.b16 %v3175
        %v3592 = vunpack.c.l.b16 %v3176
        %v3593 = vunpack.c.l.b16 %v3177
        %v3594 = vunpack.c.l.b16 %v3178
        %v3595 = vpack.c.b16 %v3580, %v3579
        %v3596 = vpack.c.b16 %v3582, %v3581
        %v3597 = vpack.c.b16 %v3584, %v3583
        %v3598 = vpack.c.b16 %v3586, %v3585
        %v3599 = vpack.c.b16 %v3588, %v3587
        %v3600 = vpack.c.b16 %v3590, %v3589
        %v3601 = vpack.c.b16 %v3592, %v3591
        %v3602 = vpack.c.b16 %v3594, %v3593
        %3611 = vmatprep.subr.bf16.mxu0 0
        %3612 = vmatpush1.bf16.msra.mxu0 %v3595
        %3613 = vmatprep.subr.bf16.mxu0 0
        %3614 = vmatpush1.bf16.msra.mxu0 %v3596
        %3615 = vmatprep.subr.bf16.mxu0 0
        %3616 = vmatpush1.bf16.msra.mxu0 %v3597
        %3617 = vmatprep.subr.bf16.mxu0 0
        %3618 = vmatpush1.bf16.msra.mxu0 %v3598
        %3619 = vmatprep.subr.bf16.mxu0 0
        %3620 = vmatpush1.bf16.msra.mxu0 %v3599
        %3621 = vmatprep.subr.bf16.mxu0 0
        %3622 = vmatpush1.bf16.msra.mxu0 %v3600
        %3623 = vmatprep.subr.bf16.mxu0 0
        %3624 = vmatpush1.bf16.msra.mxu0 %v3601
        %3625 = vmatprep.subr.bf16.mxu0 0
        %3626 = vmatpush1.bf16.msra.mxu0 %v3602
        %3627 = vmatprep.subr.bf16.mxu0 0
        %3628 = vmatpush1.bf16.msra.mxu0 0
        %3629 = vmatprep.subr.bf16.mxu0 0
        %3630 = vmatpush1.bf16.msra.mxu0 0
        %3631 = vmatprep.subr.bf16.mxu0 0
        %3632 = vmatpush1.bf16.msra.mxu0 0
        %3633 = vmatprep.subr.bf16.mxu0 0
        %3634 = vmatpush1.bf16.msra.mxu0 0
        %3635 = vmatprep.subr.bf16.mxu0 0
        %3636 = vmatpush1.bf16.msra.mxu0 0
        %3637 = vmatprep.subr.bf16.mxu0 0
        %3638 = vmatpush1.bf16.msra.mxu0 0
        %3639 = vmatprep.subr.bf16.mxu0 0
        %3640 = vmatpush1.bf16.msra.mxu0 0
        %3641 = vmatprep.subr.bf16.mxu0 0
        %3642 = vmatpush1.bf16.msra.mxu0 0
        %3643 = vmatprep.mubr.bf16.mxu0 0
        %3644 = vmatmul.mubr.bf16.gmra.mrb[0].mxu0 %v3114
        %v3645 = vpop.f32.mrb[0].mxu0
        %v3646 = vadd.f32 %v3274, %v3645
        %v3647 = vpop.f32.mrb[0].mxu0
        %v3648 = vpop.f32.mrb[0].mxu0
        %v3649 = vpop.f32.mrb[0].mxu0
        %3650 = vdwg.mxu0
        %v3667 = vunpack.c.l.b16 %v3179
        %v3668 = vunpack.c.l.b16 %v3180
        %v3669 = vunpack.c.l.b16 %v3181
        %v3670 = vunpack.c.l.b16 %v3182
        %v3671 = vunpack.c.l.b16 %v3183
        %v3672 = vunpack.c.l.b16 %v3184
        %v3673 = vunpack.c.l.b16 %v3185
        %v3674 = vunpack.c.l.b16 %v3186
        %v3675 = vunpack.c.l.b16 %v3187
        %v3676 = vunpack.c.l.b16 %v3188
        %v3677 = vunpack.c.l.b16 %v3189
        %v3678 = vunpack.c.l.b16 %v3190
        %v3679 = vunpack.c.l.b16 %v3191
        %v3680 = vunpack.c.l.b16 %v3192
        %v3681 = vunpack.c.l.b16 %v3193
        %v3682 = vunpack.c.l.b16 %v3194
        %v3683 = vpack.c.b16 %v3668, %v3667
        %v3684 = vpack.c.b16 %v3670, %v3669
        %v3685 = vpack.c.b16 %v3672, %v3671
        %v3686 = vpack.c.b16 %v3674, %v3673
        %v3687 = vpack.c.b16 %v3676, %v3675
        %v3688 = vpack.c.b16 %v3678, %v3677
        %v3689 = vpack.c.b16 %v3680, %v3679
        %v3690 = vpack.c.b16 %v3682, %v3681
        %3699 = vmatprep.subr.bf16.mxu0 0
        %3700 = vmatpush1.bf16.msra.mxu0 %v3683
        %3701 = vmatprep.subr.bf16.mxu0 0
        %3702 = vmatpush1.bf16.msra.mxu0 %v3684
        %3703 = vmatprep.subr.bf16.mxu0 0
        %3704 = vmatpush1.bf16.msra.mxu0 %v3685
        %3705 = vmatprep.subr.bf16.mxu0 0
        %3706 = vmatpush1.bf16.msra.mxu0 %v3686
        %3707 = vmatprep.subr.bf16.mxu0 0
        %3708 = vmatpush1.bf16.msra.mxu0 %v3687
        %3709 = vmatprep.subr.bf16.mxu0 0
        %3710 = vmatpush1.bf16.msra.mxu0 %v3688
        %3711 = vmatprep.subr.bf16.mxu0 0
        %3712 = vmatpush1.bf16.msra.mxu0 %v3689
        %3713 = vmatprep.subr.bf16.mxu0 0
        %3714 = vmatpush1.bf16.msra.mxu0 %v3690
        %3715 = vmatprep.subr.bf16.mxu0 0
        %3716 = vmatpush1.bf16.msra.mxu0 0
        %3717 = vmatprep.subr.bf16.mxu0 0
        %3718 = vmatpush1.bf16.msra.mxu0 0
        %3719 = vmatprep.subr.bf16.mxu0 0
        %3720 = vmatpush1.bf16.msra.mxu0 0
        %3721 = vmatprep.subr.bf16.mxu0 0
        %3722 = vmatpush1.bf16.msra.mxu0 0
        %3723 = vmatprep.subr.bf16.mxu0 0
        %3724 = vmatpush1.bf16.msra.mxu0 0
        %3725 = vmatprep.subr.bf16.mxu0 0
        %3726 = vmatpush1.bf16.msra.mxu0 0
        %3727 = vmatprep.subr.bf16.mxu0 0
        %3728 = vmatpush1.bf16.msra.mxu0 0
        %3729 = vmatprep.subr.bf16.mxu0 0
        %3730 = vmatpush1.bf16.msra.mxu0 0
        %3731 = vmatprep.mubr.bf16.mxu0 0
        %3732 = vmatmul.mubr.bf16.gmra.mrb[0].mxu0 %v3114
        %v3733 = vpop.f32.mrb[0].mxu0
        %v3734 = vadd.f32 %v3278, %v3733
        %v3735 = vpop.f32.mrb[0].mxu0
        %v3736 = vpop.f32.mrb[0].mxu0
        %v3737 = vpop.f32.mrb[0].mxu0
        %3738 = vdwg.mxu0
        %v3755 = vunpack.c.l.b16 %v3195
        %v3756 = vunpack.c.l.b16 %v3196
        %v3757 = vunpack.c.l.b16 %v3197
        %v3758 = vunpack.c.l.b16 %v3198
        %v3759 = vunpack.c.l.b16 %v3199
        %v3760 = vunpack.c.l.b16 %v3200
        %v3761 = vunpack.c.l.b16 %v3201
        %v3762 = vunpack.c.l.b16 %v3202
        %v3763 = vunpack.c.l.b16 %v3203
        %v3764 = vunpack.c.l.b16 %v3204
        %v3765 = vunpack.c.l.b16 %v3205
        %v3766 = vunpack.c.l.b16 %v3206
        %v3767 = vunpack.c.l.b16 %v3207
        %v3768 = vunpack.c.l.b16 %v3208
        %v3769 = vunpack.c.l.b16 %v3209
        %v3770 = vunpack.c.l.b16 %v3210
        %v3771 = vpack.c.b16 %v3756, %v3755
        %v3772 = vpack.c.b16 %v3758, %v3757
        %v3773 = vpack.c.b16 %v3760, %v3759
        %v3774 = vpack.c.b16 %v3762, %v3761
        %v3775 = vpack.c.b16 %v3764, %v3763
        %v3776 = vpack.c.b16 %v3766, %v3765
        %v3777 = vpack.c.b16 %v3768, %v3767
        %v3778 = vpack.c.b16 %v3770, %v3769
        %3787 = vmatprep.subr.bf16.mxu0 0
        %3788 = vmatpush1.bf16.msra.mxu0 %v3771
        %3789 = vmatprep.subr.bf16.mxu0 0
        %3790 = vmatpush1.bf16.msra.mxu0 %v3772
        %3791 = vmatprep.subr.bf16.mxu0 0
        %3792 = vmatpush1.bf16.msra.mxu0 %v3773
        %3793 = vmatprep.subr.bf16.mxu0 0
        %3794 = vmatpush1.bf16.msra.mxu0 %v3774
        %3795 = vmatprep.subr.bf16.mxu0 0
        %3796 = vmatpush1.bf16.msra.mxu0 %v3775
        %3797 = vmatprep.subr.bf16.mxu0 0
        %3798 = vmatpush1.bf16.msra.mxu0 %v3776
        %3799 = vmatprep.subr.bf16.mxu0 0
        %3800 = vmatpush1.bf16.msra.mxu0 %v3777
        %3801 = vmatprep.subr.bf16.mxu0 0
        %3802 = vmatpush1.bf16.msra.mxu0 %v3778
        %3803 = vmatprep.subr.bf16.mxu0 0
        %3804 = vmatpush1.bf16.msra.mxu0 0
        %3805 = vmatprep.subr.bf16.mxu0 0
        %3806 = vmatpush1.bf16.msra.mxu0 0
        %3807 = vmatprep.subr.bf16.mxu0 0
        %3808 = vmatpush1.bf16.msra.mxu0 0
        %3809 = vmatprep.subr.bf16.mxu0 0
        %3810 = vmatpush1.bf16.msra.mxu0 0
        %3811 = vmatprep.subr.bf16.mxu0 0
        %3812 = vmatpush1.bf16.msra.mxu0 0
        %3813 = vmatprep.subr.bf16.mxu0 0
        %3814 = vmatpush1.bf16.msra.mxu0 0
        %3815 = vmatprep.subr.bf16.mxu0 0
        %3816 = vmatpush1.bf16.msra.mxu0 0
        %3817 = vmatprep.subr.bf16.mxu0 0
        %3818 = vmatpush1.bf16.msra.mxu0 0
        %3819 = vmatprep.mubr.bf16.mxu0 0
        %3820 = vmatmul.mubr.bf16.gmra.mrb[0].mxu0 %v3114
        %v3821 = vpop.f32.mrb[0].mxu0
        %v3822 = vadd.f32 %v3282, %v3821
        %v3823 = vpop.f32.mrb[0].mxu0
        %v3824 = vpop.f32.mrb[0].mxu0
        %v3825 = vpop.f32.mrb[0].mxu0
        %3826 = vdwg.mxu0
        %v3843 = vunpack.c.l.b16 %v3211
        %v3844 = vunpack.c.l.b16 %v3212
        %v3845 = vunpack.c.l.b16 %v3213
        %v3846 = vunpack.c.l.b16 %v3214
        %v3847 = vunpack.c.l.b16 %v3215
        %v3848 = vunpack.c.l.b16 %v3216
        %v3849 = vunpack.c.l.b16 %v3217
        %v3850 = vunpack.c.l.b16 %v3218
        %v3851 = vunpack.c.l.b16 %v3219
        %v3852 = vunpack.c.l.b16 %v3220
        %v3853 = vunpack.c.l.b16 %v3221
        %v3854 = vunpack.c.l.b16 %v3222
        %v3855 = vunpack.c.l.b16 %v3223
        %v3856 = vunpack.c.l.b16 %v3224
        %v3857 = vunpack.c.l.b16 %v3225
        %v3858 = vunpack.c.l.b16 %v3226
        %v3859 = vpack.c.b16 %v3844, %v3843
        %v3860 = vpack.c.b16 %v3846, %v3845
        %v3861 = vpack.c.b16 %v3848, %v3847
        %v3862 = vpack.c.b16 %v3850, %v3849
        %v3863 = vpack.c.b16 %v3852, %v3851
        %v3864 = vpack.c.b16 %v3854, %v3853
        %v3865 = vpack.c.b16 %v3856, %v3855
        %v3866 = vpack.c.b16 %v3858, %v3857
        %3875 = vmatprep.subr.bf16.mxu0 0
        %3876 = vmatpush1.bf16.msra.mxu0 %v3859
        %3877 = vmatprep.subr.bf16.mxu0 0
        %3878 = vmatpush1.bf16.msra.mxu0 %v3860
        %3879 = vmatprep.subr.bf16.mxu0 0
        %3880 = vmatpush1.bf16.msra.mxu0 %v3861
        %3881 = vmatprep.subr.bf16.mxu0 0
        %3882 = vmatpush1.bf16.msra.mxu0 %v3862
        %3883 = vmatprep.subr.bf16.mxu0 0
        %3884 = vmatpush1.bf16.msra.mxu0 %v3863
        %3885 = vmatprep.subr.bf16.mxu0 0
        %3886 = vmatpush1.bf16.msra.mxu0 %v3864
        %3887 = vmatprep.subr.bf16.mxu0 0
        %3888 = vmatpush1.bf16.msra.mxu0 %v3865
        %3889 = vmatprep.subr.bf16.mxu0 0
        %3890 = vmatpush1.bf16.msra.mxu0 %v3866
        %3891 = vmatprep.subr.bf16.mxu0 0
        %3892 = vmatpush1.bf16.msra.mxu0 0
        %3893 = vmatprep.subr.bf16.mxu0 0
        %3894 = vmatpush1.bf16.msra.mxu0 0
        %3895 = vmatprep.subr.bf16.mxu0 0
        %3896 = vmatpush1.bf16.msra.mxu0 0
        %3897 = vmatprep.subr.bf16.mxu0 0
        %3898 = vmatpush1.bf16.msra.mxu0 0
        %3899 = vmatprep.subr.bf16.mxu0 0
        %3900 = vmatpush1.bf16.msra.mxu0 0
        %3901 = vmatprep.subr.bf16.mxu0 0
        %3902 = vmatpush1.bf16.msra.mxu0 0
        %3903 = vmatprep.subr.bf16.mxu0 0
        %3904 = vmatpush1.bf16.msra.mxu0 0
        %3905 = vmatprep.subr.bf16.mxu0 0
        %3906 = vmatpush1.bf16.msra.mxu0 0
        %3907 = vmatprep.mubr.bf16.mxu0 0
        %3908 = vmatmul.mubr.bf16.gmra.mrb[0].mxu0 %v3114
        %v3909 = vpop.f32.mrb[0].mxu0
        %v3910 = vadd.f32 %v3286, %v3909
        %v3911 = vpop.f32.mrb[0].mxu0
        %v3912 = vpop.f32.mrb[0].mxu0
        %v3913 = vpop.f32.mrb[0].mxu0
        %3914 = vdwg.mxu0
        %v3931 = vunpack.c.l.b16 %v3227
        %v3932 = vunpack.c.l.b16 %v3228
        %v3933 = vunpack.c.l.b16 %v3229
        %v3934 = vunpack.c.l.b16 %v3230
        %v3935 = vunpack.c.l.b16 %v3231
        %v3936 = vunpack.c.l.b16 %v3232
        %v3937 = vunpack.c.l.b16 %v3233
        %v3938 = vunpack.c.l.b16 %v3234
        %v3939 = vunpack.c.l.b16 %v3235
        %v3940 = vunpack.c.l.b16 %v3236
        %v3941 = vunpack.c.l.b16 %v3237
        %v3942 = vunpack.c.l.b16 %v3238
        %v3943 = vunpack.c.l.b16 %v3239
        %v3944 = vunpack.c.l.b16 %v3240
        %v3945 = vunpack.c.l.b16 %v3241
        %v3946 = vunpack.c.l.b16 %v3242
        %v3947 = vpack.c.b16 %v3932, %v3931
        %v3948 = vpack.c.b16 %v3934, %v3933
        %v3949 = vpack.c.b16 %v3936, %v3935
        %v3950 = vpack.c.b16 %v3938, %v3937
        %v3951 = vpack.c.b16 %v3940, %v3939
        %v3952 = vpack.c.b16 %v3942, %v3941
        %v3953 = vpack.c.b16 %v3944, %v3943
        %v3954 = vpack.c.b16 %v3946, %v3945
        %3963 = vmatprep.subr.bf16.mxu0 0
        %3964 = vmatpush1.bf16.msra.mxu0 %v3947
        %3965 = vmatprep.subr.bf16.mxu0 0
        %3966 = vmatpush1.bf16.msra.mxu0 %v3948
        %3967 = vmatprep.subr.bf16.mxu0 0
        %3968 = vmatpush1.bf16.msra.mxu0 %v3949
        %3969 = vmatprep.subr.bf16.mxu0 0
        %3970 = vmatpush1.bf16.msra.mxu0 %v3950
        %3971 = vmatprep.subr.bf16.mxu0 0
        %3972 = vmatpush1.bf16.msra.mxu0 %v3951
        %3973 = vmatprep.subr.bf16.mxu0 0
        %3974 = vmatpush1.bf16.msra.mxu0 %v3952
        %3975 = vmatprep.subr.bf16.mxu0 0
        %3976 = vmatpush1.bf16.msra.mxu0 %v3953
        %3977 = vmatprep.subr.bf16.mxu0 0
        %3978 = vmatpush1.bf16.msra.mxu0 %v3954
        %3979 = vmatprep.subr.bf16.mxu0 0
        %3980 = vmatpush1.bf16.msra.mxu0 0
        %3981 = vmatprep.subr.bf16.mxu0 0
        %3982 = vmatpush1.bf16.msra.mxu0 0
        %3983 = vmatprep.subr.bf16.mxu0 0
        %3984 = vmatpush1.bf16.msra.mxu0 0
        %3985 = vmatprep.subr.bf16.mxu0 0
        %3986 = vmatpush1.bf16.msra.mxu0 0
        %3987 = vmatprep.subr.bf16.mxu0 0
        %3988 = vmatpush1.bf16.msra.mxu0 0
        %3989 = vmatprep.subr.bf16.mxu0 0
        %3990 = vmatpush1.bf16.msra.mxu0 0
        %3991 = vmatprep.subr.bf16.mxu0 0
        %3992 = vmatpush1.bf16.msra.mxu0 0
        %3993 = vmatprep.subr.bf16.mxu0 0
        %3994 = vmatpush1.bf16.msra.mxu0 0
        %3995 = vmatprep.mubr.bf16.mxu0 0
        %3996 = vmatmul.mubr.bf16.gmra.mrb[0].mxu0 %v3114
        %v3997 = vpop.f32.mrb[0].mxu0
        %v3998 = vadd.f32 %v3290, %v3997
        %v3999 = vpop.f32.mrb[0].mxu0
        %v4000 = vpop.f32.mrb[0].mxu0
        %v4001 = vpop.f32.mrb[0].mxu0
        %4002 = vdwg.mxu0
        %v4003 = vpack.c.bf16 %v2845, %v2845
        %v4004 = vpack.c.bf16 %v2933, %v2933
        %v4005 = vpack.c.bf16 %v3021, %v3021
        %v4006 = vpack.c.bf16 %v3109, %v3109
        %v4007 = vpack.c.bf16 %v3382, %v3382
        %v4008 = vpack.c.bf16 %v3470, %v3470
        %v4009 = vpack.c.bf16 %v3558, %v3558
        %v4010 = vpack.c.bf16 %v3646, %v3646
        %v4012 = vsel %vm1956, %v4003, 0
        %v4015 = vsel %vm1956, %v4007, 0
        %4017 = vmatprep.subr.bf16.mxu0 0
        %4018 = vmatpush1.bf16.xpose.msra.mxu0 %v4015
        %4019 = vmatprep.subr.bf16.mxu0 0
        %4020 = vmatpush1.bf16.xpose.msra.mxu0 0
        %4021 = vmatprep.subr.bf16.mxu0 0
        %4022 = vmatpush1.bf16.xpose.msra.mxu0 0
        %4023 = vmatprep.subr.bf16.mxu0 0
        %4024 = vmatpush1.bf16.xpose.msra.mxu0 0
        %4025 = vmatprep.subr.bf16.mxu0 0
        %4026 = vmatpush1.bf16.xpose.msra.mxu0 0
        %4027 = vmatprep.subr.bf16.mxu0 0
        %4028 = vmatpush1.bf16.xpose.msra.mxu0 0
        %4029 = vmatprep.subr.bf16.mxu0 0
        %4030 = vmatpush1.bf16.xpose.msra.mxu0 0
        %4031 = vmatprep.subr.bf16.mxu0 0
        %4032 = vmatpush1.bf16.xpose.msra.mxu0 0
        %4033 = vmatprep.subr.bf16.mxu0 0
        %4034 = vmatpush1.bf16.xpose.msra.mxu0 0
        %4035 = vmatprep.subr.bf16.mxu0 0
        %4036 = vmatpush1.bf16.xpose.msra.mxu0 0
        %4037 = vmatprep.subr.bf16.mxu0 0
        %4038 = vmatpush1.bf16.xpose.msra.mxu0 0
        %4039 = vmatprep.subr.bf16.mxu0 0
        %4040 = vmatpush1.bf16.xpose.msra.mxu0 0
        %4041 = vmatprep.subr.bf16.mxu0 0
        %4042 = vmatpush1.bf16.xpose.msra.mxu0 0
        %4043 = vmatprep.subr.bf16.mxu0 0
        %4044 = vmatpush1.bf16.xpose.msra.mxu0 0
        %4045 = vmatprep.subr.bf16.mxu0 0
        %4046 = vmatpush1.bf16.xpose.msra.mxu0 0
        %4047 = vmatprep.subr.bf16.mxu0 0
        %4048 = vmatpush1.bf16.xpose.msra.mxu0 0
        %4049 = vmatprep.mubr.bf16.mxu0 0
        %4050 = vmatmul.mubr.bf16.gmra.mrb[0].mxu0 %v4012
        %v4051 = vpop.f32.mrb[0].mxu0
        %v4052 = vadd.f32 0.0, %v4051
        %v4053 = vpop.f32.mrb[0].mxu0
        %v4054 = vpop.f32.mrb[0].mxu0
        %v4055 = vpop.f32.mrb[0].mxu0
        %4056 = vdwg.mxu0
        %v4058 = vsel %vm1956, %v4004, 0
        %v4061 = vsel %vm1956, %v4008, 0
        %4063 = vmatprep.subr.bf16.mxu0 0
        %4064 = vmatpush1.bf16.xpose.msra.mxu0 %v4061
        %4065 = vmatprep.subr.bf16.mxu0 0
        %4066 = vmatpush1.bf16.xpose.msra.mxu0 0
        %4067 = vmatprep.subr.bf16.mxu0 0
        %4068 = vmatpush1.bf16.xpose.msra.mxu0 0
        %4069 = vmatprep.subr.bf16.mxu0 0
        %4070 = vmatpush1.bf16.xpose.msra.mxu0 0
        %4071 = vmatprep.subr.bf16.mxu0 0
        %4072 = vmatpush1.bf16.xpose.msra.mxu0 0
        %4073 = vmatprep.subr.bf16.mxu0 0
        %4074 = vmatpush1.bf16.xpose.msra.mxu0 0
        %4075 = vmatprep.subr.bf16.mxu0 0
        %4076 = vmatpush1.bf16.xpose.msra.mxu0 0
        %4077 = vmatprep.subr.bf16.mxu0 0
        %4078 = vmatpush1.bf16.xpose.msra.mxu0 0
        %4079 = vmatprep.subr.bf16.mxu0 0
        %4080 = vmatpush1.bf16.xpose.msra.mxu0 0
        %4081 = vmatprep.subr.bf16.mxu0 0
        %4082 = vmatpush1.bf16.xpose.msra.mxu0 0
        %4083 = vmatprep.subr.bf16.mxu0 0
        %4084 = vmatpush1.bf16.xpose.msra.mxu0 0
        %4085 = vmatprep.subr.bf16.mxu0 0
        %4086 = vmatpush1.bf16.xpose.msra.mxu0 0
        %4087 = vmatprep.subr.bf16.mxu0 0
        %4088 = vmatpush1.bf16.xpose.msra.mxu0 0
        %4089 = vmatprep.subr.bf16.mxu0 0
        %4090 = vmatpush1.bf16.xpose.msra.mxu0 0
        %4091 = vmatprep.subr.bf16.mxu0 0
        %4092 = vmatpush1.bf16.xpose.msra.mxu0 0
        %4093 = vmatprep.subr.bf16.mxu0 0
        %4094 = vmatpush1.bf16.xpose.msra.mxu0 0
        %4095 = vmatprep.mubr.bf16.mxu0 0
        %4096 = vmatmul.mubr.bf16.gmra.mrb[0].mxu0 %v4058
        %v4097 = vpop.f32.mrb[0].mxu0
        %v4098 = vadd.f32 0.0, %v4097
        %v4099 = vpop.f32.mrb[0].mxu0
        %v4100 = vpop.f32.mrb[0].mxu0
        %v4101 = vpop.f32.mrb[0].mxu0
        %4102 = vdwg.mxu0
        %v4104 = vsel %vm1956, %v4005, 0
        %v4107 = vsel %vm1956, %v4009, 0
        %4109 = vmatprep.subr.bf16.mxu0 0
        %4110 = vmatpush1.bf16.xpose.msra.mxu0 %v4107
        %4111 = vmatprep.subr.bf16.mxu0 0
        %4112 = vmatpush1.bf16.xpose.msra.mxu0 0
        %4113 = vmatprep.subr.bf16.mxu0 0
        %4114 = vmatpush1.bf16.xpose.msra.mxu0 0
        %4115 = vmatprep.subr.bf16.mxu0 0
        %4116 = vmatpush1.bf16.xpose.msra.mxu0 0
        %4117 = vmatprep.subr.bf16.mxu0 0
        %4118 = vmatpush1.bf16.xpose.msra.mxu0 0
        %4119 = vmatprep.subr.bf16.mxu0 0
        %4120 = vmatpush1.bf16.xpose.msra.mxu0 0
        %4121 = vmatprep.subr.bf16.mxu0 0
        %4122 = vmatpush1.bf16.xpose.msra.mxu0 0
        %4123 = vmatprep.subr.bf16.mxu0 0
        %4124 = vmatpush1.bf16.xpose.msra.mxu0 0
        %4125 = vmatprep.subr.bf16.mxu0 0
        %4126 = vmatpush1.bf16.xpose.msra.mxu0 0
        %4127 = vmatprep.subr.bf16.mxu0 0
        %4128 = vmatpush1.bf16.xpose.msra.mxu0 0
        %4129 = vmatprep.subr.bf16.mxu0 0
        %4130 = vmatpush1.bf16.xpose.msra.mxu0 0
        %4131 = vmatprep.subr.bf16.mxu0 0
        %4132 = vmatpush1.bf16.xpose.msra.mxu0 0
        %4133 = vmatprep.subr.bf16.mxu0 0
        %4134 = vmatpush1.bf16.xpose.msra.mxu0 0
        %4135 = vmatprep.subr.bf16.mxu0 0
        %4136 = vmatpush1.bf16.xpose.msra.mxu0 0
        %4137 = vmatprep.subr.bf16.mxu0 0
        %4138 = vmatpush1.bf16.xpose.msra.mxu0 0
        %4139 = vmatprep.subr.bf16.mxu0 0
        %4140 = vmatpush1.bf16.xpose.msra.mxu0 0
        %4141 = vmatprep.mubr.bf16.mxu0 0
        %4142 = vmatmul.mubr.bf16.gmra.mrb[0].mxu0 %v4104
        %v4143 = vpop.f32.mrb[0].mxu0
        %v4144 = vadd.f32 0.0, %v4143
        %v4145 = vpop.f32.mrb[0].mxu0
        %v4146 = vpop.f32.mrb[0].mxu0
        %v4147 = vpop.f32.mrb[0].mxu0
        %4148 = vdwg.mxu0
        %v4150 = vsel %vm1956, %v4006, 0
        %v4153 = vsel %vm1956, %v4010, 0
        %4155 = vmatprep.subr.bf16.mxu0 0
        %4156 = vmatpush1.bf16.xpose.msra.mxu0 %v4153
        %4157 = vmatprep.subr.bf16.mxu0 0
        %4158 = vmatpush1.bf16.xpose.msra.mxu0 0
        %4159 = vmatprep.subr.bf16.mxu0 0
        %4160 = vmatpush1.bf16.xpose.msra.mxu0 0
        %4161 = vmatprep.subr.bf16.mxu0 0
        %4162 = vmatpush1.bf16.xpose.msra.mxu0 0
        %4163 = vmatprep.subr.bf16.mxu0 0
        %4164 = vmatpush1.bf16.xpose.msra.mxu0 0
        %4165 = vmatprep.subr.bf16.mxu0 0
        %4166 = vmatpush1.bf16.xpose.msra.mxu0 0
        %4167 = vmatprep.subr.bf16.mxu0 0
        %4168 = vmatpush1.bf16.xpose.msra.mxu0 0
        %4169 = vmatprep.subr.bf16.mxu0 0
        %4170 = vmatpush1.bf16.xpose.msra.mxu0 0
        %4171 = vmatprep.subr.bf16.mxu0 0
        %4172 = vmatpush1.bf16.xpose.msra.mxu0 0
        %4173 = vmatprep.subr.bf16.mxu0 0
        %4174 = vmatpush1.bf16.xpose.msra.mxu0 0
        %4175 = vmatprep.subr.bf16.mxu0 0
        %4176 = vmatpush1.bf16.xpose.msra.mxu0 0
        %4177 = vmatprep.subr.bf16.mxu0 0
        %4178 = vmatpush1.bf16.xpose.msra.mxu0 0
        %4179 = vmatprep.subr.bf16.mxu0 0
        %4180 = vmatpush1.bf16.xpose.msra.mxu0 0
        %4181 = vmatprep.subr.bf16.mxu0 0
        %4182 = vmatpush1.bf16.xpose.msra.mxu0 0
        %4183 = vmatprep.subr.bf16.mxu0 0
        %4184 = vmatpush1.bf16.xpose.msra.mxu0 0
        %4185 = vmatprep.subr.bf16.mxu0 0
        %4186 = vmatpush1.bf16.xpose.msra.mxu0 0
        %4187 = vmatprep.mubr.bf16.mxu0 0
        %4188 = vmatmul.mubr.bf16.gmra.mrb[0].mxu0 %v4150
        %v4189 = vpop.f32.mrb[0].mxu0
        %v4190 = vadd.f32 0.0, %v4189
        %v4191 = vpop.f32.mrb[0].mxu0
        %v4192 = vpop.f32.mrb[0].mxu0
        %v4193 = vpop.f32.mrb[0].mxu0
        %4194 = vdwg.mxu0
        %v4195 = vmul.f32 %v4052, 0.17677669
        %v4196 = vmul.f32 %v4098, 0.17677669
        %v4197 = vmul.f32 %v4144, 0.17677669
        %v4198 = vmul.f32 %v4190, 0.17677669
        %v4199 = vsel %vm614, 1, 0
        %vm4200 = vcmp.eq.s32.totalorder %v4199, 1
        %v4201 = vsel %vm4200, -1e+10, %v4195
        %v4202 = vsel %vm4200, -1e+10, %v4196
        %v4203 = vsel %vm4200, -1e+10, %v4197
        %v4204 = vsel %vm4200, -1e+10, %v4198
        %v4205 = vsel %vm2151, %v4201, -inf
        %4206 = vmax.xlane.f32.xlu0 %v4205
        %v4207 = vpop.xlane.xlu0 %4206
        %v4208 = vsel %vm2151, %v4202, -inf
        %4209 = vmax.xlane.f32.xlu0 %v4208
        %v4210 = vpop.xlane.xlu0 %4209
        %v4211 = vsel %vm2151, %v4203, -inf
        %4212 = vmax.xlane.f32.xlu0 %v4211
        %v4213 = vpop.xlane.xlu0 %4212
        %v4214 = vsel %vm2151, %v4204, -inf
        %4215 = vmax.xlane.f32.xlu0 %v4214
        %v4216 = vpop.xlane.xlu0 %4215
        %v4217 = vsub.f32 %v4201, %v4207
        %v4218 = vsub.f32 %v4202, %v4210
        %v4219 = vsub.f32 %v4203, %v4213
        %v4220 = vsub.f32 %v4204, %v4216
        %v4221 = vmul.f32 %v4217, 1.442695
        %v4222 = vpow.pop %v4221
        %v4223 = vmul.f32 %v4218, 1.442695
        %v4224 = vpow.pop %v4223
        %v4225 = vmul.f32 %v4219, 1.442695
        %v4226 = vpow.pop %v4225
        %v4227 = vmul.f32 %v4220, 1.442695
        %v4228 = vpow.pop %v4227
        %v4229 = vsel %vm2151, %v4222, 0.0
        %4230 = vadd.xlane.f32.xlu0 %v4229
        %v4231 = vpop.xlane.xlu0 %4230
        %v4232 = vsel %vm2151, %v4224, 0.0
        %4233 = vadd.xlane.f32.xlu0 %v4232
        %v4234 = vpop.xlane.xlu0 %4233
        %v4235 = vsel %vm2151, %v4226, 0.0
        %4236 = vadd.xlane.f32.xlu0 %v4235
        %v4237 = vpop.xlane.xlu0 %4236
        %v4238 = vsel %vm2151, %v4228, 0.0
        %4239 = vadd.xlane.f32.xlu0 %v4238
        %v4240 = vpop.xlane.xlu0 %4239
        %v4241 = vpack.c.bf16 %v4222, %v4222
        %v4242 = vpack.c.bf16 %v4224, %v4224
        %v4243 = vpack.c.bf16 %v4226, %v4226
        %v4244 = vpack.c.bf16 %v4228, %v4228
        %v4245 = vpack.c.bf16 %v3734, %v3734
        %v4246 = vpack.c.bf16 %v3822, %v3822
        %v4247 = vpack.c.bf16 %v3910, %v3910
        %v4248 = vpack.c.bf16 %v3998, %v3998
        %v4250 = vsel %vm2151, %v4241, 0
        %v4253 = vsel %vm2199, %v4245, 0
        %4255 = vmatprep.subr.bf16.mxu0 0
        %4256 = vmatpush1.bf16.msra.mxu0 %v4253
        %4257 = vmatprep.subr.bf16.mxu0 0
        %4258 = vmatpush1.bf16.msra.mxu0 0
        %4259 = vmatprep.subr.bf16.mxu0 0
        %4260 = vmatpush1.bf16.msra.mxu0 0
        %4261 = vmatprep.subr.bf16.mxu0 0
        %4262 = vmatpush1.bf16.msra.mxu0 0
        %4263 = vmatprep.subr.bf16.mxu0 0
        %4264 = vmatpush1.bf16.msra.mxu0 0
        %4265 = vmatprep.subr.bf16.mxu0 0
        %4266 = vmatpush1.bf16.msra.mxu0 0
        %4267 = vmatprep.subr.bf16.mxu0 0
        %4268 = vmatpush1.bf16.msra.mxu0 0
        %4269 = vmatprep.subr.bf16.mxu0 0
        %4270 = vmatpush1.bf16.msra.mxu0 0
        %4271 = vmatprep.subr.bf16.mxu0 0
        %4272 = vmatpush1.bf16.msra.mxu0 0
        %4273 = vmatprep.subr.bf16.mxu0 0
        %4274 = vmatpush1.bf16.msra.mxu0 0
        %4275 = vmatprep.subr.bf16.mxu0 0
        %4276 = vmatpush1.bf16.msra.mxu0 0
        %4277 = vmatprep.subr.bf16.mxu0 0
        %4278 = vmatpush1.bf16.msra.mxu0 0
        %4279 = vmatprep.subr.bf16.mxu0 0
        %4280 = vmatpush1.bf16.msra.mxu0 0
        %4281 = vmatprep.subr.bf16.mxu0 0
        %4282 = vmatpush1.bf16.msra.mxu0 0
        %4283 = vmatprep.subr.bf16.mxu0 0
        %4284 = vmatpush1.bf16.msra.mxu0 0
        %4285 = vmatprep.subr.bf16.mxu0 0
        %4286 = vmatpush1.bf16.msra.mxu0 0
        %4287 = vmatprep.mubr.bf16.mxu0 0
        %4288 = vmatmul.mubr.bf16.gmra.mrb[0].mxu0 %v4250
        %v4289 = vpop.f32.mrb[0].mxu0
        %v4290 = vadd.f32 0.0, %v4289
        %v4291 = vpop.f32.mrb[0].mxu0
        %v4292 = vpop.f32.mrb[0].mxu0
        %v4293 = vpop.f32.mrb[0].mxu0
        %4294 = vdwg.mxu0
        %v4296 = vsel %vm2151, %v4242, 0
        %v4299 = vsel %vm2199, %v4246, 0
        %4301 = vmatprep.subr.bf16.mxu0 0
        %4302 = vmatpush1.bf16.msra.mxu0 %v4299
        %4303 = vmatprep.subr.bf16.mxu0 0
        %4304 = vmatpush1.bf16.msra.mxu0 0
        %4305 = vmatprep.subr.bf16.mxu0 0
        %4306 = vmatpush1.bf16.msra.mxu0 0
        %4307 = vmatprep.subr.bf16.mxu0 0
        %4308 = vmatpush1.bf16.msra.mxu0 0
        %4309 = vmatprep.subr.bf16.mxu0 0
        %4310 = vmatpush1.bf16.msra.mxu0 0
        %4311 = vmatprep.subr.bf16.mxu0 0
        %4312 = vmatpush1.bf16.msra.mxu0 0
        %4313 = vmatprep.subr.bf16.mxu0 0
        %4314 = vmatpush1.bf16.msra.mxu0 0
        %4315 = vmatprep.subr.bf16.mxu0 0
        %4316 = vmatpush1.bf16.msra.mxu0 0
        %4317 = vmatprep.subr.bf16.mxu0 0
        %4318 = vmatpush1.bf16.msra.mxu0 0
        %4319 = vmatprep.subr.bf16.mxu0 0
        %4320 = vmatpush1.bf16.msra.mxu0 0
        %4321 = vmatprep.subr.bf16.mxu0 0
        %4322 = vmatpush1.bf16.msra.mxu0 0
        %4323 = vmatprep.subr.bf16.mxu0 0
        %4324 = vmatpush1.bf16.msra.mxu0 0
        %4325 = vmatprep.subr.bf16.mxu0 0
        %4326 = vmatpush1.bf16.msra.mxu0 0
        %4327 = vmatprep.subr.bf16.mxu0 0
        %4328 = vmatpush1.bf16.msra.mxu0 0
        %4329 = vmatprep.subr.bf16.mxu0 0
        %4330 = vmatpush1.bf16.msra.mxu0 0
        %4331 = vmatprep.subr.bf16.mxu0 0
        %4332 = vmatpush1.bf16.msra.mxu0 0
        %4333 = vmatprep.mubr.bf16.mxu0 0
        %4334 = vmatmul.mubr.bf16.gmra.mrb[0].mxu0 %v4296
        %v4335 = vpop.f32.mrb[0].mxu0
        %v4336 = vadd.f32 0.0, %v4335
        %v4337 = vpop.f32.mrb[0].mxu0
        %v4338 = vpop.f32.mrb[0].mxu0
        %v4339 = vpop.f32.mrb[0].mxu0
        %4340 = vdwg.mxu0
        %v4342 = vsel %vm2151, %v4243, 0
        %v4345 = vsel %vm2199, %v4247, 0
        %4347 = vmatprep.subr.bf16.mxu0 0
        %4348 = vmatpush1.bf16.msra.mxu0 %v4345
        %4349 = vmatprep.subr.bf16.mxu0 0
        %4350 = vmatpush1.bf16.msra.mxu0 0
        %4351 = vmatprep.subr.bf16.mxu0 0
        %4352 = vmatpush1.bf16.msra.mxu0 0
        %4353 = vmatprep.subr.bf16.mxu0 0
        %4354 = vmatpush1.bf16.msra.mxu0 0
        %4355 = vmatprep.subr.bf16.mxu0 0
        %4356 = vmatpush1.bf16.msra.mxu0 0
        %4357 = vmatprep.subr.bf16.mxu0 0
        %4358 = vmatpush1.bf16.msra.mxu0 0
        %4359 = vmatprep.subr.bf16.mxu0 0
        %4360 = vmatpush1.bf16.msra.mxu0 0
        %4361 = vmatprep.subr.bf16.mxu0 0
        %4362 = vmatpush1.bf16.msra.mxu0 0
        %4363 = vmatprep.subr.bf16.mxu0 0
        %4364 = vmatpush1.bf16.msra.mxu0 0
        %4365 = vmatprep.subr.bf16.mxu0 0
        %4366 = vmatpush1.bf16.msra.mxu0 0
        %4367 = vmatprep.subr.bf16.mxu0 0
        %4368 = vmatpush1.bf16.msra.mxu0 0
        %4369 = vmatprep.subr.bf16.mxu0 0
        %4370 = vmatpush1.bf16.msra.mxu0 0
        %4371 = vmatprep.subr.bf16.mxu0 0
        %4372 = vmatpush1.bf16.msra.mxu0 0
        %4373 = vmatprep.subr.bf16.mxu0 0
        %4374 = vmatpush1.bf16.msra.mxu0 0
        %4375 = vmatprep.subr.bf16.mxu0 0
        %4376 = vmatpush1.bf16.msra.mxu0 0
        %4377 = vmatprep.subr.bf16.mxu0 0
        %4378 = vmatpush1.bf16.msra.mxu0 0
        %4379 = vmatprep.mubr.bf16.mxu0 0
        %4380 = vmatmul.mubr.bf16.gmra.mrb[0].mxu0 %v4342
        %v4381 = vpop.f32.mrb[0].mxu0
        %v4382 = vadd.f32 0.0, %v4381
        %v4383 = vpop.f32.mrb[0].mxu0
        %v4384 = vpop.f32.mrb[0].mxu0
        %v4385 = vpop.f32.mrb[0].mxu0
        %4386 = vdwg.mxu0
        %v4388 = vsel %vm2151, %v4244, 0
        %v4391 = vsel %vm2199, %v4248, 0
        %4393 = vmatprep.subr.bf16.mxu0 0
        %4394 = vmatpush1.bf16.msra.mxu0 %v4391
        %4395 = vmatprep.subr.bf16.mxu0 0
        %4396 = vmatpush1.bf16.msra.mxu0 0
        %4397 = vmatprep.subr.bf16.mxu0 0
        %4398 = vmatpush1.bf16.msra.mxu0 0
        %4399 = vmatprep.subr.bf16.mxu0 0
        %4400 = vmatpush1.bf16.msra.mxu0 0
        %4401 = vmatprep.subr.bf16.mxu0 0
        %4402 = vmatpush1.bf16.msra.mxu0 0
        %4403 = vmatprep.subr.bf16.mxu0 0
        %4404 = vmatpush1.bf16.msra.mxu0 0
        %4405 = vmatprep.subr.bf16.mxu0 0
        %4406 = vmatpush1.bf16.msra.mxu0 0
        %4407 = vmatprep.subr.bf16.mxu0 0
        %4408 = vmatpush1.bf16.msra.mxu0 0
        %4409 = vmatprep.subr.bf16.mxu0 0
        %4410 = vmatpush1.bf16.msra.mxu0 0
        %4411 = vmatprep.subr.bf16.mxu0 0
        %4412 = vmatpush1.bf16.msra.mxu0 0
        %4413 = vmatprep.subr.bf16.mxu0 0
        %4414 = vmatpush1.bf16.msra.mxu0 0
        %4415 = vmatprep.subr.bf16.mxu0 0
        %4416 = vmatpush1.bf16.msra.mxu0 0
        %4417 = vmatprep.subr.bf16.mxu0 0
        %4418 = vmatpush1.bf16.msra.mxu0 0
        %4419 = vmatprep.subr.bf16.mxu0 0
        %4420 = vmatpush1.bf16.msra.mxu0 0
        %4421 = vmatprep.subr.bf16.mxu0 0
        %4422 = vmatpush1.bf16.msra.mxu0 0
        %4423 = vmatprep.subr.bf16.mxu0 0
        %4424 = vmatpush1.bf16.msra.mxu0 0
        %4425 = vmatprep.mubr.bf16.mxu0 0
        %4426 = vmatmul.mubr.bf16.gmra.mrb[0].mxu0 %v4388
        %v4427 = vpop.f32.mrb[0].mxu0
        %v4428 = vadd.f32 0.0, %v4427
        %v4429 = vpop.f32.mrb[0].mxu0
        %v4430 = vpop.f32.mrb[0].mxu0
        %v4431 = vpop.f32.mrb[0].mxu0
        %4432 = vdwg.mxu0
        %v4433 = vrcp.pop %v4231
        %v4434 = vrcp.pop %v4234
        %v4435 = vrcp.pop %v4237
        %v4436 = vrcp.pop %v4240
        %v4437 = vmul.f32 %v4290, %v4433
        %v4438 = vmul.f32 %v4336, %v4434
        %v4439 = vmul.f32 %v4382, %v4435
        %v4440 = vmul.f32 %v4428, %v4436
        %v4441 = vpack.c.bf16 %v4437, %v4437
        %v4442 = vpack.c.bf16 %v4438, %v4438
        %v4443 = vpack.c.bf16 %v4439, %v4439
        %v4444 = vpack.c.bf16 %v4440, %v4440
        %v4445 = vld [vmem:[%s12] sm:$0xf]
        %v4446 = vld [vmem:[%s12 + $0x4] sm:$0xf]
        %v4447 = vld [vmem:[%s12 + $0x8] sm:$0xf]
        %v4448 = vld [vmem:[%s12 + $0xc] sm:$0xf]
        %v4449 = vld [vmem:[%s12 + $0x10] sm:$0xf]
        %v4450 = vld [vmem:[%s12 + $0x14] sm:$0xf]
        %v4451 = vld [vmem:[%s12 + $0x18] sm:$0xf]
        %v4452 = vld [vmem:[%s12 + $0x1c] sm:$0xf]
        %v4453 = vld [vmem:[%s12 + $0x20] sm:$0xf]
        %v4454 = vld [vmem:[%s12 + $0x24] sm:$0xf]
        %v4455 = vld [vmem:[%s12 + $0x28] sm:$0xf]
        %v4456 = vld [vmem:[%s12 + $0x2c] sm:$0xf]
        %v4457 = vld [vmem:[%s12 + $0x30] sm:$0xf]
        %v4458 = vld [vmem:[%s12 + $0x34] sm:$0xf]
        %v4459 = vld [vmem:[%s12 + $0x38] sm:$0xf]
        %v4460 = vld [vmem:[%s12 + $0x3c] sm:$0xf]
        %v4465 = vunpack.c.l.b16 %v4445
        %v4466 = vunpack.c.l.b16 %v4446
        %v4467 = vunpack.c.l.b16 %v4447
        %v4468 = vunpack.c.l.b16 %v4448
        %v4469 = vpack.c.b16 %v4466, %v4465
        %v4470 = vpack.c.b16 %v4468, %v4467
        %v4474 = vsel %vm1956, %v4441, 0
        %4476 = vmatprep.subr.bf16.mxu0 0
        %4477 = vmatpush1.bf16.msra.mxu0 %v4469
        %4478 = vmatprep.subr.bf16.mxu0 0
        %4479 = vmatpush1.bf16.msra.mxu0 %v4470
        %4480 = vmatprep.subr.bf16.mxu0 0
        %4481 = vmatpush1.bf16.msra.mxu0 0
        %4482 = vmatprep.subr.bf16.mxu0 0
        %4483 = vmatpush1.bf16.msra.mxu0 0
        %4484 = vmatprep.subr.bf16.mxu0 0
        %4485 = vmatpush1.bf16.msra.mxu0 0
        %4486 = vmatprep.subr.bf16.mxu0 0
        %4487 = vmatpush1.bf16.msra.mxu0 0
        %4488 = vmatprep.subr.bf16.mxu0 0
        %4489 = vmatpush1.bf16.msra.mxu0 0
        %4490 = vmatprep.subr.bf16.mxu0 0
        %4491 = vmatpush1.bf16.msra.mxu0 0
        %4492 = vmatprep.subr.bf16.mxu0 0
        %4493 = vmatpush1.bf16.msra.mxu0 0
        %4494 = vmatprep.subr.bf16.mxu0 0
        %4495 = vmatpush1.bf16.msra.mxu0 0
        %4496 = vmatprep.subr.bf16.mxu0 0
        %4497 = vmatpush1.bf16.msra.mxu0 0
        %4498 = vmatprep.subr.bf16.mxu0 0
        %4499 = vmatpush1.bf16.msra.mxu0 0
        %4500 = vmatprep.subr.bf16.mxu0 0
        %4501 = vmatpush1.bf16.msra.mxu0 0
        %4502 = vmatprep.subr.bf16.mxu0 0
        %4503 = vmatpush1.bf16.msra.mxu0 0
        %4504 = vmatprep.subr.bf16.mxu0 0
        %4505 = vmatpush1.bf16.msra.mxu0 0
        %4506 = vmatprep.subr.bf16.mxu0 0
        %4507 = vmatpush1.bf16.msra.mxu0 0
        %4508 = vmatprep.mubr.bf16.mxu0 0
        %4509 = vmatmul.mubr.bf16.gmra.mrb[0].mxu0 %v4474
        %v4510 = vpop.f32.mrb[0].mxu0
        %v4511 = vadd.f32 0.0, %v4510
        %v4512 = vpop.f32.mrb[0].mxu0
        %v4513 = vpop.f32.mrb[0].mxu0
        %v4514 = vpop.f32.mrb[0].mxu0
        %4515 = vdwg.mxu0
        %v4520 = vunpack.c.l.b16 %v4449
        %v4521 = vunpack.c.l.b16 %v4450
        %v4522 = vunpack.c.l.b16 %v4451
        %v4523 = vunpack.c.l.b16 %v4452
        %v4524 = vpack.c.b16 %v4521, %v4520
        %v4525 = vpack.c.b16 %v4523, %v4522
        %v4529 = vsel %vm1956, %v4442, 0
        %4531 = vmatprep.subr.bf16.mxu0 0
        %4532 = vmatpush1.bf16.msra.mxu0 %v4524
        %4533 = vmatprep.subr.bf16.mxu0 0
        %4534 = vmatpush1.bf16.msra.mxu0 %v4525
        %4535 = vmatprep.subr.bf16.mxu0 0
        %4536 = vmatpush1.bf16.msra.mxu0 0
        %4537 = vmatprep.subr.bf16.mxu0 0
        %4538 = vmatpush1.bf16.msra.mxu0 0
        %4539 = vmatprep.subr.bf16.mxu0 0
        %4540 = vmatpush1.bf16.msra.mxu0 0
        %4541 = vmatprep.subr.bf16.mxu0 0
        %4542 = vmatpush1.bf16.msra.mxu0 0
        %4543 = vmatprep.subr.bf16.mxu0 0
        %4544 = vmatpush1.bf16.msra.mxu0 0
        %4545 = vmatprep.subr.bf16.mxu0 0
        %4546 = vmatpush1.bf16.msra.mxu0 0
        %4547 = vmatprep.subr.bf16.mxu0 0
        %4548 = vmatpush1.bf16.msra.mxu0 0
        %4549 = vmatprep.subr.bf16.mxu0 0
        %4550 = vmatpush1.bf16.msra.mxu0 0
        %4551 = vmatprep.subr.bf16.mxu0 0
        %4552 = vmatpush1.bf16.msra.mxu0 0
        %4553 = vmatprep.subr.bf16.mxu0 0
        %4554 = vmatpush1.bf16.msra.mxu0 0
        %4555 = vmatprep.subr.bf16.mxu0 0
        %4556 = vmatpush1.bf16.msra.mxu0 0
        %4557 = vmatprep.subr.bf16.mxu0 0
        %4558 = vmatpush1.bf16.msra.mxu0 0
        %4559 = vmatprep.subr.bf16.mxu0 0
        %4560 = vmatpush1.bf16.msra.mxu0 0
        %4561 = vmatprep.subr.bf16.mxu0 0
        %4562 = vmatpush1.bf16.msra.mxu0 0
        %4563 = vmatprep.mubr.bf16.mxu0 0
        %4564 = vmatmul.mubr.bf16.gmra.mrb[0].mxu0 %v4529
        %v4565 = vpop.f32.mrb[0].mxu0
        %v4566 = vadd.f32 0.0, %v4565
        %v4567 = vpop.f32.mrb[0].mxu0
        %v4568 = vpop.f32.mrb[0].mxu0
        %v4569 = vpop.f32.mrb[0].mxu0
        %4570 = vdwg.mxu0
        %v4575 = vunpack.c.l.b16 %v4453
        %v4576 = vunpack.c.l.b16 %v4454
        %v4577 = vunpack.c.l.b16 %v4455
        %v4578 = vunpack.c.l.b16 %v4456
        %v4579 = vpack.c.b16 %v4576, %v4575
        %v4580 = vpack.c.b16 %v4578, %v4577
        %v4584 = vsel %vm1956, %v4443, 0
        %4586 = vmatprep.subr.bf16.mxu0 0
        %4587 = vmatpush1.bf16.msra.mxu0 %v4579
        %4588 = vmatprep.subr.bf16.mxu0 0
        %4589 = vmatpush1.bf16.msra.mxu0 %v4580
        %4590 = vmatprep.subr.bf16.mxu0 0
        %4591 = vmatpush1.bf16.msra.mxu0 0
        %4592 = vmatprep.subr.bf16.mxu0 0
        %4593 = vmatpush1.bf16.msra.mxu0 0
        %4594 = vmatprep.subr.bf16.mxu0 0
        %4595 = vmatpush1.bf16.msra.mxu0 0
        %4596 = vmatprep.subr.bf16.mxu0 0
        %4597 = vmatpush1.bf16.msra.mxu0 0
        %4598 = vmatprep.subr.bf16.mxu0 0
        %4599 = vmatpush1.bf16.msra.mxu0 0
        %4600 = vmatprep.subr.bf16.mxu0 0
        %4601 = vmatpush1.bf16.msra.mxu0 0
        %4602 = vmatprep.subr.bf16.mxu0 0
        %4603 = vmatpush1.bf16.msra.mxu0 0
        %4604 = vmatprep.subr.bf16.mxu0 0
        %4605 = vmatpush1.bf16.msra.mxu0 0
        %4606 = vmatprep.subr.bf16.mxu0 0
        %4607 = vmatpush1.bf16.msra.mxu0 0
        %4608 = vmatprep.subr.bf16.mxu0 0
        %4609 = vmatpush1.bf16.msra.mxu0 0
        %4610 = vmatprep.subr.bf16.mxu0 0
        %4611 = vmatpush1.bf16.msra.mxu0 0
        %4612 = vmatprep.subr.bf16.mxu0 0
        %4613 = vmatpush1.bf16.msra.mxu0 0
        %4614 = vmatprep.subr.bf16.mxu0 0
        %4615 = vmatpush1.bf16.msra.mxu0 0
        %4616 = vmatprep.subr.bf16.mxu0 0
        %4617 = vmatpush1.bf16.msra.mxu0 0
        %4618 = vmatprep.mubr.bf16.mxu0 0
        %4619 = vmatmul.mubr.bf16.gmra.mrb[0].mxu0 %v4584
        %v4620 = vpop.f32.mrb[0].mxu0
        %v4621 = vadd.f32 0.0, %v4620
        %v4622 = vpop.f32.mrb[0].mxu0
        %v4623 = vpop.f32.mrb[0].mxu0
        %v4624 = vpop.f32.mrb[0].mxu0
        %4625 = vdwg.mxu0
        %v4630 = vunpack.c.l.b16 %v4457
        %v4631 = vunpack.c.l.b16 %v4458
        %v4632 = vunpack.c.l.b16 %v4459
        %v4633 = vunpack.c.l.b16 %v4460
        %v4634 = vpack.c.b16 %v4631, %v4630
        %v4635 = vpack.c.b16 %v4633, %v4632
        %v4639 = vsel %vm1956, %v4444, 0
        %4641 = vmatprep.subr.bf16.mxu0 0
        %4642 = vmatpush1.bf16.msra.mxu0 %v4634
        %4643 = vmatprep.subr.bf16.mxu0 0
        %4644 = vmatpush1.bf16.msra.mxu0 %v4635
        %4645 = vmatprep.subr.bf16.mxu0 0
        %4646 = vmatpush1.bf16.msra.mxu0 0
        %4647 = vmatprep.subr.bf16.mxu0 0
        %4648 = vmatpush1.bf16.msra.mxu0 0
        %4649 = vmatprep.subr.bf16.mxu0 0
        %4650 = vmatpush1.bf16.msra.mxu0 0
        %4651 = vmatprep.subr.bf16.mxu0 0
        %4652 = vmatpush1.bf16.msra.mxu0 0
        %4653 = vmatprep.subr.bf16.mxu0 0
        %4654 = vmatpush1.bf16.msra.mxu0 0
        %4655 = vmatprep.subr.bf16.mxu0 0
        %4656 = vmatpush1.bf16.msra.mxu0 0
        %4657 = vmatprep.subr.bf16.mxu0 0
        %4658 = vmatpush1.bf16.msra.mxu0 0
        %4659 = vmatprep.subr.bf16.mxu0 0
        %4660 = vmatpush1.bf16.msra.mxu0 0
        %4661 = vmatprep.subr.bf16.mxu0 0
        %4662 = vmatpush1.bf16.msra.mxu0 0
        %4663 = vmatprep.subr.bf16.mxu0 0
        %4664 = vmatpush1.bf16.msra.mxu0 0
        %4665 = vmatprep.subr.bf16.mxu0 0
        %4666 = vmatpush1.bf16.msra.mxu0 0
        %4667 = vmatprep.subr.bf16.mxu0 0
        %4668 = vmatpush1.bf16.msra.mxu0 0
        %4669 = vmatprep.subr.bf16.mxu0 0
        %4670 = vmatpush1.bf16.msra.mxu0 0
        %4671 = vmatprep.subr.bf16.mxu0 0
        %4672 = vmatpush1.bf16.msra.mxu0 0
        %4673 = vmatprep.mubr.bf16.mxu0 0
        %4674 = vmatmul.mubr.bf16.gmra.mrb[0].mxu0 %v4639
        %v4675 = vpop.f32.mrb[0].mxu0
        %v4676 = vadd.f32 0.0, %v4675
        %v4677 = vpop.f32.mrb[0].mxu0
        %v4678 = vpop.f32.mrb[0].mxu0
        %v4679 = vpop.f32.mrb[0].mxu0
        %4680 = vdwg.mxu0
        %v4681 = vadd.f32 %v4511, %v4566
        %v4682 = vadd.f32 %v4681, %v4621
        %v4683 = vadd.f32 %v4682, %v4676
        %v4684 = vld [vmem:[%s13] sm:$0x1]
        %v4686 = vlaneseq
        %v4687 = vshrl.u32 %v4686, 7
        %v4688 = vsub.s32 0, %v4687
        %v4689 = vrot.slane %v4684, %v4688
        %v4691 = vadd.f32 %v4683, %v4689
        %v4692 = vadd.f32 %v2668, %v4691
        %s4693 = scalar_lea.vmem %s18, 1
        %v4694 = vld [vmem:[%s4693] sm:$0x1]
        %s4695 = scalar_lea.vmem %s19, 1
        %v4696 = vld [vmem:[%s4695] sm:$0x1]
        %4697 = vadd.xlane.f32.xlu0 %v4692
        %v4698 = vpop.xlane.xlu0 %4697
        %v4699 = vmul.f32 %v4698, %v2645
        %v4700 = vsub.f32 %v4692, %v4699
        %v4701 = vmul.f32 %v4700, %v4700
        %4702 = vadd.xlane.f32.xlu0 %v4701
        %v4703 = vpop.xlane.xlu0 %4702
        %v4704 = vmul.f32 %v4703, %v2645
        %v4705 = vadd.f32 %v4704, 1e-05
        %v4706 = vrsqrt.pop %v4705
        %v4707 = vmul.f32 %v4700, %v4706
        %v4709 = vlaneseq
        %v4710 = vshrl.u32 %v4709, 7
        %v4711 = vsub.s32 0, %v4710
        %v4712 = vrot.slane %v4694, %v4711
        %v4714 = vmul.f32 %v4707, %v4712
        %v4716 = vlaneseq
        %v4717 = vshrl.u32 %v4716, 7
        %v4718 = vsub.s32 0, %v4717
        %v4719 = vrot.slane %v4696, %v4718
        %v4721 = vadd.f32 %v4714, %v4719
        %v4722 = vpack.c.bf16 %v4721, %v4721
        %v4723 = vld [vmem:[%s14] sm:$0xff]
        %v4724 = vld [vmem:[%s14 + $0x8] sm:$0xff]
        %v4725 = vld [vmem:[%s14 + $0x10] sm:$0xff]
        %v4726 = vld [vmem:[%s14 + $0x18] sm:$0xff]
        %v4727 = vld [vmem:[%s14 + $0x20] sm:$0xff]
        %v4728 = vld [vmem:[%s14 + $0x28] sm:$0xff]
        %v4729 = vld [vmem:[%s14 + $0x30] sm:$0xff]
        %v4730 = vld [vmem:[%s14 + $0x38] sm:$0xff]
        %v4731 = vld [vmem:[%s14 + $0x40] sm:$0xff]
        %v4732 = vld [vmem:[%s14 + $0x48] sm:$0xff]
        %v4733 = vld [vmem:[%s14 + $0x50] sm:$0xff]
        %v4734 = vld [vmem:[%s14 + $0x58] sm:$0xff]
        %v4735 = vld [vmem:[%s14 + $0x60] sm:$0xff]
        %v4736 = vld [vmem:[%s14 + $0x68] sm:$0xff]
        %v4737 = vld [vmem:[%s14 + $0x70] sm:$0xff]
        %v4738 = vld [vmem:[%s14 + $0x78] sm:$0xff]
        %v4739 = vld [vmem:[%s15] sm:$0x3]
        %v4741 = vlaneseq
        %v4742 = vshrl.u32 %v4741, 7
        %v4743 = vsub.s32 0, %v4742
        %v4744 = vrot.slane %v4739, %v4743
        %v4745 = vlaneseq
        %v4746 = vshrl.u32 %v4745, 7
        %v4747 = vsub.s32 1, %v4746
        %v4748 = vrot.slane %v4739, %v4747
        %v4767 = vunpack.c.l.b16 %v4723
        %v4768 = vunpack.c.h.b16 %v4723
        %v4769 = vunpack.c.l.b16 %v4724
        %v4770 = vunpack.c.h.b16 %v4724
        %v4771 = vunpack.c.l.b16 %v4725
        %v4772 = vunpack.c.h.b16 %v4725
        %v4773 = vunpack.c.l.b16 %v4726
        %v4774 = vunpack.c.h.b16 %v4726
        %v4775 = vunpack.c.l.b16 %v4727
        %v4776 = vunpack.c.h.b16 %v4727
        %v4777 = vunpack.c.l.b16 %v4728
        %v4778 = vunpack.c.h.b16 %v4728
        %v4779 = vunpack.c.l.b16 %v4729
        %v4780 = vunpack.c.h.b16 %v4729
        %v4781 = vunpack.c.l.b16 %v4730
        %v4782 = vunpack.c.h.b16 %v4730
        %v4783 = vunpack.c.l.b16 %v4731
        %v4784 = vunpack.c.h.b16 %v4731
        %v4785 = vunpack.c.l.b16 %v4732
        %v4786 = vunpack.c.h.b16 %v4732
        %v4787 = vunpack.c.l.b16 %v4733
        %v4788 = vunpack.c.h.b16 %v4733
        %v4789 = vunpack.c.l.b16 %v4734
        %v4790 = vunpack.c.h.b16 %v4734
        %v4791 = vunpack.c.l.b16 %v4735
        %v4792 = vunpack.c.h.b16 %v4735
        %v4793 = vunpack.c.l.b16 %v4736
        %v4794 = vunpack.c.h.b16 %v4736
        %v4795 = vunpack.c.l.b16 %v4737
        %v4796 = vunpack.c.h.b16 %v4737
        %v4797 = vunpack.c.l.b16 %v4738
        %v4798 = vunpack.c.h.b16 %v4738
        %v4799 = vpack.c.b16 %v4769, %v4767
        %v4800 = vpack.c.b16 %v4770, %v4768
        %v4801 = vpack.c.b16 %v4773, %v4771
        %v4802 = vpack.c.b16 %v4774, %v4772
        %v4803 = vpack.c.b16 %v4777, %v4775
        %v4804 = vpack.c.b16 %v4778, %v4776
        %v4805 = vpack.c.b16 %v4781, %v4779
        %v4806 = vpack.c.b16 %v4782, %v4780
        %v4807 = vpack.c.b16 %v4785, %v4783
        %v4808 = vpack.c.b16 %v4786, %v4784
        %v4809 = vpack.c.b16 %v4789, %v4787
        %v4810 = vpack.c.b16 %v4790, %v4788
        %v4811 = vpack.c.b16 %v4793, %v4791
        %v4812 = vpack.c.b16 %v4794, %v4792
        %v4813 = vpack.c.b16 %v4797, %v4795
        %v4814 = vpack.c.b16 %v4798, %v4796
        %4831 = vmatprep.subr.bf16.mxu0 %v4800
        %4832 = vmatpush1.bf16.msra.mxu0 %v4799
        %4833 = vmatprep.subr.bf16.mxu0 %v4802
        %4834 = vmatpush1.bf16.msra.mxu0 %v4801
        %4835 = vmatprep.subr.bf16.mxu0 %v4804
        %4836 = vmatpush1.bf16.msra.mxu0 %v4803
        %4837 = vmatprep.subr.bf16.mxu0 %v4806
        %4838 = vmatpush1.bf16.msra.mxu0 %v4805
        %4839 = vmatprep.subr.bf16.mxu0 %v4808
        %4840 = vmatpush1.bf16.msra.mxu0 %v4807
        %4841 = vmatprep.subr.bf16.mxu0 %v4810
        %4842 = vmatpush1.bf16.msra.mxu0 %v4809
        %4843 = vmatprep.subr.bf16.mxu0 %v4812
        %4844 = vmatpush1.bf16.msra.mxu0 %v4811
        %4845 = vmatprep.subr.bf16.mxu0 %v4814
        %4846 = vmatpush1.bf16.msra.mxu0 %v4813
        %4847 = vmatprep.subr.bf16.mxu0 0
        %4848 = vmatpush1.bf16.msra.mxu0 0
        %4849 = vmatprep.subr.bf16.mxu0 0
        %4850 = vmatpush1.bf16.msra.mxu0 0
        %4851 = vmatprep.subr.bf16.mxu0 0
        %4852 = vmatpush1.bf16.msra.mxu0 0
        %4853 = vmatprep.subr.bf16.mxu0 0
        %4854 = vmatpush1.bf16.msra.mxu0 0
        %4855 = vmatprep.subr.bf16.mxu0 0
        %4856 = vmatpush1.bf16.msra.mxu0 0
        %4857 = vmatprep.subr.bf16.mxu0 0
        %4858 = vmatpush1.bf16.msra.mxu0 0
        %4859 = vmatprep.subr.bf16.mxu0 0
        %4860 = vmatpush1.bf16.msra.mxu0 0
        %4861 = vmatprep.subr.bf16.mxu0 0
        %4862 = vmatpush1.bf16.msra.mxu0 0
        %4863 = vmatprep.mubr.bf16.mxu0 0
        %4864 = vmatmul.mubr.bf16.gmra.mrb[0].mxu0 %v4722
        %v4865 = vpop.f32.mrb[0].mxu0
        %v4866 = vadd.f32 %v4744, %v4865
        %v4867 = vpop.f32.mrb[0].mxu0
        %v4868 = vadd.f32 %v4748, %v4867
        %v4869 = vpop.f32.mrb[0].mxu0
        %v4870 = vpop.f32.mrb[0].mxu0
        %4871 = vdwg.mxu0
        %v4872 = vmax.f32 %v4866, 0.0
        %v4873 = vmax.f32 %v4868, 0.0
        %v4874 = vpack.c.bf16 %v4872, %v4872
        %v4875 = vpack.c.bf16 %v4873, %v4873
        %v4876 = vld [vmem:[%s16] sm:$0xf]
        %v4877 = vld [vmem:[%s16 + $0x4] sm:$0xf]
        %v4878 = vld [vmem:[%s16 + $0x8] sm:$0xf]
        %v4879 = vld [vmem:[%s16 + $0xc] sm:$0xf]
        %v4880 = vld [vmem:[%s16 + $0x10] sm:$0xf]
        %v4881 = vld [vmem:[%s16 + $0x14] sm:$0xf]
        %v4882 = vld [vmem:[%s16 + $0x18] sm:$0xf]
        %v4883 = vld [vmem:[%s16 + $0x1c] sm:$0xf]
        %v4884 = vld [vmem:[%s16 + $0x20] sm:$0xf]
        %v4885 = vld [vmem:[%s16 + $0x24] sm:$0xf]
        %v4886 = vld [vmem:[%s16 + $0x28] sm:$0xf]
        %v4887 = vld [vmem:[%s16 + $0x2c] sm:$0xf]
        %v4888 = vld [vmem:[%s16 + $0x30] sm:$0xf]
        %v4889 = vld [vmem:[%s16 + $0x34] sm:$0xf]
        %v4890 = vld [vmem:[%s16 + $0x38] sm:$0xf]
        %v4891 = vld [vmem:[%s16 + $0x3c] sm:$0xf]
        %v4892 = vld [vmem:[%s16 + $0x40] sm:$0xf]
        %v4893 = vld [vmem:[%s16 + $0x44] sm:$0xf]
        %v4894 = vld [vmem:[%s16 + $0x48] sm:$0xf]
        %v4895 = vld [vmem:[%s16 + $0x4c] sm:$0xf]
        %v4896 = vld [vmem:[%s16 + $0x50] sm:$0xf]
        %v4897 = vld [vmem:[%s16 + $0x54] sm:$0xf]
        %v4898 = vld [vmem:[%s16 + $0x58] sm:$0xf]
        %v4899 = vld [vmem:[%s16 + $0x5c] sm:$0xf]
        %v4900 = vld [vmem:[%s16 + $0x60] sm:$0xf]
        %v4901 = vld [vmem:[%s16 + $0x64] sm:$0xf]
        %v4902 = vld [vmem:[%s16 + $0x68] sm:$0xf]
        %v4903 = vld [vmem:[%s16 + $0x6c] sm:$0xf]
        %v4904 = vld [vmem:[%s16 + $0x70] sm:$0xf]
        %v4905 = vld [vmem:[%s16 + $0x74] sm:$0xf]
        %v4906 = vld [vmem:[%s16 + $0x78] sm:$0xf]
        %v4907 = vld [vmem:[%s16 + $0x7c] sm:$0xf]
        %v4908 = vld [vmem:[%s17] sm:$0x1]
        %v4910 = vlaneseq
        %v4911 = vshrl.u32 %v4910, 7
        %v4912 = vsub.s32 0, %v4911
        %v4913 = vrot.slane %v4908, %v4912
        %v4947 = vunpack.c.l.b16 %v4876
        %v4948 = vunpack.c.l.b16 %v4877
        %v4949 = vunpack.c.l.b16 %v4878
        %v4950 = vunpack.c.l.b16 %v4879
        %v4951 = vunpack.c.l.b16 %v4880
        %v4952 = vunpack.c.l.b16 %v4881
        %v4953 = vunpack.c.l.b16 %v4882
        %v4954 = vunpack.c.l.b16 %v4883
        %v4955 = vunpack.c.l.b16 %v4884
        %v4956 = vunpack.c.l.b16 %v4885
        %v4957 = vunpack.c.l.b16 %v4886
        %v4958 = vunpack.c.l.b16 %v4887
        %v4959 = vunpack.c.l.b16 %v4888
        %v4960 = vunpack.c.l.b16 %v4889
        %v4961 = vunpack.c.l.b16 %v4890
        %v4962 = vunpack.c.l.b16 %v4891
        %v4963 = vunpack.c.l.b16 %v4892
        %v4964 = vunpack.c.l.b16 %v4893
        %v4965 = vunpack.c.l.b16 %v4894
        %v4966 = vunpack.c.l.b16 %v4895
        %v4967 = vunpack.c.l.b16 %v4896
        %v4968 = vunpack.c.l.b16 %v4897
        %v4969 = vunpack.c.l.b16 %v4898
        %v4970 = vunpack.c.l.b16 %v4899
        %v4971 = vunpack.c.l.b16 %v4900
        %v4972 = vunpack.c.l.b16 %v4901
        %v4973 = vunpack.c.l.b16 %v4902
        %v4974 = vunpack.c.l.b16 %v4903
        %v4975 = vunpack.c.l.b16 %v4904
        %v4976 = vunpack.c.l.b16 %v4905
        %v4977 = vunpack.c.l.b16 %v4906
        %v4978 = vunpack.c.l.b16 %v4907
        %v4979 = vpack.c.b16 %v4948, %v4947
        %v4980 = vpack.c.b16 %v4950, %v4949
        %v4981 = vpack.c.b16 %v4952, %v4951
        %v4982 = vpack.c.b16 %v4954, %v4953
        %v4983 = vpack.c.b16 %v4956, %v4955
        %v4984 = vpack.c.b16 %v4958, %v4957
        %v4985 = vpack.c.b16 %v4960, %v4959
        %v4986 = vpack.c.b16 %v4962, %v4961
        %v4987 = vpack.c.b16 %v4964, %v4963
        %v4988 = vpack.c.b16 %v4966, %v4965
        %v4989 = vpack.c.b16 %v4968, %v4967
        %v4990 = vpack.c.b16 %v4970, %v4969
        %v4991 = vpack.c.b16 %v4972, %v4971
        %v4992 = vpack.c.b16 %v4974, %v4973
        %v4993 = vpack.c.b16 %v4976, %v4975
        %v4994 = vpack.c.b16 %v4978, %v4977
        %5011 = vmatprep.subr.bf16.mxu0 0
        %5012 = vmatpush1.bf16.msra.mxu0 %v4979
        %5013 = vmatprep.subr.bf16.mxu0 0
        %5014 = vmatpush1.bf16.msra.mxu0 %v4980
        %5015 = vmatprep.subr.bf16.mxu0 0
        %5016 = vmatpush1.bf16.msra.mxu0 %v4981
        %5017 = vmatprep.subr.bf16.mxu0 0
        %5018 = vmatpush1.bf16.msra.mxu0 %v4982
        %5019 = vmatprep.subr.bf16.mxu0 0
        %5020 = vmatpush1.bf16.msra.mxu0 %v4983
        %5021 = vmatprep.subr.bf16.mxu0 0
        %5022 = vmatpush1.bf16.msra.mxu0 %v4984
        %5023 = vmatprep.subr.bf16.mxu0 0
        %5024 = vmatpush1.bf16.msra.mxu0 %v4985
        %5025 = vmatprep.subr.bf16.mxu0 0
        %5026 = vmatpush1.bf16.msra.mxu0 %v4986
        %5027 = vmatprep.subr.bf16.mxu0 0
        %5028 = vmatpush1.bf16.msra.mxu0 %v4987
        %5029 = vmatprep.subr.bf16.mxu0 0
        %5030 = vmatpush1.bf16.msra.mxu0 %v4988
        %5031 = vmatprep.subr.bf16.mxu0 0
        %5032 = vmatpush1.bf16.msra.mxu0 %v4989
        %5033 = vmatprep.subr.bf16.mxu0 0
        %5034 = vmatpush1.bf16.msra.mxu0 %v4990
        %5035 = vmatprep.subr.bf16.mxu0 0
        %5036 = vmatpush1.bf16.msra.mxu0 %v4991
        %5037 = vmatprep.subr.bf16.mxu0 0
        %5038 = vmatpush1.bf16.msra.mxu0 %v4992
        %5039 = vmatprep.subr.bf16.mxu0 0
        %5040 = vmatpush1.bf16.msra.mxu0 %v4993
        %5041 = vmatprep.subr.bf16.mxu0 0
        %5042 = vmatpush1.bf16.msra.mxu0 %v4994
        %5043 = vmatprep.mubr.bf16.mxu0 %v4875
        %5044 = vmatmul.mubr.bf16.gmra.mrb[0].mxu0 %v4874
        %v5045 = vpop.f32.mrb[0].mxu0
        %v5046 = vadd.f32 %v4913, %v5045
        %v5047 = vpop.f32.mrb[0].mxu0
        %v5048 = vpop.f32.mrb[0].mxu0
        %v5049 = vpop.f32.mrb[0].mxu0
        %5050 = vdwg.mxu0
        %v5051 = vadd.f32 %v4721, %v5046
        %s5052 = scalar_lea.vmem %s18, 2
        %v5053 = vld [vmem:[%s5052] sm:$0x1]
        %s5054 = scalar_lea.vmem %s19, 2
        %v5055 = vld [vmem:[%s5054] sm:$0x1]
        %5056 = vadd.xlane.f32.xlu0 %v5051
        %v5057 = vpop.xlane.xlu0 %5056
        %v5058 = vmul.f32 %v5057, %v2645
        %v5059 = vsub.f32 %v5051, %v5058
        %v5060 = vmul.f32 %v5059, %v5059
        %5061 = vadd.xlane.f32.xlu0 %v5060
        %v5062 = vpop.xlane.xlu0 %5061
        %v5063 = vmul.f32 %v5062, %v2645
        %v5064 = vadd.f32 %v5063, 1e-05
        %v5065 = vrsqrt.pop %v5064
        %v5066 = vmul.f32 %v5059, %v5065
        %v5068 = vlaneseq
        %v5069 = vshrl.u32 %v5068, 7
        %v5070 = vsub.s32 0, %v5069
        %v5071 = vrot.slane %v5053, %v5070
        %v5073 = vmul.f32 %v5066, %v5071
        %v5075 = vlaneseq
        %v5076 = vshrl.u32 %v5075, 7
        %v5077 = vsub.s32 0, %v5076
        %v5078 = vrot.slane %v5055, %v5077
        %v5080 = vadd.f32 %v5073, %v5078
        %5081 = vst [vmem:[%s591] sm:$0xff] %v5080
        %s5082 = sand.u32 %s440, 1
        %s5083 = scalar_lea.sflag [#allocation6], %s5082
        %s5084 = sand.u32 %s440, 1
        %s5085 = smul.addr %s5084, 8
        %s5086 = scalar_lea.vmem [#allocation5], %s5085
        // Predicated region
        $region93: #{tpu_custom_call.1} parent=91 // pred_check
          %p5087 = pneg %p450
        $region94: #{tpu_custom_call.1} parent=91 // pred_check_branch
          %5089 = sbr.rel (%p5087) target = $region96
        $region95: #{tpu_custom_call.1} parent=91 // pred_region
          %s5091 = ssub.s32 128, 128
          %5092 = vsyncadd %s5083, %s5091
          %s5093 = smul.addr %s44, 128
          %s5094 = scalar_lea.hbm %s20, %s5093
          %s5096 = sshll.u32 %s5086, 4
          %s5097 = int_to_ptr.vmem [resolvable:$true] %s5096
          %5099 = dma.vmem_to_hbm [thread:$0]  %s5097, 128, %s5094, %s5083
        $region96: #{tpu_custom_call.1} parent=91 // pred_fallthru
          _
      $region92: #{tpu_custom_call.1} parent=5 // pred_fallthru
        _
      %p5100 = scmp.le.s32.totalorder 2, %s39
      // Predicated region
      $region97: #{tpu_custom_call.1} parent=5 // pred_check
        %p5101 = pneg %p5100
      $region98: #{tpu_custom_call.1} parent=5 // pred_check_branch
        %5103 = sbr.rel (%p5101) target = $region100
      $region99: #{tpu_custom_call.1} parent=5 // pred_region
        %s5104 = ssub.s32 %s39, 2
        // Predicated region
        $region101: #{tpu_custom_call.1} parent=99 // pred_check
          %p5105 = pneg %p456
        $region102: #{tpu_custom_call.1} parent=99 // pred_check_branch
          %5107 = sbr.rel (%p5105) target = $region104
        $region103: #{tpu_custom_call.1} parent=99 // pred_region
          %s5108 = sand.u32 %s441, 1
          %s5109 = scalar_lea.sflag [#allocation6], %s5108
          %s5110 = sand.u32 %s441, 1
          %s5111 = smul.addr %s5110, 8
          %s5112 = scalar_lea.vmem [#allocation5], %s5111
          %5113 = dma.done %s5109, 128
        $region104: #{tpu_custom_call.1} parent=99 // pred_fallthru
          _
      $region100: #{tpu_custom_call.1} parent=5 // pred_fallthru
        _
    $region6: #{tpu_custom_call.1} parent=1 // loop_footer
      %s43 = sadd.s32 1, %s39
    $region7: #{tpu_custom_call.1} parent=1 // loop_footer_branch
      %38 = sbr.rel target = $region3
    $region8: #{tpu_custom_call.1} parent=1 // loop_exit
      _
    %5114 = vsyncpa [#allocation6], 1
    %s5115 = scalar_lea.sflag [#allocation6], 1
    %5116 = vsyncpa %s5115, 1

// kernel: tpu_custom_call.1
$region0: #{tpu_custom_call.1}
  #allocation0 [shape = 'u32[]', space=smem, size = 0x4, offset = 0x4, fixed_abs, tag = 'smem constant byte address 0x4 - core index']
  #allocation1 [shape = 'u32[144,128]{1,0:T(1,128)}', space=vmem, size = 0x12000, scoped, tag = 'internal scratch']
  #allocation2 [shape = 's32[1]{0}', space=sflag, size = 0x4, scoped, tag = 'scoped memory for tpu_custom_call.1']
  #allocation3 [shape = 'u8[512]{0}', space=smem, size = 0x200, scoped, tag = 'prefetched SMEM operand 0']
  #allocation4 [shape = 'u8[512]{0}', space=smem, size = 0x200, scoped, tag = 'prefetched SMEM operand 1']
  %s0 = inlined_call_operand.vmem [shape: s32[2], index: 0, kind: input, shape index: {}]
  %s1 = inlined_call_operand.vmem [shape: s32[2], index: 1, kind: input, shape index: {}]
  %s2 = inlined_call_operand.vmem [shape: f32[2,8,128], index: 2, kind: input, shape index: {}]
  %s3 = inlined_call_operand.vmem [shape: f32[2,8,128], index: 3, kind: input, shape index: {}]
  %s4 = inlined_call_operand.vmem [shape: bf16[12,128,32], index: 4, kind: input, shape index: {}]
  %s5 = inlined_call_operand.vmem [shape: f32[12,1,32], index: 5, kind: input, shape index: {}]
  %s6 = inlined_call_operand.vmem [shape: bf16[4,32,128], index: 6, kind: input, shape index: {}]
  %s7 = inlined_call_operand.vmem [shape: f32[1,128], index: 7, kind: input, shape index: {}]
  %s8 = inlined_call_operand.vmem [shape: bf16[4,128,32], index: 8, kind: input, shape index: {}]
  %s9 = inlined_call_operand.vmem [shape: f32[4,1,32], index: 9, kind: input, shape index: {}]
  %s10 = inlined_call_operand.vmem [shape: bf16[8,128,32], index: 10, kind: input, shape index: {}]
  %s11 = inlined_call_operand.vmem [shape: f32[8,1,32], index: 11, kind: input, shape index: {}]
  %s12 = inlined_call_operand.vmem [shape: bf16[4,32,128], index: 12, kind: input, shape index: {}]
  %s13 = inlined_call_operand.vmem [shape: f32[1,128], index: 13, kind: input, shape index: {}]
  %s14 = inlined_call_operand.vmem [shape: bf16[128,256], index: 14, kind: input, shape index: {}]
  %s15 = inlined_call_operand.vmem [shape: f32[1,256], index: 15, kind: input, shape index: {}]
  %s16 = inlined_call_operand.vmem [shape: bf16[256,128], index: 16, kind: input, shape index: {}]
  %s17 = inlined_call_operand.vmem [shape: f32[1,128], index: 17, kind: input, shape index: {}]
  %s18 = inlined_call_operand.vmem [shape: f32[3,1,128], index: 18, kind: input, shape index: {}]
  %s19 = inlined_call_operand.vmem [shape: f32[3,1,128], index: 19, kind: input, shape index: {}]
  %s20 = inlined_call_operand.hbm [shape: f32[2,8,128], index: 20, kind: output, shape index: {}]
  %s21 = sld [smem:[#allocation0]]
  $region105: #{tpu_custom_call.1} parent=0
    _
  %s23 = ssub.s32 1, %s21
  %s24 = scalar_select 0, %s23, %s21
  %s25 = sshll.u32 %s0, 4
  %s26 = int_to_ptr.vmem [resolvable:$true] %s25
  %28 = dma.vmem_to_smem %s26, 16, [#allocation3], [#allocation2]
  %s29 = sshll.u32 %s1, 4
  %s30 = int_to_ptr.vmem [resolvable:$true] %s29
  %32 = dma.vmem_to_smem %s30, 16, [#allocation4], [#allocation2]
  %33 = dma.done [#allocation2], 32
  %34 = sfence
  $region1: #{tpu_custom_call.1} parent=0
    #allocation5 [shape = 'u8[8192]{0}', space=vmem, size = 0x2000, scoped, tag = 'output window, operand 0']
    #allocation6 [shape = 's32[2]{0}', space=sflag, size = 0x8, scoped, tag = 'scoped memory for tpu_custom_call.1']
    %35 = vsyncpa [#allocation6], 0
    %s36 = scalar_lea.sflag [#allocation6], 1
    %37 = vsyncpa %s36, 0
    loop: start=0, step=1, limit=4
    $region2: #{tpu_custom_call.1} parent=1 // loop_pre_header
      _
    $region3: #{tpu_custom_call.1} parent=1 // loop_header
      %s39 = sphi 0, %s43
      %p40 = scmp.ge.s32.totalorder %s39, 4
      %s49 = sphi 0, %s51
      %s52 = sphi 0, %s49
      %s53 = sphi 0, %s52
      %s69 = sphi 0, %s53
      %s75 = sphi 0, %s77
      %s78 = sphi 0, %s75
      %s79 = sphi 0, %s78
      %s95 = sphi 0, %s79
      %s99 = sphi 0, %s99
      %s101 = sphi 0, %s99
      %s102 = sphi 0, %s101
      %s116 = sphi 0, %s102
      %s120 = sphi 0, %s120
      %s122 = sphi 0, %s120
      %s123 = sphi 0, %s122
      %s137 = sphi 0, %s123
      %s141 = sphi 0, %s141
      %s143 = sphi 0, %s141
      %s144 = sphi 0, %s143
      %s158 = sphi 0, %s144
      %s162 = sphi 0, %s162
      %s164 = sphi 0, %s162
      %s165 = sphi 0, %s164
      %s179 = sphi 0, %s165
      %s183 = sphi 0, %s183
      %s185 = sphi 0, %s183
      %s186 = sphi 0, %s185
      %s200 = sphi 0, %s186
      %s204 = sphi 0, %s204
      %s206 = sphi 0, %s204
      %s207 = sphi 0, %s206
      %s221 = sphi 0, %s207
      %s225 = sphi 0, %s225
      %s227 = sphi 0, %s225
      %s228 = sphi 0, %s227
      %s242 = sphi 0, %s228
      %s246 = sphi 0, %s246
      %s248 = sphi 0, %s246
      %s249 = sphi 0, %s248
      %s263 = sphi 0, %s249
      %s267 = sphi 0, %s267
      %s269 = sphi 0, %s267
      %s270 = sphi 0, %s269
      %s284 = sphi 0, %s270
      %s288 = sphi 0, %s288
      %s290 = sphi 0, %s288
      %s291 = sphi 0, %s290
      %s305 = sphi 0, %s291
      %s309 = sphi 0, %s309
      %s311 = sphi 0, %s309
      %s312 = sphi 0, %s311
      %s326 = sphi 0, %s312
      %s330 = sphi 0, %s330
      %s332 = sphi 0, %s330
      %s333 = sphi 0, %s332
      %s347 = sphi 0, %s333
      %s351 = sphi 0, %s351
      %s353 = sphi 0, %s351
      %s354 = sphi 0, %s353
      %s368 = sphi 0, %s354
      %s372 = sphi 0, %s372
      %s374 = sphi 0, %s372
      %s375 = sphi 0, %s374
      %s389 = sphi 0, %s375
      %s393 = sphi 0, %s393
      %s395 = sphi 0, %s393
      %s396 = sphi 0, %s395
      %s410 = sphi 0, %s396
      %s414 = sphi 0, %s414
      %s416 = sphi 0, %s414
      %s417 = sphi 0, %s416
      %s431 = sphi 0, %s417
      %s437 = sphi 0, %s439
      %s440 = sphi 0, %s437
      %s441 = sphi 0, %s440
      %s457 = sphi 0, %s441
    $region4: #{tpu_custom_call.1} parent=1 // loop_header_branch
      %42 = sbr.rel (%p40) target = $region8
    $region5: #{tpu_custom_call.1} parent=1 // loop_body
      %s44 = ssub.s32 %s39, 1
      %s45 = ssub.s32 %s39, 2
      %s46 = sadd.s32 %s39, 1
      %s47 = ssub.s32 %s39, %s46
      %p48 = scmp.eq.s32.totalorder %s47, 0
      %s50 = sadd.s32 %s49, 1
      %s51 = scalar_select %p48, %s49, %s50
      %p54 = pneg %p48
      %p55 = scmp.eq.s32.totalorder %s39, 1
      %p56 = por %p54, %p55
      %p57 = scmp.ne.s32.totalorder %s49, %s52
      %p58 = scmp.eq.s32.totalorder %s39, 0
      %p59 = por %p57, %p58
      %p60 = scmp.ne.s32.totalorder %s49, %s52
      %p61 = scmp.eq.s32.totalorder %s44, 1
      %p62 = por %p60, %p61
      %p63 = scmp.ne.s32.totalorder %s52, %s53
      %p64 = scmp.eq.s32.totalorder %s44, 0
      %p65 = por %p63, %p64
      %p66 = scmp.ne.s32.totalorder %s52, %s53
      %p67 = scmp.eq.s32.totalorder %s45, 1
      %p68 = por %p66, %p67
      %p70 = scmp.ne.s32.totalorder %s53, %s69
      %p71 = scmp.eq.s32.totalorder %s45, 0
      %p72 = por %p70, %p71
      %s73 = ssub.s32 %s39, %s46
      %p74 = scmp.eq.s32.totalorder %s73, 0
      %s76 = sadd.s32 %s75, 1
      %s77 = scalar_select %p74, %s75, %s76
      %p80 = pneg %p74
      %p81 = scmp.eq.s32.totalorder %s39, 1
      %p82 = por %p80, %p81
      %p83 = scmp.ne.s32.totalorder %s75, %s78
      %p84 = scmp.eq.s32.totalorder %s39, 0
      %p85 = por %p83, %p84
      %p86 = scmp.ne.s32.totalorder %s75, %s78
      %p87 = scmp.eq.s32.totalorder %s44, 1
      %p88 = por %p86, %p87
      %p89 = scmp.ne.s32.totalorder %s78, %s79
      %p90 = scmp.eq.s32.totalorder %s44, 0
      %p91 = por %p89, %p90
      %p92 = scmp.ne.s32.totalorder %s78, %s79
      %p93 = scmp.eq.s32.totalorder %s45, 1
      %p94 = por %p92, %p93
      %p96 = scmp.ne.s32.totalorder %s79, %s95
      %p97 = scmp.eq.s32.totalorder %s45, 0
      %p98 = por %p96, %p97
      %s100 = sadd.s32 %s99, 1
      %p103 = scmp.eq.s32.totalorder %s39, 1
      %p104 = scmp.ne.s32.totalorder %s99, %s101
      %p105 = scmp.eq.s32.totalorder %s39, 0
      %p106 = por %p104, %p105
      %p107 = scmp.ne.s32.totalorder %s99, %s101
      %p108 = scmp.eq.s32.totalorder %s44, 1
      %p109 = por %p107, %p108
      %p110 = scmp.ne.s32.totalorder %s101, %s102
      %p111 = scmp.eq.s32.totalorder %s44, 0
      %p112 = por %p110, %p111
      %p113 = scmp.ne.s32.totalorder %s101, %s102
      %p114 = scmp.eq.s32.totalorder %s45, 1
      %p115 = por %p113, %p114
      %p117 = scmp.ne.s32.totalorder %s102, %s116
      %p118 = scmp.eq.s32.totalorder %s45, 0
      %p119 = por %p117, %p118
      %s121 = sadd.s32 %s120, 1
      %p124 = scmp.eq.s32.totalorder %s39, 1
      %p125 = scmp.ne.s32.totalorder %s120, %s122
      %p126 = scmp.eq.s32.totalorder %s39, 0
      %p127 = por %p125, %p126
      %p128 = scmp.ne.s32.totalorder %s120, %s122
      %p129 = scmp.eq.s32.totalorder %s44, 1
      %p130 = por %p128, %p129
      %p131 = scmp.ne.s32.totalorder %s122, %s123
      %p132 = scmp.eq.s32.totalorder %s44, 0
      %p133 = por %p131, %p132
      %p134 = scmp.ne.s32.totalorder %s122, %s123
      %p135 = scmp.eq.s32.totalorder %s45, 1
      %p136 = por %p134, %p135
      %p138 = scmp.ne.s32.totalorder %s123, %s137
      %p139 = scmp.eq.s32.totalorder %s45, 0
      %p140 = por %p138, %p139
      %s142 = sadd.s32 %s141, 1
      %p145 = scmp.eq.s32.totalorder %s39, 1
      %p146 = scmp.ne.s32.totalorder %s141, %s143
      %p147 = scmp.eq.s32.totalorder %s39, 0
      %p148 = por %p146, %p147
      %p149 = scmp.ne.s32.totalorder %s141, %s143
      %p150 = scmp.eq.s32.totalorder %s44, 1
      %p151 = por %p149, %p150
      %p152 = scmp.ne.s32.totalorder %s143, %s144
      %p153 = scmp.eq.s32.totalorder %s44, 0
      %p154 = por %p152, %p153
      %p155 = scmp.ne.s32.totalorder %s143, %s144
      %p156 = scmp.eq.s32.totalorder %s45, 1
      %p157 = por %p155, %p156
      %p159 = scmp.ne.s32.totalorder %s144, %s158
      %p160 = scmp.eq.s32.totalorder %s45, 0
      %p161 = por %p159, %p160
      %s163 = sadd.s32 %s162, 1
      %p166 = scmp.eq.s32.totalorder %s39, 1
      %p167 = scmp.ne.s32.totalorder %s162, %s164
      %p168 = scmp.eq.s32.totalorder %s39, 0
      %p169 = por %p167, %p168
      %p170 = scmp.ne.s32.totalorder %s162, %s164
      %p171 = scmp.eq.s32.totalorder %s44, 1
      %p172 = por %p170, %p171
      %p173 = scmp.ne.s32.totalorder %s164, %s165
      %p174 = scmp.eq.s32.totalorder %s44, 0
      %p175 = por %p173, %p174
      %p176 = scmp.ne.s32.totalorder %s164, %s165
      %p177 = scmp.eq.s32.totalorder %s45, 1
      %p178 = por %p176, %p177
      %p180 = scmp.ne.s32.totalorder %s165, %s179
      %p181 = scmp.eq.s32.totalorder %s45, 0
      %p182 = por %p180, %p181
      %s184 = sadd.s32 %s183, 1
      %p187 = scmp.eq.s32.totalorder %s39, 1
      %p188 = scmp.ne.s32.totalorder %s183, %s185
      %p189 = scmp.eq.s32.totalorder %s39, 0
      %p190 = por %p188, %p189
      %p191 = scmp.ne.s32.totalorder %s183, %s185
      %p192 = scmp.eq.s32.totalorder %s44, 1
      %p193 = por %p191, %p192
      %p194 = scmp.ne.s32.totalorder %s185, %s186
      %p195 = scmp.eq.s32.totalorder %s44, 0
      %p196 = por %p194, %p195
      %p197 = scmp.ne.s32.totalorder %s185, %s186
      %p198 = scmp.eq.s32.totalorder %s45, 1
      %p199 = por %p197, %p198
      %p201 = scmp.ne.s32.totalorder %s186, %s200
      %p202 = scmp.eq.s32.totalorder %s45, 0
      %p203 = por %p201, %p202
      %s205 = sadd.s32 %s204, 1
      %p208 = scmp.eq.s32.totalorder %s39, 1
      %p209 = scmp.ne.s32.totalorder %s204, %s206
      %p210 = scmp.eq.s32.totalorder %s39, 0
      %p211 = por %p209, %p210
      %p212 = scmp.ne.s32.totalorder %s204, %s206
      %p213 = scmp.eq.s32.totalorder %s44, 1
      %p214 = por %p212, %p213
      %p215 = scmp.ne.s32.totalorder %s206, %s207
      %p216 = scmp.eq.s32.totalorder %s44, 0
      %p217 = por %p215, %p216
      %p218 = scmp.ne.s32.totalorder %s206, %s207
      %p219 = scmp.eq.s32.totalorder %s45, 1
      %p220 = por %p218, %p219
      %p222 = scmp.ne.s32.totalorder %s207, %s221
      %p223 = scmp.eq.s32.totalorder %s45, 0
      %p224 = por %p222, %p223
      %s226 = sadd.s32 %s225, 1
      %p229 = scmp.eq.s32.totalorder %s39, 1
      %p230 = scmp.ne.s32.totalorder %s225, %s227
      %p231 = scmp.eq.s32.totalorder %s39, 0
      %p232 = por %p230, %p231
      %p233 = scmp.ne.s32.totalorder %s225, %s227
      %p234 = scmp.eq.s32.totalorder %s44, 1
      %p235 = por %p233, %p234
      %p236 = scmp.ne.s32.totalorder %s227, %s228
      %p237 = scmp.eq.s32.totalorder %s44, 0
      %p238 = por %p236, %p237
      %p239 = scmp.ne.s32.totalorder %s227, %s228
      %p240 = scmp.eq.s32.totalorder %s45, 1
      %p241 = por %p239, %p240
      %p243 = scmp.ne.s32.totalorder %s228, %s242
      %p244 = scmp.eq.s32.totalorder %s45, 0
      %p245 = por %p243, %p244
      %s247 = sadd.s32 %s246, 1
      %p250 = scmp.eq.s32.totalorder %s39, 1
      %p251 = scmp.ne.s32.totalorder %s246, %s248
      %p252 = scmp.eq.s32.totalorder %s39, 0
      %p253 = por %p251, %p252
      %p254 = scmp.ne.s32.totalorder %s246, %s248
      %p255 = scmp.eq.s32.totalorder %s44, 1
      %p256 = por %p254, %p255
      %p257 = scmp.ne.s32.totalorder %s248, %s249
      %p258 = scmp.eq.s32.totalorder %s44, 0
      %p259 = por %p257, %p258
      %p260 = scmp.ne.s32.totalorder %s248, %s249
      %p261 = scmp.eq.s32.totalorder %s45, 1
      %p262 = por %p260, %p261
      %p264 = scmp.ne.s32.totalorder %s249, %s263
      %p265 = scmp.eq.s32.totalorder %s45, 0
      %p266 = por %p264, %p265
      %s268 = sadd.s32 %s267, 1
      %p271 = scmp.eq.s32.totalorder %s39, 1
      %p272 = scmp.ne.s32.totalorder %s267, %s269
      %p273 = scmp.eq.s32.totalorder %s39, 0
      %p274 = por %p272, %p273
      %p275 = scmp.ne.s32.totalorder %s267, %s269
      %p276 = scmp.eq.s32.totalorder %s44, 1
      %p277 = por %p275, %p276
      %p278 = scmp.ne.s32.totalorder %s269, %s270
      %p279 = scmp.eq.s32.totalorder %s44, 0
      %p280 = por %p278, %p279
      %p281 = scmp.ne.s32.totalorder %s269, %s270
      %p282 = scmp.eq.s32.totalorder %s45, 1
      %p283 = por %p281, %p282
      %p285 = scmp.ne.s32.totalorder %s270, %s284
      %p286 = scmp.eq.s32.totalorder %s45, 0
      %p287 = por %p285, %p286
      %s289 = sadd.s32 %s288, 1
      %p292 = scmp.eq.s32.totalorder %s39, 1
      %p293 = scmp.ne.s32.totalorder %s288, %s290
      %p294 = scmp.eq.s32.totalorder %s39, 0
      %p295 = por %p293, %p294
      %p296 = scmp.ne.s32.totalorder %s288, %s290
      %p297 = scmp.eq.s32.totalorder %s44, 1
      %p298 = por %p296, %p297
      %p299 = scmp.ne.s32.totalorder %s290, %s291
      %p300 = scmp.eq.s32.totalorder %s44, 0
      %p301 = por %p299, %p300
      %p302 = scmp.ne.s32.totalorder %s290, %s291
      %p303 = scmp.eq.s32.totalorder %s45, 1
      %p304 = por %p302, %p303
      %p306 = scmp.ne.s32.totalorder %s291, %s305
      %p307 = scmp.eq.s32.totalorder %s45, 0
      %p308 = por %p306, %p307
      %s310 = sadd.s32 %s309, 1
      %p313 = scmp.eq.s32.totalorder %s39, 1
      %p314 = scmp.ne.s32.totalorder %s309, %s311
      %p315 = scmp.eq.s32.totalorder %s39, 0
      %p316 = por %p314, %p315
      %p317 = scmp.ne.s32.totalorder %s309, %s311
      %p318 = scmp.eq.s32.totalorder %s44, 1
      %p319 = por %p317, %p318
      %p320 = scmp.ne.s32.totalorder %s311, %s312
      %p321 = scmp.eq.s32.totalorder %s44, 0
      %p322 = por %p320, %p321
      %p323 = scmp.ne.s32.totalorder %s311, %s312
      %p324 = scmp.eq.s32.totalorder %s45, 1
      %p325 = por %p323, %p324
      %p327 = scmp.ne.s32.totalorder %s312, %s326
      %p328 = scmp.eq.s32.totalorder %s45, 0
      %p329 = por %p327, %p328
      %s331 = sadd.s32 %s330, 1
      %p334 = scmp.eq.s32.totalorder %s39, 1
      %p335 = scmp.ne.s32.totalorder %s330, %s332
      %p336 = scmp.eq.s32.totalorder %s39, 0
      %p337 = por %p335, %p336
      %p338 = scmp.ne.s32.totalorder %s330, %s332
      %p339 = scmp.eq.s32.totalorder %s44, 1
      %p340 = por %p338, %p339
      %p341 = scmp.ne.s32.totalorder %s332, %s333
      %p342 = scmp.eq.s32.totalorder %s44, 0
      %p343 = por %p341, %p342
      %p344 = scmp.ne.s32.totalorder %s332, %s333
      %p345 = scmp.eq.s32.totalorder %s45, 1
      %p346 = por %p344, %p345
      %p348 = scmp.ne.s32.totalorder %s333, %s347
      %p349 = scmp.eq.s32.totalorder %s45, 0
      %p350 = por %p348, %p349
      %s352 = sadd.s32 %s351, 1
      %p355 = scmp.eq.s32.totalorder %s39, 1
      %p356 = scmp.ne.s32.totalorder %s351, %s353
      %p357 = scmp.eq.s32.totalorder %s39, 0
      %p358 = por %p356, %p357
      %p359 = scmp.ne.s32.totalorder %s351, %s353
      %p360 = scmp.eq.s32.totalorder %s44, 1
      %p361 = por %p359, %p360
      %p362 = scmp.ne.s32.totalorder %s353, %s354
      %p363 = scmp.eq.s32.totalorder %s44, 0
      %p364 = por %p362, %p363
      %p365 = scmp.ne.s32.totalorder %s353, %s354
      %p366 = scmp.eq.s32.totalorder %s45, 1
      %p367 = por %p365, %p366
      %p369 = scmp.ne.s32.totalorder %s354, %s368
      %p370 = scmp.eq.s32.totalorder %s45, 0
      %p371 = por %p369, %p370
      %s373 = sadd.s32 %s372, 1
      %p376 = scmp.eq.s32.totalorder %s39, 1
      %p377 = scmp.ne.s32.totalorder %s372, %s374
      %p378 = scmp.eq.s32.totalorder %s39, 0
      %p379 = por %p377, %p378
      %p380 = scmp.ne.s32.totalorder %s372, %s374
      %p381 = scmp.eq.s32.totalorder %s44, 1
      %p382 = por %p380, %p381
      %p383 = scmp.ne.s32.totalorder %s374, %s375
      %p384 = scmp.eq.s32.totalorder %s44, 0
      %p385 = por %p383, %p384
      %p386 = scmp.ne.s32.totalorder %s374, %s375
      %p387 = scmp.eq.s32.totalorder %s45, 1
      %p388 = por %p386, %p387
      %p390 = scmp.ne.s32.totalorder %s375, %s389
      %p391 = scmp.eq.s32.totalorder %s45, 0
      %p392 = por %p390, %p391
      %s394 = sadd.s32 %s393, 1
      %p397 = scmp.eq.s32.totalorder %s39, 1
      %p398 = scmp.ne.s32.totalorder %s393, %s395
      %p399 = scmp.eq.s32.totalorder %s39, 0
      %p400 = por %p398, %p399
      %p401 = scmp.ne.s32.totalorder %s393, %s395
      %p402 = scmp.eq.s32.totalorder %s44, 1
      %p403 = por %p401, %p402
      %p404 = scmp.ne.s32.totalorder %s395, %s396
      %p405 = scmp.eq.s32.totalorder %s44, 0
      %p406 = por %p404, %p405
      %p407 = scmp.ne.s32.totalorder %s395, %s396
      %p408 = scmp.eq.s32.totalorder %s45, 1
      %p409 = por %p407, %p408
      %p411 = scmp.ne.s32.totalorder %s396, %s410
      %p412 = scmp.eq.s32.totalorder %s45, 0
      %p413 = por %p411, %p412
      %s415 = sadd.s32 %s414, 1
      %p418 = scmp.eq.s32.totalorder %s39, 1
      %p419 = scmp.ne.s32.totalorder %s414, %s416
      %p420 = scmp.eq.s32.totalorder %s39, 0
      %p421 = por %p419, %p420
      %p422 = scmp.ne.s32.totalorder %s414, %s416
      %p423 = scmp.eq.s32.totalorder %s44, 1
      %p424 = por %p422, %p423
      %p425 = scmp.ne.s32.totalorder %s416, %s417
      %p426 = scmp.eq.s32.totalorder %s44, 0
      %p427 = por %p425, %p426
      %p428 = scmp.ne.s32.totalorder %s416, %s417
      %p429 = scmp.eq.s32.totalorder %s45, 1
      %p430 = por %p428, %p429
      %p432 = scmp.ne.s32.totalorder %s417, %s431
      %p433 = scmp.eq.s32.totalorder %s45, 0
      %p434 = por %p432, %p433
      %s435 = ssub.s32 %s39, %s46
      %p436 = scmp.eq.s32.totalorder %s435, 0
      %s438 = sadd.s32 %s437, 1
      %s439 = scalar_select %p436, %s437, %s438
      %p442 = pneg %p436
      %p443 = scmp.eq.s32.totalorder %s39, 1
      %p444 = por %p442, %p443
      %p445 = scmp.ne.s32.totalorder %s437, %s440
      %p446 = scmp.eq.s32.totalorder %s39, 0
      %p447 = por %p445, %p446
      %p448 = scmp.ne.s32.totalorder %s437, %s440
      %p449 = scmp.eq.s32.totalorder %s44, 1
      %p450 = por %p448, %p449
      %p451 = scmp.ne.s32.totalorder %s440, %s441
      %p452 = scmp.eq.s32.totalorder %s44, 0
      %p453 = por %p451, %p452
      %p454 = scmp.ne.s32.totalorder %s440, %s441
      %p455 = scmp.eq.s32.totalorder %s45, 1
      %p456 = por %p454, %p455
      %p458 = scmp.ne.s32.totalorder %s441, %s457
      %p459 = scmp.eq.s32.totalorder %s45, 0
      %p460 = por %p458, %p459
      %p461 = scmp.le.s32.totalorder 1, %s39
      %p462 = scmp.lt.s32.totalorder %s39, 3
      %p463 = pnand %p461, %p462
      %p464 = pneg %p463
      // Predicated region
      $region9: #{tpu_custom_call.1} parent=5 // pred_check
        _
      $region10: #{tpu_custom_call.1} parent=5 // pred_check_branch
        %466 = sbr.rel (%p463) target = $region12
      $region11: #{tpu_custom_call.1} parent=5 // pred_region
        %s467 = ssub.s32 %s39, 1
        // Predicated region
        $region13: #{tpu_custom_call.1} parent=11 // pred_check
          %p468 = pneg %p112
        $region14: #{tpu_custom_call.1} parent=11 // pred_check_branch
          %470 = sbr.rel (%p468) target = $region16
        $region15: #{tpu_custom_call.1} parent=11 // pred_region
          _
        $region16: #{tpu_custom_call.1} parent=11 // pred_fallthru
          _
        // Predicated region
        $region17: #{tpu_custom_call.1} parent=11 // pred_check
          %p471 = pneg %p133
        $region18: #{tpu_custom_call.1} parent=11 // pred_check_branch
          %473 = sbr.rel (%p471) target = $region20
        $region19: #{tpu_custom_call.1} parent=11 // pred_region
          _
        $region20: #{tpu_custom_call.1} parent=11 // pred_fallthru
          _
        // Predicated region
        $region21: #{tpu_custom_call.1} parent=11 // pred_check
          %p474 = pneg %p154
        $region22: #{tpu_custom_call.1} parent=11 // pred_check_branch
          %476 = sbr.rel (%p474) target = $region24
        $region23: #{tpu_custom_call.1} parent=11 // pred_region
          _
        $region24: #{tpu_custom_call.1} parent=11 // pred_fallthru
          _
        // Predicated region
        $region25: #{tpu_custom_call.1} parent=11 // pred_check
          %p477 = pneg %p175
        $region26: #{tpu_custom_call.1} parent=11 // pred_check_branch
          %479 = sbr.rel (%p477) target = $region28
        $region27: #{tpu_custom_call.1} parent=11 // pred_region
          _
        $region28: #{tpu_custom_call.1} parent=11 // pred_fallthru
          _
        // Predicated region
        $region29: #{tpu_custom_call.1} parent=11 // pred_check
          %p480 = pneg %p196
        $region30: #{tpu_custom_call.1} parent=11 // pred_check_branch
          %482 = sbr.rel (%p480) target = $region32
        $region31: #{tpu_custom_call.1} parent=11 // pred_region
          _
        $region32: #{tpu_custom_call.1} parent=11 // pred_fallthru
          _
        // Predicated region
        $region33: #{tpu_custom_call.1} parent=11 // pred_check
          %p483 = pneg %p217
        $region34: #{tpu_custom_call.1} parent=11 // pred_check_branch
          %485 = sbr.rel (%p483) target = $region36
        $region35: #{tpu_custom_call.1} parent=11 // pred_region
          _
        $region36: #{tpu_custom_call.1} parent=11 // pred_fallthru
          _
        // Predicated region
        $region37: #{tpu_custom_call.1} parent=11 // pred_check
          %p486 = pneg %p238
        $region38: #{tpu_custom_call.1} parent=11 // pred_check_branch
          %488 = sbr.rel (%p486) target = $region40
        $region39: #{tpu_custom_call.1} parent=11 // pred_region
          _
        $region40: #{tpu_custom_call.1} parent=11 // pred_fallthru
          _
        // Predicated region
        $region41: #{tpu_custom_call.1} parent=11 // pred_check
          %p489 = pneg %p259
        $region42: #{tpu_custom_call.1} parent=11 // pred_check_branch
          %491 = sbr.rel (%p489) target = $region44
        $region43: #{tpu_custom_call.1} parent=11 // pred_region
          _
        $region44: #{tpu_custom_call.1} parent=11 // pred_fallthru
          _
        // Predicated region
        $region45: #{tpu_custom_call.1} parent=11 // pred_check
          %p492 = pneg %p280
        $region46: #{tpu_custom_call.1} parent=11 // pred_check_branch
          %494 = sbr.rel (%p492) target = $region48
        $region47: #{tpu_custom_call.1} parent=11 // pred_region
          _
        $region48: #{tpu_custom_call.1} parent=11 // pred_fallthru
          _
        // Predicated region
        $region49: #{tpu_custom_call.1} parent=11 // pred_check
          %p495 = pneg %p301
        $region50: #{tpu_custom_call.1} parent=11 // pred_check_branch
          %497 = sbr.rel (%p495) target = $region52
        $region51: #{tpu_custom_call.1} parent=11 // pred_region
          _
        $region52: #{tpu_custom_call.1} parent=11 // pred_fallthru
          _
        // Predicated region
        $region53: #{tpu_custom_call.1} parent=11 // pred_check
          %p498 = pneg %p322
        $region54: #{tpu_custom_call.1} parent=11 // pred_check_branch
          %500 = sbr.rel (%p498) target = $region56
        $region55: #{tpu_custom_call.1} parent=11 // pred_region
          _
        $region56: #{tpu_custom_call.1} parent=11 // pred_fallthru
          _
        // Predicated region
        $region57: #{tpu_custom_call.1} parent=11 // pred_check
          %p501 = pneg %p343
        $region58: #{tpu_custom_call.1} parent=11 // pred_check_branch
          %503 = sbr.rel (%p501) target = $region60
        $region59: #{tpu_custom_call.1} parent=11 // pred_region
          _
        $region60: #{tpu_custom_call.1} parent=11 // pred_fallthru
          _
        // Predicated region
        $region61: #{tpu_custom_call.1} parent=11 // pred_check
          %p504 = pneg %p364
        $region62: #{tpu_custom_call.1} parent=11 // pred_check_branch
          %506 = sbr.rel (%p504) target = $region64
        $region63: #{tpu_custom_call.1} parent=11 // pred_region
          _
        $region64: #{tpu_custom_call.1} parent=11 // pred_fallthru
          _
        // Predicated region
        $region65: #{tpu_custom_call.1} parent=11 // pred_check
          %p507 = pneg %p385
        $region66: #{tpu_custom_call.1} parent=11 // pred_check_branch
          %509 = sbr.rel (%p507) target = $region68
        $region67: #{tpu_custom_call.1} parent=11 // pred_region
          _
        $region68: #{tpu_custom_call.1} parent=11 // pred_fallthru
          _
        // Predicated region
        $region69: #{tpu_custom_call.1} parent=11 // pred_check
          %p510 = pneg %p406
        $region70: #{tpu_custom_call.1} parent=11 // pred_check_branch
          %512 = sbr.rel (%p510) target = $region72
        $region71: #{tpu_custom_call.1} parent=11 // pred_region
          _
        $region72: #{tpu_custom_call.1} parent=11 // pred_fallthru
          _
        // Predicated region
        $region73: #{tpu_custom_call.1} parent=11 // pred_check
          %p513 = pneg %p427
        $region74: #{tpu_custom_call.1} parent=11 // pred_check_branch
          %515 = sbr.rel (%p513) target = $region76
        $region75: #{tpu_custom_call.1} parent=11 // pred_region
          _
        $region76: #{tpu_custom_call.1} parent=11 // pred_fallthru
          _
      $region12: #{tpu_custom_call.1} parent=5 // pred_fallthru
        _
      %p516 = scmp.lt.s32.totalorder %s39, 2
      // Predicated region
      $region77: #{tpu_custom_call.1} parent=5 // pred_check
        %p517 = pneg %p516
      $region78: #{tpu_custom_call.1} parent=5 // pred_check_branch
        %519 = sbr.rel (%p517) target = $region80
      $region79: #{tpu_custom_call.1} parent=5 // pred_region
        // Predicated region
        $region81: #{tpu_custom_call.1} parent=79 // pred_check
          %p520 = pneg %p59
        $region82: #{tpu_custom_call.1} parent=79 // pred_check_branch
          %522 = sbr.rel (%p520) target = $region84
        $region83: #{tpu_custom_call.1} parent=79 // pred_region
          %p523 = scmp.lt.s32.totalorder %s39, 1
          %s524 = scalar_select %p523, %s39, 1
          %s525 = smul.addr %s524, 8
          %s526 = scalar_lea.vmem %s2, %s525
        $region84: #{tpu_custom_call.1} parent=79 // pred_fallthru
          _
        // Predicated region
        $region85: #{tpu_custom_call.1} parent=79 // pred_check
          %p527 = pneg %p85
        $region86: #{tpu_custom_call.1} parent=79 // pred_check_branch
          %529 = sbr.rel (%p527) target = $region88
        $region87: #{tpu_custom_call.1} parent=79 // pred_region
          %p530 = scmp.lt.s32.totalorder %s39, 1
          %s531 = scalar_select %p530, %s39, 1
          %s532 = smul.addr %s531, 8
          %s533 = scalar_lea.vmem %s3, %s532
        $region88: #{tpu_custom_call.1} parent=79 // pred_fallthru
          _
      $region80: #{tpu_custom_call.1} parent=5 // pred_fallthru
        _
      %p534 = scmp.le.s32.totalorder 1, %s39
      %p535 = scmp.lt.s32.totalorder %s39, 3
      %p536 = pnand %p534, %p535
      %p537 = pneg %p536
      // Predicated region
      $region89: #{tpu_custom_call.1} parent=5 // pred_check
        _
      $region90: #{tpu_custom_call.1} parent=5 // pred_check_branch
        %539 = sbr.rel (%p536) target = $region92
      $region91: #{tpu_custom_call.1} parent=5 // pred_region
        %s540 = ssub.s32 %s39, 1
        %p541 = scmp.lt.s32.totalorder %s44, 1
        %s542 = scalar_select %p541, %s44, 1
        %s543 = smul.addr %s542, 8
        %s544 = scalar_lea.vmem %s2, %s543
        %p545 = pneg %p65
        %p546 = pneg %p62
        %p547 = scmp.lt.s32.totalorder %s44, 1
        %s548 = scalar_select %p547, %s44, 1
        %s549 = smul.addr %s548, 8
        %s550 = scalar_lea.vmem %s3, %s549
        %p551 = pneg %p91
        %p552 = pneg %p88
        %p553 = pneg %p112
        %p554 = pneg %p109
        %p555 = pneg %p133
        %p556 = pneg %p130
        %p557 = pneg %p154
        %p558 = pneg %p151
        %p559 = pneg %p175
        %p560 = pneg %p172
        %p561 = pneg %p196
        %p562 = pneg %p193
        %p563 = pneg %p217
        %p564 = pneg %p214
        %p565 = pneg %p238
        %p566 = pneg %p235
        %p567 = pneg %p259
        %p568 = pneg %p256
        %p569 = pneg %p280
        %p570 = pneg %p277
        %p571 = pneg %p301
        %p572 = pneg %p298
        %p573 = pneg %p322
        %p574 = pneg %p319
        %p575 = pneg %p343
        %p576 = pneg %p340
        %p577 = pneg %p364
        %p578 = pneg %p361
        %p579 = pneg %p385
        %p580 = pneg %p382
        %p581 = pneg %p406
        %p582 = pneg %p403
        %p583 = pneg %p427
        %p584 = pneg %p424
        %p585 = pneg %p453
        %p586 = pneg %p450
        %s587 = sand.u32 %s440, 1
        %s588 = scalar_lea.sflag [#allocation6], %s587
        %s589 = sand.u32 %s440, 1
        %s590 = smul.addr %s589, 8
        %s591 = scalar_lea.vmem [#allocation5], %s590
        %p592 = scmp.lt.s32.totalorder %s44, 1
        %s593 = scalar_select %p592, %s44, 1
        %s594 = smul.addr %s593, 8
        %s595 = scalar_lea.vmem %s2, %s594
        %p596 = scmp.lt.s32.totalorder %s44, 1
        %s597 = scalar_select %p596, %s44, 1
        %s598 = smul.addr %s597, 8
        %s599 = scalar_lea.vmem %s3, %s598
        %s601 = sld [smem:[#allocation3 + %s44]]
        %s602 = sld [smem:[#allocation4 + %s44]]
        %v603 = vld [vmem:[%s595] sm:$0xff]
        %v604 = vld [vmem:[%s599] sm:$0xff]
        %v605 = vlaneseq
        %v606 = vshrl.u32 %v605, 7
        %v607 = vlaneseq
        %v608 = vand.u32 %v607, 127
        %vm609 = vcmp.gt.s32.totalorder %v608, %v606
        %v610 = vstv %s601
        %vm611 = vcmp.ge.s32.totalorder %v608, %v610
        %vm612 = vmor %vm609, %vm611
        %v613 = vstv %s602
        %vm614 = vcmp.ge.s32.totalorder %v608, %v613
        %v615 = vpack.c.bf16 %v603, %v603
        %v616 = vld [vmem:[%s4] sm:$0xf]
        %v617 = vld [vmem:[%s4 + $0x4] sm:$0xf]
        %v618 = vld [vmem:[%s4 + $0x8] sm:$0xf]
        %v619 = vld [vmem:[%s4 + $0xc] sm:$0xf]
        %v620 = vld [vmem:[%s4 + $0x10] sm:$0xf]
        %v621 = vld [vmem:[%s4 + $0x14] sm:$0xf]
        %v622 = vld [vmem:[%s4 + $0x18] sm:$0xf]
        %v623 = vld [vmem:[%s4 + $0x1c] sm:$0xf]
        %v624 = vld [vmem:[%s4 + $0x20] sm:$0xf]
        %v625 = vld [vmem:[%s4 + $0x24] sm:$0xf]
        %v626 = vld [vmem:[%s4 + $0x28] sm:$0xf]
        %v627 = vld [vmem:[%s4 + $0x2c] sm:$0xf]
        %v628 = vld [vmem:[%s4 + $0x30] sm:$0xf]
        %v629 = vld [vmem:[%s4 + $0x34] sm:$0xf]
        %v630 = vld [vmem:[%s4 + $0x38] sm:$0xf]
        %v631 = vld [vmem:[%s4 + $0x3c] sm:$0xf]
        %v632 = vld [vmem:[%s4 + $0x40] sm:$0xf]
        %v633 = vld [vmem:[%s4 + $0x44] sm:$0xf]
        %v634 = vld [vmem:[%s4 + $0x48] sm:$0xf]
        %v635 = vld [vmem:[%s4 + $0x4c] sm:$0xf]
        %v636 = vld [vmem:[%s4 + $0x50] sm:$0xf]
        %v637 = vld [vmem:[%s4 + $0x54] sm:$0xf]
        %v638 = vld [vmem:[%s4 + $0x58] sm:$0xf]
        %v639 = vld [vmem:[%s4 + $0x5c] sm:$0xf]
        %v640 = vld [vmem:[%s4 + $0x60] sm:$0xf]
        %v641 = vld [vmem:[%s4 + $0x64] sm:$0xf]
        %v642 = vld [vmem:[%s4 + $0x68] sm:$0xf]
        %v643 = vld [vmem:[%s4 + $0x6c] sm:$0xf]
        %v644 = vld [vmem:[%s4 + $0x70] sm:$0xf]
        %v645 = vld [vmem:[%s4 + $0x74] sm:$0xf]
        %v646 = vld [vmem:[%s4 + $0x78] sm:$0xf]
        %v647 = vld [vmem:[%s4 + $0x7c] sm:$0xf]
        %v648 = vld [vmem:[%s4 + $0x80] sm:$0xf]
        %v649 = vld [vmem:[%s4 + $0x84] sm:$0xf]
        %v650 = vld [vmem:[%s4 + $0x88] sm:$0xf]
        %v651 = vld [vmem:[%s4 + $0x8c] sm:$0xf]
        %v652 = vld [vmem:[%s4 + $0x90] sm:$0xf]
        %v653 = vld [vmem:[%s4 + $0x94] sm:$0xf]
        %v654 = vld [vmem:[%s4 + $0x98] sm:$0xf]
        %v655 = vld [vmem:[%s4 + $0x9c] sm:$0xf]
        %v656 = vld [vmem:[%s4 + $0xa0] sm:$0xf]
        %v657 = vld [vmem:[%s4 + $0xa4] sm:$0xf]
        %v658 = vld [vmem:[%s4 + $0xa8] sm:$0xf]
        %v659 = vld [vmem:[%s4 + $0xac] sm:$0xf]
        %v660 = vld [vmem:[%s4 + $0xb0] sm:$0xf]
        %v661 = vld [vmem:[%s4 + $0xb4] sm:$0xf]
        %v662 = vld [vmem:[%s4 + $0xb8] sm:$0xf]
        %v663 = vld [vmem:[%s4 + $0xbc] sm:$0xf]
        %v664 = vld [vmem:[%s4 + $0xc0] sm:$0xf]
        %v665 = vld [vmem:[%s4 + $0xc4] sm:$0xf]
        %v666 = vld [vmem:[%s4 + $0xc8] sm:$0xf]
        %v667 = vld [vmem:[%s4 + $0xcc] sm:$0xf]
        %v668 = vld [vmem:[%s4 + $0xd0] sm:$0xf]
        %v669 = vld [vmem:[%s4 + $0xd4] sm:$0xf]
        %v670 = vld [vmem:[%s4 + $0xd8] sm:$0xf]
        %v671 = vld [vmem:[%s4 + $0xdc] sm:$0xf]
        %v672 = vld [vmem:[%s4 + $0xe0] sm:$0xf]
        %v673 = vld [vmem:[%s4 + $0xe4] sm:$0xf]
        %v674 = vld [vmem:[%s4 + $0xe8] sm:$0xf]
        %v675 = vld [vmem:[%s4 + $0xec] sm:$0xf]
        %v676 = vld [vmem:[%s4 + $0xf0] sm:$0xf]
        %v677 = vld [vmem:[%s4 + $0xf4] sm:$0xf]
        %v678 = vld [vmem:[%s4 + $0xf8] sm:$0xf]
        %v679 = vld [vmem:[%s4 + $0xfc] sm:$0xf]
        %v680 = vld [vmem:[%s4 + $0x100] sm:$0xf]
        %v681 = vld [vmem:[%s4 + $0x104] sm:$0xf]
        %v682 = vld [vmem:[%s4 + $0x108] sm:$0xf]
        %v683 = vld [vmem:[%s4 + $0x10c] sm:$0xf]
        %v684 = vld [vmem:[%s4 + $0x110] sm:$0xf]
        %v685 = vld [vmem:[%s4 + $0x114] sm:$0xf]
        %v686 = vld [vmem:[%s4 + $0x118] sm:$0xf]
        %v687 = vld [vmem:[%s4 + $0x11c] sm:$0xf]
        %v688 = vld [vmem:[%s4 + $0x120] sm:$0xf]
        %v689 = vld [vmem:[%s4 + $0x124] sm:$0xf]
        %v690 = vld [vmem:[%s4 + $0x128] sm:$0xf]
        %v691 = vld [vmem:[%s4 + $0x12c] sm:$0xf]
        %v692 = vld [vmem:[%s4 + $0x130] sm:$0xf]
        %v693 = vld [vmem:[%s4 + $0x134] sm:$0xf]
        %v694 = vld [vmem:[%s4 + $0x138] sm:$0xf]
        %v695 = vld [vmem:[%s4 + $0x13c] sm:$0xf]
        %v696 = vld [vmem:[%s4 + $0x140] sm:$0xf]
        %v697 = vld [vmem:[%s4 + $0x144] sm:$0xf]
        %v698 = vld [vmem:[%s4 + $0x148] sm:$0xf]
        %v699 = vld [vmem:[%s4 + $0x14c] sm:$0xf]
        %v700 = vld [vmem:[%s4 + $0x150] sm:$0xf]
        %v701 = vld [vmem:[%s4 + $0x154] sm:$0xf]
        %v702 = vld [vmem:[%s4 + $0x158] sm:$0xf]
        %v703 = vld [vmem:[%s4 + $0x15c] sm:$0xf]
        %v704 = vld [vmem:[%s4 + $0x160] sm:$0xf]
        %v705 = vld [vmem:[%s4 + $0x164] sm:$0xf]
        %v706 = vld [vmem:[%s4 + $0x168] sm:$0xf]
        %v707 = vld [vmem:[%s4 + $0x16c] sm:$0xf]
        %v708 = vld [vmem:[%s4 + $0x170] sm:$0xf]
        %v709 = vld [vmem:[%s4 + $0x174] sm:$0xf]
        %v710 = vld [vmem:[%s4 + $0x178] sm:$0xf]
        %v711 = vld [vmem:[%s4 + $0x17c] sm:$0xf]
        %v712 = vld [vmem:[%s4 + $0x180] sm:$0xf]
        %v713 = vld [vmem:[%s4 + $0x184] sm:$0xf]
        %v714 = vld [vmem:[%s4 + $0x188] sm:$0xf]
        %v715 = vld [vmem:[%s4 + $0x18c] sm:$0xf]
        %v716 = vld [vmem:[%s4 + $0x190] sm:$0xf]
        %v717 = vld [vmem:[%s4 + $0x194] sm:$0xf]
        %v718 = vld [vmem:[%s4 + $0x198] sm:$0xf]
        %v719 = vld [vmem:[%s4 + $0x19c] sm:$0xf]
        %v720 = vld [vmem:[%s4 + $0x1a0] sm:$0xf]
        %v721 = vld [vmem:[%s4 + $0x1a4] sm:$0xf]
        %v722 = vld [vmem:[%s4 + $0x1a8] sm:$0xf]
        %v723 = vld [vmem:[%s4 + $0x1ac] sm:$0xf]
        %v724 = vld [vmem:[%s4 + $0x1b0] sm:$0xf]
        %v725 = vld [vmem:[%s4 + $0x1b4] sm:$0xf]
        %v726 = vld [vmem:[%s4 + $0x1b8] sm:$0xf]
        %v727 = vld [vmem:[%s4 + $0x1bc] sm:$0xf]
        %v728 = vld [vmem:[%s4 + $0x1c0] sm:$0xf]
        %v729 = vld [vmem:[%s4 + $0x1c4] sm:$0xf]
        %v730 = vld [vmem:[%s4 + $0x1c8] sm:$0xf]
        %v731 = vld [vmem:[%s4 + $0x1cc] sm:$0xf]
        %v732 = vld [vmem:[%s4 + $0x1d0] sm:$0xf]
        %v733 = vld [vmem:[%s4 + $0x1d4] sm:$0xf]
        %v734 = vld [vmem:[%s4 + $0x1d8] sm:$0xf]
        %v735 = vld [vmem:[%s4 + $0x1dc] sm:$0xf]
        %v736 = vld [vmem:[%s4 + $0x1e0] sm:$0xf]
        %v737 = vld [vmem:[%s4 + $0x1e4] sm:$0xf]
        %v738 = vld [vmem:[%s4 + $0x1e8] sm:$0xf]
        %v739 = vld [vmem:[%s4 + $0x1ec] sm:$0xf]
        %v740 = vld [vmem:[%s4 + $0x1f0] sm:$0xf]
        %v741 = vld [vmem:[%s4 + $0x1f4] sm:$0xf]
        %v742 = vld [vmem:[%s4 + $0x1f8] sm:$0xf]
        %v743 = vld [vmem:[%s4 + $0x1fc] sm:$0xf]
        %v744 = vld [vmem:[%s4 + $0x200] sm:$0xf]
        %v745 = vld [vmem:[%s4 + $0x204] sm:$0xf]
        %v746 = vld [vmem:[%s4 + $0x208] sm:$0xf]
        %v747 = vld [vmem:[%s4 + $0x20c] sm:$0xf]
        %v748 = vld [vmem:[%s4 + $0x210] sm:$0xf]
        %v749 = vld [vmem:[%s4 + $0x214] sm:$0xf]
        %v750 = vld [vmem:[%s4 + $0x218] sm:$0xf]
        %v751 = vld [vmem:[%s4 + $0x21c] sm:$0xf]
        %v752 = vld [vmem:[%s4 + $0x220] sm:$0xf]
        %v753 = vld [vmem:[%s4 + $0x224] sm:$0xf]
        %v754 = vld [vmem:[%s4 + $0x228] sm:$0xf]
        %v755 = vld [vmem:[%s4 + $0x22c] sm:$0xf]
        %v756 = vld [vmem:[%s4 + $0x230] sm:$0xf]
        %v757 = vld [vmem:[%s4 + $0x234] sm:$0xf]
        %v758 = vld [vmem:[%s4 + $0x238] sm:$0xf]
        %v759 = vld [vmem:[%s4 + $0x23c] sm:$0xf]
        %v760 = vld [vmem:[%s4 + $0x240] sm:$0xf]
        %v761 = vld [vmem:[%s4 + $0x244] sm:$0xf]
        %v762 = vld [vmem:[%s4 + $0x248] sm:$0xf]
        %v763 = vld [vmem:[%s4 + $0x24c] sm:$0xf]
        %v764 = vld [vmem:[%s4 + $0x250] sm:$0xf]
        %v765 = vld [vmem:[%s4 + $0x254] sm:$0xf]
        %v766 = vld [vmem:[%s4 + $0x258] sm:$0xf]
        %v767 = vld [vmem:[%s4 + $0x25c] sm:$0xf]
        %v768 = vld [vmem:[%s4 + $0x260] sm:$0xf]
        %v769 = vld [vmem:[%s4 + $0x264] sm:$0xf]
        %v770 = vld [vmem:[%s4 + $0x268] sm:$0xf]
        %v771 = vld [vmem:[%s4 + $0x26c] sm:$0xf]
        %v772 = vld [vmem:[%s4 + $0x270] sm:$0xf]
        %v773 = vld [vmem:[%s4 + $0x274] sm:$0xf]
        %v774 = vld [vmem:[%s4 + $0x278] sm:$0xf]
        %v775 = vld [vmem:[%s4 + $0x27c] sm:$0xf]
        %v776 = vld [vmem:[%s4 + $0x280] sm:$0xf]
        %v777 = vld [vmem:[%s4 + $0x284] sm:$0xf]
        %v778 = vld [vmem:[%s4 + $0x288] sm:$0xf]
        %v779 = vld [vmem:[%s4 + $0x28c] sm:$0xf]
        %v780 = vld [vmem:[%s4 + $0x290] sm:$0xf]
        %v781 = vld [vmem:[%s4 + $0x294] sm:$0xf]
        %v782 = vld [vmem:[%s4 + $0x298] sm:$0xf]
        %v783 = vld [vmem:[%s4 + $0x29c] sm:$0xf]
        %v784 = vld [vmem:[%s4 + $0x2a0] sm:$0xf]
        %v785 = vld [vmem:[%s4 + $0x2a4] sm:$0xf]
        %v786 = vld [vmem:[%s4 + $0x2a8] sm:$0xf]
        %v787 = vld [vmem:[%s4 + $0x2ac] sm:$0xf]
        %v788 = vld [vmem:[%s4 + $0x2b0] sm:$0xf]
        %v789 = vld [vmem:[%s4 + $0x2b4] sm:$0xf]
        %v790 = vld [vmem:[%s4 + $0x2b8] sm:$0xf]
        %v791 = vld [vmem:[%s4 + $0x2bc] sm:$0xf]
        %v792 = vld [vmem:[%s4 + $0x2c0] sm:$0xf]
        %v793 = vld [vmem:[%s4 + $0x2c4] sm:$0xf]
        %v794 = vld [vmem:[%s4 + $0x2c8] sm:$0xf]
        %v795 = vld [vmem:[%s4 + $0x2cc] sm:$0xf]
        %v796 = vld [vmem:[%s4 + $0x2d0] sm:$0xf]
        %v797 = vld [vmem:[%s4 + $0x2d4] sm:$0xf]
        %v798 = vld [vmem:[%s4 + $0x2d8] sm:$0xf]
        %v799 = vld [vmem:[%s4 + $0x2dc] sm:$0xf]
        %v800 = vld [vmem:[%s4 + $0x2e0] sm:$0xf]
        %v801 = vld [vmem:[%s4 + $0x2e4] sm:$0xf]
        %v802 = vld [vmem:[%s4 + $0x2e8] sm:$0xf]
        %v803 = vld [vmem:[%s4 + $0x2ec] sm:$0xf]
        %v804 = vld [vmem:[%s4 + $0x2f0] sm:$0xf]
        %v805 = vld [vmem:[%s4 + $0x2f4] sm:$0xf]
        %v806 = vld [vmem:[%s4 + $0x2f8] sm:$0xf]
        %v807 = vld [vmem:[%s4 + $0x2fc] sm:$0xf]
        %v808 = vld [vmem:[%s5] sm:$0x1]
        %v809 = vld [vmem:[%s5 + $0x1] sm:$0x1]
        %v810 = vld [vmem:[%s5 + $0x2] sm:$0x1]
        %v811 = vld [vmem:[%s5 + $0x3] sm:$0x1]
        %v812 = vld [vmem:[%s5 + $0x4] sm:$0x1]
        %v813 = vld [vmem:[%s5 + $0x5] sm:$0x1]
        %v814 = vld [vmem:[%s5 + $0x6] sm:$0x1]
        %v815 = vld [vmem:[%s5 + $0x7] sm:$0x1]
        %v816 = vld [vmem:[%s5 + $0x8] sm:$0x1]
        %v817 = vld [vmem:[%s5 + $0x9] sm:$0x1]
        %v818 = vld [vmem:[%s5 + $0xa] sm:$0x1]
        %v819 = vld [vmem:[%s5 + $0xb] sm:$0x1]
        %v832 = vlaneseq
        %v833 = vshrl.u32 %v832, 7
        %v834 = vsub.s32 0, %v833
        %v835 = vrot.slane %v808, %v834
        %v836 = vlaneseq
        %v837 = vshrl.u32 %v836, 7
        %v838 = vsub.s32 0, %v837
        %v839 = vrot.slane %v809, %v838
        %v840 = vlaneseq
        %v841 = vshrl.u32 %v840, 7
        %v842 = vsub.s32 0, %v841
        %v843 = vrot.slane %v810, %v842
        %v844 = vlaneseq
        %v845 = vshrl.u32 %v844, 7
        %v846 = vsub.s32 0, %v845
        %v847 = vrot.slane %v811, %v846
        %v848 = vlaneseq
        %v849 = vshrl.u32 %v848, 7
        %v850 = vsub.s32 0, %v849
        %v851 = vrot.slane %v812, %v850
        %v852 = vlaneseq
        %v853 = vshrl.u32 %v852, 7
        %v854 = vsub.s32 0, %v853
        %v855 = vrot.slane %v813, %v854
        %v856 = vlaneseq
        %v857 = vshrl.u32 %v856, 7
        %v858 = vsub.s32 0, %v857
        %v859 = vrot.slane %v814, %v858
        %v860 = vlaneseq
        %v861 = vshrl.u32 %v860, 7
        %v862 = vsub.s32 0, %v861
        %v863 = vrot.slane %v815, %v862
        %v864 = vlaneseq
        %v865 = vshrl.u32 %v864, 7
        %v866 = vsub.s32 0, %v865
        %v867 = vrot.slane %v816, %v866
        %v868 = vlaneseq
        %v869 = vshrl.u32 %v868, 7
        %v870 = vsub.s32 0, %v869
        %v871 = vrot.slane %v817, %v870
        %v872 = vlaneseq
        %v873 = vshrl.u32 %v872, 7
        %v874 = vsub.s32 0, %v873
        %v875 = vrot.slane %v818, %v874
        %v876 = vlaneseq
        %v877 = vshrl.u32 %v876, 7
        %v878 = vsub.s32 0, %v877
        %v879 = vrot.slane %v819, %v878
        %v908 = vunpack.c.l.b16 %v616
        %v909 = vunpack.c.l.b16 %v617
        %v910 = vunpack.c.l.b16 %v618
        %v911 = vunpack.c.l.b16 %v619
        %v912 = vunpack.c.l.b16 %v620
        %v913 = vunpack.c.l.b16 %v621
        %v914 = vunpack.c.l.b16 %v622
        %v915 = vunpack.c.l.b16 %v623
        %v916 = vunpack.c.l.b16 %v624
        %v917 = vunpack.c.l.b16 %v625
        %v918 = vunpack.c.l.b16 %v626
        %v919 = vunpack.c.l.b16 %v627
        %v920 = vunpack.c.l.b16 %v628
        %v921 = vunpack.c.l.b16 %v629
        %v922 = vunpack.c.l.b16 %v630
        %v923 = vunpack.c.l.b16 %v631
        %v924 = vpack.c.b16 %v909, %v908
        %v925 = vpack.c.b16 %v911, %v910
        %v926 = vpack.c.b16 %v913, %v912
        %v927 = vpack.c.b16 %v915, %v914
        %v928 = vpack.c.b16 %v917, %v916
        %v929 = vpack.c.b16 %v919, %v918
        %v930 = vpack.c.b16 %v921, %v920
        %v931 = vpack.c.b16 %v923, %v922
        %940 = vmatprep.subr.bf16.mxu0 0
        %941 = vmatpush1.bf16.msra.mxu0 %v924
        %942 = vmatprep.subr.bf16.mxu0 0
        %943 = vmatpush1.bf16.msra.mxu0 %v925
        %944 = vmatprep.subr.bf16.mxu0 0
        %945 = vmatpush1.bf16.msra.mxu0 %v926
        %946 = vmatprep.subr.bf16.mxu0 0
        %947 = vmatpush1.bf16.msra.mxu0 %v927
        %948 = vmatprep.subr.bf16.mxu0 0
        %949 = vmatpush1.bf16.msra.mxu0 %v928
        %950 = vmatprep.subr.bf16.mxu0 0
        %951 = vmatpush1.bf16.msra.mxu0 %v929
        %952 = vmatprep.subr.bf16.mxu0 0
        %953 = vmatpush1.bf16.msra.mxu0 %v930
        %954 = vmatprep.subr.bf16.mxu0 0
        %955 = vmatpush1.bf16.msra.mxu0 %v931
        %956 = vmatprep.subr.bf16.mxu0 0
        %957 = vmatpush1.bf16.msra.mxu0 0
        %958 = vmatprep.subr.bf16.mxu0 0
        %959 = vmatpush1.bf16.msra.mxu0 0
        %960 = vmatprep.subr.bf16.mxu0 0
        %961 = vmatpush1.bf16.msra.mxu0 0
        %962 = vmatprep.subr.bf16.mxu0 0
        %963 = vmatpush1.bf16.msra.mxu0 0
        %964 = vmatprep.subr.bf16.mxu0 0
        %965 = vmatpush1.bf16.msra.mxu0 0
        %966 = vmatprep.subr.bf16.mxu0 0
        %967 = vmatpush1.bf16.msra.mxu0 0
        %968 = vmatprep.subr.bf16.mxu0 0
        %969 = vmatpush1.bf16.msra.mxu0 0
        %970 = vmatprep.subr.bf16.mxu0 0
        %971 = vmatpush1.bf16.msra.mxu0 0
        %972 = vmatprep.mubr.bf16.mxu0 0
        %973 = vmatmul.mubr.bf16.gmra.mrb[0].mxu0 %v615
        %v974 = vpop.f32.mrb[0].mxu0
        %v975 = vadd.f32 %v835, %v974
        %v976 = vpop.f32.mrb[0].mxu0
        %v977 = vpop.f32.mrb[0].mxu0
        %v978 = vpop.f32.mrb[0].mxu0
        %979 = vdwg.mxu0
        %v996 = vunpack.c.l.b16 %v632
        %v997 = vunpack.c.l.b16 %v633
        %v998 = vunpack.c.l.b16 %v634
        %v999 = vunpack.c.l.b16 %v635
        %v1000 = vunpack.c.l.b16 %v636
        %v1001 = vunpack.c.l.b16 %v637
        %v1002 = vunpack.c.l.b16 %v638
        %v1003 = vunpack.c.l.b16 %v639
        %v1004 = vunpack.c.l.b16 %v640
        %v1005 = vunpack.c.l.b16 %v641
        %v1006 = vunpack.c.l.b16 %v642
        %v1007 = vunpack.c.l.b16 %v643
        %v1008 = vunpack.c.l.b16 %v644
        %v1009 = vunpack.c.l.b16 %v645
        %v1010 = vunpack.c.l.b16 %v646
        %v1011 = vunpack.c.l.b16 %v647
        %v1012 = vpack.c.b16 %v997, %v996
        %v1013 = vpack.c.b16 %v999, %v998
        %v1014 = vpack.c.b16 %v1001, %v1000
        %v1015 = vpack.c.b16 %v1003, %v1002
        %v1016 = vpack.c.b16 %v1005, %v1004
        %v1017 = vpack.c.b16 %v1007, %v1006
        %v1018 = vpack.c.b16 %v1009, %v1008
        %v1019 = vpack.c.b16 %v1011, %v1010
        %1028 = vmatprep.subr.bf16.mxu0 0
        %1029 = vmatpush1.bf16.msra.mxu0 %v1012
        %1030 = vmatprep.subr.bf16.mxu0 0
        %1031 = vmatpush1.bf16.msra.mxu0 %v1013
        %1032 = vmatprep.subr.bf16.mxu0 0
        %1033 = vmatpush1.bf16.msra.mxu0 %v1014
        %1034 = vmatprep.subr.bf16.mxu0 0
        %1035 = vmatpush1.bf16.msra.mxu0 %v1015
        %1036 = vmatprep.subr.bf16.mxu0 0
        %1037 = vmatpush1.bf16.msra.mxu0 %v1016
        %1038 = vmatprep.subr.bf16.mxu0 0
        %1039 = vmatpush1.bf16.msra.mxu0 %v1017
        %1040 = vmatprep.subr.bf16.mxu0 0
        %1041 = vmatpush1.bf16.msra.mxu0 %v1018
        %1042 = vmatprep.subr.bf16.mxu0 0
        %1043 = vmatpush1.bf16.msra.mxu0 %v1019
        %1044 = vmatprep.subr.bf16.mxu0 0
        %1045 = vmatpush1.bf16.msra.mxu0 0
        %1046 = vmatprep.subr.bf16.mxu0 0
        %1047 = vmatpush1.bf16.msra.mxu0 0
        %1048 = vmatprep.subr.bf16.mxu0 0
        %1049 = vmatpush1.bf16.msra.mxu0 0
        %1050 = vmatprep.subr.bf16.mxu0 0
        %1051 = vmatpush1.bf16.msra.mxu0 0
        %1052 = vmatprep.subr.bf16.mxu0 0
        %1053 = vmatpush1.bf16.msra.mxu0 0
        %1054 = vmatprep.subr.bf16.mxu0 0
        %1055 = vmatpush1.bf16.msra.mxu0 0
        %1056 = vmatprep.subr.bf16.mxu0 0
        %1057 = vmatpush1.bf16.msra.mxu0 0
        %1058 = vmatprep.subr.bf16.mxu0 0
        %1059 = vmatpush1.bf16.msra.mxu0 0
        %1060 = vmatprep.mubr.bf16.mxu0 0
        %1061 = vmatmul.mubr.bf16.gmra.mrb[0].mxu0 %v615
        %v1062 = vpop.f32.mrb[0].mxu0
        %v1063 = vadd.f32 %v839, %v1062
        %v1064 = vpop.f32.mrb[0].mxu0
        %v1065 = vpop.f32.mrb[0].mxu0
        %v1066 = vpop.f32.mrb[0].mxu0
        %1067 = vdwg.mxu0
        %v1084 = vunpack.c.l.b16 %v648
        %v1085 = vunpack.c.l.b16 %v649
        %v1086 = vunpack.c.l.b16 %v650
        %v1087 = vunpack.c.l.b16 %v651
        %v1088 = vunpack.c.l.b16 %v652
        %v1089 = vunpack.c.l.b16 %v653
        %v1090 = vunpack.c.l.b16 %v654
        %v1091 = vunpack.c.l.b16 %v655
        %v1092 = vunpack.c.l.b16 %v656
        %v1093 = vunpack.c.l.b16 %v657
        %v1094 = vunpack.c.l.b16 %v658
        %v1095 = vunpack.c.l.b16 %v659
        %v1096 = vunpack.c.l.b16 %v660
        %v1097 = vunpack.c.l.b16 %v661
        %v1098 = vunpack.c.l.b16 %v662
        %v1099 = vunpack.c.l.b16 %v663
        %v1100 = vpack.c.b16 %v1085, %v1084
        %v1101 = vpack.c.b16 %v1087, %v1086
        %v1102 = vpack.c.b16 %v1089, %v1088
        %v1103 = vpack.c.b16 %v1091, %v1090
        %v1104 = vpack.c.b16 %v1093, %v1092
        %v1105 = vpack.c.b16 %v1095, %v1094
        %v1106 = vpack.c.b16 %v1097, %v1096
        %v1107 = vpack.c.b16 %v1099, %v1098
        %1116 = vmatprep.subr.bf16.mxu0 0
        %1117 = vmatpush1.bf16.msra.mxu0 %v1100
        %1118 = vmatprep.subr.bf16.mxu0 0
        %1119 = vmatpush1.bf16.msra.mxu0 %v1101
        %1120 = vmatprep.subr.bf16.mxu0 0
        %1121 = vmatpush1.bf16.msra.mxu0 %v1102
        %1122 = vmatprep.subr.bf16.mxu0 0
        %1123 = vmatpush1.bf16.msra.mxu0 %v1103
        %1124 = vmatprep.subr.bf16.mxu0 0
        %1125 = vmatpush1.bf16.msra.mxu0 %v1104
        %1126 = vmatprep.subr.bf16.mxu0 0
        %1127 = vmatpush1.bf16.msra.mxu0 %v1105
        %1128 = vmatprep.subr.bf16.mxu0 0
        %1129 = vmatpush1.bf16.msra.mxu0 %v1106
        %1130 = vmatprep.subr.bf16.mxu0 0
        %1131 = vmatpush1.bf16.msra.mxu0 %v1107
        %1132 = vmatprep.subr.bf16.mxu0 0
        %1133 = vmatpush1.bf16.msra.mxu0 0
        %1134 = vmatprep.subr.bf16.mxu0 0
        %1135 = vmatpush1.bf16.msra.mxu0 0
        %1136 = vmatprep.subr.bf16.mxu0 0
        %1137 = vmatpush1.bf16.msra.mxu0 0
        %1138 = vmatprep.subr.bf16.mxu0 0
        %1139 = vmatpush1.bf16.msra.mxu0 0
        %1140 = vmatprep.subr.bf16.mxu0 0
        %1141 = vmatpush1.bf16.msra.mxu0 0
        %1142 = vmatprep.subr.bf16.mxu0 0
        %1143 = vmatpush1.bf16.msra.mxu0 0
        %1144 = vmatprep.subr.bf16.mxu0 0
        %1145 = vmatpush1.bf16.msra.mxu0 0
        %1146 = vmatprep.subr.bf16.mxu0 0
        %1147 = vmatpush1.bf16.msra.mxu0 0
        %1148 = vmatprep.mubr.bf16.mxu0 0
        %1149 = vmatmul.mubr.bf16.gmra.mrb[0].mxu0 %v615
        %v1150 = vpop.f32.mrb[0].mxu0
        %v1151 = vadd.f32 %v843, %v1150
        %v1152 = vpop.f32.mrb[0].mxu0
        %v1153 = vpop.f32.mrb[0].mxu0
        %v1154 = vpop.f32.mrb[0].mxu0
        %1155 = vdwg.mxu0
        %v1172 = vunpack.c.l.b16 %v664
        %v1173 = vunpack.c.l.b16 %v665
        %v1174 = vunpack.c.l.b16 %v666
        %v1175 = vunpack.c.l.b16 %v667
        %v1176 = vunpack.c.l.b16 %v668
        %v1177 = vunpack.c.l.b16 %v669
        %v1178 = vunpack.c.l.b16 %v670
        %v1179 = vunpack.c.l.b16 %v671
        %v1180 = vunpack.c.l.b16 %v672
        %v1181 = vunpack.c.l.b16 %v673
        %v1182 = vunpack.c.l.b16 %v674
        %v1183 = vunpack.c.l.b16 %v675
        %v1184 = vunpack.c.l.b16 %v676
        %v1185 = vunpack.c.l.b16 %v677
        %v1186 = vunpack.c.l.b16 %v678
        %v1187 = vunpack.c.l.b16 %v679
        %v1188 = vpack.c.b16 %v1173, %v1172
        %v1189 = vpack.c.b16 %v1175, %v1174
        %v1190 = vpack.c.b16 %v1177, %v1176
        %v1191 = vpack.c.b16 %v1179, %v1178
        %v1192 = vpack.c.b16 %v1181, %v1180
        %v1193 = vpack.c.b16 %v1183, %v1182
        %v1194 = vpack.c.b16 %v1185, %v1184
        %v1195 = vpack.c.b16 %v1187, %v1186
        %1204 = vmatprep.subr.bf16.mxu0 0
        %1205 = vmatpush1.bf16.msra.mxu0 %v1188
        %1206 = vmatprep.subr.bf16.mxu0 0
        %1207 = vmatpush1.bf16.msra.mxu0 %v1189
        %1208 = vmatprep.subr.bf16.mxu0 0
        %1209 = vmatpush1.bf16.msra.mxu0 %v1190
        %1210 = vmatprep.subr.bf16.mxu0 0
        %1211 = vmatpush1.bf16.msra.mxu0 %v1191
        %1212 = vmatprep.subr.bf16.mxu0 0
        %1213 = vmatpush1.bf16.msra.mxu0 %v1192
        %1214 = vmatprep.subr.bf16.mxu0 0
        %1215 = vmatpush1.bf16.msra.mxu0 %v1193
        %1216 = vmatprep.subr.bf16.mxu0 0
        %1217 = vmatpush1.bf16.msra.mxu0 %v1194
        %1218 = vmatprep.subr.bf16.mxu0 0
        %1219 = vmatpush1.bf16.msra.mxu0 %v1195
        %1220 = vmatprep.subr.bf16.mxu0 0
        %1221 = vmatpush1.bf16.msra.mxu0 0
        %1222 = vmatprep.subr.bf16.mxu0 0
        %1223 = vmatpush1.bf16.msra.mxu0 0
        %1224 = vmatprep.subr.bf16.mxu0 0
        %1225 = vmatpush1.bf16.msra.mxu0 0
        %1226 = vmatprep.subr.bf16.mxu0 0
        %1227 = vmatpush1.bf16.msra.mxu0 0
        %1228 = vmatprep.subr.bf16.mxu0 0
        %1229 = vmatpush1.bf16.msra.mxu0 0
        %1230 = vmatprep.subr.bf16.mxu0 0
        %1231 = vmatpush1.bf16.msra.mxu0 0
        %1232 = vmatprep.subr.bf16.mxu0 0
        %1233 = vmatpush1.bf16.msra.mxu0 0
        %1234 = vmatprep.subr.bf16.mxu0 0
        %1235 = vmatpush1.bf16.msra.mxu0 0
        %1236 = vmatprep.mubr.bf16.mxu0 0
        %1237 = vmatmul.mubr.bf16.gmra.mrb[0].mxu0 %v615
        %v1238 = vpop.f32.mrb[0].mxu0
        %v1239 = vadd.f32 %v847, %v1238
        %v1240 = vpop.f32.mrb[0].mxu0
        %v1241 = vpop.f32.mrb[0].mxu0
        %v1242 = vpop.f32.mrb[0].mxu0
        %1243 = vdwg.mxu0
        %v1260 = vunpack.c.l.b16 %v680
        %v1261 = vunpack.c.l.b16 %v681
        %v1262 = vunpack.c.l.b16 %v682
        %v1263 = vunpack.c.l.b16 %v683
        %v1264 = vunpack.c.l.b16 %v684
        %v1265 = vunpack.c.l.b16 %v685
        %v1266 = vunpack.c.l.b16 %v686
        %v1267 = vunpack.c.l.b16 %v687
        %v1268 = vunpack.c.l.b16 %v688
        %v1269 = vunpack.c.l.b16 %v689
        %v1270 = vunpack.c.l.b16 %v690
        %v1271 = vunpack.c.l.b16 %v691
        %v1272 = vunpack.c.l.b16 %v692
        %v1273 = vunpack.c.l.b16 %v693
        %v1274 = vunpack.c.l.b16 %v694
        %v1275 = vunpack.c.l.b16 %v695
        %v1276 = vpack.c.b16 %v1261, %v1260
        %v1277 = vpack.c.b16 %v1263, %v1262
        %v1278 = vpack.c.b16 %v1265, %v1264
        %v1279 = vpack.c.b16 %v1267, %v1266
        %v1280 = vpack.c.b16 %v1269, %v1268
        %v1281 = vpack.c.b16 %v1271, %v1270
        %v1282 = vpack.c.b16 %v1273, %v1272
        %v1283 = vpack.c.b16 %v1275, %v1274
        %1292 = vmatprep.subr.bf16.mxu0 0
        %1293 = vmatpush1.bf16.msra.mxu0 %v1276
        %1294 = vmatprep.subr.bf16.mxu0 0
        %1295 = vmatpush1.bf16.msra.mxu0 %v1277
        %1296 = vmatprep.subr.bf16.mxu0 0
        %1297 = vmatpush1.bf16.msra.mxu0 %v1278
        %1298 = vmatprep.subr.bf16.mxu0 0
        %1299 = vmatpush1.bf16.msra.mxu0 %v1279
        %1300 = vmatprep.subr.bf16.mxu0 0
        %1301 = vmatpush1.bf16.msra.mxu0 %v1280
        %1302 = vmatprep.subr.bf16.mxu0 0
        %1303 = vmatpush1.bf16.msra.mxu0 %v1281
        %1304 = vmatprep.subr.bf16.mxu0 0
        %1305 = vmatpush1.bf16.msra.mxu0 %v1282
        %1306 = vmatprep.subr.bf16.mxu0 0
        %1307 = vmatpush1.bf16.msra.mxu0 %v1283
        %1308 = vmatprep.subr.bf16.mxu0 0
        %1309 = vmatpush1.bf16.msra.mxu0 0
        %1310 = vmatprep.subr.bf16.mxu0 0
        %1311 = vmatpush1.bf16.msra.mxu0 0
        %1312 = vmatprep.subr.bf16.mxu0 0
        %1313 = vmatpush1.bf16.msra.mxu0 0
        %1314 = vmatprep.subr.bf16.mxu0 0
        %1315 = vmatpush1.bf16.msra.mxu0 0
        %1316 = vmatprep.subr.bf16.mxu0 0
        %1317 = vmatpush1.bf16.msra.mxu0 0
        %1318 = vmatprep.subr.bf16.mxu0 0
        %1319 = vmatpush1.bf16.msra.mxu0 0
        %1320 = vmatprep.subr.bf16.mxu0 0
        %1321 = vmatpush1.bf16.msra.mxu0 0
        %1322 = vmatprep.subr.bf16.mxu0 0
        %1323 = vmatpush1.bf16.msra.mxu0 0
        %1324 = vmatprep.mubr.bf16.mxu0 0
        %1325 = vmatmul.mubr.bf16.gmra.mrb[0].mxu0 %v615
        %v1326 = vpop.f32.mrb[0].mxu0
        %v1327 = vadd.f32 %v851, %v1326
        %v1328 = vpop.f32.mrb[0].mxu0
        %v1329 = vpop.f32.mrb[0].mxu0
        %v1330 = vpop.f32.mrb[0].mxu0
        %1331 = vdwg.mxu0
        %v1348 = vunpack.c.l.b16 %v696
        %v1349 = vunpack.c.l.b16 %v697
        %v1350 = vunpack.c.l.b16 %v698
        %v1351 = vunpack.c.l.b16 %v699
        %v1352 = vunpack.c.l.b16 %v700
        %v1353 = vunpack.c.l.b16 %v701
        %v1354 = vunpack.c.l.b16 %v702
        %v1355 = vunpack.c.l.b16 %v703
        %v1356 = vunpack.c.l.b16 %v704
        %v1357 = vunpack.c.l.b16 %v705
        %v1358 = vunpack.c.l.b16 %v706
        %v1359 = vunpack.c.l.b16 %v707
        %v1360 = vunpack.c.l.b16 %v708
        %v1361 = vunpack.c.l.b16 %v709
        %v1362 = vunpack.c.l.b16 %v710
        %v1363 = vunpack.c.l.b16 %v711
        %v1364 = vpack.c.b16 %v1349, %v1348
        %v1365 = vpack.c.b16 %v1351, %v1350
        %v1366 = vpack.c.b16 %v1353, %v1352
        %v1367 = vpack.c.b16 %v1355, %v1354
        %v1368 = vpack.c.b16 %v1357, %v1356
        %v1369 = vpack.c.b16 %v1359, %v1358
        %v1370 = vpack.c.b16 %v1361, %v1360
        %v1371 = vpack.c.b16 %v1363, %v1362
        %1380 = vmatprep.subr.bf16.mxu0 0
        %1381 = vmatpush1.bf16.msra.mxu0 %v1364
        %1382 = vmatprep.subr.bf16.mxu0 0
        %1383 = vmatpush1.bf16.msra.mxu0 %v1365
        %1384 = vmatprep.subr.bf16.mxu0 0
        %1385 = vmatpush1.bf16.msra.mxu0 %v1366
        %1386 = vmatprep.subr.bf16.mxu0 0
        %1387 = vmatpush1.bf16.msra.mxu0 %v1367
        %1388 = vmatprep.subr.bf16.mxu0 0
        %1389 = vmatpush1.bf16.msra.mxu0 %v1368
        %1390 = vmatprep.subr.bf16.mxu0 0
        %1391 = vmatpush1.bf16.msra.mxu0 %v1369
        %1392 = vmatprep.subr.bf16.mxu0 0
        %1393 = vmatpush1.bf16.msra.mxu0 %v1370
        %1394 = vmatprep.subr.bf16.mxu0 0
        %1395 = vmatpush1.bf16.msra.mxu0 %v1371
        %1396 = vmatprep.subr.bf16.mxu0 0
        %1397 = vmatpush1.bf16.msra.mxu0 0
        %1398 = vmatprep.subr.bf16.mxu0 0
        %1399 = vmatpush1.bf16.msra.mxu0 0
        %1400 = vmatprep.subr.bf16.mxu0 0
        %1401 = vmatpush1.bf16.msra.mxu0 0
        %1402 = vmatprep.subr.bf16.mxu0 0
        %1403 = vmatpush1.bf16.msra.mxu0 0
        %1404 = vmatprep.subr.bf16.mxu0 0
        %1405 = vmatpush1.bf16.msra.mxu0 0
        %1406 = vmatprep.subr.bf16.mxu0 0
        %1407 = vmatpush1.bf16.msra.mxu0 0
        %1408 = vmatprep.subr.bf16.mxu0 0
        %1409 = vmatpush1.bf16.msra.mxu0 0
        %1410 = vmatprep.subr.bf16.mxu0 0
        %1411 = vmatpush1.bf16.msra.mxu0 0
        %1412 = vmatprep.mubr.bf16.mxu0 0
        %1413 = vmatmul.mubr.bf16.gmra.mrb[0].mxu0 %v615
        %v1414 = vpop.f32.mrb[0].mxu0
        %v1415 = vadd.f32 %v855, %v1414
        %v1416 = vpop.f32.mrb[0].mxu0
        %v1417 = vpop.f32.mrb[0].mxu0
        %v1418 = vpop.f32.mrb[0].mxu0
        %1419 = vdwg.mxu0
        %v1436 = vunpack.c.l.b16 %v712
        %v1437 = vunpack.c.l.b16 %v713
        %v1438 = vunpack.c.l.b16 %v714
        %v1439 = vunpack.c.l.b16 %v715
        %v1440 = vunpack.c.l.b16 %v716
        %v1441 = vunpack.c.l.b16 %v717
        %v1442 = vunpack.c.l.b16 %v718
        %v1443 = vunpack.c.l.b16 %v719
        %v1444 = vunpack.c.l.b16 %v720
        %v1445 = vunpack.c.l.b16 %v721
        %v1446 = vunpack.c.l.b16 %v722
        %v1447 = vunpack.c.l.b16 %v723
        %v1448 = vunpack.c.l.b16 %v724
        %v1449 = vunpack.c.l.b16 %v725
        %v1450 = vunpack.c.l.b16 %v726
        %v1451 = vunpack.c.l.b16 %v727
        %v1452 = vpack.c.b16 %v1437, %v1436
        %v1453 = vpack.c.b16 %v1439, %v1438
        %v1454 = vpack.c.b16 %v1441, %v1440
        %v1455 = vpack.c.b16 %v1443, %v1442
        %v1456 = vpack.c.b16 %v1445, %v1444
        %v1457 = vpack.c.b16 %v1447, %v1446
        %v1458 = vpack.c.b16 %v1449, %v1448
        %v1459 = vpack.c.b16 %v1451, %v1450
        %1468 = vmatprep.subr.bf16.mxu0 0
        %1469 = vmatpush1.bf16.msra.mxu0 %v1452
        %1470 = vmatprep.subr.bf16.mxu0 0
        %1471 = vmatpush1.bf16.msra.mxu0 %v1453
        %1472 = vmatprep.subr.bf16.mxu0 0
        %1473 = vmatpush1.bf16.msra.mxu0 %v1454
        %1474 = vmatprep.subr.bf16.mxu0 0
        %1475 = vmatpush1.bf16.msra.mxu0 %v1455
        %1476 = vmatprep.subr.bf16.mxu0 0
        %1477 = vmatpush1.bf16.msra.mxu0 %v1456
        %1478 = vmatprep.subr.bf16.mxu0 0
        %1479 = vmatpush1.bf16.msra.mxu0 %v1457
        %1480 = vmatprep.subr.bf16.mxu0 0
        %1481 = vmatpush1.bf16.msra.mxu0 %v1458
        %1482 = vmatprep.subr.bf16.mxu0 0
        %1483 = vmatpush1.bf16.msra.mxu0 %v1459
        %1484 = vmatprep.subr.bf16.mxu0 0
        %1485 = vmatpush1.bf16.msra.mxu0 0
        %1486 = vmatprep.subr.bf16.mxu0 0
        %1487 = vmatpush1.bf16.msra.mxu0 0
        %1488 = vmatprep.subr.bf16.mxu0 0
        %1489 = vmatpush1.bf16.msra.mxu0 0
        %1490 = vmatprep.subr.bf16.mxu0 0
        %1491 = vmatpush1.bf16.msra.mxu0 0
        %1492 = vmatprep.subr.bf16.mxu0 0
        %1493 = vmatpush1.bf16.msra.mxu0 0
        %1494 = vmatprep.subr.bf16.mxu0 0
        %1495 = vmatpush1.bf16.msra.mxu0 0
        %1496 = vmatprep.subr.bf16.mxu0 0
        %1497 = vmatpush1.bf16.msra.mxu0 0
        %1498 = vmatprep.subr.bf16.mxu0 0
        %1499 = vmatpush1.bf16.msra.mxu0 0
        %1500 = vmatprep.mubr.bf16.mxu0 0
        %1501 = vmatmul.mubr.bf16.gmra.mrb[0].mxu0 %v615
        %v1502 = vpop.f32.mrb[0].mxu0
        %v1503 = vadd.f32 %v859, %v1502
        %v1504 = vpop.f32.mrb[0].mxu0
        %v1505 = vpop.f32.mrb[0].mxu0
        %v1506 = vpop.f32.mrb[0].mxu0
        %1507 = vdwg.mxu0
        %v1524 = vunpack.c.l.b16 %v728
        %v1525 = vunpack.c.l.b16 %v729
        %v1526 = vunpack.c.l.b16 %v730
        %v1527 = vunpack.c.l.b16 %v731
        %v1528 = vunpack.c.l.b16 %v732
        %v1529 = vunpack.c.l.b16 %v733
        %v1530 = vunpack.c.l.b16 %v734
        %v1531 = vunpack.c.l.b16 %v735
        %v1532 = vunpack.c.l.b16 %v736
        %v1533 = vunpack.c.l.b16 %v737
        %v1534 = vunpack.c.l.b16 %v738
        %v1535 = vunpack.c.l.b16 %v739
        %v1536 = vunpack.c.l.b16 %v740
        %v1537 = vunpack.c.l.b16 %v741
        %v1538 = vunpack.c.l.b16 %v742
        %v1539 = vunpack.c.l.b16 %v743
        %v1540 = vpack.c.b16 %v1525, %v1524
        %v1541 = vpack.c.b16 %v1527, %v1526
        %v1542 = vpack.c.b16 %v1529, %v1528
        %v1543 = vpack.c.b16 %v1531, %v1530
        %v1544 = vpack.c.b16 %v1533, %v1532
        %v1545 = vpack.c.b16 %v1535, %v1534
        %v1546 = vpack.c.b16 %v1537, %v1536
        %v1547 = vpack.c.b16 %v1539, %v1538
        %1556 = vmatprep.subr.bf16.mxu0 0
        %1557 = vmatpush1.bf16.msra.mxu0 %v1540
        %1558 = vmatprep.subr.bf16.mxu0 0
        %1559 = vmatpush1.bf16.msra.mxu0 %v1541
        %1560 = vmatprep.subr.bf16.mxu0 0
        %1561 = vmatpush1.bf16.msra.mxu0 %v1542
        %1562 = vmatprep.subr.bf16.mxu0 0
        %1563 = vmatpush1.bf16.msra.mxu0 %v1543
        %1564 = vmatprep.subr.bf16.mxu0 0
        %1565 = vmatpush1.bf16.msra.mxu0 %v1544
        %1566 = vmatprep.subr.bf16.mxu0 0
        %1567 = vmatpush1.bf16.msra.mxu0 %v1545
        %1568 = vmatprep.subr.bf16.mxu0 0
        %1569 = vmatpush1.bf16.msra.mxu0 %v1546
        %1570 = vmatprep.subr.bf16.mxu0 0
        %1571 = vmatpush1.bf16.msra.mxu0 %v1547
        %1572 = vmatprep.subr.bf16.mxu0 0
        %1573 = vmatpush1.bf16.msra.mxu0 0
        %1574 = vmatprep.subr.bf16.mxu0 0
        %1575 = vmatpush1.bf16.msra.mxu0 0
        %1576 = vmatprep.subr.bf16.mxu0 0
        %1577 = vmatpush1.bf16.msra.mxu0 0
        %1578 = vmatprep.subr.bf16.mxu0 0
        %1579 = vmatpush1.bf16.msra.mxu0 0
        %1580 = vmatprep.subr.bf16.mxu0 0
        %1581 = vmatpush1.bf16.msra.mxu0 0
        %1582 = vmatprep.subr.bf16.mxu0 0
        %1583 = vmatpush1.bf16.msra.mxu0 0
        %1584 = vmatprep.subr.bf16.mxu0 0
        %1585 = vmatpush1.bf16.msra.mxu0 0
        %1586 = vmatprep.subr.bf16.mxu0 0
        %1587 = vmatpush1.bf16.msra.mxu0 0
        %1588 = vmatprep.mubr.bf16.mxu0 0
        %1589 = vmatmul.mubr.bf16.gmra.mrb[0].mxu0 %v615
        %v1590 = vpop.f32.mrb[0].mxu0
        %v1591 = vadd.f32 %v863, %v1590
        %v1592 = vpop.f32.mrb[0].mxu0
        %v1593 = vpop.f32.mrb[0].mxu0
        %v1594 = vpop.f32.mrb[0].mxu0
        %1595 = vdwg.mxu0
        %v1612 = vunpack.c.l.b16 %v744
        %v1613 = vunpack.c.l.b16 %v745
        %v1614 = vunpack.c.l.b16 %v746
        %v1615 = vunpack.c.l.b16 %v747
        %v1616 = vunpack.c.l.b16 %v748
        %v1617 = vunpack.c.l.b16 %v749
        %v1618 = vunpack.c.l.b16 %v750
        %v1619 = vunpack.c.l.b16 %v751
        %v1620 = vunpack.c.l.b16 %v752
        %v1621 = vunpack.c.l.b16 %v753
        %v1622 = vunpack.c.l.b16 %v754
        %v1623 = vunpack.c.l.b16 %v755
        %v1624 = vunpack.c.l.b16 %v756
        %v1625 = vunpack.c.l.b16 %v757
        %v1626 = vunpack.c.l.b16 %v758
        %v1627 = vunpack.c.l.b16 %v759
        %v1628 = vpack.c.b16 %v1613, %v1612
        %v1629 = vpack.c.b16 %v1615, %v1614
        %v1630 = vpack.c.b16 %v1617, %v1616
        %v1631 = vpack.c.b16 %v1619, %v1618
        %v1632 = vpack.c.b16 %v1621, %v1620
        %v1633 = vpack.c.b16 %v1623, %v1622
        %v1634 = vpack.c.b16 %v1625, %v1624
        %v1635 = vpack.c.b16 %v1627, %v1626
        %1644 = vmatprep.subr.bf16.mxu0 0
        %1645 = vmatpush1.bf16.msra.mxu0 %v1628
        %1646 = vmatprep.subr.bf16.mxu0 0
        %1647 = vmatpush1.bf16.msra.mxu0 %v1629
        %1648 = vmatprep.subr.bf16.mxu0 0
        %1649 = vmatpush1.bf16.msra.mxu0 %v1630
        %1650 = vmatprep.subr.bf16.mxu0 0
        %1651 = vmatpush1.bf16.msra.mxu0 %v1631
        %1652 = vmatprep.subr.bf16.mxu0 0
        %1653 = vmatpush1.bf16.msra.mxu0 %v1632
        %1654 = vmatprep.subr.bf16.mxu0 0
        %1655 = vmatpush1.bf16.msra.mxu0 %v1633
        %1656 = vmatprep.subr.bf16.mxu0 0
        %1657 = vmatpush1.bf16.msra.mxu0 %v1634
        %1658 = vmatprep.subr.bf16.mxu0 0
        %1659 = vmatpush1.bf16.msra.mxu0 %v1635
        %1660 = vmatprep.subr.bf16.mxu0 0
        %1661 = vmatpush1.bf16.msra.mxu0 0
        %1662 = vmatprep.subr.bf16.mxu0 0
        %1663 = vmatpush1.bf16.msra.mxu0 0
        %1664 = vmatprep.subr.bf16.mxu0 0
        %1665 = vmatpush1.bf16.msra.mxu0 0
        %1666 = vmatprep.subr.bf16.mxu0 0
        %1667 = vmatpush1.bf16.msra.mxu0 0
        %1668 = vmatprep.subr.bf16.mxu0 0
        %1669 = vmatpush1.bf16.msra.mxu0 0
        %1670 = vmatprep.subr.bf16.mxu0 0
        %1671 = vmatpush1.bf16.msra.mxu0 0
        %1672 = vmatprep.subr.bf16.mxu0 0
        %1673 = vmatpush1.bf16.msra.mxu0 0
        %1674 = vmatprep.subr.bf16.mxu0 0
        %1675 = vmatpush1.bf16.msra.mxu0 0
        %1676 = vmatprep.mubr.bf16.mxu0 0
        %1677 = vmatmul.mubr.bf16.gmra.mrb[0].mxu0 %v615
        %v1678 = vpop.f32.mrb[0].mxu0
        %v1679 = vadd.f32 %v867, %v1678
        %v1680 = vpop.f32.mrb[0].mxu0
        %v1681 = vpop.f32.mrb[0].mxu0
        %v1682 = vpop.f32.mrb[0].mxu0
        %1683 = vdwg.mxu0
        %v1700 = vunpack.c.l.b16 %v760
        %v1701 = vunpack.c.l.b16 %v761
        %v1702 = vunpack.c.l.b16 %v762
        %v1703 = vunpack.c.l.b16 %v763
        %v1704 = vunpack.c.l.b16 %v764
        %v1705 = vunpack.c.l.b16 %v765
        %v1706 = vunpack.c.l.b16 %v766
        %v1707 = vunpack.c.l.b16 %v767
        %v1708 = vunpack.c.l.b16 %v768
        %v1709 = vunpack.c.l.b16 %v769
        %v1710 = vunpack.c.l.b16 %v770
        %v1711 = vunpack.c.l.b16 %v771
        %v1712 = vunpack.c.l.b16 %v772
        %v1713 = vunpack.c.l.b16 %v773
        %v1714 = vunpack.c.l.b16 %v774
        %v1715 = vunpack.c.l.b16 %v775
        %v1716 = vpack.c.b16 %v1701, %v1700
        %v1717 = vpack.c.b16 %v1703, %v1702
        %v1718 = vpack.c.b16 %v1705, %v1704
        %v1719 = vpack.c.b16 %v1707, %v1706
        %v1720 = vpack.c.b16 %v1709, %v1708
        %v1721 = vpack.c.b16 %v1711, %v1710
        %v1722 = vpack.c.b16 %v1713, %v1712
        %v1723 = vpack.c.b16 %v1715, %v1714
        %1732 = vmatprep.subr.bf16.mxu0 0
        %1733 = vmatpush1.bf16.msra.mxu0 %v1716
        %1734 = vmatprep.subr.bf16.mxu0 0
        %1735 = vmatpush1.bf16.msra.mxu0 %v1717
        %1736 = vmatprep.subr.bf16.mxu0 0
        %1737 = vmatpush1.bf16.msra.mxu0 %v1718
        %1738 = vmatprep.subr.bf16.mxu0 0
        %1739 = vmatpush1.bf16.msra.mxu0 %v1719
        %1740 = vmatprep.subr.bf16.mxu0 0
        %1741 = vmatpush1.bf16.msra.mxu0 %v1720
        %1742 = vmatprep.subr.bf16.mxu0 0
        %1743 = vmatpush1.bf16.msra.mxu0 %v1721
        %1744 = vmatprep.subr.bf16.mxu0 0
        %1745 = vmatpush1.bf16.msra.mxu0 %v1722
        %1746 = vmatprep.subr.bf16.mxu0 0
        %1747 = vmatpush1.bf16.msra.mxu0 %v1723
        %1748 = vmatprep.subr.bf16.mxu0 0
        %1749 = vmatpush1.bf16.msra.mxu0 0
        %1750 = vmatprep.subr.bf16.mxu0 0
        %1751 = vmatpush1.bf16.msra.mxu0 0
        %1752 = vmatprep.subr.bf16.mxu0 0
        %1753 = vmatpush1.bf16.msra.mxu0 0
        %1754 = vmatprep.subr.bf16.mxu0 0
        %1755 = vmatpush1.bf16.msra.mxu0 0
        %1756 = vmatprep.subr.bf16.mxu0 0
        %1757 = vmatpush1.bf16.msra.mxu0 0
        %1758 = vmatprep.subr.bf16.mxu0 0
        %1759 = vmatpush1.bf16.msra.mxu0 0
        %1760 = vmatprep.subr.bf16.mxu0 0
        %1761 = vmatpush1.bf16.msra.mxu0 0
        %1762 = vmatprep.subr.bf16.mxu0 0
        %1763 = vmatpush1.bf16.msra.mxu0 0
        %1764 = vmatprep.mubr.bf16.mxu0 0
        %1765 = vmatmul.mubr.bf16.gmra.mrb[0].mxu0 %v615
        %v1766 = vpop.f32.mrb[0].mxu0
        %v1767 = vadd.f32 %v871, %v1766
        %v1768 = vpop.f32.mrb[0].mxu0
        %v1769 = vpop.f32.mrb[0].mxu0
        %v1770 = vpop.f32.mrb[0].mxu0
        %1771 = vdwg.mxu0
        %v1788 = vunpack.c.l.b16 %v776
        %v1789 = vunpack.c.l.b16 %v777
        %v1790 = vunpack.c.l.b16 %v778
        %v1791 = vunpack.c.l.b16 %v779
        %v1792 = vunpack.c.l.b16 %v780
        %v1793 = vunpack.c.l.b16 %v781
        %v1794 = vunpack.c.l.b16 %v782
        %v1795 = vunpack.c.l.b16 %v783
        %v1796 = vunpack.c.l.b16 %v784
        %v1797 = vunpack.c.l.b16 %v785
        %v1798 = vunpack.c.l.b16 %v786
        %v1799 = vunpack.c.l.b16 %v787
        %v1800 = vunpack.c.l.b16 %v788
        %v1801 = vunpack.c.l.b16 %v789
        %v1802 = vunpack.c.l.b16 %v790
        %v1803 = vunpack.c.l.b16 %v791
        %v1804 = vpack.c.b16 %v1789, %v1788
        %v1805 = vpack.c.b16 %v1791, %v1790
        %v1806 = vpack.c.b16 %v1793, %v1792
        %v1807 = vpack.c.b16 %v1795, %v1794
        %v1808 = vpack.c.b16 %v1797, %v1796
        %v1809 = vpack.c.b16 %v1799, %v1798
        %v1810 = vpack.c.b16 %v1801, %v1800
        %v1811 = vpack.c.b16 %v1803, %v1802
        %1820 = vmatprep.subr.bf16.mxu0 0
        %1821 = vmatpush1.bf16.msra.mxu0 %v1804
        %1822 = vmatprep.subr.bf16.mxu0 0
        %1823 = vmatpush1.bf16.msra.mxu0 %v1805
        %1824 = vmatprep.subr.bf16.mxu0 0
        %1825 = vmatpush1.bf16.msra.mxu0 %v1806
        %1826 = vmatprep.subr.bf16.mxu0 0
        %1827 = vmatpush1.bf16.msra.mxu0 %v1807
        %1828 = vmatprep.subr.bf16.mxu0 0
        %1829 = vmatpush1.bf16.msra.mxu0 %v1808
        %1830 = vmatprep.subr.bf16.mxu0 0
        %1831 = vmatpush1.bf16.msra.mxu0 %v1809
        %1832 = vmatprep.subr.bf16.mxu0 0
        %1833 = vmatpush1.bf16.msra.mxu0 %v1810
        %1834 = vmatprep.subr.bf16.mxu0 0
        %1835 = vmatpush1.bf16.msra.mxu0 %v1811
        %1836 = vmatprep.subr.bf16.mxu0 0
        %1837 = vmatpush1.bf16.msra.mxu0 0
        %1838 = vmatprep.subr.bf16.mxu0 0
        %1839 = vmatpush1.bf16.msra.mxu0 0
        %1840 = vmatprep.subr.bf16.mxu0 0
        %1841 = vmatpush1.bf16.msra.mxu0 0
        %1842 = vmatprep.subr.bf16.mxu0 0
        %1843 = vmatpush1.bf16.msra.mxu0 0
        %1844 = vmatprep.subr.bf16.mxu0 0
        %1845 = vmatpush1.bf16.msra.mxu0 0
        %1846 = vmatprep.subr.bf16.mxu0 0
        %1847 = vmatpush1.bf16.msra.mxu0 0
        %1848 = vmatprep.subr.bf16.mxu0 0
        %1849 = vmatpush1.bf16.msra.mxu0 0
        %1850 = vmatprep.subr.bf16.mxu0 0
        %1851 = vmatpush1.bf16.msra.mxu0 0
        %1852 = vmatprep.mubr.bf16.mxu0 0
        %1853 = vmatmul.mubr.bf16.gmra.mrb[0].mxu0 %v615
        %v1854 = vpop.f32.mrb[0].mxu0
        %v1855 = vadd.f32 %v875, %v1854
        %v1856 = vpop.f32.mrb[0].mxu0
        %v1857 = vpop.f32.mrb[0].mxu0
        %v1858 = vpop.f32.mrb[0].mxu0
        %1859 = vdwg.mxu0
        %v1876 = vunpack.c.l.b16 %v792
        %v1877 = vunpack.c.l.b16 %v793
        %v1878 = vunpack.c.l.b16 %v794
        %v1879 = vunpack.c.l.b16 %v795
        %v1880 = vunpack.c.l.b16 %v796
        %v1881 = vunpack.c.l.b16 %v797
        %v1882 = vunpack.c.l.b16 %v798
        %v1883 = vunpack.c.l.b16 %v799
        %v1884 = vunpack.c.l.b16 %v800
        %v1885 = vunpack.c.l.b16 %v801
        %v1886 = vunpack.c.l.b16 %v802
        %v1887 = vunpack.c.l.b16 %v803
        %v1888 = vunpack.c.l.b16 %v804
        %v1889 = vunpack.c.l.b16 %v805
        %v1890 = vunpack.c.l.b16 %v806
        %v1891 = vunpack.c.l.b16 %v807
        %v1892 = vpack.c.b16 %v1877, %v1876
        %v1893 = vpack.c.b16 %v1879, %v1878
        %v1894 = vpack.c.b16 %v1881, %v1880
        %v1895 = vpack.c.b16 %v1883, %v1882
        %v1896 = vpack.c.b16 %v1885, %v1884
        %v1897 = vpack.c.b16 %v1887, %v1886
        %v1898 = vpack.c.b16 %v1889, %v1888
        %v1899 = vpack.c.b16 %v1891, %v1890
        %1908 = vmatprep.subr.bf16.mxu0 0
        %1909 = vmatpush1.bf16.msra.mxu0 %v1892
        %1910 = vmatprep.subr.bf16.mxu0 0
        %1911 = vmatpush1.bf16.msra.mxu0 %v1893
        %1912 = vmatprep.subr.bf16.mxu0 0
        %1913 = vmatpush1.bf16.msra.mxu0 %v1894
        %1914 = vmatprep.subr.bf16.mxu0 0
        %1915 = vmatpush1.bf16.msra.mxu0 %v1895
        %1916 = vmatprep.subr.bf16.mxu0 0
        %1917 = vmatpush1.bf16.msra.mxu0 %v1896
        %1918 = vmatprep.subr.bf16.mxu0 0
        %1919 = vmatpush1.bf16.msra.mxu0 %v1897
        %1920 = vmatprep.subr.bf16.mxu0 0
        %1921 = vmatpush1.bf16.msra.mxu0 %v1898
        %1922 = vmatprep.subr.bf16.mxu0 0
        %1923 = vmatpush1.bf16.msra.mxu0 %v1899
        %1924 = vmatprep.subr.bf16.mxu0 0
        %1925 = vmatpush1.bf16.msra.mxu0 0
        %1926 = vmatprep.subr.bf16.mxu0 0
        %1927 = vmatpush1.bf16.msra.mxu0 0
        %1928 = vmatprep.subr.bf16.mxu0 0
        %1929 = vmatpush1.bf16.msra.mxu0 0
        %1930 = vmatprep.subr.bf16.mxu0 0
        %1931 = vmatpush1.bf16.msra.mxu0 0
        %1932 = vmatprep.subr.bf16.mxu0 0
        %1933 = vmatpush1.bf16.msra.mxu0 0
        %1934 = vmatprep.subr.bf16.mxu0 0
        %1935 = vmatpush1.bf16.msra.mxu0 0
        %1936 = vmatprep.subr.bf16.mxu0 0
        %1937 = vmatpush1.bf16.msra.mxu0 0
        %1938 = vmatprep.subr.bf16.mxu0 0
        %1939 = vmatpush1.bf16.msra.mxu0 0
        %1940 = vmatprep.mubr.bf16.mxu0 0
        %1941 = vmatmul.mubr.bf16.gmra.mrb[0].mxu0 %v615
        %v1942 = vpop.f32.mrb[0].mxu0
        %v1943 = vadd.f32 %v879, %v1942
        %v1944 = vpop.f32.mrb[0].mxu0
        %v1945 = vpop.f32.mrb[0].mxu0
        %v1946 = vpop.f32.mrb[0].mxu0
        %1947 = vdwg.mxu0
        %v1948 = vpack.c.bf16 %v975, %v975
        %v1949 = vpack.c.bf16 %v1063, %v1063
        %v1950 = vpack.c.bf16 %v1151, %v1151
        %v1951 = vpack.c.bf16 %v1239, %v1239
        %v1952 = vpack.c.bf16 %v1327, %v1327
        %v1953 = vpack.c.bf16 %v1415, %v1415
        %v1954 = vpack.c.bf16 %v1503, %v1503
        %v1955 = vpack.c.bf16 %v1591, %v1591
        %vm1956 = vcmask 261120
        %v1958 = vsel %vm1956, %v1948, 0
        %v1961 = vsel %vm1956, %v1952, 0
        %1963 = vmatprep.subr.bf16.mxu0 0
        %1964 = vmatpush1.bf16.xpose.msra.mxu0 %v1961
        %1965 = vmatprep.subr.bf16.mxu0 0
        %1966 = vmatpush1.bf16.xpose.msra.mxu0 0
        %1967 = vmatprep.subr.bf16.mxu0 0
        %1968 = vmatpush1.bf16.xpose.msra.mxu0 0
        %1969 = vmatprep.subr.bf16.mxu0 0
        %1970 = vmatpush1.bf16.xpose.msra.mxu0 0
        %1971 = vmatprep.subr.bf16.mxu0 0
        %1972 = vmatpush1.bf16.xpose.msra.mxu0 0
        %1973 = vmatprep.subr.bf16.mxu0 0
        %1974 = vmatpush1.bf16.xpose.msra.mxu0 0
        %1975 = vmatprep.subr.bf16.mxu0 0
        %1976 = vmatpush1.bf16.xpose.msra.mxu0 0
        %1977 = vmatprep.subr.bf16.mxu0 0
        %1978 = vmatpush1.bf16.xpose.msra.mxu0 0
        %1979 = vmatprep.subr.bf16.mxu0 0
        %1980 = vmatpush1.bf16.xpose.msra.mxu0 0
        %1981 = vmatprep.subr.bf16.mxu0 0
        %1982 = vmatpush1.bf16.xpose.msra.mxu0 0
        %1983 = vmatprep.subr.bf16.mxu0 0
        %1984 = vmatpush1.bf16.xpose.msra.mxu0 0
        %1985 = vmatprep.subr.bf16.mxu0 0
        %1986 = vmatpush1.bf16.xpose.msra.mxu0 0
        %1987 = vmatprep.subr.bf16.mxu0 0
        %1988 = vmatpush1.bf16.xpose.msra.mxu0 0
        %1989 = vmatprep.subr.bf16.mxu0 0
        %1990 = vmatpush1.bf16.xpose.msra.mxu0 0
        %1991 = vmatprep.subr.bf16.mxu0 0
        %1992 = vmatpush1.bf16.xpose.msra.mxu0 0
        %1993 = vmatprep.subr.bf16.mxu0 0
        %1994 = vmatpush1.bf16.xpose.msra.mxu0 0
        %1995 = vmatprep.mubr.bf16.mxu0 0
        %1996 = vmatmul.mubr.bf16.gmra.mrb[0].mxu0 %v1958
        %v1997 = vpop.f32.mrb[0].mxu0
        %v1998 = vadd.f32 0.0, %v1997
        %v1999 = vpop.f32.mrb[0].mxu0
        %v2000 = vpop.f32.mrb[0].mxu0
        %v2001 = vpop.f32.mrb[0].mxu0
        %2002 = vdwg.mxu0
        %v2004 = vsel %vm1956, %v1949, 0
        %v2007 = vsel %vm1956, %v1953, 0
        %2009 = vmatprep.subr.bf16.mxu0 0
        %2010 = vmatpush1.bf16.xpose.msra.mxu0 %v2007
        %2011 = vmatprep.subr.bf16.mxu0 0
        %2012 = vmatpush1.bf16.xpose.msra.mxu0 0
        %2013 = vmatprep.subr.bf16.mxu0 0
        %2014 = vmatpush1.bf16.xpose.msra.mxu0 0
        %2015 = vmatprep.subr.bf16.mxu0 0
        %2016 = vmatpush1.bf16.xpose.msra.mxu0 0
        %2017 = vmatprep.subr.bf16.mxu0 0
        %2018 = vmatpush1.bf16.xpose.msra.mxu0 0
        %2019 = vmatprep.subr.bf16.mxu0 0
        %2020 = vmatpush1.bf16.xpose.msra.mxu0 0
        %2021 = vmatprep.subr.bf16.mxu0 0
        %2022 = vmatpush1.bf16.xpose.msra.mxu0 0
        %2023 = vmatprep.subr.bf16.mxu0 0
        %2024 = vmatpush1.bf16.xpose.msra.mxu0 0
        %2025 = vmatprep.subr.bf16.mxu0 0
        %2026 = vmatpush1.bf16.xpose.msra.mxu0 0
        %2027 = vmatprep.subr.bf16.mxu0 0
        %2028 = vmatpush1.bf16.xpose.msra.mxu0 0
        %2029 = vmatprep.subr.bf16.mxu0 0
        %2030 = vmatpush1.bf16.xpose.msra.mxu0 0
        %2031 = vmatprep.subr.bf16.mxu0 0
        %2032 = vmatpush1.bf16.xpose.msra.mxu0 0
        %2033 = vmatprep.subr.bf16.mxu0 0
        %2034 = vmatpush1.bf16.xpose.msra.mxu0 0
        %2035 = vmatprep.subr.bf16.mxu0 0
        %2036 = vmatpush1.bf16.xpose.msra.mxu0 0
        %2037 = vmatprep.subr.bf16.mxu0 0
        %2038 = vmatpush1.bf16.xpose.msra.mxu0 0
        %2039 = vmatprep.subr.bf16.mxu0 0
        %2040 = vmatpush1.bf16.xpose.msra.mxu0 0
        %2041 = vmatprep.mubr.bf16.mxu0 0
        %2042 = vmatmul.mubr.bf16.gmra.mrb[0].mxu0 %v2004
        %v2043 = vpop.f32.mrb[0].mxu0
        %v2044 = vadd.f32 0.0, %v2043
        %v2045 = vpop.f32.mrb[0].mxu0
        %v2046 = vpop.f32.mrb[0].mxu0
        %v2047 = vpop.f32.mrb[0].mxu0
        %2048 = vdwg.mxu0
        %v2050 = vsel %vm1956, %v1950, 0
        %v2053 = vsel %vm1956, %v1954, 0
        %2055 = vmatprep.subr.bf16.mxu0 0
        %2056 = vmatpush1.bf16.xpose.msra.mxu0 %v2053
        %2057 = vmatprep.subr.bf16.mxu0 0
        %2058 = vmatpush1.bf16.xpose.msra.mxu0 0
        %2059 = vmatprep.subr.bf16.mxu0 0
        %2060 = vmatpush1.bf16.xpose.msra.mxu0 0
        %2061 = vmatprep.subr.bf16.mxu0 0
        %2062 = vmatpush1.bf16.xpose.msra.mxu0 0
        %2063 = vmatprep.subr.bf16.mxu0 0
        %2064 = vmatpush1.bf16.xpose.msra.mxu0 0
        %2065 = vmatprep.subr.bf16.mxu0 0
        %2066 = vmatpush1.bf16.xpose.msra.mxu0 0
        %2067 = vmatprep.subr.bf16.mxu0 0
        %2068 = vmatpush1.bf16.xpose.msra.mxu0 0
        %2069 = vmatprep.subr.bf16.mxu0 0
        %2070 = vmatpush1.bf16.xpose.msra.mxu0 0
        %2071 = vmatprep.subr.bf16.mxu0 0
        %2072 = vmatpush1.bf16.xpose.msra.mxu0 0
        %2073 = vmatprep.subr.bf16.mxu0 0
        %2074 = vmatpush1.bf16.xpose.msra.mxu0 0
        %2075 = vmatprep.subr.bf16.mxu0 0
        %2076 = vmatpush1.bf16.xpose.msra.mxu0 0
        %2077 = vmatprep.subr.bf16.mxu0 0
        %2078 = vmatpush1.bf16.xpose.msra.mxu0 0
        %2079 = vmatprep.subr.bf16.mxu0 0
        %2080 = vmatpush1.bf16.xpose.msra.mxu0 0
        %2081 = vmatprep.subr.bf16.mxu0 0
        %2082 = vmatpush1.bf16.xpose.msra.mxu0 0
        %2083 = vmatprep.subr.bf16.mxu0 0
        %2084 = vmatpush1.bf16.xpose.msra.mxu0 0
        %2085 = vmatprep.subr.bf16.mxu0 0
        %2086 = vmatpush1.bf16.xpose.msra.mxu0 0
        %2087 = vmatprep.mubr.bf16.mxu0 0
        %2088 = vmatmul.mubr.bf16.gmra.mrb[0].mxu0 %v2050
        %v2089 = vpop.f32.mrb[0].mxu0
        %v2090 = vadd.f32 0.0, %v2089
        %v2091 = vpop.f32.mrb[0].mxu0
        %v2092 = vpop.f32.mrb[0].mxu0
        %v2093 = vpop.f32.mrb[0].mxu0
        %2094 = vdwg.mxu0
        %v2096 = vsel %vm1956, %v1951, 0
        %v2099 = vsel %vm1956, %v1955, 0
        %2101 = vmatprep.subr.bf16.mxu0 0
        %2102 = vmatpush1.bf16.xpose.msra.mxu0 %v2099
        %2103 = vmatprep.subr.bf16.mxu0 0
        %2104 = vmatpush1.bf16.xpose.msra.mxu0 0
        %2105 = vmatprep.subr.bf16.mxu0 0
        %2106 = vmatpush1.bf16.xpose.msra.mxu0 0
        %2107 = vmatprep.subr.bf16.mxu0 0
        %2108 = vmatpush1.bf16.xpose.msra.mxu0 0
        %2109 = vmatprep.subr.bf16.mxu0 0
        %2110 = vmatpush1.bf16.xpose.msra.mxu0 0
        %2111 = vmatprep.subr.bf16.mxu0 0
        %2112 = vmatpush1.bf16.xpose.msra.mxu0 0
        %2113 = vmatprep.subr.bf16.mxu0 0
        %2114 = vmatpush1.bf16.xpose.msra.mxu0 0
        %2115 = vmatprep.subr.bf16.mxu0 0
        %2116 = vmatpush1.bf16.xpose.msra.mxu0 0
        %2117 = vmatprep.subr.bf16.mxu0 0
        %2118 = vmatpush1.bf16.xpose.msra.mxu0 0
        %2119 = vmatprep.subr.bf16.mxu0 0
        %2120 = vmatpush1.bf16.xpose.msra.mxu0 0
        %2121 = vmatprep.subr.bf16.mxu0 0
        %2122 = vmatpush1.bf16.xpose.msra.mxu0 0
        %2123 = vmatprep.subr.bf16.mxu0 0
        %2124 = vmatpush1.bf16.xpose.msra.mxu0 0
        %2125 = vmatprep.subr.bf16.mxu0 0
        %2126 = vmatpush1.bf16.xpose.msra.mxu0 0
        %2127 = vmatprep.subr.bf16.mxu0 0
        %2128 = vmatpush1.bf16.xpose.msra.mxu0 0
        %2129 = vmatprep.subr.bf16.mxu0 0
        %2130 = vmatpush1.bf16.xpose.msra.mxu0 0
        %2131 = vmatprep.subr.bf16.mxu0 0
        %2132 = vmatpush1.bf16.xpose.msra.mxu0 0
        %2133 = vmatprep.mubr.bf16.mxu0 0
        %2134 = vmatmul.mubr.bf16.gmra.mrb[0].mxu0 %v2096
        %v2135 = vpop.f32.mrb[0].mxu0
        %v2136 = vadd.f32 0.0, %v2135
        %v2137 = vpop.f32.mrb[0].mxu0
        %v2138 = vpop.f32.mrb[0].mxu0
        %v2139 = vpop.f32.mrb[0].mxu0
        %2140 = vdwg.mxu0
        %v2141 = vmul.f32 %v1998, 0.17677669
        %v2142 = vmul.f32 %v2044, 0.17677669
        %v2143 = vmul.f32 %v2090, 0.17677669
        %v2144 = vmul.f32 %v2136, 0.17677669
        %v2145 = vsel %vm612, 1, 0
        %vm2146 = vcmp.eq.s32.totalorder %v2145, 1
        %v2147 = vsel %vm2146, -1e+10, %v2141
        %v2148 = vsel %vm2146, -1e+10, %v2142
        %v2149 = vsel %vm2146, -1e+10, %v2143
        %v2150 = vsel %vm2146, -1e+10, %v2144
        %vm2151 = vcmask 64512
        %v2152 = vsel %vm2151, %v2147, -inf
        %2153 = vmax.xlane.f32.xlu0 %v2152
        %v2154 = vpop.xlane.xlu0 %2153
        %v2155 = vsel %vm2151, %v2148, -inf
        %2156 = vmax.xlane.f32.xlu0 %v2155
        %v2157 = vpop.xlane.xlu0 %2156
        %v2158 = vsel %vm2151, %v2149, -inf
        %2159 = vmax.xlane.f32.xlu0 %v2158
        %v2160 = vpop.xlane.xlu0 %2159
        %v2161 = vsel %vm2151, %v2150, -inf
        %2162 = vmax.xlane.f32.xlu0 %v2161
        %v2163 = vpop.xlane.xlu0 %2162
        %v2164 = vsub.f32 %v2147, %v2154
        %v2165 = vsub.f32 %v2148, %v2157
        %v2166 = vsub.f32 %v2149, %v2160
        %v2167 = vsub.f32 %v2150, %v2163
        %v2168 = vmul.f32 %v2164, 1.442695
        %v2169 = vpow.pop %v2168
        %v2170 = vmul.f32 %v2165, 1.442695
        %v2171 = vpow.pop %v2170
        %v2172 = vmul.f32 %v2166, 1.442695
        %v2173 = vpow.pop %v2172
        %v2174 = vmul.f32 %v2167, 1.442695
        %v2175 = vpow.pop %v2174
        %v2176 = vsel %vm2151, %v2169, 0.0
        %2177 = vadd.xlane.f32.xlu0 %v2176
        %v2178 = vpop.xlane.xlu0 %2177
        %v2179 = vsel %vm2151, %v2171, 0.0
        %2180 = vadd.xlane.f32.xlu0 %v2179
        %v2181 = vpop.xlane.xlu0 %2180
        %v2182 = vsel %vm2151, %v2173, 0.0
        %2183 = vadd.xlane.f32.xlu0 %v2182
        %v2184 = vpop.xlane.xlu0 %2183
        %v2185 = vsel %vm2151, %v2175, 0.0
        %2186 = vadd.xlane.f32.xlu0 %v2185
        %v2187 = vpop.xlane.xlu0 %2186
        %v2188 = vpack.c.bf16 %v2169, %v2169
        %v2189 = vpack.c.bf16 %v2171, %v2171
        %v2190 = vpack.c.bf16 %v2173, %v2173
        %v2191 = vpack.c.bf16 %v2175, %v2175
        %v2192 = vpack.c.bf16 %v1679, %v1679
        %v2193 = vpack.c.bf16 %v1767, %v1767
        %v2194 = vpack.c.bf16 %v1855, %v1855
        %v2195 = vpack.c.bf16 %v1943, %v1943
        %v2197 = vsel %vm2151, %v2188, 0
        %vm2199 = vcmask 1043456
        %v2201 = vsel %vm2199, %v2192, 0
        %2203 = vmatprep.subr.bf16.mxu0 0
        %2204 = vmatpush1.bf16.msra.mxu0 %v2201
        %2205 = vmatprep.subr.bf16.mxu0 0
        %2206 = vmatpush1.bf16.msra.mxu0 0
        %2207 = vmatprep.subr.bf16.mxu0 0
        %2208 = vmatpush1.bf16.msra.mxu0 0
        %2209 = vmatprep.subr.bf16.mxu0 0
        %2210 = vmatpush1.bf16.msra.mxu0 0
        %2211 = vmatprep.subr.bf16.mxu0 0
        %2212 = vmatpush1.bf16.msra.mxu0 0
        %2213 = vmatprep.subr.bf16.mxu0 0
        %2214 = vmatpush1.bf16.msra.mxu0 0
        %2215 = vmatprep.subr.bf16.mxu0 0
        %2216 = vmatpush1.bf16.msra.mxu0 0
        %2217 = vmatprep.subr.bf16.mxu0 0
        %2218 = vmatpush1.bf16.msra.mxu0 0
        %2219 = vmatprep.subr.bf16.mxu0 0
        %2220 = vmatpush1.bf16.msra.mxu0 0
        %2221 = vmatprep.subr.bf16.mxu0 0
        %2222 = vmatpush1.bf16.msra.mxu0 0
        %2223 = vmatprep.subr.bf16.mxu0 0
        %2224 = vmatpush1.bf16.msra.mxu0 0
        %2225 = vmatprep.subr.bf16.mxu0 0
        %2226 = vmatpush1.bf16.msra.mxu0 0
        %2227 = vmatprep.subr.bf16.mxu0 0
        %2228 = vmatpush1.bf16.msra.mxu0 0
        %2229 = vmatprep.subr.bf16.mxu0 0
        %2230 = vmatpush1.bf16.msra.mxu0 0
        %2231 = vmatprep.subr.bf16.mxu0 0
        %2232 = vmatpush1.bf16.msra.mxu0 0
        %2233 = vmatprep.subr.bf16.mxu0 0
        %2234 = vmatpush1.bf16.msra.mxu0 0
        %2235 = vmatprep.mubr.bf16.mxu0 0
        %2236 = vmatmul.mubr.bf16.gmra.mrb[0].mxu0 %v2197
        %v2237 = vpop.f32.mrb[0].mxu0
        %v2238 = vadd.f32 0.0, %v2237
        %v2239 = vpop.f32.mrb[0].mxu0
        %v2240 = vpop.f32.mrb[0].mxu0
        %v2241 = vpop.f32.mrb[0].mxu0
        %2242 = vdwg.mxu0
        %v2244 = vsel %vm2151, %v2189, 0
        %v2247 = vsel %vm2199, %v2193, 0
        %2249 = vmatprep.subr.bf16.mxu0 0
        %2250 = vmatpush1.bf16.msra.mxu0 %v2247
        %2251 = vmatprep.subr.bf16.mxu0 0
        %2252 = vmatpush1.bf16.msra.mxu0 0
        %2253 = vmatprep.subr.bf16.mxu0 0
        %2254 = vmatpush1.bf16.msra.mxu0 0
        %2255 = vmatprep.subr.bf16.mxu0 0
        %2256 = vmatpush1.bf16.msra.mxu0 0
        %2257 = vmatprep.subr.bf16.mxu0 0
        %2258 = vmatpush1.bf16.msra.mxu0 0
        %2259 = vmatprep.subr.bf16.mxu0 0
        %2260 = vmatpush1.bf16.msra.mxu0 0
        %2261 = vmatprep.subr.bf16.mxu0 0
        %2262 = vmatpush1.bf16.msra.mxu0 0
        %2263 = vmatprep.subr.bf16.mxu0 0
        %2264 = vmatpush1.bf16.msra.mxu0 0
        %2265 = vmatprep.subr.bf16.mxu0 0
        %2266 = vmatpush1.bf16.msra.mxu0 0
        %2267 = vmatprep.subr.bf16.mxu0 0
        %2268 = vmatpush1.bf16.msra.mxu0 0
        %2269 = vmatprep.subr.bf16.mxu0 0
        %2270 = vmatpush1.bf16.msra.mxu0 0
        %2271 = vmatprep.subr.bf16.mxu0 0
        %2272 = vmatpush1.bf16.msra.mxu0 0
        %2273 = vmatprep.subr.bf16.mxu0 0
        %2274 = vmatpush1.bf16.msra.mxu0 0
        %2275 = vmatprep.subr.bf16.mxu0 0
        %2276 = vmatpush1.bf16.msra.mxu0 0
        %2277 = vmatprep.subr.bf16.mxu0 0
        %2278 = vmatpush1.bf16.msra.mxu0 0
        %2279 = vmatprep.subr.bf16.mxu0 0
        %2280 = vmatpush1.bf16.msra.mxu0 0
        %2281 = vmatprep.mubr.bf16.mxu0 0
        %2282 = vmatmul.mubr.bf16.gmra.mrb[0].mxu0 %v2244
        %v2283 = vpop.f32.mrb[0].mxu0
        %v2284 = vadd.f32 0.0, %v2283
        %v2285 = vpop.f32.mrb[0].mxu0
        %v2286 = vpop.f32.mrb[0].mxu0
        %v2287 = vpop.f32.mrb[0].mxu0
        %2288 = vdwg.mxu0
        %v2290 = vsel %vm2151, %v2190, 0
        %v2293 = vsel %vm2199, %v2194, 0
        %2295 = vmatprep.subr.bf16.mxu0 0
        %2296 = vmatpush1.bf16.msra.mxu0 %v2293
        %2297 = vmatprep.subr.bf16.mxu0 0
        %2298 = vmatpush1.bf16.msra.mxu0 0
        %2299 = vmatprep.subr.bf16.mxu0 0
        %2300 = vmatpush1.bf16.msra.mxu0 0
        %2301 = vmatprep.subr.bf16.mxu0 0
        %2302 = vmatpush1.bf16.msra.mxu0 0
        %2303 = vmatprep.subr.bf16.mxu0 0
        %2304 = vmatpush1.bf16.msra.mxu0 0
        %2305 = vmatprep.subr.bf16.mxu0 0
        %2306 = vmatpush1.bf16.msra.mxu0 0
        %2307 = vmatprep.subr.bf16.mxu0 0
        %2308 = vmatpush1.bf16.msra.mxu0 0
        %2309 = vmatprep.subr.bf16.mxu0 0
        %2310 = vmatpush1.bf16.msra.mxu0 0
        %2311 = vmatprep.subr.bf16.mxu0 0
        %2312 = vmatpush1.bf16.msra.mxu0 0
        %2313 = vmatprep.subr.bf16.mxu0 0
        %2314 = vmatpush1.bf16.msra.mxu0 0
        %2315 = vmatprep.subr.bf16.mxu0 0
        %2316 = vmatpush1.bf16.msra.mxu0 0
        %2317 = vmatprep.subr.bf16.mxu0 0
        %2318 = vmatpush1.bf16.msra.mxu0 0
        %2319 = vmatprep.subr.bf16.mxu0 0
        %2320 = vmatpush1.bf16.msra.mxu0 0
        %2321 = vmatprep.subr.bf16.mxu0 0
        %2322 = vmatpush1.bf16.msra.mxu0 0
        %2323 = vmatprep.subr.bf16.mxu0 0
        %2324 = vmatpush1.bf16.msra.mxu0 0
        %2325 = vmatprep.subr.bf16.mxu0 0
        %2326 = vmatpush1.bf16.msra.mxu0 0
        %2327 = vmatprep.mubr.bf16.mxu0 0
        %2328 = vmatmul.mubr.bf16.gmra.mrb[0].mxu0 %v2290
        %v2329 = vpop.f32.mrb[0].mxu0
        %v2330 = vadd.f32 0.0, %v2329
        %v2331 = vpop.f32.mrb[0].mxu0
        %v2332 = vpop.f32.mrb[0].mxu0
        %v2333 = vpop.f32.mrb[0].mxu0
        %2334 = vdwg.mxu0
        %v2336 = vsel %vm2151, %v2191, 0
        %v2339 = vsel %vm2199, %v2195, 0
        %2341 = vmatprep.subr.bf16.mxu0 0
        %2342 = vmatpush1.bf16.msra.mxu0 %v2339
        %2343 = vmatprep.subr.bf16.mxu0 0
        %2344 = vmatpush1.bf16.msra.mxu0 0
        %2345 = vmatprep.subr.bf16.mxu0 0
        %2346 = vmatpush1.bf16.msra.mxu0 0
        %2347 = vmatprep.subr.bf16.mxu0 0
        %2348 = vmatpush1.bf16.msra.mxu0 0
        %2349 = vmatprep.subr.bf16.mxu0 0
        %2350 = vmatpush1.bf16.msra.mxu0 0
        %2351 = vmatprep.subr.bf16.mxu0 0
        %2352 = vmatpush1.bf16.msra.mxu0 0
        %2353 = vmatprep.subr.bf16.mxu0 0
        %2354 = vmatpush1.bf16.msra.mxu0 0
        %2355 = vmatprep.subr.bf16.mxu0 0
        %2356 = vmatpush1.bf16.msra.mxu0 0
        %2357 = vmatprep.subr.bf16.mxu0 0
        %2358 = vmatpush1.bf16.msra.mxu0 0
        %2359 = vmatprep.subr.bf16.mxu0 0
        %2360 = vmatpush1.bf16.msra.mxu0 0
        %2361 = vmatprep.subr.bf16.mxu0 0
        %2362 = vmatpush1.bf16.msra.mxu0 0
        %2363 = vmatprep.subr.bf16.mxu0 0
        %2364 = vmatpush1.bf16.msra.mxu0 0
        %2365 = vmatprep.subr.bf16.mxu0 0
        %2366 = vmatpush1.bf16.msra.mxu0 0
        %2367 = vmatprep.subr.bf16.mxu0 0
        %2368 = vmatpush1.bf16.msra.mxu0 0
        %2369 = vmatprep.subr.bf16.mxu0 0
        %2370 = vmatpush1.bf16.msra.mxu0 0
        %2371 = vmatprep.subr.bf16.mxu0 0
        %2372 = vmatpush1.bf16.msra.mxu0 0
        %2373 = vmatprep.mubr.bf16.mxu0 0
        %2374 = vmatmul.mubr.bf16.gmra.mrb[0].mxu0 %v2336
        %v2375 = vpop.f32.mrb[0].mxu0
        %v2376 = vadd.f32 0.0, %v2375
        %v2377 = vpop.f32.mrb[0].mxu0
        %v2378 = vpop.f32.mrb[0].mxu0
        %v2379 = vpop.f32.mrb[0].mxu0
        %2380 = vdwg.mxu0
        %v2381 = vrcp.pop %v2178
        %v2382 = vrcp.pop %v2181
        %v2383 = vrcp.pop %v2184
        %v2384 = vrcp.pop %v2187
        %v2385 = vmul.f32 %v2238, %v2381
        %v2386 = vmul.f32 %v2284, %v2382
        %v2387 = vmul.f32 %v2330, %v2383
        %v2388 = vmul.f32 %v2376, %v2384
        %v2389 = vpack.c.bf16 %v2385, %v2385
        %v2390 = vpack.c.bf16 %v2386, %v2386
        %v2391 = vpack.c.bf16 %v2387, %v2387
        %v2392 = vpack.c.bf16 %v2388, %v2388
        %v2393 = vld [vmem:[%s6] sm:$0xf]
        %v2394 = vld [vmem:[%s6 + $0x4] sm:$0xf]
        %v2395 = vld [vmem:[%s6 + $0x8] sm:$0xf]
        %v2396 = vld [vmem:[%s6 + $0xc] sm:$0xf]
        %v2397 = vld [vmem:[%s6 + $0x10] sm:$0xf]
        %v2398 = vld [vmem:[%s6 + $0x14] sm:$0xf]
        %v2399 = vld [vmem:[%s6 + $0x18] sm:$0xf]
        %v2400 = vld [vmem:[%s6 + $0x1c] sm:$0xf]
        %v2401 = vld [vmem:[%s6 + $0x20] sm:$0xf]
        %v2402 = vld [vmem:[%s6 + $0x24] sm:$0xf]
        %v2403 = vld [vmem:[%s6 + $0x28] sm:$0xf]
        %v2404 = vld [vmem:[%s6 + $0x2c] sm:$0xf]
        %v2405 = vld [vmem:[%s6 + $0x30] sm:$0xf]
        %v2406 = vld [vmem:[%s6 + $0x34] sm:$0xf]
        %v2407 = vld [vmem:[%s6 + $0x38] sm:$0xf]
        %v2408 = vld [vmem:[%s6 + $0x3c] sm:$0xf]
        %v2413 = vunpack.c.l.b16 %v2393
        %v2414 = vunpack.c.l.b16 %v2394
        %v2415 = vunpack.c.l.b16 %v2395
        %v2416 = vunpack.c.l.b16 %v2396
        %v2417 = vpack.c.b16 %v2414, %v2413
        %v2418 = vpack.c.b16 %v2416, %v2415
        %v2422 = vsel %vm1956, %v2389, 0
        %2424 = vmatprep.subr.bf16.mxu0 0
        %2425 = vmatpush1.bf16.msra.mxu0 %v2417
        %2426 = vmatprep.subr.bf16.mxu0 0
        %2427 = vmatpush1.bf16.msra.mxu0 %v2418
        %2428 = vmatprep.subr.bf16.mxu0 0
        %2429 = vmatpush1.bf16.msra.mxu0 0
        %2430 = vmatprep.subr.bf16.mxu0 0
        %2431 = vmatpush1.bf16.msra.mxu0 0
        %2432 = vmatprep.subr.bf16.mxu0 0
        %2433 = vmatpush1.bf16.msra.mxu0 0
        %2434 = vmatprep.subr.bf16.mxu0 0
        %2435 = vmatpush1.bf16.msra.mxu0 0
        %2436 = vmatprep.subr.bf16.mxu0 0
        %2437 = vmatpush1.bf16.msra.mxu0 0
        %2438 = vmatprep.subr.bf16.mxu0 0
        %2439 = vmatpush1.bf16.msra.mxu0 0
        %2440 = vmatprep.subr.bf16.mxu0 0
        %2441 = vmatpush1.bf16.msra.mxu0 0
        %2442 = vmatprep.subr.bf16.mxu0 0
        %2443 = vmatpush1.bf16.msra.mxu0 0
        %2444 = vmatprep.subr.bf16.mxu0 0
        %2445 = vmatpush1.bf16.msra.mxu0 0
        %2446 = vmatprep.subr.bf16.mxu0 0
        %2447 = vmatpush1.bf16.msra.mxu0 0
        %2448 = vmatprep.subr.bf16.mxu0 0
        %2449 = vmatpush1.bf16.msra.mxu0 0
        %2450 = vmatprep.subr.bf16.mxu0 0
        %2451 = vmatpush1.bf16.msra.mxu0 0
        %2452 = vmatprep.subr.bf16.mxu0 0
        %2453 = vmatpush1.bf16.msra.mxu0 0
        %2454 = vmatprep.subr.bf16.mxu0 0
        %2455 = vmatpush1.bf16.msra.mxu0 0
        %2456 = vmatprep.mubr.bf16.mxu0 0
        %2457 = vmatmul.mubr.bf16.gmra.mrb[0].mxu0 %v2422
        %v2458 = vpop.f32.mrb[0].mxu0
        %v2459 = vadd.f32 0.0, %v2458
        %v2460 = vpop.f32.mrb[0].mxu0
        %v2461 = vpop.f32.mrb[0].mxu0
        %v2462 = vpop.f32.mrb[0].mxu0
        %2463 = vdwg.mxu0
        %v2468 = vunpack.c.l.b16 %v2397
        %v2469 = vunpack.c.l.b16 %v2398
        %v2470 = vunpack.c.l.b16 %v2399
        %v2471 = vunpack.c.l.b16 %v2400
        %v2472 = vpack.c.b16 %v2469, %v2468
        %v2473 = vpack.c.b16 %v2471, %v2470
        %v2477 = vsel %vm1956, %v2390, 0
        %2479 = vmatprep.subr.bf16.mxu0 0
        %2480 = vmatpush1.bf16.msra.mxu0 %v2472
        %2481 = vmatprep.subr.bf16.mxu0 0
        %2482 = vmatpush1.bf16.msra.mxu0 %v2473
        %2483 = vmatprep.subr.bf16.mxu0 0
        %2484 = vmatpush1.bf16.msra.mxu0 0
        %2485 = vmatprep.subr.bf16.mxu0 0
        %2486 = vmatpush1.bf16.msra.mxu0 0
        %2487 = vmatprep.subr.bf16.mxu0 0
        %2488 = vmatpush1.bf16.msra.mxu0 0
        %2489 = vmatprep.subr.bf16.mxu0 0
        %2490 = vmatpush1.bf16.msra.mxu0 0
        %2491 = vmatprep.subr.bf16.mxu0 0
        %2492 = vmatpush1.bf16.msra.mxu0 0
        %2493 = vmatprep.subr.bf16.mxu0 0
        %2494 = vmatpush1.bf16.msra.mxu0 0
        %2495 = vmatprep.subr.bf16.mxu0 0
        %2496 = vmatpush1.bf16.msra.mxu0 0
        %2497 = vmatprep.subr.bf16.mxu0 0
        %2498 = vmatpush1.bf16.msra.mxu0 0
        %2499 = vmatprep.subr.bf16.mxu0 0
        %2500 = vmatpush1.bf16.msra.mxu0 0
        %2501 = vmatprep.subr.bf16.mxu0 0
        %2502 = vmatpush1.bf16.msra.mxu0 0
        %2503 = vmatprep.subr.bf16.mxu0 0
        %2504 = vmatpush1.bf16.msra.mxu0 0
        %2505 = vmatprep.subr.bf16.mxu0 0
        %2506 = vmatpush1.bf16.msra.mxu0 0
        %2507 = vmatprep.subr.bf16.mxu0 0
        %2508 = vmatpush1.bf16.msra.mxu0 0
        %2509 = vmatprep.subr.bf16.mxu0 0
        %2510 = vmatpush1.bf16.msra.mxu0 0
        %2511 = vmatprep.mubr.bf16.mxu0 0
        %2512 = vmatmul.mubr.bf16.gmra.mrb[0].mxu0 %v2477
        %v2513 = vpop.f32.mrb[0].mxu0
        %v2514 = vadd.f32 0.0, %v2513
        %v2515 = vpop.f32.mrb[0].mxu0
        %v2516 = vpop.f32.mrb[0].mxu0
        %v2517 = vpop.f32.mrb[0].mxu0
        %2518 = vdwg.mxu0
        %v2523 = vunpack.c.l.b16 %v2401
        %v2524 = vunpack.c.l.b16 %v2402
        %v2525 = vunpack.c.l.b16 %v2403
        %v2526 = vunpack.c.l.b16 %v2404
        %v2527 = vpack.c.b16 %v2524, %v2523
        %v2528 = vpack.c.b16 %v2526, %v2525
        %v2532 = vsel %vm1956, %v2391, 0
        %2534 = vmatprep.subr.bf16.mxu0 0
        %2535 = vmatpush1.bf16.msra.mxu0 %v2527
        %2536 = vmatprep.subr.bf16.mxu0 0
        %2537 = vmatpush1.bf16.msra.mxu0 %v2528
        %2538 = vmatprep.subr.bf16.mxu0 0
        %2539 = vmatpush1.bf16.msra.mxu0 0
        %2540 = vmatprep.subr.bf16.mxu0 0
        %2541 = vmatpush1.bf16.msra.mxu0 0
        %2542 = vmatprep.subr.bf16.mxu0 0
        %2543 = vmatpush1.bf16.msra.mxu0 0
        %2544 = vmatprep.subr.bf16.mxu0 0
        %2545 = vmatpush1.bf16.msra.mxu0 0
        %2546 = vmatprep.subr.bf16.mxu0 0
        %2547 = vmatpush1.bf16.msra.mxu0 0
        %2548 = vmatprep.subr.bf16.mxu0 0
        %2549 = vmatpush1.bf16.msra.mxu0 0
        %2550 = vmatprep.subr.bf16.mxu0 0
        %2551 = vmatpush1.bf16.msra.mxu0 0
        %2552 = vmatprep.subr.bf16.mxu0 0
        %2553 = vmatpush1.bf16.msra.mxu0 0
        %2554 = vmatprep.subr.bf16.mxu0 0
        %2555 = vmatpush1.bf16.msra.mxu0 0
        %2556 = vmatprep.subr.bf16.mxu0 0
        %2557 = vmatpush1.bf16.msra.mxu0 0
        %2558 = vmatprep.subr.bf16.mxu0 0
        %2559 = vmatpush1.bf16.msra.mxu0 0
        %2560 = vmatprep.subr.bf16.mxu0 0
        %2561 = vmatpush1.bf16.msra.mxu0 0
        %2562 = vmatprep.subr.bf16.mxu0 0
        %2563 = vmatpush1.bf16.msra.mxu0 0
        %2564 = vmatprep.subr.bf16.mxu0 0
        %2565 = vmatpush1.bf16.msra.mxu0 0
        %2566 = vmatprep.mubr.bf16.mxu0 0
        %2567 = vmatmul.mubr.bf16.gmra.mrb[0].mxu0 %v2532
        %v2568 = vpop.f32.mrb[0].mxu0
        %v2569 = vadd.f32 0.0, %v2568
        %v2570 = vpop.f32.mrb[0].mxu0
        %v2571 = vpop.f32.mrb[0].mxu0
        %v2572 = vpop.f32.mrb[0].mxu0
        %2573 = vdwg.mxu0
        %v2578 = vunpack.c.l.b16 %v2405
        %v2579 = vunpack.c.l.b16 %v2406
        %v2580 = vunpack.c.l.b16 %v2407
        %v2581 = vunpack.c.l.b16 %v2408
        %v2582 = vpack.c.b16 %v2579, %v2578
        %v2583 = vpack.c.b16 %v2581, %v2580
        %v2587 = vsel %vm1956, %v2392, 0
        %2589 = vmatprep.subr.bf16.mxu0 0
        %2590 = vmatpush1.bf16.msra.mxu0 %v2582
        %2591 = vmatprep.subr.bf16.mxu0 0
        %2592 = vmatpush1.bf16.msra.mxu0 %v2583
        %2593 = vmatprep.subr.bf16.mxu0 0
        %2594 = vmatpush1.bf16.msra.mxu0 0
        %2595 = vmatprep.subr.bf16.mxu0 0
        %2596 = vmatpush1.bf16.msra.mxu0 0
        %2597 = vmatprep.subr.bf16.mxu0 0
        %2598 = vmatpush1.bf16.msra.mxu0 0
        %2599 = vmatprep.subr.bf16.mxu0 0
        %2600 = vmatpush1.bf16.msra.mxu0 0
        %2601 = vmatprep.subr.bf16.mxu0 0
        %2602 = vmatpush1.bf16.msra.mxu0 0
        %2603 = vmatprep.subr.bf16.mxu0 0
        %2604 = vmatpush1.bf16.msra.mxu0 0
        %2605 = vmatprep.subr.bf16.mxu0 0
        %2606 = vmatpush1.bf16.msra.mxu0 0
        %2607 = vmatprep.subr.bf16.mxu0 0
        %2608 = vmatpush1.bf16.msra.mxu0 0
        %2609 = vmatprep.subr.bf16.mxu0 0
        %2610 = vmatpush1.bf16.msra.mxu0 0
        %2611 = vmatprep.subr.bf16.mxu0 0
        %2612 = vmatpush1.bf16.msra.mxu0 0
        %2613 = vmatprep.subr.bf16.mxu0 0
        %2614 = vmatpush1.bf16.msra.mxu0 0
        %2615 = vmatprep.subr.bf16.mxu0 0
        %2616 = vmatpush1.bf16.msra.mxu0 0
        %2617 = vmatprep.subr.bf16.mxu0 0
        %2618 = vmatpush1.bf16.msra.mxu0 0
        %2619 = vmatprep.subr.bf16.mxu0 0
        %2620 = vmatpush1.bf16.msra.mxu0 0
        %2621 = vmatprep.mubr.bf16.mxu0 0
        %2622 = vmatmul.mubr.bf16.gmra.mrb[0].mxu0 %v2587
        %v2623 = vpop.f32.mrb[0].mxu0
        %v2624 = vadd.f32 0.0, %v2623
        %v2625 = vpop.f32.mrb[0].mxu0
        %v2626 = vpop.f32.mrb[0].mxu0
        %v2627 = vpop.f32.mrb[0].mxu0
        %2628 = vdwg.mxu0
        %v2629 = vadd.f32 %v2459, %v2514
        %v2630 = vadd.f32 %v2629, %v2569
        %v2631 = vadd.f32 %v2630, %v2624
        %v2632 = vld [vmem:[%s7] sm:$0x1]
        %v2634 = vlaneseq
        %v2635 = vshrl.u32 %v2634, 7
        %v2636 = vsub.s32 0, %v2635
        %v2637 = vrot.slane %v2632, %v2636
        %v2639 = vadd.f32 %v2631, %v2637
        %v2640 = vadd.f32 %v603, %v2639
        %v2641 = vld [vmem:[%s18] sm:$0x1]
        %v2642 = vld [vmem:[%s19] sm:$0x1]
        %2643 = vadd.xlane.f32.xlu0 %v2640
        %v2644 = vpop.xlane.xlu0 %2643
        %v2645 = vrcp.pop 128.0
        %v2646 = vmul.f32 %v2644, %v2645
        %v2647 = vsub.f32 %v2640, %v2646
        %v2648 = vmul.f32 %v2647, %v2647
        %2649 = vadd.xlane.f32.xlu0 %v2648
        %v2650 = vpop.xlane.xlu0 %2649
        %v2651 = vmul.f32 %v2650, %v2645
        %v2652 = vadd.f32 %v2651, 1e-05
        %v2653 = vrsqrt.pop %v2652
        %v2654 = vmul.f32 %v2647, %v2653
        %v2656 = vlaneseq
        %v2657 = vshrl.u32 %v2656, 7
        %v2658 = vsub.s32 0, %v2657
        %v2659 = vrot.slane %v2641, %v2658
        %v2661 = vmul.f32 %v2654, %v2659
        %v2663 = vlaneseq
        %v2664 = vshrl.u32 %v2663, 7
        %v2665 = vsub.s32 0, %v2664
        %v2666 = vrot.slane %v2642, %v2665
        %v2668 = vadd.f32 %v2661, %v2666
        %v2669 = vpack.c.bf16 %v2668, %v2668
        %v2670 = vld [vmem:[%s8] sm:$0xf]
        %v2671 = vld [vmem:[%s8 + $0x4] sm:$0xf]
        %v2672 = vld [vmem:[%s8 + $0x8] sm:$0xf]
        %v2673 = vld [vmem:[%s8 + $0xc] sm:$0xf]
        %v2674 = vld [vmem:[%s8 + $0x10] sm:$0xf]
        %v2675 = vld [vmem:[%s8 + $0x14] sm:$0xf]
        %v2676 = vld [vmem:[%s8 + $0x18] sm:$0xf]
        %v2677 = vld [vmem:[%s8 + $0x1c] sm:$0xf]
        %v2678 = vld [vmem:[%s8 + $0x20] sm:$0xf]
        %v2679 = vld [vmem:[%s8 + $0x24] sm:$0xf]
        %v2680 = vld [vmem:[%s8 + $0x28] sm:$0xf]
        %v2681 = vld [vmem:[%s8 + $0x2c] sm:$0xf]
        %v2682 = vld [vmem:[%s8 + $0x30] sm:$0xf]
        %v2683 = vld [vmem:[%s8 + $0x34] sm:$0xf]
        %v2684 = vld [vmem:[%s8 + $0x38] sm:$0xf]
        %v2685 = vld [vmem:[%s8 + $0x3c] sm:$0xf]
        %v2686 = vld [vmem:[%s8 + $0x40] sm:$0xf]
        %v2687 = vld [vmem:[%s8 + $0x44] sm:$0xf]
        %v2688 = vld [vmem:[%s8 + $0x48] sm:$0xf]
        %v2689 = vld [vmem:[%s8 + $0x4c] sm:$0xf]
        %v2690 = vld [vmem:[%s8 + $0x50] sm:$0xf]
        %v2691 = vld [vmem:[%s8 + $0x54] sm:$0xf]
        %v2692 = vld [vmem:[%s8 + $0x58] sm:$0xf]
        %v2693 = vld [vmem:[%s8 + $0x5c] sm:$0xf]
        %v2694 = vld [vmem:[%s8 + $0x60] sm:$0xf]
        %v2695 = vld [vmem:[%s8 + $0x64] sm:$0xf]
        %v2696 = vld [vmem:[%s8 + $0x68] sm:$0xf]
        %v2697 = vld [vmem:[%s8 + $0x6c] sm:$0xf]
        %v2698 = vld [vmem:[%s8 + $0x70] sm:$0xf]
        %v2699 = vld [vmem:[%s8 + $0x74] sm:$0xf]
        %v2700 = vld [vmem:[%s8 + $0x78] sm:$0xf]
        %v2701 = vld [vmem:[%s8 + $0x7c] sm:$0xf]
        %v2702 = vld [vmem:[%s8 + $0x80] sm:$0xf]
        %v2703 = vld [vmem:[%s8 + $0x84] sm:$0xf]
        %v2704 = vld [vmem:[%s8 + $0x88] sm:$0xf]
        %v2705 = vld [vmem:[%s8 + $0x8c] sm:$0xf]
        %v2706 = vld [vmem:[%s8 + $0x90] sm:$0xf]
        %v2707 = vld [vmem:[%s8 + $0x94] sm:$0xf]
        %v2708 = vld [vmem:[%s8 + $0x98] sm:$0xf]
        %v2709 = vld [vmem:[%s8 + $0x9c] sm:$0xf]
        %v2710 = vld [vmem:[%s8 + $0xa0] sm:$0xf]
        %v2711 = vld [vmem:[%s8 + $0xa4] sm:$0xf]
        %v2712 = vld [vmem:[%s8 + $0xa8] sm:$0xf]
        %v2713 = vld [vmem:[%s8 + $0xac] sm:$0xf]
        %v2714 = vld [vmem:[%s8 + $0xb0] sm:$0xf]
        %v2715 = vld [vmem:[%s8 + $0xb4] sm:$0xf]
        %v2716 = vld [vmem:[%s8 + $0xb8] sm:$0xf]
        %v2717 = vld [vmem:[%s8 + $0xbc] sm:$0xf]
        %v2718 = vld [vmem:[%s8 + $0xc0] sm:$0xf]
        %v2719 = vld [vmem:[%s8 + $0xc4] sm:$0xf]
        %v2720 = vld [vmem:[%s8 + $0xc8] sm:$0xf]
        %v2721 = vld [vmem:[%s8 + $0xcc] sm:$0xf]
        %v2722 = vld [vmem:[%s8 + $0xd0] sm:$0xf]
        %v2723 = vld [vmem:[%s8 + $0xd4] sm:$0xf]
        %v2724 = vld [vmem:[%s8 + $0xd8] sm:$0xf]
        %v2725 = vld [vmem:[%s8 + $0xdc] sm:$0xf]
        %v2726 = vld [vmem:[%s8 + $0xe0] sm:$0xf]
        %v2727 = vld [vmem:[%s8 + $0xe4] sm:$0xf]
        %v2728 = vld [vmem:[%s8 + $0xe8] sm:$0xf]
        %v2729 = vld [vmem:[%s8 + $0xec] sm:$0xf]
        %v2730 = vld [vmem:[%s8 + $0xf0] sm:$0xf]
        %v2731 = vld [vmem:[%s8 + $0xf4] sm:$0xf]
        %v2732 = vld [vmem:[%s8 + $0xf8] sm:$0xf]
        %v2733 = vld [vmem:[%s8 + $0xfc] sm:$0xf]
        %v2734 = vld [vmem:[%s9] sm:$0x1]
        %v2735 = vld [vmem:[%s9 + $0x1] sm:$0x1]
        %v2736 = vld [vmem:[%s9 + $0x2] sm:$0x1]
        %v2737 = vld [vmem:[%s9 + $0x3] sm:$0x1]
        %v2742 = vlaneseq
        %v2743 = vshrl.u32 %v2742, 7
        %v2744 = vsub.s32 0, %v2743
        %v2745 = vrot.slane %v2734, %v2744
        %v2746 = vlaneseq
        %v2747 = vshrl.u32 %v2746, 7
        %v2748 = vsub.s32 0, %v2747
        %v2749 = vrot.slane %v2735, %v2748
        %v2750 = vlaneseq
        %v2751 = vshrl.u32 %v2750, 7
        %v2752 = vsub.s32 0, %v2751
        %v2753 = vrot.slane %v2736, %v2752
        %v2754 = vlaneseq
        %v2755 = vshrl.u32 %v2754, 7
        %v2756 = vsub.s32 0, %v2755
        %v2757 = vrot.slane %v2737, %v2756
        %v2778 = vunpack.c.l.b16 %v2670
        %v2779 = vunpack.c.l.b16 %v2671
        %v2780 = vunpack.c.l.b16 %v2672
        %v2781 = vunpack.c.l.b16 %v2673
        %v2782 = vunpack.c.l.b16 %v2674
        %v2783 = vunpack.c.l.b16 %v2675
        %v2784 = vunpack.c.l.b16 %v2676
        %v2785 = vunpack.c.l.b16 %v2677
        %v2786 = vunpack.c.l.b16 %v2678
        %v2787 = vunpack.c.l.b16 %v2679
        %v2788 = vunpack.c.l.b16 %v2680
        %v2789 = vunpack.c.l.b16 %v2681
        %v2790 = vunpack.c.l.b16 %v2682
        %v2791 = vunpack.c.l.b16 %v2683
        %v2792 = vunpack.c.l.b16 %v2684
        %v2793 = vunpack.c.l.b16 %v2685
        %v2794 = vpack.c.b16 %v2779, %v2778
        %v2795 = vpack.c.b16 %v2781, %v2780
        %v2796 = vpack.c.b16 %v2783, %v2782
        %v2797 = vpack.c.b16 %v2785, %v2784
        %v2798 = vpack.c.b16 %v2787, %v2786
        %v2799 = vpack.c.b16 %v2789, %v2788
        %v2800 = vpack.c.b16 %v2791, %v2790
        %v2801 = vpack.c.b16 %v2793, %v2792
        %2810 = vmatprep.subr.bf16.mxu0 0
        %2811 = vmatpush1.bf16.msra.mxu0 %v2794
        %2812 = vmatprep.subr.bf16.mxu0 0
        %2813 = vmatpush1.bf16.msra.mxu0 %v2795
        %2814 = vmatprep.subr.bf16.mxu0 0
        %2815 = vmatpush1.bf16.msra.mxu0 %v2796
        %2816 = vmatprep.subr.bf16.mxu0 0
        %2817 = vmatpush1.bf16.msra.mxu0 %v2797
        %2818 = vmatprep.subr.bf16.mxu0 0
        %2819 = vmatpush1.bf16.msra.mxu0 %v2798
        %2820 = vmatprep.subr.bf16.mxu0 0
        %2821 = vmatpush1.bf16.msra.mxu0 %v2799
        %2822 = vmatprep.subr.bf16.mxu0 0
        %2823 = vmatpush1.bf16.msra.mxu0 %v2800
        %2824 = vmatprep.subr.bf16.mxu0 0
        %2825 = vmatpush1.bf16.msra.mxu0 %v2801
        %2826 = vmatprep.subr.bf16.mxu0 0
        %2827 = vmatpush1.bf16.msra.mxu0 0
        %2828 = vmatprep.subr.bf16.mxu0 0
        %2829 = vmatpush1.bf16.msra.mxu0 0
        %2830 = vmatprep.subr.bf16.mxu0 0
        %2831 = vmatpush1.bf16.msra.mxu0 0
        %2832 = vmatprep.subr.bf16.mxu0 0
        %2833 = vmatpush1.bf16.msra.mxu0 0
        %2834 = vmatprep.subr.bf16.mxu0 0
        %2835 = vmatpush1.bf16.msra.mxu0 0
        %2836 = vmatprep.subr.bf16.mxu0 0
        %2837 = vmatpush1.bf16.msra.mxu0 0
        %2838 = vmatprep.subr.bf16.mxu0 0
        %2839 = vmatpush1.bf16.msra.mxu0 0
        %2840 = vmatprep.subr.bf16.mxu0 0
        %2841 = vmatpush1.bf16.msra.mxu0 0
        %2842 = vmatprep.mubr.bf16.mxu0 0
        %2843 = vmatmul.mubr.bf16.gmra.mrb[0].mxu0 %v2669
        %v2844 = vpop.f32.mrb[0].mxu0
        %v2845 = vadd.f32 %v2745, %v2844
        %v2846 = vpop.f32.mrb[0].mxu0
        %v2847 = vpop.f32.mrb[0].mxu0
        %v2848 = vpop.f32.mrb[0].mxu0
        %2849 = vdwg.mxu0
        %v2866 = vunpack.c.l.b16 %v2686
        %v2867 = vunpack.c.l.b16 %v2687
        %v2868 = vunpack.c.l.b16 %v2688
        %v2869 = vunpack.c.l.b16 %v2689
        %v2870 = vunpack.c.l.b16 %v2690
        %v2871 = vunpack.c.l.b16 %v2691
        %v2872 = vunpack.c.l.b16 %v2692
        %v2873 = vunpack.c.l.b16 %v2693
        %v2874 = vunpack.c.l.b16 %v2694
        %v2875 = vunpack.c.l.b16 %v2695
        %v2876 = vunpack.c.l.b16 %v2696
        %v2877 = vunpack.c.l.b16 %v2697
        %v2878 = vunpack.c.l.b16 %v2698
        %v2879 = vunpack.c.l.b16 %v2699
        %v2880 = vunpack.c.l.b16 %v2700
        %v2881 = vunpack.c.l.b16 %v2701
        %v2882 = vpack.c.b16 %v2867, %v2866
        %v2883 = vpack.c.b16 %v2869, %v2868
        %v2884 = vpack.c.b16 %v2871, %v2870
        %v2885 = vpack.c.b16 %v2873, %v2872
        %v2886 = vpack.c.b16 %v2875, %v2874
        %v2887 = vpack.c.b16 %v2877, %v2876
        %v2888 = vpack.c.b16 %v2879, %v2878
        %v2889 = vpack.c.b16 %v2881, %v2880
        %2898 = vmatprep.subr.bf16.mxu0 0
        %2899 = vmatpush1.bf16.msra.mxu0 %v2882
        %2900 = vmatprep.subr.bf16.mxu0 0
        %2901 = vmatpush1.bf16.msra.mxu0 %v2883
        %2902 = vmatprep.subr.bf16.mxu0 0
        %2903 = vmatpush1.bf16.msra.mxu0 %v2884
        %2904 = vmatprep.subr.bf16.mxu0 0
        %2905 = vmatpush1.bf16.msra.mxu0 %v2885
        %2906 = vmatprep.subr.bf16.mxu0 0
        %2907 = vmatpush1.bf16.msra.mxu0 %v2886
        %2908 = vmatprep.subr.bf16.mxu0 0
        %2909 = vmatpush1.bf16.msra.mxu0 %v2887
        %2910 = vmatprep.subr.bf16.mxu0 0
        %2911 = vmatpush1.bf16.msra.mxu0 %v2888
        %2912 = vmatprep.subr.bf16.mxu0 0
        %2913 = vmatpush1.bf16.msra.mxu0 %v2889
        %2914 = vmatprep.subr.bf16.mxu0 0
        %2915 = vmatpush1.bf16.msra.mxu0 0
        %2916 = vmatprep.subr.bf16.mxu0 0
        %2917 = vmatpush1.bf16.msra.mxu0 0
        %2918 = vmatprep.subr.bf16.mxu0 0
        %2919 = vmatpush1.bf16.msra.mxu0 0
        %2920 = vmatprep.subr.bf16.mxu0 0
        %2921 = vmatpush1.bf16.msra.mxu0 0
        %2922 = vmatprep.subr.bf16.mxu0 0
        %2923 = vmatpush1.bf16.msra.mxu0 0
        %2924 = vmatprep.subr.bf16.mxu0 0
        %2925 = vmatpush1.bf16.msra.mxu0 0
        %2926 = vmatprep.subr.bf16.mxu0 0
        %2927 = vmatpush1.bf16.msra.mxu0 0
        %2928 = vmatprep.subr.bf16.mxu0 0
        %2929 = vmatpush1.bf16.msra.mxu0 0
        %2930 = vmatprep.mubr.bf16.mxu0 0
        %2931 = vmatmul.mubr.bf16.gmra.mrb[0].mxu0 %v2669
        %v2932 = vpop.f32.mrb[0].mxu0
        %v2933 = vadd.f32 %v2749, %v2932
        %v2934 = vpop.f32.mrb[0].mxu0
        %v2935 = vpop.f32.mrb[0].mxu0
        %v2936 = vpop.f32.mrb[0].mxu0
        %2937 = vdwg.mxu0
        %v2954 = vunpack.c.l.b16 %v2702
        %v2955 = vunpack.c.l.b16 %v2703
        %v2956 = vunpack.c.l.b16 %v2704
        %v2957 = vunpack.c.l.b16 %v2705
        %v2958 = vunpack.c.l.b16 %v2706
        %v2959 = vunpack.c.l.b16 %v2707
        %v2960 = vunpack.c.l.b16 %v2708
        %v2961 = vunpack.c.l.b16 %v2709
        %v2962 = vunpack.c.l.b16 %v2710
        %v2963 = vunpack.c.l.b16 %v2711
        %v2964 = vunpack.c.l.b16 %v2712
        %v2965 = vunpack.c.l.b16 %v2713
        %v2966 = vunpack.c.l.b16 %v2714
        %v2967 = vunpack.c.l.b16 %v2715
        %v2968 = vunpack.c.l.b16 %v2716
        %v2969 = vunpack.c.l.b16 %v2717
        %v2970 = vpack.c.b16 %v2955, %v2954
        %v2971 = vpack.c.b16 %v2957, %v2956
        %v2972 = vpack.c.b16 %v2959, %v2958
        %v2973 = vpack.c.b16 %v2961, %v2960
        %v2974 = vpack.c.b16 %v2963, %v2962
        %v2975 = vpack.c.b16 %v2965, %v2964
        %v2976 = vpack.c.b16 %v2967, %v2966
        %v2977 = vpack.c.b16 %v2969, %v2968
        %2986 = vmatprep.subr.bf16.mxu0 0
        %2987 = vmatpush1.bf16.msra.mxu0 %v2970
        %2988 = vmatprep.subr.bf16.mxu0 0
        %2989 = vmatpush1.bf16.msra.mxu0 %v2971
        %2990 = vmatprep.subr.bf16.mxu0 0
        %2991 = vmatpush1.bf16.msra.mxu0 %v2972
        %2992 = vmatprep.subr.bf16.mxu0 0
        %2993 = vmatpush1.bf16.msra.mxu0 %v2973
        %2994 = vmatprep.subr.bf16.mxu0 0
        %2995 = vmatpush1.bf16.msra.mxu0 %v2974
        %2996 = vmatprep.subr.bf16.mxu0 0
        %2997 = vmatpush1.bf16.msra.mxu0 %v2975
        %2998 = vmatprep.subr.bf16.mxu0 0
        %2999 = vmatpush1.bf16.msra.mxu0 %v2976
        %3000 = vmatprep.subr.bf16.mxu0 0
        %3001 = vmatpush1.bf16.msra.mxu0 %v2977
        %3002 = vmatprep.subr.bf16.mxu0 0
        %3003 = vmatpush1.bf16.msra.mxu0 0
        %3004 = vmatprep.subr.bf16.mxu0 0
        %3005 = vmatpush1.bf16.msra.mxu0 0
        %3006 = vmatprep.subr.bf16.mxu0 0
        %3007 = vmatpush1.bf16.msra.mxu0 0
        %3008 = vmatprep.subr.bf16.mxu0 0
        %3009 = vmatpush1.bf16.msra.mxu0 0
        %3010 = vmatprep.subr.bf16.mxu0 0
        %3011 = vmatpush1.bf16.msra.mxu0 0
        %3012 = vmatprep.subr.bf16.mxu0 0
        %3013 = vmatpush1.bf16.msra.mxu0 0
        %3014 = vmatprep.subr.bf16.mxu0 0
        %3015 = vmatpush1.bf16.msra.mxu0 0
        %3016 = vmatprep.subr.bf16.mxu0 0
        %3017 = vmatpush1.bf16.msra.mxu0 0
        %3018 = vmatprep.mubr.bf16.mxu0 0
        %3019 = vmatmul.mubr.bf16.gmra.mrb[0].mxu0 %v2669
        %v3020 = vpop.f32.mrb[0].mxu0
        %v3021 = vadd.f32 %v2753, %v3020
        %v3022 = vpop.f32.mrb[0].mxu0
        %v3023 = vpop.f32.mrb[0].mxu0
        %v3024 = vpop.f32.mrb[0].mxu0
        %3025 = vdwg.mxu0
        %v3042 = vunpack.c.l.b16 %v2718
        %v3043 = vunpack.c.l.b16 %v2719
        %v3044 = vunpack.c.l.b16 %v2720
        %v3045 = vunpack.c.l.b16 %v2721
        %v3046 = vunpack.c.l.b16 %v2722
        %v3047 = vunpack.c.l.b16 %v2723
        %v3048 = vunpack.c.l.b16 %v2724
        %v3049 = vunpack.c.l.b16 %v2725
        %v3050 = vunpack.c.l.b16 %v2726
        %v3051 = vunpack.c.l.b16 %v2727
        %v3052 = vunpack.c.l.b16 %v2728
        %v3053 = vunpack.c.l.b16 %v2729
        %v3054 = vunpack.c.l.b16 %v2730
        %v3055 = vunpack.c.l.b16 %v2731
        %v3056 = vunpack.c.l.b16 %v2732
        %v3057 = vunpack.c.l.b16 %v2733
        %v3058 = vpack.c.b16 %v3043, %v3042
        %v3059 = vpack.c.b16 %v3045, %v3044
        %v3060 = vpack.c.b16 %v3047, %v3046
        %v3061 = vpack.c.b16 %v3049, %v3048
        %v3062 = vpack.c.b16 %v3051, %v3050
        %v3063 = vpack.c.b16 %v3053, %v3052
        %v3064 = vpack.c.b16 %v3055, %v3054
        %v3065 = vpack.c.b16 %v3057, %v3056
        %3074 = vmatprep.subr.bf16.mxu0 0
        %3075 = vmatpush1.bf16.msra.mxu0 %v3058
        %3076 = vmatprep.subr.bf16.mxu0 0
        %3077 = vmatpush1.bf16.msra.mxu0 %v3059
        %3078 = vmatprep.subr.bf16.mxu0 0
        %3079 = vmatpush1.bf16.msra.mxu0 %v3060
        %3080 = vmatprep.subr.bf16.mxu0 0
        %3081 = vmatpush1.bf16.msra.mxu0 %v3061
        %3082 = vmatprep.subr.bf16.mxu0 0
        %3083 = vmatpush1.bf16.msra.mxu0 %v3062
        %3084 = vmatprep.subr.bf16.mxu0 0
        %3085 = vmatpush1.bf16.msra.mxu0 %v3063
        %3086 = vmatprep.subr.bf16.mxu0 0
        %3087 = vmatpush1.bf16.msra.mxu0 %v3064
        %3088 = vmatprep.subr.bf16.mxu0 0
        %3089 = vmatpush1.bf16.msra.mxu0 %v3065
        %3090 = vmatprep.subr.bf16.mxu0 0
        %3091 = vmatpush1.bf16.msra.mxu0 0
        %3092 = vmatprep.subr.bf16.mxu0 0
        %3093 = vmatpush1.bf16.msra.mxu0 0
        %3094 = vmatprep.subr.bf16.mxu0 0
        %3095 = vmatpush1.bf16.msra.mxu0 0
        %3096 = vmatprep.subr.bf16.mxu0 0
        %3097 = vmatpush1.bf16.msra.mxu0 0
        %3098 = vmatprep.subr.bf16.mxu0 0
        %3099 = vmatpush1.bf16.msra.mxu0 0
        %3100 = vmatprep.subr.bf16.mxu0 0
        %3101 = vmatpush1.bf16.msra.mxu0 0
        %3102 = vmatprep.subr.bf16.mxu0 0
        %3103 = vmatpush1.bf16.msra.mxu0 0
        %3104 = vmatprep.subr.bf16.mxu0 0
        %3105 = vmatpush1.bf16.msra.mxu0 0
        %3106 = vmatprep.mubr.bf16.mxu0 0
        %3107 = vmatmul.mubr.bf16.gmra.mrb[0].mxu0 %v2669
        %v3108 = vpop.f32.mrb[0].mxu0
        %v3109 = vadd.f32 %v2757, %v3108
        %v3110 = vpop.f32.mrb[0].mxu0
        %v3111 = vpop.f32.mrb[0].mxu0
        %v3112 = vpop.f32.mrb[0].mxu0
        %3113 = vdwg.mxu0
        %v3114 = vpack.c.bf16 %v604, %v604
        %v3115 = vld [vmem:[%s10] sm:$0xf]
        %v3116 = vld [vmem:[%s10 + $0x4] sm:$0xf]
        %v3117 = vld [vmem:[%s10 + $0x8] sm:$0xf]
        %v3118 = vld [vmem:[%s10 + $0xc] sm:$0xf]
        %v3119 = vld [vmem:[%s10 + $0x10] sm:$0xf]
        %v3120 = vld [vmem:[%s10 + $0x14] sm:$0xf]
        %v3121 = vld [vmem:[%s10 + $0x18] sm:$0xf]
        %v3122 = vld [vmem:[%s10 + $0x1c] sm:$0xf]
        %v3123 = vld [vmem:[%s10 + $0x20] sm:$0xf]
        %v3124 = vld [vmem:[%s10 + $0x24] sm:$0xf]
        %v3125 = vld [vmem:[%s10 + $0x28] sm:$0xf]
        %v3126 = vld [vmem:[%s10 + $0x2c] sm:$0xf]
        %v3127 = vld [vmem:[%s10 + $0x30] sm:$0xf]
        %v3128 = vld [vmem:[%s10 + $0x34] sm:$0xf]
        %v3129 = vld [vmem:[%s10 + $0x38] sm:$0xf]
        %v3130 = vld [vmem:[%s10 + $0x3c] sm:$0xf]
        %v3131 = vld [vmem:[%s10 + $0x40] sm:$0xf]
        %v3132 = vld [vmem:[%s10 + $0x44] sm:$0xf]
        %v3133 = vld [vmem:[%s10 + $0x48] sm:$0xf]
        %v3134 = vld [vmem:[%s10 + $0x4c] sm:$0xf]
        %v3135 = vld [vmem:[%s10 + $0x50] sm:$0xf]
        %v3136 = vld [vmem:[%s10 + $0x54] sm:$0xf]
        %v3137 = vld [vmem:[%s10 + $0x58] sm:$0xf]
        %v3138 = vld [vmem:[%s10 + $0x5c] sm:$0xf]
        %v3139 = vld [vmem:[%s10 + $0x60] sm:$0xf]
        %v3140 = vld [vmem:[%s10 + $0x64] sm:$0xf]
        %v3141 = vld [vmem:[%s10 + $0x68] sm:$0xf]
        %v3142 = vld [vmem:[%s10 + $0x6c] sm:$0xf]
        %v3143 = vld [vmem:[%s10 + $0x70] sm:$0xf]
        %v3144 = vld [vmem:[%s10 + $0x74] sm:$0xf]
        %v3145 = vld [vmem:[%s10 + $0x78] sm:$0xf]
        %v3146 = vld [vmem:[%s10 + $0x7c] sm:$0xf]
        %v3147 = vld [vmem:[%s10 + $0x80] sm:$0xf]
        %v3148 = vld [vmem:[%s10 + $0x84] sm:$0xf]
        %v3149 = vld [vmem:[%s10 + $0x88] sm:$0xf]
        %v3150 = vld [vmem:[%s10 + $0x8c] sm:$0xf]
        %v3151 = vld [vmem:[%s10 + $0x90] sm:$0xf]
        %v3152 = vld [vmem:[%s10 + $0x94] sm:$0xf]
        %v3153 = vld [vmem:[%s10 + $0x98] sm:$0xf]
        %v3154 = vld [vmem:[%s10 + $0x9c] sm:$0xf]
        %v3155 = vld [vmem:[%s10 + $0xa0] sm:$0xf]
        %v3156 = vld [vmem:[%s10 + $0xa4] sm:$0xf]
        %v3157 = vld [vmem:[%s10 + $0xa8] sm:$0xf]
        %v3158 = vld [vmem:[%s10 + $0xac] sm:$0xf]
        %v3159 = vld [vmem:[%s10 + $0xb0] sm:$0xf]
        %v3160 = vld [vmem:[%s10 + $0xb4] sm:$0xf]
        %v3161 = vld [vmem:[%s10 + $0xb8] sm:$0xf]
        %v3162 = vld [vmem:[%s10 + $0xbc] sm:$0xf]
        %v3163 = vld [vmem:[%s10 + $0xc0] sm:$0xf]
        %v3164 = vld [vmem:[%s10 + $0xc4] sm:$0xf]
        %v3165 = vld [vmem:[%s10 + $0xc8] sm:$0xf]
        %v3166 = vld [vmem:[%s10 + $0xcc] sm:$0xf]
        %v3167 = vld [vmem:[%s10 + $0xd0] sm:$0xf]
        %v3168 = vld [vmem:[%s10 + $0xd4] sm:$0xf]
        %v3169 = vld [vmem:[%s10 + $0xd8] sm:$0xf]
        %v3170 = vld [vmem:[%s10 + $0xdc] sm:$0xf]
        %v3171 = vld [vmem:[%s10 + $0xe0] sm:$0xf]
        %v3172 = vld [vmem:[%s10 + $0xe4] sm:$0xf]
        %v3173 = vld [vmem:[%s10 + $0xe8] sm:$0xf]
        %v3174 = vld [vmem:[%s10 + $0xec] sm:$0xf]
        %v3175 = vld [vmem:[%s10 + $0xf0] sm:$0xf]
        %v3176 = vld [vmem:[%s10 + $0xf4] sm:$0xf]
        %v3177 = vld [vmem:[%s10 + $0xf8] sm:$0xf]
        %v3178 = vld [vmem:[%s10 + $0xfc] sm:$0xf]
        %v3179 = vld [vmem:[%s10 + $0x100] sm:$0xf]
        %v3180 = vld [vmem:[%s10 + $0x104] sm:$0xf]
        %v3181 = vld [vmem:[%s10 + $0x108] sm:$0xf]
        %v3182 = vld [vmem:[%s10 + $0x10c] sm:$0xf]
        %v3183 = vld [vmem:[%s10 + $0x110] sm:$0xf]
        %v3184 = vld [vmem:[%s10 + $0x114] sm:$0xf]
        %v3185 = vld [vmem:[%s10 + $0x118] sm:$0xf]
        %v3186 = vld [vmem:[%s10 + $0x11c] sm:$0xf]
        %v3187 = vld [vmem:[%s10 + $0x120] sm:$0xf]
        %v3188 = vld [vmem:[%s10 + $0x124] sm:$0xf]
        %v3189 = vld [vmem:[%s10 + $0x128] sm:$0xf]
        %v3190 = vld [vmem:[%s10 + $0x12c] sm:$0xf]
        %v3191 = vld [vmem:[%s10 + $0x130] sm:$0xf]
        %v3192 = vld [vmem:[%s10 + $0x134] sm:$0xf]
        %v3193 = vld [vmem:[%s10 + $0x138] sm:$0xf]
        %v3194 = vld [vmem:[%s10 + $0x13c] sm:$0xf]
        %v3195 = vld [vmem:[%s10 + $0x140] sm:$0xf]
        %v3196 = vld [vmem:[%s10 + $0x144] sm:$0xf]
        %v3197 = vld [vmem:[%s10 + $0x148] sm:$0xf]
        %v3198 = vld [vmem:[%s10 + $0x14c] sm:$0xf]
        %v3199 = vld [vmem:[%s10 + $0x150] sm:$0xf]
        %v3200 = vld [vmem:[%s10 + $0x154] sm:$0xf]
        %v3201 = vld [vmem:[%s10 + $0x158] sm:$0xf]
        %v3202 = vld [vmem:[%s10 + $0x15c] sm:$0xf]
        %v3203 = vld [vmem:[%s10 + $0x160] sm:$0xf]
        %v3204 = vld [vmem:[%s10 + $0x164] sm:$0xf]
        %v3205 = vld [vmem:[%s10 + $0x168] sm:$0xf]
        %v3206 = vld [vmem:[%s10 + $0x16c] sm:$0xf]
        %v3207 = vld [vmem:[%s10 + $0x170] sm:$0xf]
        %v3208 = vld [vmem:[%s10 + $0x174] sm:$0xf]
        %v3209 = vld [vmem:[%s10 + $0x178] sm:$0xf]
        %v3210 = vld [vmem:[%s10 + $0x17c] sm:$0xf]
        %v3211 = vld [vmem:[%s10 + $0x180] sm:$0xf]
        %v3212 = vld [vmem:[%s10 + $0x184] sm:$0xf]
        %v3213 = vld [vmem:[%s10 + $0x188] sm:$0xf]
        %v3214 = vld [vmem:[%s10 + $0x18c] sm:$0xf]
        %v3215 = vld [vmem:[%s10 + $0x190] sm:$0xf]
        %v3216 = vld [vmem:[%s10 + $0x194] sm:$0xf]
        %v3217 = vld [vmem:[%s10 + $0x198] sm:$0xf]
        %v3218 = vld [vmem:[%s10 + $0x19c] sm:$0xf]
        %v3219 = vld [vmem:[%s10 + $0x1a0] sm:$0xf]
        %v3220 = vld [vmem:[%s10 + $0x1a4] sm:$0xf]
        %v3221 = vld [vmem:[%s10 + $0x1a8] sm:$0xf]
        %v3222 = vld [vmem:[%s10 + $0x1ac] sm:$0xf]
        %v3223 = vld [vmem:[%s10 + $0x1b0] sm:$0xf]
        %v3224 = vld [vmem:[%s10 + $0x1b4] sm:$0xf]
        %v3225 = vld [vmem:[%s10 + $0x1b8] sm:$0xf]
        %v3226 = vld [vmem:[%s10 + $0x1bc] sm:$0xf]
        %v3227 = vld [vmem:[%s10 + $0x1c0] sm:$0xf]
        %v3228 = vld [vmem:[%s10 + $0x1c4] sm:$0xf]
        %v3229 = vld [vmem:[%s10 + $0x1c8] sm:$0xf]
        %v3230 = vld [vmem:[%s10 + $0x1cc] sm:$0xf]
        %v3231 = vld [vmem:[%s10 + $0x1d0] sm:$0xf]
        %v3232 = vld [vmem:[%s10 + $0x1d4] sm:$0xf]
        %v3233 = vld [vmem:[%s10 + $0x1d8] sm:$0xf]
        %v3234 = vld [vmem:[%s10 + $0x1dc] sm:$0xf]
        %v3235 = vld [vmem:[%s10 + $0x1e0] sm:$0xf]
        %v3236 = vld [vmem:[%s10 + $0x1e4] sm:$0xf]
        %v3237 = vld [vmem:[%s10 + $0x1e8] sm:$0xf]
        %v3238 = vld [vmem:[%s10 + $0x1ec] sm:$0xf]
        %v3239 = vld [vmem:[%s10 + $0x1f0] sm:$0xf]
        %v3240 = vld [vmem:[%s10 + $0x1f4] sm:$0xf]
        %v3241 = vld [vmem:[%s10 + $0x1f8] sm:$0xf]
        %v3242 = vld [vmem:[%s10 + $0x1fc] sm:$0xf]
        %v3243 = vld [vmem:[%s11] sm:$0x1]
        %v3244 = vld [vmem:[%s11 + $0x1] sm:$0x1]
        %v3245 = vld [vmem:[%s11 + $0x2] sm:$0x1]
        %v3246 = vld [vmem:[%s11 + $0x3] sm:$0x1]
        %v3247 = vld [vmem:[%s11 + $0x4] sm:$0x1]
        %v3248 = vld [vmem:[%s11 + $0x5] sm:$0x1]
        %v3249 = vld [vmem:[%s11 + $0x6] sm:$0x1]
        %v3250 = vld [vmem:[%s11 + $0x7] sm:$0x1]
        %v3259 = vlaneseq
        %v3260 = vshrl.u32 %v3259, 7
        %v3261 = vsub.s32 0, %v3260
        %v3262 = vrot.slane %v3243, %v3261
        %v3263 = vlaneseq
        %v3264 = vshrl.u32 %v3263, 7
        %v3265 = vsub.s32 0, %v3264
        %v3266 = vrot.slane %v3244, %v3265
        %v3267 = vlaneseq
        %v3268 = vshrl.u32 %v3267, 7
        %v3269 = vsub.s32 0, %v3268
        %v3270 = vrot.slane %v3245, %v3269
        %v3271 = vlaneseq
        %v3272 = vshrl.u32 %v3271, 7
        %v3273 = vsub.s32 0, %v3272
        %v3274 = vrot.slane %v3246, %v3273
        %v3275 = vlaneseq
        %v3276 = vshrl.u32 %v3275, 7
        %v3277 = vsub.s32 0, %v3276
        %v3278 = vrot.slane %v3247, %v3277
        %v3279 = vlaneseq
        %v3280 = vshrl.u32 %v3279, 7
        %v3281 = vsub.s32 0, %v3280
        %v3282 = vrot.slane %v3248, %v3281
        %v3283 = vlaneseq
        %v3284 = vshrl.u32 %v3283, 7
        %v3285 = vsub.s32 0, %v3284
        %v3286 = vrot.slane %v3249, %v3285
        %v3287 = vlaneseq
        %v3288 = vshrl.u32 %v3287, 7
        %v3289 = vsub.s32 0, %v3288
        %v3290 = vrot.slane %v3250, %v3289
        %v3315 = vunpack.c.l.b16 %v3115
        %v3316 = vunpack.c.l.b16 %v3116
        %v3317 = vunpack.c.l.b16 %v3117
        %v3318 = vunpack.c.l.b16 %v3118
        %v3319 = vunpack.c.l.b16 %v3119
        %v3320 = vunpack.c.l.b16 %v3120
        %v3321 = vunpack.c.l.b16 %v3121
        %v3322 = vunpack.c.l.b16 %v3122
        %v3323 = vunpack.c.l.b16 %v3123
        %v3324 = vunpack.c.l.b16 %v3124
        %v3325 = vunpack.c.l.b16 %v3125
        %v3326 = vunpack.c.l.b16 %v3126
        %v3327 = vunpack.c.l.b16 %v3127
        %v3328 = vunpack.c.l.b16 %v3128
        %v3329 = vunpack.c.l.b16 %v3129
        %v3330 = vunpack.c.l.b16 %v3130
        %v3331 = vpack.c.b16 %v3316, %v3315
        %v3332 = vpack.c.b16 %v3318, %v3317
        %v3333 = vpack.c.b16 %v3320, %v3319
        %v3334 = vpack.c.b16 %v3322, %v3321
        %v3335 = vpack.c.b16 %v3324, %v3323
        %v3336 = vpack.c.b16 %v3326, %v3325
        %v3337 = vpack.c.b16 %v3328, %v3327
        %v3338 = vpack.c.b16 %v3330, %v3329
        %3347 = vmatprep.subr.bf16.mxu0 0
        %3348 = vmatpush1.bf16.msra.mxu0 %v3331
        %3349 = vmatprep.subr.bf16.mxu0 0
        %3350 = vmatpush1.bf16.msra.mxu0 %v3332
        %3351 = vmatprep.subr.bf16.mxu0 0
        %3352 = vmatpush1.bf16.msra.mxu0 %v3333
        %3353 = vmatprep.subr.bf16.mxu0 0
        %3354 = vmatpush1.bf16.msra.mxu0 %v3334
        %3355 = vmatprep.subr.bf16.mxu0 0
        %3356 = vmatpush1.bf16.msra.mxu0 %v3335
        %3357 = vmatprep.subr.bf16.mxu0 0
        %3358 = vmatpush1.bf16.msra.mxu0 %v3336
        %3359 = vmatprep.subr.bf16.mxu0 0
        %3360 = vmatpush1.bf16.msra.mxu0 %v3337
        %3361 = vmatprep.subr.bf16.mxu0 0
        %3362 = vmatpush1.bf16.msra.mxu0 %v3338
        %3363 = vmatprep.subr.bf16.mxu0 0
        %3364 = vmatpush1.bf16.msra.mxu0 0
        %3365 = vmatprep.subr.bf16.mxu0 0
        %3366 = vmatpush1.bf16.msra.mxu0 0
        %3367 = vmatprep.subr.bf16.mxu0 0
        %3368 = vmatpush1.bf16.msra.mxu0 0
        %3369 = vmatprep.subr.bf16.mxu0 0
        %3370 = vmatpush1.bf16.msra.mxu0 0
        %3371 = vmatprep.subr.bf16.mxu0 0
        %3372 = vmatpush1.bf16.msra.mxu0 0
        %3373 = vmatprep.subr.bf16.mxu0 0
        %3374 = vmatpush1.bf16.msra.mxu0 0
        %3375 = vmatprep.subr.bf16.mxu0 0
        %3376 = vmatpush1.bf16.msra.mxu0 0
        %3377 = vmatprep.subr.bf16.mxu0 0
        %3378 = vmatpush1.bf16.msra.mxu0 0
        %3379 = vmatprep.mubr.bf16.mxu0 0
        %3380 = vmatmul.mubr.bf16.gmra.mrb[0].mxu0 %v3114
        %v3381 = vpop.f32.mrb[0].mxu0
        %v3382 = vadd.f32 %v3262, %v3381
        %v3383 = vpop.f32.mrb[0].mxu0
        %v3384 = vpop.f32.mrb[0].mxu0
        %v3385 = vpop.f32.mrb[0].mxu0
        %3386 = vdwg.mxu0
        %v3403 = vunpack.c.l.b16 %v3131
        %v3404 = vunpack.c.l.b16 %v3132
        %v3405 = vunpack.c.l.b16 %v3133
        %v3406 = vunpack.c.l.b16 %v3134
        %v3407 = vunpack.c.l.b16 %v3135
        %v3408 = vunpack.c.l.b16 %v3136
        %v3409 = vunpack.c.l.b16 %v3137
        %v3410 = vunpack.c.l.b16 %v3138
        %v3411 = vunpack.c.l.b16 %v3139
        %v3412 = vunpack.c.l.b16 %v3140
        %v3413 = vunpack.c.l.b16 %v3141
        %v3414 = vunpack.c.l.b16 %v3142
        %v3415 = vunpack.c.l.b16 %v3143
        %v3416 = vunpack.c.l.b16 %v3144
        %v3417 = vunpack.c.l.b16 %v3145
        %v3418 = vunpack.c.l.b16 %v3146
        %v3419 = vpack.c.b16 %v3404, %v3403
        %v3420 = vpack.c.b16 %v3406, %v3405
        %v3421 = vpack.c.b16 %v3408, %v3407
        %v3422 = vpack.c.b16 %v3410, %v3409
        %v3423 = vpack.c.b16 %v3412, %v3411
        %v3424 = vpack.c.b16 %v3414, %v3413
        %v3425 = vpack.c.b16 %v3416, %v3415
        %v3426 = vpack.c.b16 %v3418, %v3417
        %3435 = vmatprep.subr.bf16.mxu0 0
        %3436 = vmatpush1.bf16.msra.mxu0 %v3419
        %3437 = vmatprep.subr.bf16.mxu0 0
        %3438 = vmatpush1.bf16.msra.mxu0 %v3420
        %3439 = vmatprep.subr.bf16.mxu0 0
        %3440 = vmatpush1.bf16.msra.mxu0 %v3421
        %3441 = vmatprep.subr.bf16.mxu0 0
        %3442 = vmatpush1.bf16.msra.mxu0 %v3422
        %3443 = vmatprep.subr.bf16.mxu0 0
        %3444 = vmatpush1.bf16.msra.mxu0 %v3423
        %3445 = vmatprep.subr.bf16.mxu0 0
        %3446 = vmatpush1.bf16.msra.mxu0 %v3424
        %3447 = vmatprep.subr.bf16.mxu0 0
        %3448 = vmatpush1.bf16.msra.mxu0 %v3425
        %3449 = vmatprep.subr.bf16.mxu0 0
        %3450 = vmatpush1.bf16.msra.mxu0 %v3426
        %3451 = vmatprep.subr.bf16.mxu0 0
        %3452 = vmatpush1.bf16.msra.mxu0 0
        %3453 = vmatprep.subr.bf16.mxu0 0
        %3454 = vmatpush1.bf16.msra.mxu0 0
        %3455 = vmatprep.subr.bf16.mxu0 0
        %3456 = vmatpush1.bf16.msra.mxu0 0
        %3457 = vmatprep.subr.bf16.mxu0 0
        %3458 = vmatpush1.bf16.msra.mxu0 0
        %3459 = vmatprep.subr.bf16.mxu0 0
        %3460 = vmatpush1.bf16.msra.mxu0 0
        %3461 = vmatprep.subr.bf16.mxu0 0
        %3462 = vmatpush1.bf16.msra.mxu0 0
        %3463 = vmatprep.subr.bf16.mxu0 0
        %3464 = vmatpush1.bf16.msra.mxu0 0
        %3465 = vmatprep.subr.bf16.mxu0 0
        %3466 = vmatpush1.bf16.msra.mxu0 0
        %3467 = vmatprep.mubr.bf16.mxu0 0
        %3468 = vmatmul.mubr.bf16.gmra.mrb[0].mxu0 %v3114
        %v3469 = vpop.f32.mrb[0].mxu0
        %v3470 = vadd.f32 %v3266, %v3469
        %v3471 = vpop.f32.mrb[0].mxu0
        %v3472 = vpop.f32.mrb[0].mxu0
        %v3473 = vpop.f32.mrb[0].mxu0
        %3474 = vdwg.mxu0
        %v3491 = vunpack.c.l.b16 %v3147
        %v3492 = vunpack.c.l.b16 %v3148
        %v3493 = vunpack.c.l.b16 %v3149
        %v3494 = vunpack.c.l.b16 %v3150
        %v3495 = vunpack.c.l.b16 %v3151
        %v3496 = vunpack.c.l.b16 %v3152
        %v3497 = vunpack.c.l.b16 %v3153
        %v3498 = vunpack.c.l.b16 %v3154
        %v3499 = vunpack.c.l.b16 %v3155
        %v3500 = vunpack.c.l.b16 %v3156
        %v3501 = vunpack.c.l.b16 %v3157
        %v3502 = vunpack.c.l.b16 %v3158
        %v3503 = vunpack.c.l.b16 %v3159
        %v3504 = vunpack.c.l.b16 %v3160
        %v3505 = vunpack.c.l.b16 %v3161
        %v3506 = vunpack.c.l.b16 %v3162
        %v3507 = vpack.c.b16 %v3492, %v3491
        %v3508 = vpack.c.b16 %v3494, %v3493
        %v3509 = vpack.c.b16 %v3496, %v3495
        %v3510 = vpack.c.b16 %v3498, %v3497
        %v3511 = vpack.c.b16 %v3500, %v3499
        %v3512 = vpack.c.b16 %v3502, %v3501
        %v3513 = vpack.c.b16 %v3504, %v3503
        %v3514 = vpack.c.b16 %v3506, %v3505
        %3523 = vmatprep.subr.bf16.mxu0 0
        %3524 = vmatpush1.bf16.msra.mxu0 %v3507
        %3525 = vmatprep.subr.bf16.mxu0 0
        %3526 = vmatpush1.bf16.msra.mxu0 %v3508
        %3527 = vmatprep.subr.bf16.mxu0 0
        %3528 = vmatpush1.bf16.msra.mxu0 %v3509
        %3529 = vmatprep.subr.bf16.mxu0 0
        %3530 = vmatpush1.bf16.msra.mxu0 %v3510
        %3531 = vmatprep.subr.bf16.mxu0 0
        %3532 = vmatpush1.bf16.msra.mxu0 %v3511
        %3533 = vmatprep.subr.bf16.mxu0 0
        %3534 = vmatpush1.bf16.msra.mxu0 %v3512
        %3535 = vmatprep.subr.bf16.mxu0 0
        %3536 = vmatpush1.bf16.msra.mxu0 %v3513
        %3537 = vmatprep.subr.bf16.mxu0 0
        %3538 = vmatpush1.bf16.msra.mxu0 %v3514
        %3539 = vmatprep.subr.bf16.mxu0 0
        %3540 = vmatpush1.bf16.msra.mxu0 0
        %3541 = vmatprep.subr.bf16.mxu0 0
        %3542 = vmatpush1.bf16.msra.mxu0 0
        %3543 = vmatprep.subr.bf16.mxu0 0
        %3544 = vmatpush1.bf16.msra.mxu0 0
        %3545 = vmatprep.subr.bf16.mxu0 0
        %3546 = vmatpush1.bf16.msra.mxu0 0
        %3547 = vmatprep.subr.bf16.mxu0 0
        %3548 = vmatpush1.bf16.msra.mxu0 0
        %3549 = vmatprep.subr.bf16.mxu0 0
        %3550 = vmatpush1.bf16.msra.mxu0 0
        %3551 = vmatprep.subr.bf16.mxu0 0
        %3552 = vmatpush1.bf16.msra.mxu0 0
        %3553 = vmatprep.subr.bf16.mxu0 0
        %3554 = vmatpush1.bf16.msra.mxu0 0
        %3555 = vmatprep.mubr.bf16.mxu0 0
        %3556 = vmatmul.mubr.bf16.gmra.mrb[0].mxu0 %v3114
        %v3557 = vpop.f32.mrb[0].mxu0
        %v3558 = vadd.f32 %v3270, %v3557
        %v3559 = vpop.f32.mrb[0].mxu0
        %v3560 = vpop.f32.mrb[0].mxu0
        %v3561 = vpop.f32.mrb[0].mxu0
        %3562 = vdwg.mxu0
        %v3579 = vunpack.c.l.b16 %v3163
        %v3580 = vunpack.c.l.b16 %v3164
        %v3581 = vunpack.c.l.b16 %v3165
        %v3582 = vunpack.c.l.b16 %v3166
        %v3583 = vunpack.c.l.b16 %v3167
        %v3584 = vunpack.c.l.b16 %v3168
        %v3585 = vunpack.c.l.b16 %v3169
        %v3586 = vunpack.c.l.b16 %v3170
        %v3587 = vunpack.c.l.b16 %v3171
        %v3588 = vunpack.c.l.b16 %v3172
        %v3589 = vunpack.c.l.b16 %v3173
        %v3590 = vunpack.c.l.b16 %v3174
        %v3591 = vunpack.c.l.b16 %v3175
        %v3592 = vunpack.c.l.b16 %v3176
        %v3593 = vunpack.c.l.b16 %v3177
        %v3594 = vunpack.c.l.b16 %v3178
        %v3595 = vpack.c.b16 %v3580, %v3579
        %v3596 = vpack.c.b16 %v3582, %v3581
        %v3597 = vpack.c.b16 %v3584, %v3583
        %v3598 = vpack.c.b16 %v3586, %v3585
        %v3599 = vpack.c.b16 %v3588, %v3587
        %v3600 = vpack.c.b16 %v3590, %v3589
        %v3601 = vpack.c.b16 %v3592, %v3591
        %v3602 = vpack.c.b16 %v3594, %v3593
        %3611 = vmatprep.subr.bf16.mxu0 0
        %3612 = vmatpush1.bf16.msra.mxu0 %v3595
        %3613 = vmatprep.subr.bf16.mxu0 0
        %3614 = vmatpush1.bf16.msra.mxu0 %v3596
        %3615 = vmatprep.subr.bf16.mxu0 0
        %3616 = vmatpush1.bf16.msra.mxu0 %v3597
        %3617 = vmatprep.subr.bf16.mxu0 0
        %3618 = vmatpush1.bf16.msra.mxu0 %v3598
        %3619 = vmatprep.subr.bf16.mxu0 0
        %3620 = vmatpush1.bf16.msra.mxu0 %v3599
        %3621 = vmatprep.subr.bf16.mxu0 0
        %3622 = vmatpush1.bf16.msra.mxu0 %v3600
        %3623 = vmatprep.subr.bf16.mxu0 0
        %3624 = vmatpush1.bf16.msra.mxu0 %v3601
        %3625 = vmatprep.subr.bf16.mxu0 0
        %3626 = vmatpush1.bf16.msra.mxu0 %v3602
        %3627 = vmatprep.subr.bf16.mxu0 0
        %3628 = vmatpush1.bf16.msra.mxu0 0
        %3629 = vmatprep.subr.bf16.mxu0 0
        %3630 = vmatpush1.bf16.msra.mxu0 0
        %3631 = vmatprep.subr.bf16.mxu0 0
        %3632 = vmatpush1.bf16.msra.mxu0 0
        %3633 = vmatprep.subr.bf16.mxu0 0
        %3634 = vmatpush1.bf16.msra.mxu0 0
        %3635 = vmatprep.subr.bf16.mxu0 0
        %3636 = vmatpush1.bf16.msra.mxu0 0
        %3637 = vmatprep.subr.bf16.mxu0 0
        %3638 = vmatpush1.bf16.msra.mxu0 0
        %3639 = vmatprep.subr.bf16.mxu0 0
        %3640 = vmatpush1.bf16.msra.mxu0 0
        %3641 = vmatprep.subr.bf16.mxu0 0
        %3642 = vmatpush1.bf16.msra.mxu0 0
        %3643 = vmatprep.mubr.bf16.mxu0 0
        %3644 = vmatmul.mubr.bf16.gmra.mrb[0].mxu0 %v3114
        %v3645 = vpop.f32.mrb[0].mxu0
        %v3646 = vadd.f32 %v3274, %v3645
        %v3647 = vpop.f32.mrb[0].mxu0
        %v3648 = vpop.f32.mrb[0].mxu0
        %v3649 = vpop.f32.mrb[0].mxu0
        %3650 = vdwg.mxu0
        %v3667 = vunpack.c.l.b16 %v3179
        %v3668 = vunpack.c.l.b16 %v3180
        %v3669 = vunpack.c.l.b16 %v3181
        %v3670 = vunpack.c.l.b16 %v3182
        %v3671 = vunpack.c.l.b16 %v3183
        %v3672 = vunpack.c.l.b16 %v3184
        %v3673 = vunpack.c.l.b16 %v3185
        %v3674 = vunpack.c.l.b16 %v3186
        %v3675 = vunpack.c.l.b16 %v3187
        %v3676 = vunpack.c.l.b16 %v3188
        %v3677 = vunpack.c.l.b16 %v3189
        %v3678 = vunpack.c.l.b16 %v3190
        %v3679 = vunpack.c.l.b16 %v3191
        %v3680 = vunpack.c.l.b16 %v3192
        %v3681 = vunpack.c.l.b16 %v3193
        %v3682 = vunpack.c.l.b16 %v3194
        %v3683 = vpack.c.b16 %v3668, %v3667
        %v3684 = vpack.c.b16 %v3670, %v3669
        %v3685 = vpack.c.b16 %v3672, %v3671
        %v3686 = vpack.c.b16 %v3674, %v3673
        %v3687 = vpack.c.b16 %v3676, %v3675
        %v3688 = vpack.c.b16 %v3678, %v3677
        %v3689 = vpack.c.b16 %v3680, %v3679
        %v3690 = vpack.c.b16 %v3682, %v3681
        %3699 = vmatprep.subr.bf16.mxu0 0
        %3700 = vmatpush1.bf16.msra.mxu0 %v3683
        %3701 = vmatprep.subr.bf16.mxu0 0
        %3702 = vmatpush1.bf16.msra.mxu0 %v3684
        %3703 = vmatprep.subr.bf16.mxu0 0
        %3704 = vmatpush1.bf16.msra.mxu0 %v3685
        %3705 = vmatprep.subr.bf16.mxu0 0
        %3706 = vmatpush1.bf16.msra.mxu0 %v3686
        %3707 = vmatprep.subr.bf16.mxu0 0
        %3708 = vmatpush1.bf16.msra.mxu0 %v3687
        %3709 = vmatprep.subr.bf16.mxu0 0
        %3710 = vmatpush1.bf16.msra.mxu0 %v3688
        %3711 = vmatprep.subr.bf16.mxu0 0
        %3712 = vmatpush1.bf16.msra.mxu0 %v3689
        %3713 = vmatprep.subr.bf16.mxu0 0
        %3714 = vmatpush1.bf16.msra.mxu0 %v3690
        %3715 = vmatprep.subr.bf16.mxu0 0
        %3716 = vmatpush1.bf16.msra.mxu0 0
        %3717 = vmatprep.subr.bf16.mxu0 0
        %3718 = vmatpush1.bf16.msra.mxu0 0
        %3719 = vmatprep.subr.bf16.mxu0 0
        %3720 = vmatpush1.bf16.msra.mxu0 0
        %3721 = vmatprep.subr.bf16.mxu0 0
        %3722 = vmatpush1.bf16.msra.mxu0 0
        %3723 = vmatprep.subr.bf16.mxu0 0
        %3724 = vmatpush1.bf16.msra.mxu0 0
        %3725 = vmatprep.subr.bf16.mxu0 0
        %3726 = vmatpush1.bf16.msra.mxu0 0
        %3727 = vmatprep.subr.bf16.mxu0 0
        %3728 = vmatpush1.bf16.msra.mxu0 0
        %3729 = vmatprep.subr.bf16.mxu0 0
        %3730 = vmatpush1.bf16.msra.mxu0 0
        %3731 = vmatprep.mubr.bf16.mxu0 0
        %3732 = vmatmul.mubr.bf16.gmra.mrb[0].mxu0 %v3114
        %v3733 = vpop.f32.mrb[0].mxu0
        %v3734 = vadd.f32 %v3278, %v3733
        %v3735 = vpop.f32.mrb[0].mxu0
        %v3736 = vpop.f32.mrb[0].mxu0
        %v3737 = vpop.f32.mrb[0].mxu0
        %3738 = vdwg.mxu0
        %v3755 = vunpack.c.l.b16 %v3195
        %v3756 = vunpack.c.l.b16 %v3196
        %v3757 = vunpack.c.l.b16 %v3197
        %v3758 = vunpack.c.l.b16 %v3198
        %v3759 = vunpack.c.l.b16 %v3199
        %v3760 = vunpack.c.l.b16 %v3200
        %v3761 = vunpack.c.l.b16 %v3201
        %v3762 = vunpack.c.l.b16 %v3202
        %v3763 = vunpack.c.l.b16 %v3203
        %v3764 = vunpack.c.l.b16 %v3204
        %v3765 = vunpack.c.l.b16 %v3205
        %v3766 = vunpack.c.l.b16 %v3206
        %v3767 = vunpack.c.l.b16 %v3207
        %v3768 = vunpack.c.l.b16 %v3208
        %v3769 = vunpack.c.l.b16 %v3209
        %v3770 = vunpack.c.l.b16 %v3210
        %v3771 = vpack.c.b16 %v3756, %v3755
        %v3772 = vpack.c.b16 %v3758, %v3757
        %v3773 = vpack.c.b16 %v3760, %v3759
        %v3774 = vpack.c.b16 %v3762, %v3761
        %v3775 = vpack.c.b16 %v3764, %v3763
        %v3776 = vpack.c.b16 %v3766, %v3765
        %v3777 = vpack.c.b16 %v3768, %v3767
        %v3778 = vpack.c.b16 %v3770, %v3769
        %3787 = vmatprep.subr.bf16.mxu0 0
        %3788 = vmatpush1.bf16.msra.mxu0 %v3771
        %3789 = vmatprep.subr.bf16.mxu0 0
        %3790 = vmatpush1.bf16.msra.mxu0 %v3772
        %3791 = vmatprep.subr.bf16.mxu0 0
        %3792 = vmatpush1.bf16.msra.mxu0 %v3773
        %3793 = vmatprep.subr.bf16.mxu0 0
        %3794 = vmatpush1.bf16.msra.mxu0 %v3774
        %3795 = vmatprep.subr.bf16.mxu0 0
        %3796 = vmatpush1.bf16.msra.mxu0 %v3775
        %3797 = vmatprep.subr.bf16.mxu0 0
        %3798 = vmatpush1.bf16.msra.mxu0 %v3776
        %3799 = vmatprep.subr.bf16.mxu0 0
        %3800 = vmatpush1.bf16.msra.mxu0 %v3777
        %3801 = vmatprep.subr.bf16.mxu0 0
        %3802 = vmatpush1.bf16.msra.mxu0 %v3778
        %3803 = vmatprep.subr.bf16.mxu0 0
        %3804 = vmatpush1.bf16.msra.mxu0 0
        %3805 = vmatprep.subr.bf16.mxu0 0
        %3806 = vmatpush1.bf16.msra.mxu0 0
        %3807 = vmatprep.subr.bf16.mxu0 0
        %3808 = vmatpush1.bf16.msra.mxu0 0
        %3809 = vmatprep.subr.bf16.mxu0 0
        %3810 = vmatpush1.bf16.msra.mxu0 0
        %3811 = vmatprep.subr.bf16.mxu0 0
        %3812 = vmatpush1.bf16.msra.mxu0 0
        %3813 = vmatprep.subr.bf16.mxu0 0
        %3814 = vmatpush1.bf16.msra.mxu0 0
        %3815 = vmatprep.subr.bf16.mxu0 0
        %3816 = vmatpush1.bf16.msra.mxu0 0
        %3817 = vmatprep.subr.bf16.mxu0 0
        %3818 = vmatpush1.bf16.msra.mxu0 0
        %3819 = vmatprep.mubr.bf16.mxu0 0
        %3820 = vmatmul.mubr.bf16.gmra.mrb[0].mxu0 %v3114
        %v3821 = vpop.f32.mrb[0].mxu0
        %v3822 = vadd.f32 %v3282, %v3821
        %v3823 = vpop.f32.mrb[0].mxu0
        %v3824 = vpop.f32.mrb[0].mxu0
        %v3825 = vpop.f32.mrb[0].mxu0
        %3826 = vdwg.mxu0
        %v3843 = vunpack.c.l.b16 %v3211
        %v3844 = vunpack.c.l.b16 %v3212
        %v3845 = vunpack.c.l.b16 %v3213
        %v3846 = vunpack.c.l.b16 %v3214
        %v3847 = vunpack.c.l.b16 %v3215
        %v3848 = vunpack.c.l.b16 %v3216
        %v3849 = vunpack.c.l.b16 %v3217
        %v3850 = vunpack.c.l.b16 %v3218
        %v3851 = vunpack.c.l.b16 %v3219
        %v3852 = vunpack.c.l.b16 %v3220
        %v3853 = vunpack.c.l.b16 %v3221
        %v3854 = vunpack.c.l.b16 %v3222
        %v3855 = vunpack.c.l.b16 %v3223
        %v3856 = vunpack.c.l.b16 %v3224
        %v3857 = vunpack.c.l.b16 %v3225
        %v3858 = vunpack.c.l.b16 %v3226
        %v3859 = vpack.c.b16 %v3844, %v3843
        %v3860 = vpack.c.b16 %v3846, %v3845
        %v3861 = vpack.c.b16 %v3848, %v3847
        %v3862 = vpack.c.b16 %v3850, %v3849
        %v3863 = vpack.c.b16 %v3852, %v3851
        %v3864 = vpack.c.b16 %v3854, %v3853
        %v3865 = vpack.c.b16 %v3856, %v3855
        %v3866 = vpack.c.b16 %v3858, %v3857
        %3875 = vmatprep.subr.bf16.mxu0 0
        %3876 = vmatpush1.bf16.msra.mxu0 %v3859
        %3877 = vmatprep.subr.bf16.mxu0 0
        %3878 = vmatpush1.bf16.msra.mxu0 %v3860
        %3879 = vmatprep.subr.bf16.mxu0 0
        %3880 = vmatpush1.bf16.msra.mxu0 %v3861
        %3881 = vmatprep.subr.bf16.mxu0 0
        %3882 = vmatpush1.bf16.msra.mxu0 %v3862
        %3883 = vmatprep.subr.bf16.mxu0 0
        %3884 = vmatpush1.bf16.msra.mxu0 %v3863
        %3885 = vmatprep.subr.bf16.mxu0 0
        %3886 = vmatpush1.bf16.msra.mxu0 %v3864
        %3887 = vmatprep.subr.bf16.mxu0 0
        %3888 = vmatpush1.bf16.msra.mxu0 %v3865
        %3889 = vmatprep.subr.bf16.mxu0 0
        %3890 = vmatpush1.bf16.msra.mxu0 %v3866
        %3891 = vmatprep.subr.bf16.mxu0 0
        %3892 = vmatpush1.bf16.msra.mxu0 0
        %3893 = vmatprep.subr.bf16.mxu0 0
        %3894 = vmatpush1.bf16.msra.mxu0 0
        %3895 = vmatprep.subr.bf16.mxu0 0
        %3896 = vmatpush1.bf16.msra.mxu0 0
        %3897 = vmatprep.subr.bf16.mxu0 0
        %3898 = vmatpush1.bf16.msra.mxu0 0
        %3899 = vmatprep.subr.bf16.mxu0 0
        %3900 = vmatpush1.bf16.msra.mxu0 0
        %3901 = vmatprep.subr.bf16.mxu0 0
        %3902 = vmatpush1.bf16.msra.mxu0 0
        %3903 = vmatprep.subr.bf16.mxu0 0
        %3904 = vmatpush1.bf16.msra.mxu0 0
        %3905 = vmatprep.subr.bf16.mxu0 0
        %3906 = vmatpush1.bf16.msra.mxu0 0
        %3907 = vmatprep.mubr.bf16.mxu0 0
        %3908 = vmatmul.mubr.bf16.gmra.mrb[0].mxu0 %v3114
        %v3909 = vpop.f32.mrb[0].mxu0
        %v3910 = vadd.f32 %v3286, %v3909
        %v3911 = vpop.f32.mrb[0].mxu0
        %v3912 = vpop.f32.mrb[0].mxu0
        %v3913 = vpop.f32.mrb[0].mxu0
        %3914 = vdwg.mxu0
        %v3931 = vunpack.c.l.b16 %v3227
        %v3932 = vunpack.c.l.b16 %v3228
        %v3933 = vunpack.c.l.b16 %v3229
        %v3934 = vunpack.c.l.b16 %v3230
        %v3935 = vunpack.c.l.b16 %v3231
        %v3936 = vunpack.c.l.b16 %v3232
        %v3937 = vunpack.c.l.b16 %v3233
        %v3938 = vunpack.c.l.b16 %v3234
        %v3939 = vunpack.c.l.b16 %v3235
        %v3940 = vunpack.c.l.b16 %v3236
        %v3941 = vunpack.c.l.b16 %v3237
        %v3942 = vunpack.c.l.b16 %v3238
        %v3943 = vunpack.c.l.b16 %v3239
        %v3944 = vunpack.c.l.b16 %v3240
        %v3945 = vunpack.c.l.b16 %v3241
        %v3946 = vunpack.c.l.b16 %v3242
        %v3947 = vpack.c.b16 %v3932, %v3931
        %v3948 = vpack.c.b16 %v3934, %v3933
        %v3949 = vpack.c.b16 %v3936, %v3935
        %v3950 = vpack.c.b16 %v3938, %v3937
        %v3951 = vpack.c.b16 %v3940, %v3939
        %v3952 = vpack.c.b16 %v3942, %v3941
        %v3953 = vpack.c.b16 %v3944, %v3943
        %v3954 = vpack.c.b16 %v3946, %v3945
        %3963 = vmatprep.subr.bf16.mxu0 0
        %3964 = vmatpush1.bf16.msra.mxu0 %v3947
        %3965 = vmatprep.subr.bf16.mxu0 0
        %3966 = vmatpush1.bf16.msra.mxu0 %v3948
        %3967 = vmatprep.subr.bf16.mxu0 0
        %3968 = vmatpush1.bf16.msra.mxu0 %v3949
        %3969 = vmatprep.subr.bf16.mxu0 0
        %3970 = vmatpush1.bf16.msra.mxu0 %v3950
        %3971 = vmatprep.subr.bf16.mxu0 0
        %3972 = vmatpush1.bf16.msra.mxu0 %v3951
        %3973 = vmatprep.subr.bf16.mxu0 0
        %3974 = vmatpush1.bf16.msra.mxu0 %v3952
        %3975 = vmatprep.subr.bf16.mxu0 0
        %3976 = vmatpush1.bf16.msra.mxu0 %v3953
        %3977 = vmatprep.subr.bf16.mxu0 0
        %3978 = vmatpush1.bf16.msra.mxu0 %v3954
        %3979 = vmatprep.subr.bf16.mxu0 0
        %3980 = vmatpush1.bf16.msra.mxu0 0
        %3981 = vmatprep.subr.bf16.mxu0 0
        %3982 = vmatpush1.bf16.msra.mxu0 0
        %3983 = vmatprep.subr.bf16.mxu0 0
        %3984 = vmatpush1.bf16.msra.mxu0 0
        %3985 = vmatprep.subr.bf16.mxu0 0
        %3986 = vmatpush1.bf16.msra.mxu0 0
        %3987 = vmatprep.subr.bf16.mxu0 0
        %3988 = vmatpush1.bf16.msra.mxu0 0
        %3989 = vmatprep.subr.bf16.mxu0 0
        %3990 = vmatpush1.bf16.msra.mxu0 0
        %3991 = vmatprep.subr.bf16.mxu0 0
        %3992 = vmatpush1.bf16.msra.mxu0 0
        %3993 = vmatprep.subr.bf16.mxu0 0
        %3994 = vmatpush1.bf16.msra.mxu0 0
        %3995 = vmatprep.mubr.bf16.mxu0 0
        %3996 = vmatmul.mubr.bf16.gmra.mrb[0].mxu0 %v3114
        %v3997 = vpop.f32.mrb[0].mxu0
        %v3998 = vadd.f32 %v3290, %v3997
        %v3999 = vpop.f32.mrb[0].mxu0
        %v4000 = vpop.f32.mrb[0].mxu0
        %v4001 = vpop.f32.mrb[0].mxu0
        %4002 = vdwg.mxu0
        %v4003 = vpack.c.bf16 %v2845, %v2845
        %v4004 = vpack.c.bf16 %v2933, %v2933
        %v4005 = vpack.c.bf16 %v3021, %v3021
        %v4006 = vpack.c.bf16 %v3109, %v3109
        %v4007 = vpack.c.bf16 %v3382, %v3382
        %v4008 = vpack.c.bf16 %v3470, %v3470
        %v4009 = vpack.c.bf16 %v3558, %v3558
        %v4010 = vpack.c.bf16 %v3646, %v3646
        %v4012 = vsel %vm1956, %v4003, 0
        %v4015 = vsel %vm1956, %v4007, 0
        %4017 = vmatprep.subr.bf16.mxu0 0
        %4018 = vmatpush1.bf16.xpose.msra.mxu0 %v4015
        %4019 = vmatprep.subr.bf16.mxu0 0
        %4020 = vmatpush1.bf16.xpose.msra.mxu0 0
        %4021 = vmatprep.subr.bf16.mxu0 0
        %4022 = vmatpush1.bf16.xpose.msra.mxu0 0
        %4023 = vmatprep.subr.bf16.mxu0 0
        %4024 = vmatpush1.bf16.xpose.msra.mxu0 0
        %4025 = vmatprep.subr.bf16.mxu0 0
        %4026 = vmatpush1.bf16.xpose.msra.mxu0 0
        %4027 = vmatprep.subr.bf16.mxu0 0
        %4028 = vmatpush1.bf16.xpose.msra.mxu0 0
        %4029 = vmatprep.subr.bf16.mxu0 0
        %4030 = vmatpush1.bf16.xpose.msra.mxu0 0
        %4031 = vmatprep.subr.bf16.mxu0 0
        %4032 = vmatpush1.bf16.xpose.msra.mxu0 0
        %4033 = vmatprep.subr.bf16.mxu0 0
        %4034 = vmatpush1.bf16.xpose.msra.mxu0 0
        %4035 = vmatprep.subr.bf16.mxu0 0
        %4036 = vmatpush1.bf16.xpose.msra.mxu0 0
        %4037 = vmatprep.subr.bf16.mxu0 0
        %4038 = vmatpush1.bf16.xpose.msra.mxu0 0
        %4039 = vmatprep.subr.bf16.mxu0 0
        %4040 = vmatpush1.bf16.xpose.msra.mxu0 0
        %4041 = vmatprep.subr.bf16.mxu0 0
        %4042 = vmatpush1.bf16.xpose.msra.mxu0 0
        %4043 = vmatprep.subr.bf16.mxu0 0
        %4044 = vmatpush1.bf16.xpose.msra.mxu0 0
        %4045 = vmatprep.subr.bf16.mxu0 0
        %4046 = vmatpush1.bf16.xpose.msra.mxu0 0
        %4047 = vmatprep.subr.bf16.mxu0 0
        %4048 = vmatpush1.bf16.xpose.msra.mxu0 0
        %4049 = vmatprep.mubr.bf16.mxu0 0
        %4050 = vmatmul.mubr.bf16.gmra.mrb[0].mxu0 %v4012
        %v4051 = vpop.f32.mrb[0].mxu0
        %v4052 = vadd.f32 0.0, %v4051
        %v4053 = vpop.f32.mrb[0].mxu0
        %v4054 = vpop.f32.mrb[0].mxu0
        %v4055 = vpop.f32.mrb[0].mxu0
        %4056 = vdwg.mxu0
        %v4058 = vsel %vm1956, %v4004, 0
        %v4061 = vsel %vm1956, %v4008, 0
        %4063 = vmatprep.subr.bf16.mxu0 0
        %4064 = vmatpush1.bf16.xpose.msra.mxu0 %v4061
        %4065 = vmatprep.subr.bf16.mxu0 0
        %4066 = vmatpush1.bf16.xpose.msra.mxu0 0
        %4067 = vmatprep.subr.bf16.mxu0 0
        %4068 = vmatpush1.bf16.xpose.msra.mxu0 0
        %4069 = vmatprep.subr.bf16.mxu0 0
        %4070 = vmatpush1.bf16.xpose.msra.mxu0 0
        %4071 = vmatprep.subr.bf16.mxu0 0
        %4072 = vmatpush1.bf16.xpose.msra.mxu0 0
        %4073 = vmatprep.subr.bf16.mxu0 0
        %4074 = vmatpush1.bf16.xpose.msra.mxu0 0
        %4075 = vmatprep.subr.bf16.mxu0 0
        %4076 = vmatpush1.bf16.xpose.msra.mxu0 0
        %4077 = vmatprep.subr.bf16.mxu0 0
        %4078 = vmatpush1.bf16.xpose.msra.mxu0 0
        %4079 = vmatprep.subr.bf16.mxu0 0
        %4080 = vmatpush1.bf16.xpose.msra.mxu0 0
        %4081 = vmatprep.subr.bf16.mxu0 0
        %4082 = vmatpush1.bf16.xpose.msra.mxu0 0
        %4083 = vmatprep.subr.bf16.mxu0 0
        %4084 = vmatpush1.bf16.xpose.msra.mxu0 0
        %4085 = vmatprep.subr.bf16.mxu0 0
        %4086 = vmatpush1.bf16.xpose.msra.mxu0 0
        %4087 = vmatprep.subr.bf16.mxu0 0
        %4088 = vmatpush1.bf16.xpose.msra.mxu0 0
        %4089 = vmatprep.subr.bf16.mxu0 0
        %4090 = vmatpush1.bf16.xpose.msra.mxu0 0
        %4091 = vmatprep.subr.bf16.mxu0 0
        %4092 = vmatpush1.bf16.xpose.msra.mxu0 0
        %4093 = vmatprep.subr.bf16.mxu0 0
        %4094 = vmatpush1.bf16.xpose.msra.mxu0 0
        %4095 = vmatprep.mubr.bf16.mxu0 0
        %4096 = vmatmul.mubr.bf16.gmra.mrb[0].mxu0 %v4058
        %v4097 = vpop.f32.mrb[0].mxu0
        %v4098 = vadd.f32 0.0, %v4097
        %v4099 = vpop.f32.mrb[0].mxu0
        %v4100 = vpop.f32.mrb[0].mxu0
        %v4101 = vpop.f32.mrb[0].mxu0
        %4102 = vdwg.mxu0
        %v4104 = vsel %vm1956, %v4005, 0
        %v4107 = vsel %vm1956, %v4009, 0
        %4109 = vmatprep.subr.bf16.mxu0 0
        %4110 = vmatpush1.bf16.xpose.msra.mxu0 %v4107
        %4111 = vmatprep.subr.bf16.mxu0 0
        %4112 = vmatpush1.bf16.xpose.msra.mxu0 0
        %4113 = vmatprep.subr.bf16.mxu0 0
        %4114 = vmatpush1.bf16.xpose.msra.mxu0 0
        %4115 = vmatprep.subr.bf16.mxu0 0
        %4116 = vmatpush1.bf16.xpose.msra.mxu0 0
        %4117 = vmatprep.subr.bf16.mxu0 0
        %4118 = vmatpush1.bf16.xpose.msra.mxu0 0
        %4119 = vmatprep.subr.bf16.mxu0 0
        %4120 = vmatpush1.bf16.xpose.msra.mxu0 0
        %4121 = vmatprep.subr.bf16.mxu0 0
        %4122 = vmatpush1.bf16.xpose.msra.mxu0 0
        %4123 = vmatprep.subr.bf16.mxu0 0
        %4124 = vmatpush1.bf16.xpose.msra.mxu0 0
        %4125 = vmatprep.subr.bf16.mxu0 0
        %4126 = vmatpush1.bf16.xpose.msra.mxu0 0
        %4127 = vmatprep.subr.bf16.mxu0 0
        %4128 = vmatpush1.bf16.xpose.msra.mxu0 0
        %4129 = vmatprep.subr.bf16.mxu0 0
        %4130 = vmatpush1.bf16.xpose.msra.mxu0 0
        %4131 = vmatprep.subr.bf16.mxu0 0
        %4132 = vmatpush1.bf16.xpose.msra.mxu0 0
        %4133 = vmatprep.subr.bf16.mxu0 0
        %4134 = vmatpush1.bf16.xpose.msra.mxu0 0
        %4135 = vmatprep.subr.bf16.mxu0 0
        %4136 = vmatpush1.bf16.xpose.msra.mxu0 0
        %4137 = vmatprep.subr.bf16.mxu0 0
        %4138 = vmatpush1.bf16.xpose.msra.mxu0 0
        %4139 = vmatprep.subr.bf16.mxu0 0
        %4140 = vmatpush1.bf16.xpose.msra.mxu0 0
        %4141 = vmatprep.mubr.bf16.mxu0 0
        %4142 = vmatmul.mubr.bf16.gmra.mrb[0].mxu0 %v4104
        %v4143 = vpop.f32.mrb[0].mxu0
        %v4144 = vadd.f32 0.0, %v4143
        %v4145 = vpop.f32.mrb[0].mxu0
        %v4146 = vpop.f32.mrb[0].mxu0
        %v4147 = vpop.f32.mrb[0].mxu0
        %4148 = vdwg.mxu0
        %v4150 = vsel %vm1956, %v4006, 0
        %v4153 = vsel %vm1956, %v4010, 0
        %4155 = vmatprep.subr.bf16.mxu0 0
        %4156 = vmatpush1.bf16.xpose.msra.mxu0 %v4153
        %4157 = vmatprep.subr.bf16.mxu0 0
        %4158 = vmatpush1.bf16.xpose.msra.mxu0 0
        %4159 = vmatprep.subr.bf16.mxu0 0
        %4160 = vmatpush1.bf16.xpose.msra.mxu0 0
        %4161 = vmatprep.subr.bf16.mxu0 0
        %4162 = vmatpush1.bf16.xpose.msra.mxu0 0
        %4163 = vmatprep.subr.bf16.mxu0 0
        %4164 = vmatpush1.bf16.xpose.msra.mxu0 0
        %4165 = vmatprep.subr.bf16.mxu0 0
        %4166 = vmatpush1.bf16.xpose.msra.mxu0 0
        %4167 = vmatprep.subr.bf16.mxu0 0
        %4168 = vmatpush1.bf16.xpose.msra.mxu0 0
        %4169 = vmatprep.subr.bf16.mxu0 0
        %4170 = vmatpush1.bf16.xpose.msra.mxu0 0
        %4171 = vmatprep.subr.bf16.mxu0 0
        %4172 = vmatpush1.bf16.xpose.msra.mxu0 0
        %4173 = vmatprep.subr.bf16.mxu0 0
        %4174 = vmatpush1.bf16.xpose.msra.mxu0 0
        %4175 = vmatprep.subr.bf16.mxu0 0
        %4176 = vmatpush1.bf16.xpose.msra.mxu0 0
        %4177 = vmatprep.subr.bf16.mxu0 0
        %4178 = vmatpush1.bf16.xpose.msra.mxu0 0
        %4179 = vmatprep.subr.bf16.mxu0 0
        %4180 = vmatpush1.bf16.xpose.msra.mxu0 0
        %4181 = vmatprep.subr.bf16.mxu0 0
        %4182 = vmatpush1.bf16.xpose.msra.mxu0 0
        %4183 = vmatprep.subr.bf16.mxu0 0
        %4184 = vmatpush1.bf16.xpose.msra.mxu0 0
        %4185 = vmatprep.subr.bf16.mxu0 0
        %4186 = vmatpush1.bf16.xpose.msra.mxu0 0
        %4187 = vmatprep.mubr.bf16.mxu0 0
        %4188 = vmatmul.mubr.bf16.gmra.mrb[0].mxu0 %v4150
        %v4189 = vpop.f32.mrb[0].mxu0
        %v4190 = vadd.f32 0.0, %v4189
        %v4191 = vpop.f32.mrb[0].mxu0
        %v4192 = vpop.f32.mrb[0].mxu0
        %v4193 = vpop.f32.mrb[0].mxu0
        %4194 = vdwg.mxu0
        %v4195 = vmul.f32 %v4052, 0.17677669
        %v4196 = vmul.f32 %v4098, 0.17677669
        %v4197 = vmul.f32 %v4144, 0.17677669
        %v4198 = vmul.f32 %v4190, 0.17677669
        %v4199 = vsel %vm614, 1, 0
        %vm4200 = vcmp.eq.s32.totalorder %v4199, 1
        %v4201 = vsel %vm4200, -1e+10, %v4195
        %v4202 = vsel %vm4200, -1e+10, %v4196
        %v4203 = vsel %vm4200, -1e+10, %v4197
        %v4204 = vsel %vm4200, -1e+10, %v4198
        %v4205 = vsel %vm2151, %v4201, -inf
        %4206 = vmax.xlane.f32.xlu0 %v4205
        %v4207 = vpop.xlane.xlu0 %4206
        %v4208 = vsel %vm2151, %v4202, -inf
        %4209 = vmax.xlane.f32.xlu0 %v4208
        %v4210 = vpop.xlane.xlu0 %4209
        %v4211 = vsel %vm2151, %v4203, -inf
        %4212 = vmax.xlane.f32.xlu0 %v4211
        %v4213 = vpop.xlane.xlu0 %4212
        %v4214 = vsel %vm2151, %v4204, -inf
        %4215 = vmax.xlane.f32.xlu0 %v4214
        %v4216 = vpop.xlane.xlu0 %4215
        %v4217 = vsub.f32 %v4201, %v4207
        %v4218 = vsub.f32 %v4202, %v4210
        %v4219 = vsub.f32 %v4203, %v4213
        %v4220 = vsub.f32 %v4204, %v4216
        %v4221 = vmul.f32 %v4217, 1.442695
        %v4222 = vpow.pop %v4221
        %v4223 = vmul.f32 %v4218, 1.442695
        %v4224 = vpow.pop %v4223
        %v4225 = vmul.f32 %v4219, 1.442695
        %v4226 = vpow.pop %v4225
        %v4227 = vmul.f32 %v4220, 1.442695
        %v4228 = vpow.pop %v4227
        %v4229 = vsel %vm2151, %v4222, 0.0
        %4230 = vadd.xlane.f32.xlu0 %v4229
        %v4231 = vpop.xlane.xlu0 %4230
        %v4232 = vsel %vm2151, %v4224, 0.0
        %4233 = vadd.xlane.f32.xlu0 %v4232
        %v4234 = vpop.xlane.xlu0 %4233
        %v4235 = vsel %vm2151, %v4226, 0.0
        %4236 = vadd.xlane.f32.xlu0 %v4235
        %v4237 = vpop.xlane.xlu0 %4236
        %v4238 = vsel %vm2151, %v4228, 0.0
        %4239 = vadd.xlane.f32.xlu0 %v4238
        %v4240 = vpop.xlane.xlu0 %4239
        %v4241 = vpack.c.bf16 %v4222, %v4222
        %v4242 = vpack.c.bf16 %v4224, %v4224
        %v4243 = vpack.c.bf16 %v4226, %v4226
        %v4244 = vpack.c.bf16 %v4228, %v4228
        %v4245 = vpack.c.bf16 %v3734, %v3734
        %v4246 = vpack.c.bf16 %v3822, %v3822
        %v4247 = vpack.c.bf16 %v3910, %v3910
        %v4248 = vpack.c.bf16 %v3998, %v3998
        %v4250 = vsel %vm2151, %v4241, 0
        %v4253 = vsel %vm2199, %v4245, 0
        %4255 = vmatprep.subr.bf16.mxu0 0
        %4256 = vmatpush1.bf16.msra.mxu0 %v4253
        %4257 = vmatprep.subr.bf16.mxu0 0
        %4258 = vmatpush1.bf16.msra.mxu0 0
        %4259 = vmatprep.subr.bf16.mxu0 0
        %4260 = vmatpush1.bf16.msra.mxu0 0
        %4261 = vmatprep.subr.bf16.mxu0 0
        %4262 = vmatpush1.bf16.msra.mxu0 0
        %4263 = vmatprep.subr.bf16.mxu0 0
        %4264 = vmatpush1.bf16.msra.mxu0 0
        %4265 = vmatprep.subr.bf16.mxu0 0
        %4266 = vmatpush1.bf16.msra.mxu0 0
        %4267 = vmatprep.subr.bf16.mxu0 0
        %4268 = vmatpush1.bf16.msra.mxu0 0
        %4269 = vmatprep.subr.bf16.mxu0 0
        %4270 = vmatpush1.bf16.msra.mxu0 0
        %4271 = vmatprep.subr.bf16.mxu0 0
        %4272 = vmatpush1.bf16.msra.mxu0 0
        %4273 = vmatprep.subr.bf16.mxu0 0
        %4274 = vmatpush1.bf16.msra.mxu0 0
        %4275 = vmatprep.subr.bf16.mxu0 0
        %4276 = vmatpush1.bf16.msra.mxu0 0
        %4277 = vmatprep.subr.bf16.mxu0 0
        %4278 = vmatpush1.bf16.msra.mxu0 0
        %4279 = vmatprep.subr.bf16.mxu0 0
        %4280 = vmatpush1.bf16.msra.mxu0 0
        %4281 = vmatprep.subr.bf16.mxu0 0
        %4282 = vmatpush1.bf16.msra.mxu0 0
        %4283 = vmatprep.subr.bf16.mxu0 0
        %4284 = vmatpush1.bf16.msra.mxu0 0
        %4285 = vmatprep.subr.bf16.mxu0 0
        %4286 = vmatpush1.bf16.msra.mxu0 0
        %4287 = vmatprep.mubr.bf16.mxu0 0
        %4288 = vmatmul.mubr.bf16.gmra.mrb[0].mxu0 %v4250
        %v4289 = vpop.f32.mrb[0].mxu0
        %v4290 = vadd.f32 0.0, %v4289
        %v4291 = vpop.f32.mrb[0].mxu0
        %v4292 = vpop.f32.mrb[0].mxu0
        %v4293 = vpop.f32.mrb[0].mxu0
        %4294 = vdwg.mxu0
        %v4296 = vsel %vm2151, %v4242, 0
        %v4299 = vsel %vm2199, %v4246, 0
        %4301 = vmatprep.subr.bf16.mxu0 0
        %4302 = vmatpush1.bf16.msra.mxu0 %v4299
        %4303 = vmatprep.subr.bf16.mxu0 0
        %4304 = vmatpush1.bf16.msra.mxu0 0
        %4305 = vmatprep.subr.bf16.mxu0 0
        %4306 = vmatpush1.bf16.msra.mxu0 0
        %4307 = vmatprep.subr.bf16.mxu0 0
        %4308 = vmatpush1.bf16.msra.mxu0 0
        %4309 = vmatprep.subr.bf16.mxu0 0
        %4310 = vmatpush1.bf16.msra.mxu0 0
        %4311 = vmatprep.subr.bf16.mxu0 0
        %4312 = vmatpush1.bf16.msra.mxu0 0
        %4313 = vmatprep.subr.bf16.mxu0 0
        %4314 = vmatpush1.bf16.msra.mxu0 0
        %4315 = vmatprep.subr.bf16.mxu0 0
        %4316 = vmatpush1.bf16.msra.mxu0 0
        %4317 = vmatprep.subr.bf16.mxu0 0
        %4318 = vmatpush1.bf16.msra.mxu0 0
        %4319 = vmatprep.subr.bf16.mxu0 0
        %4320 = vmatpush1.bf16.msra.mxu0 0
        %4321 = vmatprep.subr.bf16.mxu0 0
        %4322 = vmatpush1.bf16.msra.mxu0 0
        %4323 = vmatprep.subr.bf16.mxu0 0
        %4324 = vmatpush1.bf16.msra.mxu0 0
        %4325 = vmatprep.subr.bf16.mxu0 0
        %4326 = vmatpush1.bf16.msra.mxu0 0
        %4327 = vmatprep.subr.bf16.mxu0 0
        %4328 = vmatpush1.bf16.msra.mxu0 0
        %4329 = vmatprep.subr.bf16.mxu0 0
        %4330 = vmatpush1.bf16.msra.mxu0 0
        %4331 = vmatprep.subr.bf16.mxu0 0
        %4332 = vmatpush1.bf16.msra.mxu0 0
        %4333 = vmatprep.mubr.bf16.mxu0 0
        %4334 = vmatmul.mubr.bf16.gmra.mrb[0].mxu0 %v4296
        %v4335 = vpop.f32.mrb[0].mxu0
        %v4336 = vadd.f32 0.0, %v4335
        %v4337 = vpop.f32.mrb[0].mxu0
        %v4338 = vpop.f32.mrb[0].mxu0
        %v4339 = vpop.f32.mrb[0].mxu0
        %4340 = vdwg.mxu0
        %v4342 = vsel %vm2151, %v4243, 0
        %v4345 = vsel %vm2199, %v4247, 0
        %4347 = vmatprep.subr.bf16.mxu0 0
        %4348 = vmatpush1.bf16.msra.mxu0 %v4345
        %4349 = vmatprep.subr.bf16.mxu0 0
        %4350 = vmatpush1.bf16.msra.mxu0 0
        %4351 = vmatprep.subr.bf16.mxu0 0
        %4352 = vmatpush1.bf16.msra.mxu0 0
        %4353 = vmatprep.subr.bf16.mxu0 0
        %4354 = vmatpush1.bf16.msra.mxu0 0
        %4355 = vmatprep.subr.bf16.mxu0 0
        %4356 = vmatpush1.bf16.msra.mxu0 0
        %4357 = vmatprep.subr.bf16.mxu0 0
        %4358 = vmatpush1.bf16.msra.mxu0 0
        %4359 = vmatprep.subr.bf16.mxu0 0
        %4360 = vmatpush1.bf16.msra.mxu0 0
        %4361 = vmatprep.subr.bf16.mxu0 0
        %4362 = vmatpush1.bf16.msra.mxu0 0
        %4363 = vmatprep.subr.bf16.mxu0 0
        %4364 = vmatpush1.bf16.msra.mxu0 0
        %4365 = vmatprep.subr.bf16.mxu0 0
        %4366 = vmatpush1.bf16.msra.mxu0 0
        %4367 = vmatprep.subr.bf16.mxu0 0
        %4368 = vmatpush1.bf16.msra.mxu0 0
        %4369 = vmatprep.subr.bf16.mxu0 0
        %4370 = vmatpush1.bf16.msra.mxu0 0
        %4371 = vmatprep.subr.bf16.mxu0 0
        %4372 = vmatpush1.bf16.msra.mxu0 0
        %4373 = vmatprep.subr.bf16.mxu0 0
        %4374 = vmatpush1.bf16.msra.mxu0 0
        %4375 = vmatprep.subr.bf16.mxu0 0
        %4376 = vmatpush1.bf16.msra.mxu0 0
        %4377 = vmatprep.subr.bf16.mxu0 0
        %4378 = vmatpush1.bf16.msra.mxu0 0
        %4379 = vmatprep.mubr.bf16.mxu0 0
        %4380 = vmatmul.mubr.bf16.gmra.mrb[0].mxu0 %v4342
        %v4381 = vpop.f32.mrb[0].mxu0
        %v4382 = vadd.f32 0.0, %v4381
        %v4383 = vpop.f32.mrb[0].mxu0
        %v4384 = vpop.f32.mrb[0].mxu0
        %v4385 = vpop.f32.mrb[0].mxu0
        %4386 = vdwg.mxu0
        %v4388 = vsel %vm2151, %v4244, 0
        %v4391 = vsel %vm2199, %v4248, 0
        %4393 = vmatprep.subr.bf16.mxu0 0
        %4394 = vmatpush1.bf16.msra.mxu0 %v4391
        %4395 = vmatprep.subr.bf16.mxu0 0
        %4396 = vmatpush1.bf16.msra.mxu0 0
        %4397 = vmatprep.subr.bf16.mxu0 0
        %4398 = vmatpush1.bf16.msra.mxu0 0
        %4399 = vmatprep.subr.bf16.mxu0 0
        %4400 = vmatpush1.bf16.msra.mxu0 0
        %4401 = vmatprep.subr.bf16.mxu0 0
        %4402 = vmatpush1.bf16.msra.mxu0 0
        %4403 = vmatprep.subr.bf16.mxu0 0
        %4404 = vmatpush1.bf16.msra.mxu0 0
        %4405 = vmatprep.subr.bf16.mxu0 0
        %4406 = vmatpush1.bf16.msra.mxu0 0
        %4407 = vmatprep.subr.bf16.mxu0 0
        %4408 = vmatpush1.bf16.msra.mxu0 0
        %4409 = vmatprep.subr.bf16.mxu0 0
        %4410 = vmatpush1.bf16.msra.mxu0 0
        %4411 = vmatprep.subr.bf16.mxu0 0
        %4412 = vmatpush1.bf16.msra.mxu0 0
        %4413 = vmatprep.subr.bf16.mxu0 0
        %4414 = vmatpush1.bf16.msra.mxu0 0
        %4415 = vmatprep.subr.bf16.mxu0 0
        %4416 = vmatpush1.bf16.msra.mxu0 0
        %4417 = vmatprep.subr.bf16.mxu0 0
        %4418 = vmatpush1.bf16.msra.mxu0 0
        %4419 = vmatprep.subr.bf16.mxu0 0
        %4420 = vmatpush1.bf16.msra.mxu0 0
        %4421 = vmatprep.subr.bf16.mxu0 0
        %4422 = vmatpush1.bf16.msra.mxu0 0
        %4423 = vmatprep.subr.bf16.mxu0 0
        %4424 = vmatpush1.bf16.msra.mxu0 0
        %4425 = vmatprep.mubr.bf16.mxu0 0
        %4426 = vmatmul.mubr.bf16.gmra.mrb[0].mxu0 %v4388
        %v4427 = vpop.f32.mrb[0].mxu0
        %v4428 = vadd.f32 0.0, %v4427
        %v4429 = vpop.f32.mrb[0].mxu0
        %v4430 = vpop.f32.mrb[0].mxu0
        %v4431 = vpop.f32.mrb[0].mxu0
        %4432 = vdwg.mxu0
        %v4433 = vrcp.pop %v4231
        %v4434 = vrcp.pop %v4234
        %v4435 = vrcp.pop %v4237
        %v4436 = vrcp.pop %v4240
        %v4437 = vmul.f32 %v4290, %v4433
        %v4438 = vmul.f32 %v4336, %v4434
        %v4439 = vmul.f32 %v4382, %v4435
        %v4440 = vmul.f32 %v4428, %v4436
        %v4441 = vpack.c.bf16 %v4437, %v4437
        %v4442 = vpack.c.bf16 %v4438, %v4438
        %v4443 = vpack.c.bf16 %v4439, %v4439
        %v4444 = vpack.c.bf16 %v4440, %v4440
        %v4445 = vld [vmem:[%s12] sm:$0xf]
        %v4446 = vld [vmem:[%s12 + $0x4] sm:$0xf]
        %v4447 = vld [vmem:[%s12 + $0x8] sm:$0xf]
        %v4448 = vld [vmem:[%s12 + $0xc] sm:$0xf]
        %v4449 = vld [vmem:[%s12 + $0x10] sm:$0xf]
        %v4450 = vld [vmem:[%s12 + $0x14] sm:$0xf]
        %v4451 = vld [vmem:[%s12 + $0x18] sm:$0xf]
        %v4452 = vld [vmem:[%s12 + $0x1c] sm:$0xf]
        %v4453 = vld [vmem:[%s12 + $0x20] sm:$0xf]
        %v4454 = vld [vmem:[%s12 + $0x24] sm:$0xf]
        %v4455 = vld [vmem:[%s12 + $0x28] sm:$0xf]
        %v4456 = vld [vmem:[%s12 + $0x2c] sm:$0xf]
        %v4457 = vld [vmem:[%s12 + $0x30] sm:$0xf]
        %v4458 = vld [vmem:[%s12 + $0x34] sm:$0xf]
        %v4459 = vld [vmem:[%s12 + $0x38] sm:$0xf]
        %v4460 = vld [vmem:[%s12 + $0x3c] sm:$0xf]
        %v4465 = vunpack.c.l.b16 %v4445
        %v4466 = vunpack.c.l.b16 %v4446
        %v4467 = vunpack.c.l.b16 %v4447
        %v4468 = vunpack.c.l.b16 %v4448
        %v4469 = vpack.c.b16 %v4466, %v4465
        %v4470 = vpack.c.b16 %v4468, %v4467
        %v4474 = vsel %vm1956, %v4441, 0
        %4476 = vmatprep.subr.bf16.mxu0 0
        %4477 = vmatpush1.bf16.msra.mxu0 %v4469
        %4478 = vmatprep.subr.bf16.mxu0 0
        %4479 = vmatpush1.bf16.msra.mxu0 %v4470
        %4480 = vmatprep.subr.bf16.mxu0 0
        %4481 = vmatpush1.bf16.msra.mxu0 0
        %4482 = vmatprep.subr.bf16.mxu0 0
        %4483 = vmatpush1.bf16.msra.mxu0 0
        %4484 = vmatprep.subr.bf16.mxu0 0
        %4485 = vmatpush1.bf16.msra.mxu0 0
        %4486 = vmatprep.subr.bf16.mxu0 0
        %4487 = vmatpush1.bf16.msra.mxu0 0
        %4488 = vmatprep.subr.bf16.mxu0 0
        %4489 = vmatpush1.bf16.msra.mxu0 0
        %4490 = vmatprep.subr.bf16.mxu0 0
        %4491 = vmatpush1.bf16.msra.mxu0 0
        %4492 = vmatprep.subr.bf16.mxu0 0
        %4493 = vmatpush1.bf16.msra.mxu0 0
        %4494 = vmatprep.subr.bf16.mxu0 0
        %4495 = vmatpush1.bf16.msra.mxu0 0
        %4496 = vmatprep.subr.bf16.mxu0 0
        %4497 = vmatpush1.bf16.msra.mxu0 0
        %4498 = vmatprep.subr.bf16.mxu0 0
        %4499 = vmatpush1.bf16.msra.mxu0 0
        %4500 = vmatprep.subr.bf16.mxu0 0
        %4501 = vmatpush1.bf16.msra.mxu0 0
        %4502 = vmatprep.subr.bf16.mxu0 0
        %4503 = vmatpush1.bf16.msra.mxu0 0
        %4504 = vmatprep.subr.bf16.mxu0 0
        %4505 = vmatpush1.bf16.msra.mxu0 0
        %4506 = vmatprep.subr.bf16.mxu0 0
        %4507 = vmatpush1.bf16.msra.mxu0 0
        %4508 = vmatprep.mubr.bf16.mxu0 0
        %4509 = vmatmul.mubr.bf16.gmra.mrb[0].mxu0 %v4474
        %v4510 = vpop.f32.mrb[0].mxu0
        %v4511 = vadd.f32 0.0, %v4510
        %v4512 = vpop.f32.mrb[0].mxu0
        %v4513 = vpop.f32.mrb[0].mxu0
        %v4514 = vpop.f32.mrb[0].mxu0
        %4515 = vdwg.mxu0
        %v4520 = vunpack.c.l.b16 %v4449
        %v4521 = vunpack.c.l.b16 %v4450
        %v4522 = vunpack.c.l.b16 %v4451
        %v4523 = vunpack.c.l.b16 %v4452
        %v4524 = vpack.c.b16 %v4521, %v4520
        %v4525 = vpack.c.b16 %v4523, %v4522
        %v4529 = vsel %vm1956, %v4442, 0
        %4531 = vmatprep.subr.bf16.mxu0 0
        %4532 = vmatpush1.bf16.msra.mxu0 %v4524
        %4533 = vmatprep.subr.bf16.mxu0 0
        %4534 = vmatpush1.bf16.msra.mxu0 %v4525
        %4535 = vmatprep.subr.bf16.mxu0 0
        %4536 = vmatpush1.bf16.msra.mxu0 0
        %4537 = vmatprep.subr.bf16.mxu0 0
        %4538 = vmatpush1.bf16.msra.mxu0 0
        %4539 = vmatprep.subr.bf16.mxu0 0
        %4540 = vmatpush1.bf16.msra.mxu0 0
        %4541 = vmatprep.subr.bf16.mxu0 0
        %4542 = vmatpush1.bf16.msra.mxu0 0
        %4543 = vmatprep.subr.bf16.mxu0 0
        %4544 = vmatpush1.bf16.msra.mxu0 0
        %4545 = vmatprep.subr.bf16.mxu0 0
        %4546 = vmatpush1.bf16.msra.mxu0 0
        %4547 = vmatprep.subr.bf16.mxu0 0
        %4548 = vmatpush1.bf16.msra.mxu0 0
        %4549 = vmatprep.subr.bf16.mxu0 0
        %4550 = vmatpush1.bf16.msra.mxu0 0
        %4551 = vmatprep.subr.bf16.mxu0 0
        %4552 = vmatpush1.bf16.msra.mxu0 0
        %4553 = vmatprep.subr.bf16.mxu0 0
        %4554 = vmatpush1.bf16.msra.mxu0 0
        %4555 = vmatprep.subr.bf16.mxu0 0
        %4556 = vmatpush1.bf16.msra.mxu0 0
        %4557 = vmatprep.subr.bf16.mxu0 0
        %4558 = vmatpush1.bf16.msra.mxu0 0
        %4559 = vmatprep.subr.bf16.mxu0 0
        %4560 = vmatpush1.bf16.msra.mxu0 0
        %4561 = vmatprep.subr.bf16.mxu0 0
        %4562 = vmatpush1.bf16.msra.mxu0 0
        %4563 = vmatprep.mubr.bf16.mxu0 0
        %4564 = vmatmul.mubr.bf16.gmra.mrb[0].mxu0 %v4529
        %v4565 = vpop.f32.mrb[0].mxu0
        %v4566 = vadd.f32 0.0, %v4565
        %v4567 = vpop.f32.mrb[0].mxu0
        %v4568 = vpop.f32.mrb[0].mxu0
        %v4569 = vpop.f32.mrb[0].mxu0
        %4570 = vdwg.mxu0
        %v4575 = vunpack.c.l.b16 %v4453
        %v4576 = vunpack.c.l.b16 %v4454
        %v4577 = vunpack.c.l.b16 %v4455
        %v4578 = vunpack.c.l.b16 %v4456
        %v4579 = vpack.c.b16 %v4576, %v4575
        %v4580 = vpack.c.b16 %v4578, %v4577
        %v4584 = vsel %vm1956, %v4443, 0
        %4586 = vmatprep.subr.bf16.mxu0 0
        %4587 = vmatpush1.bf16.msra.mxu0 %v4579
        %4588 = vmatprep.subr.bf16.mxu0 0
        %4589 = vmatpush1.bf16.msra.mxu0 %v4580
        %4590 = vmatprep.subr.bf16.mxu0 0
        %4591 = vmatpush1.bf16.msra.mxu0 0
        %4592 = vmatprep.subr.bf16.mxu0 0
        %4593 = vmatpush1.bf16.msra.mxu0 0
        %4594 = vmatprep.subr.bf16.mxu0 0
        %4595 = vmatpush1.bf16.msra.mxu0 0
        %4596 = vmatprep.subr.bf16.mxu0 0
        %4597 = vmatpush1.bf16.msra.mxu0 0
        %4598 = vmatprep.subr.bf16.mxu0 0
        %4599 = vmatpush1.bf16.msra.mxu0 0
        %4600 = vmatprep.subr.bf16.mxu0 0
        %4601 = vmatpush1.bf16.msra.mxu0 0
        %4602 = vmatprep.subr.bf16.mxu0 0
        %4603 = vmatpush1.bf16.msra.mxu0 0
        %4604 = vmatprep.subr.bf16.mxu0 0
        %4605 = vmatpush1.bf16.msra.mxu0 0
        %4606 = vmatprep.subr.bf16.mxu0 0
        %4607 = vmatpush1.bf16.msra.mxu0 0
        %4608 = vmatprep.subr.bf16.mxu0 0
        %4609 = vmatpush1.bf16.msra.mxu0 0
        %4610 = vmatprep.subr.bf16.mxu0 0
        %4611 = vmatpush1.bf16.msra.mxu0 0
        %4612 = vmatprep.subr.bf16.mxu0 0
        %4613 = vmatpush1.bf16.msra.mxu0 0
        %4614 = vmatprep.subr.bf16.mxu0 0
        %4615 = vmatpush1.bf16.msra.mxu0 0
        %4616 = vmatprep.subr.bf16.mxu0 0
        %4617 = vmatpush1.bf16.msra.mxu0 0
        %4618 = vmatprep.mubr.bf16.mxu0 0
        %4619 = vmatmul.mubr.bf16.gmra.mrb[0].mxu0 %v4584
        %v4620 = vpop.f32.mrb[0].mxu0
        %v4621 = vadd.f32 0.0, %v4620
        %v4622 = vpop.f32.mrb[0].mxu0
        %v4623 = vpop.f32.mrb[0].mxu0
        %v4624 = vpop.f32.mrb[0].mxu0
        %4625 = vdwg.mxu0
        %v4630 = vunpack.c.l.b16 %v4457
        %v4631 = vunpack.c.l.b16 %v4458
        %v4632 = vunpack.c.l.b16 %v4459
        %v4633 = vunpack.c.l.b16 %v4460
        %v4634 = vpack.c.b16 %v4631, %v4630
        %v4635 = vpack.c.b16 %v4633, %v4632
        %v4639 = vsel %vm1956, %v4444, 0
        %4641 = vmatprep.subr.bf16.mxu0 0
        %4642 = vmatpush1.bf16.msra.mxu0 %v4634
        %4643 = vmatprep.subr.bf16.mxu0 0
        %4644 = vmatpush1.bf16.msra.mxu0 %v4635
        %4645 = vmatprep.subr.bf16.mxu0 0
        %4646 = vmatpush1.bf16.msra.mxu0 0
        %4647 = vmatprep.subr.bf16.mxu0 0
        %4648 = vmatpush1.bf16.msra.mxu0 0
        %4649 = vmatprep.subr.bf16.mxu0 0
        %4650 = vmatpush1.bf16.msra.mxu0 0
        %4651 = vmatprep.subr.bf16.mxu0 0
        %4652 = vmatpush1.bf16.msra.mxu0 0
        %4653 = vmatprep.subr.bf16.mxu0 0
        %4654 = vmatpush1.bf16.msra.mxu0 0
        %4655 = vmatprep.subr.bf16.mxu0 0
        %4656 = vmatpush1.bf16.msra.mxu0 0
        %4657 = vmatprep.subr.bf16.mxu0 0
        %4658 = vmatpush1.bf16.msra.mxu0 0
        %4659 = vmatprep.subr.bf16.mxu0 0
        %4660 = vmatpush1.bf16.msra.mxu0 0
        %4661 = vmatprep.subr.bf16.mxu0 0
        %4662 = vmatpush1.bf16.msra.mxu0 0
        %4663 = vmatprep.subr.bf16.mxu0 0
        %4664 = vmatpush1.bf16.msra.mxu0 0
        %4665 = vmatprep.subr.bf16.mxu0 0
        %4666 = vmatpush1.bf16.msra.mxu0 0
        %4667 = vmatprep.subr.bf16.mxu0 0
        %4668 = vmatpush1.bf16.msra.mxu0 0
        %4669 = vmatprep.subr.bf16.mxu0 0
        %4670 = vmatpush1.bf16.msra.mxu0 0
        %4671 = vmatprep.subr.bf16.mxu0 0
        %4672 = vmatpush1.bf16.msra.mxu0 0
        %4673 = vmatprep.mubr.bf16.mxu0 0
        %4674 = vmatmul.mubr.bf16.gmra.mrb[0].mxu0 %v4639
        %v4675 = vpop.f32.mrb[0].mxu0
        %v4676 = vadd.f32 0.0, %v4675
        %v4677 = vpop.f32.mrb[0].mxu0
        %v4678 = vpop.f32.mrb[0].mxu0
        %v4679 = vpop.f32.mrb[0].mxu0
        %4680 = vdwg.mxu0
        %v4681 = vadd.f32 %v4511, %v4566
        %v4682 = vadd.f32 %v4681, %v4621
        %v4683 = vadd.f32 %v4682, %v4676
        %v4684 = vld [vmem:[%s13] sm:$0x1]
        %v4686 = vlaneseq
        %v4687 = vshrl.u32 %v4686, 7
        %v4688 = vsub.s32 0, %v4687
        %v4689 = vrot.slane %v4684, %v4688
        %v4691 = vadd.f32 %v4683, %v4689
        %v4692 = vadd.f32 %v2668, %v4691
        %s4693 = scalar_lea.vmem %s18, 1
        %v4694 = vld [vmem:[%s4693] sm:$0x1]
        %s4695 = scalar_lea.vmem %s19, 1
        %v4696 = vld [vmem:[%s4695] sm:$0x1]
        %4697 = vadd.xlane.f32.xlu0 %v4692
        %v4698 = vpop.xlane.xlu0 %4697
        %v4699 = vmul.f32 %v4698, %v2645
        %v4700 = vsub.f32 %v4692, %v4699
        %v4701 = vmul.f32 %v4700, %v4700
        %4702 = vadd.xlane.f32.xlu0 %v4701
        %v4703 = vpop.xlane.xlu0 %4702
        %v4704 = vmul.f32 %v4703, %v2645
        %v4705 = vadd.f32 %v4704, 1e-05
        %v4706 = vrsqrt.pop %v4705
        %v4707 = vmul.f32 %v4700, %v4706
        %v4709 = vlaneseq
        %v4710 = vshrl.u32 %v4709, 7
        %v4711 = vsub.s32 0, %v4710
        %v4712 = vrot.slane %v4694, %v4711
        %v4714 = vmul.f32 %v4707, %v4712
        %v4716 = vlaneseq
        %v4717 = vshrl.u32 %v4716, 7
        %v4718 = vsub.s32 0, %v4717
        %v4719 = vrot.slane %v4696, %v4718
        %v4721 = vadd.f32 %v4714, %v4719
        %v4722 = vpack.c.bf16 %v4721, %v4721
        %v4723 = vld [vmem:[%s14] sm:$0xff]
        %v4724 = vld [vmem:[%s14 + $0x8] sm:$0xff]
        %v4725 = vld [vmem:[%s14 + $0x10] sm:$0xff]
        %v4726 = vld [vmem:[%s14 + $0x18] sm:$0xff]
        %v4727 = vld [vmem:[%s14 + $0x20] sm:$0xff]
        %v4728 = vld [vmem:[%s14 + $0x28] sm:$0xff]
        %v4729 = vld [vmem:[%s14 + $0x30] sm:$0xff]
        %v4730 = vld [vmem:[%s14 + $0x38] sm:$0xff]
        %v4731 = vld [vmem:[%s14 + $0x40] sm:$0xff]
        %v4732 = vld [vmem:[%s14 + $0x48] sm:$0xff]
        %v4733 = vld [vmem:[%s14 + $0x50] sm:$0xff]
        %v4734 = vld [vmem:[%s14 + $0x58] sm:$0xff]
        %v4735 = vld [vmem:[%s14 + $0x60] sm:$0xff]
        %v4736 = vld [vmem:[%s14 + $0x68] sm:$0xff]
        %v4737 = vld [vmem:[%s14 + $0x70] sm:$0xff]
        %v4738 = vld [vmem:[%s14 + $0x78] sm:$0xff]
        %v4739 = vld [vmem:[%s15] sm:$0x3]
        %v4741 = vlaneseq
        %v4742 = vshrl.u32 %v4741, 7
        %v4743 = vsub.s32 0, %v4742
        %v4744 = vrot.slane %v4739, %v4743
        %v4745 = vlaneseq
        %v4746 = vshrl.u32 %v4745, 7
        %v4747 = vsub.s32 1, %v4746
        %v4748 = vrot.slane %v4739, %v4747
        %v4767 = vunpack.c.l.b16 %v4723
        %v4768 = vunpack.c.h.b16 %v4723
        %v4769 = vunpack.c.l.b16 %v4724
        %v4770 = vunpack.c.h.b16 %v4724
        %v4771 = vunpack.c.l.b16 %v4725
        %v4772 = vunpack.c.h.b16 %v4725
        %v4773 = vunpack.c.l.b16 %v4726
        %v4774 = vunpack.c.h.b16 %v4726
        %v4775 = vunpack.c.l.b16 %v4727
        %v4776 = vunpack.c.h.b16 %v4727
        %v4777 = vunpack.c.l.b16 %v4728
        %v4778 = vunpack.c.h.b16 %v4728
        %v4779 = vunpack.c.l.b16 %v4729
        %v4780 = vunpack.c.h.b16 %v4729
        %v4781 = vunpack.c.l.b16 %v4730
        %v4782 = vunpack.c.h.b16 %v4730
        %v4783 = vunpack.c.l.b16 %v4731
        %v4784 = vunpack.c.h.b16 %v4731
        %v4785 = vunpack.c.l.b16 %v4732
        %v4786 = vunpack.c.h.b16 %v4732
        %v4787 = vunpack.c.l.b16 %v4733
        %v4788 = vunpack.c.h.b16 %v4733
        %v4789 = vunpack.c.l.b16 %v4734
        %v4790 = vunpack.c.h.b16 %v4734
        %v4791 = vunpack.c.l.b16 %v4735
        %v4792 = vunpack.c.h.b16 %v4735
        %v4793 = vunpack.c.l.b16 %v4736
        %v4794 = vunpack.c.h.b16 %v4736
        %v4795 = vunpack.c.l.b16 %v4737
        %v4796 = vunpack.c.h.b16 %v4737
        %v4797 = vunpack.c.l.b16 %v4738
        %v4798 = vunpack.c.h.b16 %v4738
        %v4799 = vpack.c.b16 %v4769, %v4767
        %v4800 = vpack.c.b16 %v4770, %v4768
        %v4801 = vpack.c.b16 %v4773, %v4771
        %v4802 = vpack.c.b16 %v4774, %v4772
        %v4803 = vpack.c.b16 %v4777, %v4775
        %v4804 = vpack.c.b16 %v4778, %v4776
        %v4805 = vpack.c.b16 %v4781, %v4779
        %v4806 = vpack.c.b16 %v4782, %v4780
        %v4807 = vpack.c.b16 %v4785, %v4783
        %v4808 = vpack.c.b16 %v4786, %v4784
        %v4809 = vpack.c.b16 %v4789, %v4787
        %v4810 = vpack.c.b16 %v4790, %v4788
        %v4811 = vpack.c.b16 %v4793, %v4791
        %v4812 = vpack.c.b16 %v4794, %v4792
        %v4813 = vpack.c.b16 %v4797, %v4795
        %v4814 = vpack.c.b16 %v4798, %v4796
        %4831 = vmatprep.subr.bf16.mxu0 %v4800
        %4832 = vmatpush1.bf16.msra.mxu0 %v4799
        %4833 = vmatprep.subr.bf16.mxu0 %v4802
        %4834 = vmatpush1.bf16.msra.mxu0 %v4801
        %4835 = vmatprep.subr.bf16.mxu0 %v4804
        %4836 = vmatpush1.bf16.msra.mxu0 %v4803
        %4837 = vmatprep.subr.bf16.mxu0 %v4806
        %4838 = vmatpush1.bf16.msra.mxu0 %v4805
        %4839 = vmatprep.subr.bf16.mxu0 %v4808
        %4840 = vmatpush1.bf16.msra.mxu0 %v4807
        %4841 = vmatprep.subr.bf16.mxu0 %v4810
        %4842 = vmatpush1.bf16.msra.mxu0 %v4809
        %4843 = vmatprep.subr.bf16.mxu0 %v4812
        %4844 = vmatpush1.bf16.msra.mxu0 %v4811
        %4845 = vmatprep.subr.bf16.mxu0 %v4814
        %4846 = vmatpush1.bf16.msra.mxu0 %v4813
        %4847 = vmatprep.subr.bf16.mxu0 0
        %4848 = vmatpush1.bf16.msra.mxu0 0
        %4849 = vmatprep.subr.bf16.mxu0 0
        %4850 = vmatpush1.bf16.msra.mxu0 0
        %4851 = vmatprep.subr.bf16.mxu0 0
        %4852 = vmatpush1.bf16.msra.mxu0 0
        %4853 = vmatprep.subr.bf16.mxu0 0
        %4854 = vmatpush1.bf16.msra.mxu0 0
        %4855 = vmatprep.subr.bf16.mxu0 0
        %4856 = vmatpush1.bf16.msra.mxu0 0
        %4857 = vmatprep.subr.bf16.mxu0 0
        %4858 = vmatpush1.bf16.msra.mxu0 0
        %4859 = vmatprep.subr.bf16.mxu0 0
        %4860 = vmatpush1.bf16.msra.mxu0 0
        %4861 = vmatprep.subr.bf16.mxu0 0
        %4862 = vmatpush1.bf16.msra.mxu0 0
        %4863 = vmatprep.mubr.bf16.mxu0 0
        %4864 = vmatmul.mubr.bf16.gmra.mrb[0].mxu0 %v4722
        %v4865 = vpop.f32.mrb[0].mxu0
        %v4866 = vadd.f32 %v4744, %v4865
        %v4867 = vpop.f32.mrb[0].mxu0
        %v4868 = vadd.f32 %v4748, %v4867
        %v4869 = vpop.f32.mrb[0].mxu0
        %v4870 = vpop.f32.mrb[0].mxu0
        %4871 = vdwg.mxu0
        %v4872 = vmax.f32 %v4866, 0.0
        %v4873 = vmax.f32 %v4868, 0.0
        %v4874 = vpack.c.bf16 %v4872, %v4872
        %v4875 = vpack.c.bf16 %v4873, %v4873
        %v4876 = vld [vmem:[%s16] sm:$0xf]
        %v4877 = vld [vmem:[%s16 + $0x4] sm:$0xf]
        %v4878 = vld [vmem:[%s16 + $0x8] sm:$0xf]
        %v4879 = vld [vmem:[%s16 + $0xc] sm:$0xf]
        %v4880 = vld [vmem:[%s16 + $0x10] sm:$0xf]
        %v4881 = vld [vmem:[%s16 + $0x14] sm:$0xf]
        %v4882 = vld [vmem:[%s16 + $0x18] sm:$0xf]
        %v4883 = vld [vmem:[%s16 + $0x1c] sm:$0xf]
        %v4884 = vld [vmem:[%s16 + $0x20] sm:$0xf]
        %v4885 = vld [vmem:[%s16 + $0x24] sm:$0xf]
        %v4886 = vld [vmem:[%s16 + $0x28] sm:$0xf]
        %v4887 = vld [vmem:[%s16 + $0x2c] sm:$0xf]
        %v4888 = vld [vmem:[%s16 + $0x30] sm:$0xf]
        %v4889 = vld [vmem:[%s16 + $0x34] sm:$0xf]
        %v4890 = vld [vmem:[%s16 + $0x38] sm:$0xf]
        %v4891 = vld [vmem:[%s16 + $0x3c] sm:$0xf]
        %v4892 = vld [vmem:[%s16 + $0x40] sm:$0xf]
        %v4893 = vld [vmem:[%s16 + $0x44] sm:$0xf]
        %v4894 = vld [vmem:[%s16 + $0x48] sm:$0xf]
        %v4895 = vld [vmem:[%s16 + $0x4c] sm:$0xf]
        %v4896 = vld [vmem:[%s16 + $0x50] sm:$0xf]
        %v4897 = vld [vmem:[%s16 + $0x54] sm:$0xf]
        %v4898 = vld [vmem:[%s16 + $0x58] sm:$0xf]
        %v4899 = vld [vmem:[%s16 + $0x5c] sm:$0xf]
        %v4900 = vld [vmem:[%s16 + $0x60] sm:$0xf]
        %v4901 = vld [vmem:[%s16 + $0x64] sm:$0xf]
        %v4902 = vld [vmem:[%s16 + $0x68] sm:$0xf]
        %v4903 = vld [vmem:[%s16 + $0x6c] sm:$0xf]
        %v4904 = vld [vmem:[%s16 + $0x70] sm:$0xf]
        %v4905 = vld [vmem:[%s16 + $0x74] sm:$0xf]
        %v4906 = vld [vmem:[%s16 + $0x78] sm:$0xf]
        %v4907 = vld [vmem:[%s16 + $0x7c] sm:$0xf]
        %v4908 = vld [vmem:[%s17] sm:$0x1]
        %v4910 = vlaneseq
        %v4911 = vshrl.u32 %v4910, 7
        %v4912 = vsub.s32 0, %v4911
        %v4913 = vrot.slane %v4908, %v4912
        %v4947 = vunpack.c.l.b16 %v4876
        %v4948 = vunpack.c.l.b16 %v4877
        %v4949 = vunpack.c.l.b16 %v4878
        %v4950 = vunpack.c.l.b16 %v4879
        %v4951 = vunpack.c.l.b16 %v4880
        %v4952 = vunpack.c.l.b16 %v4881
        %v4953 = vunpack.c.l.b16 %v4882
        %v4954 = vunpack.c.l.b16 %v4883
        %v4955 = vunpack.c.l.b16 %v4884
        %v4956 = vunpack.c.l.b16 %v4885
        %v4957 = vunpack.c.l.b16 %v4886
        %v4958 = vunpack.c.l.b16 %v4887
        %v4959 = vunpack.c.l.b16 %v4888
        %v4960 = vunpack.c.l.b16 %v4889
        %v4961 = vunpack.c.l.b16 %v4890
        %v4962 = vunpack.c.l.b16 %v4891
        %v4963 = vunpack.c.l.b16 %v4892
        %v4964 = vunpack.c.l.b16 %v4893
        %v4965 = vunpack.c.l.b16 %v4894
        %v4966 = vunpack.c.l.b16 %v4895
        %v4967 = vunpack.c.l.b16 %v4896
        %v4968 = vunpack.c.l.b16 %v4897
        %v4969 = vunpack.c.l.b16 %v4898
        %v4970 = vunpack.c.l.b16 %v4899
        %v4971 = vunpack.c.l.b16 %v4900
        %v4972 = vunpack.c.l.b16 %v4901
        %v4973 = vunpack.c.l.b16 %v4902
        %v4974 = vunpack.c.l.b16 %v4903
        %v4975 = vunpack.c.l.b16 %v4904
        %v4976 = vunpack.c.l.b16 %v4905
        %v4977 = vunpack.c.l.b16 %v4906
        %v4978 = vunpack.c.l.b16 %v4907
        %v4979 = vpack.c.b16 %v4948, %v4947
        %v4980 = vpack.c.b16 %v4950, %v4949
        %v4981 = vpack.c.b16 %v4952, %v4951
        %v4982 = vpack.c.b16 %v4954, %v4953
        %v4983 = vpack.c.b16 %v4956, %v4955
        %v4984 = vpack.c.b16 %v4958, %v4957
        %v4985 = vpack.c.b16 %v4960, %v4959
        %v4986 = vpack.c.b16 %v4962, %v4961
        %v4987 = vpack.c.b16 %v4964, %v4963
        %v4988 = vpack.c.b16 %v4966, %v4965
        %v4989 = vpack.c.b16 %v4968, %v4967
        %v4990 = vpack.c.b16 %v4970, %v4969
        %v4991 = vpack.c.b16 %v4972, %v4971
        %v4992 = vpack.c.b16 %v4974, %v4973
        %v4993 = vpack.c.b16 %v4976, %v4975
        %v4994 = vpack.c.b16 %v4978, %v4977
        %5011 = vmatprep.subr.bf16.mxu0 0
        %5012 = vmatpush1.bf16.msra.mxu0 %v4979
        %5013 = vmatprep.subr.bf16.mxu0 0
        %5014 = vmatpush1.bf16.msra.mxu0 %v4980
        %5015 = vmatprep.subr.bf16.mxu0 0
        %5016 = vmatpush1.bf16.msra.mxu0 %v4981
        %5017 = vmatprep.subr.bf16.mxu0 0
        %5018 = vmatpush1.bf16.msra.mxu0 %v4982
        %5019 = vmatprep.subr.bf16.mxu0 0
        %5020 = vmatpush1.bf16.msra.mxu0 %v4983
        %5021 = vmatprep.subr.bf16.mxu0 0
        %5022 = vmatpush1.bf16.msra.mxu0 %v4984
        %5023 = vmatprep.subr.bf16.mxu0 0
        %5024 = vmatpush1.bf16.msra.mxu0 %v4985
        %5025 = vmatprep.subr.bf16.mxu0 0
        %5026 = vmatpush1.bf16.msra.mxu0 %v4986
        %5027 = vmatprep.subr.bf16.mxu0 0
        %5028 = vmatpush1.bf16.msra.mxu0 %v4987
        %5029 = vmatprep.subr.bf16.mxu0 0
        %5030 = vmatpush1.bf16.msra.mxu0 %v4988
        %5031 = vmatprep.subr.bf16.mxu0 0
        %5032 = vmatpush1.bf16.msra.mxu0 %v4989
        %5033 = vmatprep.subr.bf16.mxu0 0
        %5034 = vmatpush1.bf16.msra.mxu0 %v4990
        %5035 = vmatprep.subr.bf16.mxu0 0
        %5036 = vmatpush1.bf16.msra.mxu0 %v4991
        %5037 = vmatprep.subr.bf16.mxu0 0
        %5038 = vmatpush1.bf16.msra.mxu0 %v4992
        %5039 = vmatprep.subr.bf16.mxu0 0
        %5040 = vmatpush1.bf16.msra.mxu0 %v4993
        %5041 = vmatprep.subr.bf16.mxu0 0
        %5042 = vmatpush1.bf16.msra.mxu0 %v4994
        %5043 = vmatprep.mubr.bf16.mxu0 %v4875
        %5044 = vmatmul.mubr.bf16.gmra.mrb[0].mxu0 %v4874
        %v5045 = vpop.f32.mrb[0].mxu0
        %v5046 = vadd.f32 %v4913, %v5045
        %v5047 = vpop.f32.mrb[0].mxu0
        %v5048 = vpop.f32.mrb[0].mxu0
        %v5049 = vpop.f32.mrb[0].mxu0
        %5050 = vdwg.mxu0
        %v5051 = vadd.f32 %v4721, %v5046
        %s5052 = scalar_lea.vmem %s18, 2
        %v5053 = vld [vmem:[%s5052] sm:$0x1]
        %s5054 = scalar_lea.vmem %s19, 2
        %v5055 = vld [vmem:[%s5054] sm:$0x1]
        %5056 = vadd.xlane.f32.xlu0 %v5051
        %v5057 = vpop.xlane.xlu0 %5056
        %v5058 = vmul.f32 %v5057, %v2645
        %v5059 = vsub.f32 %v5051, %v5058
        %v5060 = vmul.f32 %v5059, %v5059
        %5061 = vadd.xlane.f32.xlu0 %v5060
        %v5062 = vpop.xlane.xlu0 %5061
        %v5063 = vmul.f32 %v5062, %v2645
        %v5064 = vadd.f32 %v5063, 1e-05
        %v5065 = vrsqrt.pop %v5064
        %v5066 = vmul.f32 %v5059, %v5065
        %v5068 = vlaneseq
        %v5069 = vshrl.u32 %v5068, 7
        %v5070 = vsub.s32 0, %v5069
        %v5071 = vrot.slane %v5053, %v5070
        %v5073 = vmul.f32 %v5066, %v5071
        %v5075 = vlaneseq
        %v5076 = vshrl.u32 %v5075, 7
        %v5077 = vsub.s32 0, %v5076
        %v5078 = vrot.slane %v5055, %v5077
        %v5080 = vadd.f32 %v5073, %v5078
        %5081 = vst [vmem:[%s591] sm:$0xff] %v5080
        %s5082 = sand.u32 %s440, 1
        %s5083 = scalar_lea.sflag [#allocation6], %s5082
        %s5084 = sand.u32 %s440, 1
        %s5085 = smul.addr %s5084, 8
        %s5086 = scalar_lea.vmem [#allocation5], %s5085
        // Predicated region
        $region93: #{tpu_custom_call.1} parent=91 // pred_check
          %p5087 = pneg %p450
        $region94: #{tpu_custom_call.1} parent=91 // pred_check_branch
          %5089 = sbr.rel (%p5087) target = $region96
        $region95: #{tpu_custom_call.1} parent=91 // pred_region
          %s5091 = ssub.s32 128, 128
          %5092 = vsyncadd %s5083, %s5091
          %s5093 = smul.addr %s44, 128
          %s5094 = scalar_lea.hbm %s20, %s5093
          %s5096 = sshll.u32 %s5086, 4
          %s5097 = int_to_ptr.vmem [resolvable:$true] %s5096
          %5099 = dma.vmem_to_hbm [thread:$0]  %s5097, 128, %s5094, %s5083
        $region96: #{tpu_custom_call.1} parent=91 // pred_fallthru
          _
      $region92: #{tpu_custom_call.1} parent=5 // pred_fallthru
        _
      %p5100 = scmp.le.s32.totalorder 2, %s39
      // Predicated region
      $region97: #{tpu_custom_call.1} parent=5 // pred_check
        %p5101 = pneg %p5100
      $region98: #{tpu_custom_call.1} parent=5 // pred_check_branch
        %5103 = sbr.rel (%p5101) target = $region100
      $region99: #{tpu_custom_call.1} parent=5 // pred_region
        %s5104 = ssub.s32 %s39, 2
        // Predicated region
        $region101: #{tpu_custom_call.1} parent=99 // pred_check
          %p5105 = pneg %p456
        $region102: #{tpu_custom_call.1} parent=99 // pred_check_branch
          %5107 = sbr.rel (%p5105) target = $region104
        $region103: #{tpu_custom_call.1} parent=99 // pred_region
          %s5108 = sand.u32 %s441, 1
          %s5109 = scalar_lea.sflag [#allocation6], %s5108
          %s5110 = sand.u32 %s441, 1
          %s5111 = smul.addr %s5110, 8
          %s5112 = scalar_lea.vmem [#allocation5], %s5111
          %5113 = dma.done %s5109, 128
        $region104: #{tpu_custom_call.1} parent=99 // pred_fallthru
          _
      $region100: #{tpu_custom_call.1} parent=5 // pred_fallthru
        _
    $region6: #{tpu_custom_call.1} parent=1 // loop_footer
      %s43 = sadd.s32 1, %s39
    $region7: #{tpu_custom_call.1} parent=1 // loop_footer_branch
      %38 = sbr.rel target = $region3
    $region8: #{tpu_custom_call.1} parent=1 // loop_exit
      _
    %5114 = vsyncpa [#allocation6], 1
    %s5115 = scalar_lea.sflag [#allocation6], 1
    %5116 = vsyncpa %s5115, 1

</llo_original>
